<compile_context>
chip_gen: v6e
topology: v6e:2x2x1
jax: 0.10.0
libtpu: 0.0.40
codegen_flags: <defaults>
</compile_context>

<pallas_src>
import functools

import jax
import jax.numpy as jnp
from jax.experimental import pallas as pl
from jax.experimental.pallas import tpu as pltpu

# bf16 operands for the MXU (f32 accumulation).  Set to jnp.float32 for exact
# f32 parity with the PyTorch reference.
MATMUL_DTYPE = jnp.bfloat16
_LN_EPS = 1e-5
_VMEM_LIMIT = 48 * 1024 * 1024        # explicit scoped-VMEM budget (fits v7x's 64 MiB)


def _round_up(n, m):
    return ((n + m - 1) // m) * m


def _pick_group_tile(total, seq_len, row_cap=512):
    """Largest divisor g of `total` with (g == total or g % 8 == 0) such that
    g * seq_len rows fit `row_cap`; falls back to the smallest legal divisor.
    (The second-to-last block dim must be a multiple of 8 or the full dim.)"""
    cands = [g for g in range(1, total + 1)
             if total % g == 0 and (g == total or g % 8 == 0)]
    fitting = [g for g in cands if g * seq_len <= row_cap]
    return max(fitting) if fitting else min(cands)


# ----------------------------------------------------------------------------
# In-kernel helpers (traced inside the Pallas kernels)
# ----------------------------------------------------------------------------

def _layernorm(x, gamma, beta):
    """Row-wise LayerNorm, single-pass statistics, f32 math."""
    x = x.astype(jnp.float32)
    m = jnp.mean(x, axis=-1, keepdims=True)
    m2 = jnp.mean(x * x, axis=-1, keepdims=True)
    inv = jax.lax.rsqrt(m2 - m * m + _LN_EPS)
    return (x - m) * inv * gamma + beta


def _mha(x2d, groups, seq, wq, bq, wk, bk, wv, bv, wo, bo, num_heads):
    """Multi-head attention over `groups` sequences of length `seq`.

    x2d: (groups*seq, D) f32 rows (sequence-major).  The attention scale is
    pre-folded into wq/bq.  Each head's output is accumulated directly through
    its slice of the output projection: no concat, only the accumulator stays
    live across heads.
    """
    d = x2d.shape[-1]
    dh = d // num_heads
    xm = x2d.astype(MATMUL_DTYPE)
    q = jnp.dot(xm, wq, preferred_element_type=jnp.float32) + bq
    k = jnp.dot(xm, wk, preferred_element_type=jnp.float32) + bk
    v = jnp.dot(xm, wv, preferred_element_type=jnp.float32) + bv
    acc = jnp.zeros((groups * seq, d), jnp.float32) + bo
    for h in range(num_heads):                      # static unroll; small live range
        sl = slice(h * dh, (h + 1) * dh)
        qh = q[:, sl].reshape(groups, seq, dh).astype(MATMUL_DTYPE)
        kh = k[:, sl].reshape(groups, seq, dh).astype(MATMUL_DTYPE)
        vh = v[:, sl].reshape(groups, seq, dh).astype(MATMUL_DTYPE)
        s = jnp.einsum('gqd,gkd->gqk', qh, kh, preferred_element_type=jnp.float32)
        s = s - jnp.max(s, axis=-1, keepdims=True)
        pr = jnp.exp(s)
        pr = pr * pl.reciprocal(jnp.sum(pr, axis=-1, keepdims=True), approx=True)
        oh = jnp.einsum('gqk,gkd->gqd', pr.astype(MATMUL_DTYPE), vh,
                        preferred_element_type=jnp.float32)
        acc = acc + jnp.dot(oh.reshape(groups * seq, dh).astype(MATMUL_DTYPE),
                            wo[sl, :], preferred_element_type=jnp.float32)
    return acc


# ----------------------------------------------------------------------------
# Fused Pallas kernels
# ----------------------------------------------------------------------------

def _temporal_block_kernel(x_ref, pos_ref, time_ref, g1_ref, be1_ref,
                           wq_ref, bq_ref, wk_ref, bk_ref, wv_ref, bv_ref,
                           wo_ref, bo_ref, wf_ref, bf_ref, o_ref, *, num_heads):
    # x_ref block: (1, T, TP, D) raw patch tokens, time-major.
    xb = x_ref[0].astype(jnp.float32)                                   # (T, TP, D)
    t, tp, d = xb.shape
    xb = xb + time_ref[...][:, None, :] + pos_ref[...][None, :, :]      # pos + time embed
    xs = pltpu.einshape("tpd->ptd", xb)                                 # (TP, T, D) seq-major
    x2d = xs.reshape(tp * t, d)
    h = _layernorm(x2d, g1_ref[...], be1_ref[...])
    a = _mha(h, tp, t, wq_ref[...], bq_ref[...], wk_ref[...], bk_ref[...],
             wv_ref[...], bv_ref[...], wo_ref[...], bo_ref[...], num_heads)
    a = jnp.dot(a.astype(MATMUL_DTYPE), wf_ref[...],
                preferred_element_type=jnp.float32) + bf_ref[...]       # temporal_fc
    out = (x2d + a).reshape(tp, t, d)                                   # residual add
    o_ref[0] = out.astype(o_ref.dtype)


def _spatial_block_kernel(cls_ref, x_ref, g1_ref, be1_ref,
                          wq_ref, bq_ref, wk_ref, bk_ref, wv_ref, bv_ref,
                          wo_ref, bo_ref, op_ref, oc_ref, *, num_heads):
    # cls_ref: (1, 1, D); x_ref: (1, P, TT, D) patch-major temporal output.
    xpm = x_ref[0].astype(jnp.float32)                                  # (P, TT, D)
    p_, tt, d = xpm.shape
    xp = pltpu.einshape("ptd->tpd", xpm)                                # (TT, P, D)
    cls = cls_ref[0].astype(jnp.float32)                                # (1, D)
    cls_b = jnp.broadcast_to(cls[None, :, :], (tt, 1, d))
    seq = jnp.concatenate([cls_b, xp], axis=1)                          # (TT, 1+P, D)
    s = p_ + 1
    x2d = seq.reshape(tt * s, d)
    h = _layernorm(x2d, g1_ref[...], be1_ref[...])
    a = _mha(h, tt, s, wq_ref[...], bq_ref[...], wk_ref[...], bk_ref[...],
             wv_ref[...], bv_ref[...], wo_ref[...], bo_ref[...], num_heads)
    a3 = a.reshape(tt, s, d)
    oc_ref[0] = a3[:, 0, :].astype(oc_ref.dtype)                        # per-frame cls output
    op_ref[0] = (xp + a3[:, 1:, :]).astype(op_ref.dtype)                # residual on patches


def _ln_mlp_kernel(x_ref, g_ref, b_ref, w1_ref, b1_ref, w2_ref, b2_ref, o_ref):
    x = x_ref[...].astype(jnp.float32)                                  # (RT, D)
    h = _layernorm(x, g_ref[...], b_ref[...])
    h = jnp.dot(h.astype(MATMUL_DTYPE), w1_ref[...],
                preferred_element_type=jnp.float32) + b1_ref[...]
    h = h * jax.nn.sigmoid(1.702 * h)                                   # CLIP quick_gelu
    y = jnp.dot(h.astype(MATMUL_DTYPE), w2_ref[...],
                preferred_element_type=jnp.float32) + b2_ref[...]
    o_ref[...] = (x + y).astype(o_ref.dtype)                            # residual add


# ----------------------------------------------------------------------------
# Pallas wrappers
# ----------------------------------------------------------------------------

def temporal_block(patches, pos_patch, time_embed, p, num_heads):
    """Fused CLIPLayer_AttnTime.  patches: (B, T, P, D) raw tokens.
    Returns (B, P, T, D) = embed + temporal_fc(attn(LN1(embed))),
    where embed = patches + pos_embed + time_embed."""
    b, t, pp, d = patches.shape
    tp = _pick_group_tile(pp, t)
    scale = float(d // num_heads) ** -0.5
    wq = (p['t_wq'] * scale).astype(MATMUL_DTYPE)                       # scale folded in
    bq = (p['t_bq'] * scale).reshape(1, d).astype(jnp.float32)
    args = (patches, pos_patch, time_embed,
            p['t_ln1_g'].reshape(1, d), p['t_ln1_b'].reshape(1, d),
            wq, bq,
            p['t_wk'].astype(MATMUL_DTYPE), p['t_bk'].reshape(1, d),
            p['t_wv'].astype(MATMUL_DTYPE), p['t_bv'].reshape(1, d),
            p['t_wo'].astype(MATMUL_DTYPE), p['t_bo'].reshape(1, d),
            p['t_fc_w'].astype(MATMUL_DTYPE), p['t_fc_b'].reshape(1, d))
    wspec = pl.BlockSpec((d, d), lambda bi, pi: (0, 0))
    vspec = pl.BlockSpec((1, d), lambda bi, pi: (0, 0))
    return pl.pallas_call(
        functools.partial(_temporal_block_kernel, num_heads=num_heads),
        out_shape=jax.ShapeDtypeStruct((b, pp, t, d), patches.dtype),
        grid=(b, pp // tp),
        in_specs=[
            pl.BlockSpec((1, t, tp, d), lambda bi, pi: (bi, 0, pi, 0)),
            pl.BlockSpec((tp, d), lambda bi, pi: (pi, 0)),
            pl.BlockSpec((t, d), lambda bi, pi: (0, 0)),
            vspec, vspec,
            wspec, vspec, wspec, vspec, wspec, vspec,
            wspec, vspec,
            wspec, vspec,
        ],
        out_specs=pl.BlockSpec((1, tp, t, d), lambda bi, pi: (bi, pi, 0, 0)),
        compiler_params=pltpu.CompilerParams(
            dimension_semantics=("parallel", "parallel"),
            vmem_limit_bytes=_VMEM_LIMIT),
    )(*args)


def spatial_attn_block(cls0, y, p, num_heads):
    """Fused spatial LN1 + MHA.  cls0: (B, 1, D); y: (B, P, T, D).
    Returns (patches_out (B, T, P, D) = y + attn_patches,
             attn_cls    (B, T, D)    = per-frame cls attention output)."""
    b, pp, t, d = y.shape
    tt = _pick_group_tile(t, pp + 1)
    scale = float(d // num_heads) ** -0.5
    wq = (p['s_wq'] * scale).astype(MATMUL_DTYPE)
    bq = (p['s_bq'] * scale).reshape(1, d).astype(jnp.float32)
    args = (cls0, y,
            p['s_ln1_g'].reshape(1, d), p['s_ln1_b'].reshape(1, d),
            wq, bq,
            p['s_wk'].astype(MATMUL_DTYPE), p['s_bk'].reshape(1, d),
            p['s_wv'].astype(MATMUL_DTYPE), p['s_bv'].reshape(1, d),
            p['s_wo'].astype(MATMUL_DTYPE), p['s_bo'].reshape(1, d))
    wspec = pl.BlockSpec((d, d), lambda bi, ti: (0, 0))
    vspec = pl.BlockSpec((1, d), lambda bi, ti: (0, 0))
    return pl.pallas_call(
        functools.partial(_spatial_block_kernel, num_heads=num_heads),
        out_shape=(jax.ShapeDtypeStruct((b, t, pp, d), y.dtype),
                   jax.ShapeDtypeStruct((b, t, d), jnp.float32)),
        grid=(b, t // tt),
        in_specs=[
            pl.BlockSpec((1, 1, d), lambda bi, ti: (bi, 0, 0)),
            pl.BlockSpec((1, pp, tt, d), lambda bi, ti: (bi, 0, ti, 0)),
            vspec, vspec,
            wspec, vspec, wspec, vspec, wspec, vspec,
            wspec, vspec,
        ],
        out_specs=(pl.BlockSpec((1, tt, pp, d), lambda bi, ti: (bi, ti, 0, 0)),
                   pl.BlockSpec((1, tt, d), lambda bi, ti: (bi, ti, 0))),
        compiler_params=pltpu.CompilerParams(
            dimension_semantics=("parallel", "parallel"),
            vmem_limit_bytes=_VMEM_LIMIT),
    )(*args)


def ln_mlp_block(x, p):
    """Fused LN2 + CLIP MLP + residual on rows.  x: (N, D)."""
    n, d = x.shape
    i_dim = p['s_fc1_w'].shape[1]
    rt = min(256, _round_up(n, 8))
    n_pad = _round_up(n, rt)
    xp = jnp.pad(x, ((0, n_pad - n), (0, 0))) if n_pad != n else x
    out = pl.pallas_call(
        _ln_mlp_kernel,
        out_shape=jax.ShapeDtypeStruct((n_pad, d), x.dtype),
        grid=(n_pad // rt,),
        in_specs=[
            pl.BlockSpec((rt, d), lambda i: (i, 0)),
            pl.BlockSpec((1, d), lambda i: (0, 0)),
            pl.BlockSpec((1, d), lambda i: (0, 0)),
            pl.BlockSpec((d, i_dim), lambda i: (0, 0)),
            pl.BlockSpec((1, i_dim), lambda i: (0, 0)),
            pl.BlockSpec((i_dim, d), lambda i: (0, 0)),
            pl.BlockSpec((1, d), lambda i: (0, 0)),
        ],
        out_specs=pl.BlockSpec((rt, d), lambda i: (i, 0)),
        compiler_params=pltpu.CompilerParams(
            dimension_semantics=("parallel",),
            vmem_limit_bytes=_VMEM_LIMIT),
    )(xp,
      p['s_ln2_g'].reshape(1, d), p['s_ln2_b'].reshape(1, d),
      p['s_fc1_w'].astype(MATMUL_DTYPE), p['s_fc1_b'].reshape(1, i_dim),
      p['s_fc2_w'].astype(MATMUL_DTYPE), p['s_fc2_b'].reshape(1, d))
    return out[:n]


# ----------------------------------------------------------------------------
# Module forward (tiny cls-path glue in plain JAX, hot path in fused kernels)
# ----------------------------------------------------------------------------

def vitclip_stan_layer(x, p, num_heads):
    """VITCLIP_STANLayer forward (input_ini + AttnTime + Spatial).  x: (B, T, L, D).
    Returns (cls (B, D), patch tokens (B, T, P, D))."""
    b, t, l, d = x.shape
    pp = l - 1
    # input_ini cls token: (mean_t(raw cls) + (class_embedding + pos_embed[0])) / 2.
    # (The reference's quirky `x[:B, 0]` slice picks rows that all equal
    #  class_embedding + pos_embed[0], so this is the identical value.)
    cls_old = jnp.mean(x[:, :, 0, :], axis=1)                            # (B, D)
    cls_new = p['class_embedding'] + p['pos_embed'][0]                   # (D,)
    cls0 = 0.5 * (cls_old + cls_new[None, :])                            # (B, D)

    patches = x[:, :, 1:, :]                                             # (B, T, P, D)
    y = temporal_block(patches, p['pos_embed'][1:pp + 1],
                       p['time_embed'][:t], p, num_heads)                # (B, P, T, D)

    patches1, attn_cls = spatial_attn_block(cls0[:, None, :], y, p, num_heads)
    cls1 = cls0 + jnp.mean(attn_cls, axis=1)                             # (B, D)

    cls2 = ln_mlp_block(cls1, p)                                         # (B, D)
    patches2 = ln_mlp_block(patches1.reshape(b * t * pp, d), p).reshape(b, t, pp, d)
    return cls2, patches2


def vitclip_stan_forward(inner_feature, pooler_output, mask, params, num_heads):
    # inner_feature: (B, num_stan_layers=1, T, L, D).  The module output only
    # consumes the cls token of the STAN layer output.
    max_length = mask.shape[1]
    cls2, _patches2 = vitclip_stan_layer(inner_feature[:, 0], params, num_heads)
    b, d = cls2.shape
    cls_rep = jnp.broadcast_to(cls2[:, None, :], (b, max_length, d))
    return jnp.concatenate([pooler_output, cls_rep], axis=2)


# ----------------------------------------------------------------------------
# Deterministic synthetic parameters
# ----------------------------------------------------------------------------

def init_params(key, D, I, T, num_pos=50):
    ks = jax.random.split(key, 24)
    w = lambda k, shape: 0.02 * jax.random.normal(k, shape, jnp.float32)
    p = {
        'class_embedding': w(ks[0], (D,)),
        'pos_embed': w(ks[1], (num_pos, D)),
        'time_embed': w(ks[2], (T, D)),
        # temporal (AttnTime) layer
        't_ln1_g': jnp.ones((D,), jnp.float32), 't_ln1_b': jnp.zeros((D,), jnp.float32),
        't_wq': w(ks[3], (D, D)), 't_bq': w(ks[4], (D,)),
        't_wk': w(ks[5], (D, D)), 't_bk': w(ks[6], (D,)),
        't_wv': w(ks[7], (D, D)), 't_bv': w(ks[8], (D,)),
        't_wo': w(ks[9], (D, D)), 't_bo': w(ks[10], (D,)),
        't_fc_w': w(ks[11], (D, D)), 't_fc_b': w(ks[12], (D,)),
        # spatial layer
        's_ln1_g': jnp.ones((D,), jnp.float32), 's_ln1_b': jnp.zeros((D,), jnp.float32),
        's_wq': w(ks[13], (D, D)), 's_bq': w(ks[14], (D,)),
        's_wk': w(ks[15], (D, D)), 's_bk': w(ks[16], (D,)),
        's_wv': w(ks[17], (D, D)), 's_bv': w(ks[18], (D,)),
        's_wo': w(ks[19], (D, D)), 's_bo': w(ks[20], (D,)),
        's_ln2_g': jnp.ones((D,), jnp.float32), 's_ln2_b': jnp.zeros((D,), jnp.float32),
        's_fc1_w': w(ks[21], (D, I)), 's_fc1_b': w(ks[22], (I,)),
        's_fc2_w': w(ks[23], (I, D)), 's_fc2_b': jnp.zeros((D,), jnp.float32),
    }
    return p


# ----------------------------------------------------------------------------

if __name__ == "__main__":
    # Small shapes consistent with the module (L includes 1 cls token + 4 patches).
    B, T, L, D = 2, 4, 5, 32
    NUM_HEADS, INTER = 4, 64
    MAX_LEN, POOL_D = 8, 16

    key = jax.random.PRNGKey(0)
    k_feat, k_pool, k_param = jax.random.split(key, 3)

    inner_feature = jax.random.normal(k_feat, (B, 1, T, L, D), jnp.float32)
    pooler_output = jax.random.normal(k_pool, (B, MAX_LEN, POOL_D), jnp.float32)
    mask = jnp.ones((B, MAX_LEN), jnp.float32)

    params = init_params(k_param, D, INTER, T)

    fwd = jax.jit(functools.partial(vitclip_stan_forward, num_heads=NUM_HEADS))
    out = fwd(inner_feature, pooler_output, mask, params)
    out = jax.block_until_ready(out)

    assert out.shape == (B, MAX_LEN, POOL_D + D), out.shape
    assert bool(jnp.all(jnp.isfinite(out)))
    # TODO(synk): Dropout / DropPath (dropout_layer, proj_drop) are eval-mode
    # identities; training-mode stochastic paths are not implemented.
    print("KERNEL_OK")
</pallas_src>

<mosaic_0001>
module attributes {stable_mosaic.version = 11 : i64} {
  func.func @_spatial_block_kernel(%arg0: i32, %arg1: i32, %arg2: memref<1x1x32xf32, #tpu.memory_space<vmem>>, %arg3: memref<1x4x4x32xf32, #tpu.memory_space<vmem>>, %arg4: memref<1x32xf32, #tpu.memory_space<vmem>>, %arg5: memref<1x32xf32, #tpu.memory_space<vmem>>, %arg6: memref<32x32xbf16, #tpu.memory_space<vmem>>, %arg7: memref<1x32xf32, #tpu.memory_space<vmem>>, %arg8: memref<32x32xbf16, #tpu.memory_space<vmem>>, %arg9: memref<1x32xf32, #tpu.memory_space<vmem>>, %arg10: memref<32x32xbf16, #tpu.memory_space<vmem>>, %arg11: memref<1x32xf32, #tpu.memory_space<vmem>>, %arg12: memref<32x32xbf16, #tpu.memory_space<vmem>>, %arg13: memref<1x32xf32, #tpu.memory_space<vmem>>, %arg14: memref<1x4x4x32xf32, #tpu.memory_space<vmem>>, %arg15: memref<1x4x32xf32, #tpu.memory_space<vmem>>) attributes {dimension_semantics = [#tpu.dimension_semantics<parallel>, #tpu.dimension_semantics<parallel>], iteration_bounds = array<i64: 2, 1>, scalar_prefetch = 0 : i64, scratch_operands = 0 : i64, tpu.core_type = #tpu.core_type<tc>, window_params = [{transform_indices = @transform_0, window_bounds = array<i64: 1, 1, 32>}, {transform_indices = @transform_1, window_bounds = array<i64: 1, 4, 4, 32>}, {pipeline_mode = #tpu.pipeline_mode<synchronous>, transform_indices = @transform_2, window_bounds = array<i64: 1, 32>}, {pipeline_mode = #tpu.pipeline_mode<synchronous>, transform_indices = @transform_3, window_bounds = array<i64: 1, 32>}, {pipeline_mode = #tpu.pipeline_mode<synchronous>, transform_indices = @transform_4, window_bounds = array<i64: 32, 32>}, {pipeline_mode = #tpu.pipeline_mode<synchronous>, transform_indices = @transform_5, window_bounds = array<i64: 1, 32>}, {pipeline_mode = #tpu.pipeline_mode<synchronous>, transform_indices = @transform_6, window_bounds = array<i64: 32, 32>}, {pipeline_mode = #tpu.pipeline_mode<synchronous>, transform_indices = @transform_7, window_bounds = array<i64: 1, 32>}, {pipeline_mode = #tpu.pipeline_mode<synchronous>, transform_indices = @transform_8, window_bounds = array<i64: 32, 32>}, {pipeline_mode = #tpu.pipeline_mode<synchronous>, transform_indices = @transform_9, window_bounds = array<i64: 1, 32>}, {pipeline_mode = #tpu.pipeline_mode<synchronous>, transform_indices = @transform_10, window_bounds = array<i64: 32, 32>}, {pipeline_mode = #tpu.pipeline_mode<synchronous>, transform_indices = @transform_11, window_bounds = array<i64: 1, 32>}, {transform_indices = @transform_12, window_bounds = array<i64: 1, 4, 4, 32>}, {transform_indices = @transform_13, window_bounds = array<i64: 1, 4, 32>}]} {
    %c0 = arith.constant 0 : index
    %c0_0 = arith.constant 0 : index
    %c0_1 = arith.constant 0 : index
    %c0_2 = arith.constant 0 : index
    %0 = vector.load %arg3[%c0, %c0_0, %c0_1, %c0_2] : memref<1x4x4x32xf32, #tpu.memory_space<vmem>>, vector<1x4x4x32xf32>
    %1 = vector.shape_cast %0 : vector<1x4x4x32xf32> to vector<4x4x32xf32>
    %2 = tpu.transpose %1, [1, 0, 2] : vector<4x4x32xf32> -> vector<4x4x32xf32>
    %c0_3 = arith.constant 0 : index
    %c0_4 = arith.constant 0 : index
    %c0_5 = arith.constant 0 : index
    %3 = vector.load %arg2[%c0_3, %c0_4, %c0_5] : memref<1x1x32xf32, #tpu.memory_space<vmem>>, vector<1x1x32xf32>
    %4 = vector.shape_cast %3 : vector<1x1x32xf32> to vector<1x32xf32>
    %5 = vector.shape_cast %4 : vector<1x32xf32> to vector<1x1x32xf32>
    %6 = vector.shape_cast %5 : vector<1x1x32xf32> to vector<1x1x32xf32>
    %7 = vector.broadcast %6 : vector<1x1x32xf32> to vector<4x1x32xf32>
    %8 = tpu.concatenate %7, %2 in 1 : vector<4x1x32xf32>, vector<4x4x32xf32> -> vector<4x5x32xf32>
    %9 = vector.shape_cast %8 : vector<4x5x32xf32> to vector<20x32xf32>
    %c0_6 = arith.constant 0 : index
    %c0_7 = arith.constant 0 : index
    %10 = vector.load %arg4[%c0_6, %c0_7] : memref<1x32xf32, #tpu.memory_space<vmem>>, vector<1x32xf32>
    %c0_8 = arith.constant 0 : index
    %c0_9 = arith.constant 0 : index
    %11 = vector.load %arg5[%c0_8, %c0_9] : memref<1x32xf32, #tpu.memory_space<vmem>>, vector<1x32xf32>
    %cst = arith.constant dense<0.000000e+00> : vector<20xf32>
    %12 = vector.multi_reduction <add>, %9, %cst [1] : vector<20x32xf32> to vector<20xf32>
    %13 = vector.shape_cast %12 : vector<20xf32> to vector<20x1xf32>
    %cst_10 = arith.constant 3.200000e+01 : f32
    %14 = vector.broadcast %cst_10 : f32 to vector<20x1xf32>
    %15 = arith.divf %13, %14 : vector<20x1xf32>
    %16 = arith.mulf %9, %9 : vector<20x32xf32>
    %cst_11 = arith.constant dense<0.000000e+00> : vector<20xf32>
    %17 = vector.multi_reduction <add>, %16, %cst_11 [1] : vector<20x32xf32> to vector<20xf32>
    %18 = vector.shape_cast %17 : vector<20xf32> to vector<20x1xf32>
    %cst_12 = arith.constant 3.200000e+01 : f32
    %19 = vector.broadcast %cst_12 : f32 to vector<20x1xf32>
    %20 = arith.divf %18, %19 : vector<20x1xf32>
    %21 = arith.mulf %15, %15 : vector<20x1xf32>
    %22 = arith.subf %20, %21 : vector<20x1xf32>
    %cst_13 = arith.constant 9.99999974E-6 : f32
    %23 = vector.broadcast %cst_13 : f32 to vector<20x1xf32>
    %24 = arith.addf %22, %23 : vector<20x1xf32>
    %25 = math.rsqrt %24 : vector<20x1xf32>
    %26 = vector.broadcast %15 : vector<20x1xf32> to vector<20x32xf32>
    %27 = arith.subf %9, %26 : vector<20x32xf32>
    %28 = vector.broadcast %25 : vector<20x1xf32> to vector<20x32xf32>
    %29 = arith.mulf %27, %28 : vector<20x32xf32>
    %30 = vector.broadcast %10 : vector<1x32xf32> to vector<20x32xf32>
    %31 = arith.mulf %29, %30 : vector<20x32xf32>
    %32 = vector.broadcast %11 : vector<1x32xf32> to vector<20x32xf32>
    %33 = arith.addf %31, %32 : vector<20x32xf32>
    %c0_14 = arith.constant 0 : index
    %c0_15 = arith.constant 0 : index
    %34 = vector.load %arg6[%c0_14, %c0_15] : memref<32x32xbf16, #tpu.memory_space<vmem>>, vector<32x32xbf16>
    %c0_16 = arith.constant 0 : index
    %c0_17 = arith.constant 0 : index
    %35 = vector.load %arg7[%c0_16, %c0_17] : memref<1x32xf32, #tpu.memory_space<vmem>>, vector<1x32xf32>
    %c0_18 = arith.constant 0 : index
    %c0_19 = arith.constant 0 : index
    %36 = vector.load %arg8[%c0_18, %c0_19] : memref<32x32xbf16, #tpu.memory_space<vmem>>, vector<32x32xbf16>
    %c0_20 = arith.constant 0 : index
    %c0_21 = arith.constant 0 : index
    %37 = vector.load %arg9[%c0_20, %c0_21] : memref<1x32xf32, #tpu.memory_space<vmem>>, vector<1x32xf32>
    %c0_22 = arith.constant 0 : index
    %c0_23 = arith.constant 0 : index
    %38 = vector.load %arg10[%c0_22, %c0_23] : memref<32x32xbf16, #tpu.memory_space<vmem>>, vector<32x32xbf16>
    %c0_24 = arith.constant 0 : index
    %c0_25 = arith.constant 0 : index
    %39 = vector.load %arg11[%c0_24, %c0_25] : memref<1x32xf32, #tpu.memory_space<vmem>>, vector<1x32xf32>
    %c0_26 = arith.constant 0 : index
    %c0_27 = arith.constant 0 : index
    %40 = vector.load %arg12[%c0_26, %c0_27] : memref<32x32xbf16, #tpu.memory_space<vmem>>, vector<32x32xbf16>
    %c0_28 = arith.constant 0 : index
    %c0_29 = arith.constant 0 : index
    %41 = vector.load %arg13[%c0_28, %c0_29] : memref<1x32xf32, #tpu.memory_space<vmem>>, vector<1x32xf32>
    %42 = arith.truncf %33 : vector<20x32xf32> to vector<20x32xbf16>
    %cst_30 = arith.constant dense<0.000000e+00> : vector<20x32xf32>
    %43 = tpu.matmul %42, %34, %cst_30 {dimension_numbers = #tpu.dot_dimension_numbers<[1], [0], [0], [1], [0, 0, 1, 1], [], []>} : vector<20x32xbf16>, vector<32x32xbf16>, vector<20x32xf32> -> vector<20x32xf32>
    %44 = vector.broadcast %35 : vector<1x32xf32> to vector<20x32xf32>
    %45 = arith.addf %43, %44 : vector<20x32xf32>
    %cst_31 = arith.constant dense<0.000000e+00> : vector<20x32xf32>
    %46 = tpu.matmul %42, %36, %cst_31 {dimension_numbers = #tpu.dot_dimension_numbers<[1], [0], [0], [1], [0, 0, 1, 1], [], []>} : vector<20x32xbf16>, vector<32x32xbf16>, vector<20x32xf32> -> vector<20x32xf32>
    %47 = vector.broadcast %37 : vector<1x32xf32> to vector<20x32xf32>
    %48 = arith.addf %46, %47 : vector<20x32xf32>
    %cst_32 = arith.constant dense<0.000000e+00> : vector<20x32xf32>
    %49 = tpu.matmul %42, %38, %cst_32 {dimension_numbers = #tpu.dot_dimension_numbers<[1], [0], [0], [1], [0, 0, 1, 1], [], []>} : vector<20x32xbf16>, vector<32x32xbf16>, vector<20x32xf32> -> vector<20x32xf32>
    %50 = vector.broadcast %39 : vector<1x32xf32> to vector<20x32xf32>
    %51 = arith.addf %49, %50 : vector<20x32xf32>
    %cst_33 = arith.constant 0.000000e+00 : f32
    %52 = vector.broadcast %cst_33 : f32 to vector<20x32xf32>
    %53 = vector.broadcast %41 : vector<1x32xf32> to vector<20x32xf32>
    %54 = arith.addf %52, %53 : vector<20x32xf32>
    %55 = vector.extract_strided_slice %45 {offsets = [0, 0], sizes = [20, 8], strides = [1, 1]} : vector<20x32xf32> to vector<20x8xf32>
    %56 = vector.shape_cast %55 : vector<20x8xf32> to vector<4x5x8xf32>
    %57 = arith.truncf %56 : vector<4x5x8xf32> to vector<4x5x8xbf16>
    %58 = vector.extract_strided_slice %48 {offsets = [0, 0], sizes = [20, 8], strides = [1, 1]} : vector<20x32xf32> to vector<20x8xf32>
    %59 = vector.shape_cast %58 : vector<20x8xf32> to vector<4x5x8xf32>
    %60 = arith.truncf %59 : vector<4x5x8xf32> to vector<4x5x8xbf16>
    %61 = vector.extract_strided_slice %51 {offsets = [0, 0], sizes = [20, 8], strides = [1, 1]} : vector<20x32xf32> to vector<20x8xf32>
    %62 = vector.shape_cast %61 : vector<20x8xf32> to vector<4x5x8xf32>
    %63 = arith.truncf %62 : vector<4x5x8xf32> to vector<4x5x8xbf16>
    "tpu.trace_start"() <{level = 10 : i32, message = "gqd,gkd->gqk"}> : () -> ()
    %cst_34 = arith.constant dense<0.000000e+00> : vector<4x5x5xf32>
    %64 = tpu.matmul %57, %60, %cst_34 {dimension_numbers = #tpu.dot_dimension_numbers<[2], [2], [1], [1], [0, 0, 0, 1, 1, 1], [0], [0]>} : vector<4x5x8xbf16>, vector<4x5x8xbf16>, vector<4x5x5xf32> -> vector<4x5x5xf32>
    "tpu.trace_stop"() : () -> ()
    %cst_35 = arith.constant dense<0xFF800000> : vector<4x5xf32>
    %65 = vector.multi_reduction <maximumf>, %64, %cst_35 [2] : vector<4x5x5xf32> to vector<4x5xf32>
    %66 = vector.shape_cast %65 : vector<4x5xf32> to vector<4x5x1xf32>
    %67 = vector.broadcast %66 : vector<4x5x1xf32> to vector<4x5x5xf32>
    %68 = arith.subf %64, %67 : vector<4x5x5xf32>
    %69 = math.exp %68 : vector<4x5x5xf32>
    %cst_36 = arith.constant dense<0.000000e+00> : vector<4x5xf32>
    %70 = vector.multi_reduction <add>, %69, %cst_36 [2] : vector<4x5x5xf32> to vector<4x5xf32>
    %71 = vector.shape_cast %70 : vector<4x5xf32> to vector<4x5x1xf32>
    %72 = tpu.reciprocal %71 {approx = true} : vector<4x5x1xf32> -> vector<4x5x1xf32>
    %73 = vector.broadcast %72 : vector<4x5x1xf32> to vector<4x5x5xf32>
    %74 = arith.mulf %69, %73 : vector<4x5x5xf32>
    %75 = arith.truncf %74 : vector<4x5x5xf32> to vector<4x5x5xbf16>
    "tpu.trace_start"() <{level = 10 : i32, message = "gqk,gkd->gqd"}> : () -> ()
    %cst_37 = arith.constant dense<0.000000e+00> : vector<4x5x8xf32>
    %76 = tpu.matmul %75, %63, %cst_37 {dimension_numbers = #tpu.dot_dimension_numbers<[2], [1], [1], [2], [0, 0, 0, 1, 1, 2], [0], [0]>} : vector<4x5x5xbf16>, vector<4x5x8xbf16>, vector<4x5x8xf32> -> vector<4x5x8xf32>
    "tpu.trace_stop"() : () -> ()
    %77 = vector.shape_cast %76 : vector<4x5x8xf32> to vector<20x8xf32>
    %78 = arith.truncf %77 : vector<20x8xf32> to vector<20x8xbf16>
    %79 = vector.extract_strided_slice %40 {offsets = [0, 0], sizes = [8, 32], strides = [1, 1]} : vector<32x32xbf16> to vector<8x32xbf16>
    %cst_38 = arith.constant dense<0.000000e+00> : vector<20x32xf32>
    %80 = tpu.matmul %78, %79, %cst_38 {dimension_numbers = #tpu.dot_dimension_numbers<[1], [0], [0], [1], [0, 0, 1, 1], [], []>} : vector<20x8xbf16>, vector<8x32xbf16>, vector<20x32xf32> -> vector<20x32xf32>
    %81 = arith.addf %54, %80 : vector<20x32xf32>
    %82 = vector.extract_strided_slice %45 {offsets = [0, 8], sizes = [20, 8], strides = [1, 1]} : vector<20x32xf32> to vector<20x8xf32>
    %83 = vector.shape_cast %82 : vector<20x8xf32> to vector<4x5x8xf32>
    %84 = arith.truncf %83 : vector<4x5x8xf32> to vector<4x5x8xbf16>
    %85 = vector.extract_strided_slice %48 {offsets = [0, 8], sizes = [20, 8], strides = [1, 1]} : vector<20x32xf32> to vector<20x8xf32>
    %86 = vector.shape_cast %85 : vector<20x8xf32> to vector<4x5x8xf32>
    %87 = arith.truncf %86 : vector<4x5x8xf32> to vector<4x5x8xbf16>
    %88 = vector.extract_strided_slice %51 {offsets = [0, 8], sizes = [20, 8], strides = [1, 1]} : vector<20x32xf32> to vector<20x8xf32>
    %89 = vector.shape_cast %88 : vector<20x8xf32> to vector<4x5x8xf32>
    %90 = arith.truncf %89 : vector<4x5x8xf32> to vector<4x5x8xbf16>
    "tpu.trace_start"() <{level = 10 : i32, message = "gqd,gkd->gqk"}> : () -> ()
    %cst_39 = arith.constant dense<0.000000e+00> : vector<4x5x5xf32>
    %91 = tpu.matmul %84, %87, %cst_39 {dimension_numbers = #tpu.dot_dimension_numbers<[2], [2], [1], [1], [0, 0, 0, 1, 1, 1], [0], [0]>} : vector<4x5x8xbf16>, vector<4x5x8xbf16>, vector<4x5x5xf32> -> vector<4x5x5xf32>
    "tpu.trace_stop"() : () -> ()
    %cst_40 = arith.constant dense<0xFF800000> : vector<4x5xf32>
    %92 = vector.multi_reduction <maximumf>, %91, %cst_40 [2] : vector<4x5x5xf32> to vector<4x5xf32>
    %93 = vector.shape_cast %92 : vector<4x5xf32> to vector<4x5x1xf32>
    %94 = vector.broadcast %93 : vector<4x5x1xf32> to vector<4x5x5xf32>
    %95 = arith.subf %91, %94 : vector<4x5x5xf32>
    %96 = math.exp %95 : vector<4x5x5xf32>
    %cst_41 = arith.constant dense<0.000000e+00> : vector<4x5xf32>
    %97 = vector.multi_reduction <add>, %96, %cst_41 [2] : vector<4x5x5xf32> to vector<4x5xf32>
    %98 = vector.shape_cast %97 : vector<4x5xf32> to vector<4x5x1xf32>
    %99 = tpu.reciprocal %98 {approx = true} : vector<4x5x1xf32> -> vector<4x5x1xf32>
    %100 = vector.broadcast %99 : vector<4x5x1xf32> to vector<4x5x5xf32>
    %101 = arith.mulf %96, %100 : vector<4x5x5xf32>
    %102 = arith.truncf %101 : vector<4x5x5xf32> to vector<4x5x5xbf16>
    "tpu.trace_start"() <{level = 10 : i32, message = "gqk,gkd->gqd"}> : () -> ()
    %cst_42 = arith.constant dense<0.000000e+00> : vector<4x5x8xf32>
    %103 = tpu.matmul %102, %90, %cst_42 {dimension_numbers = #tpu.dot_dimension_numbers<[2], [1], [1], [2], [0, 0, 0, 1, 1, 2], [0], [0]>} : vector<4x5x5xbf16>, vector<4x5x8xbf16>, vector<4x5x8xf32> -> vector<4x5x8xf32>
    "tpu.trace_stop"() : () -> ()
    %104 = vector.shape_cast %103 : vector<4x5x8xf32> to vector<20x8xf32>
    %105 = arith.truncf %104 : vector<20x8xf32> to vector<20x8xbf16>
    %106 = vector.extract_strided_slice %40 {offsets = [8, 0], sizes = [8, 32], strides = [1, 1]} : vector<32x32xbf16> to vector<8x32xbf16>
    %cst_43 = arith.constant dense<0.000000e+00> : vector<20x32xf32>
    %107 = tpu.matmul %105, %106, %cst_43 {dimension_numbers = #tpu.dot_dimension_numbers<[1], [0], [0], [1], [0, 0, 1, 1], [], []>} : vector<20x8xbf16>, vector<8x32xbf16>, vector<20x32xf32> -> vector<20x32xf32>
    %108 = arith.addf %81, %107 : vector<20x32xf32>
    %109 = vector.extract_strided_slice %45 {offsets = [0, 16], sizes = [20, 8], strides = [1, 1]} : vector<20x32xf32> to vector<20x8xf32>
    %110 = vector.shape_cast %109 : vector<20x8xf32> to vector<4x5x8xf32>
    %111 = arith.truncf %110 : vector<4x5x8xf32> to vector<4x5x8xbf16>
    %112 = vector.extract_strided_slice %48 {offsets = [0, 16], sizes = [20, 8], strides = [1, 1]} : vector<20x32xf32> to vector<20x8xf32>
    %113 = vector.shape_cast %112 : vector<20x8xf32> to vector<4x5x8xf32>
    %114 = arith.truncf %113 : vector<4x5x8xf32> to vector<4x5x8xbf16>
    %115 = vector.extract_strided_slice %51 {offsets = [0, 16], sizes = [20, 8], strides = [1, 1]} : vector<20x32xf32> to vector<20x8xf32>
    %116 = vector.shape_cast %115 : vector<20x8xf32> to vector<4x5x8xf32>
    %117 = arith.truncf %116 : vector<4x5x8xf32> to vector<4x5x8xbf16>
    "tpu.trace_start"() <{level = 10 : i32, message = "gqd,gkd->gqk"}> : () -> ()
    %cst_44 = arith.constant dense<0.000000e+00> : vector<4x5x5xf32>
    %118 = tpu.matmul %111, %114, %cst_44 {dimension_numbers = #tpu.dot_dimension_numbers<[2], [2], [1], [1], [0, 0, 0, 1, 1, 1], [0], [0]>} : vector<4x5x8xbf16>, vector<4x5x8xbf16>, vector<4x5x5xf32> -> vector<4x5x5xf32>
    "tpu.trace_stop"() : () -> ()
    %cst_45 = arith.constant dense<0xFF800000> : vector<4x5xf32>
    %119 = vector.multi_reduction <maximumf>, %118, %cst_45 [2] : vector<4x5x5xf32> to vector<4x5xf32>
    %120 = vector.shape_cast %119 : vector<4x5xf32> to vector<4x5x1xf32>
    %121 = vector.broadcast %120 : vector<4x5x1xf32> to vector<4x5x5xf32>
    %122 = arith.subf %118, %121 : vector<4x5x5xf32>
    %123 = math.exp %122 : vector<4x5x5xf32>
    %cst_46 = arith.constant dense<0.000000e+00> : vector<4x5xf32>
    %124 = vector.multi_reduction <add>, %123, %cst_46 [2] : vector<4x5x5xf32> to vector<4x5xf32>
    %125 = vector.shape_cast %124 : vector<4x5xf32> to vector<4x5x1xf32>
    %126 = tpu.reciprocal %125 {approx = true} : vector<4x5x1xf32> -> vector<4x5x1xf32>
    %127 = vector.broadcast %126 : vector<4x5x1xf32> to vector<4x5x5xf32>
    %128 = arith.mulf %123, %127 : vector<4x5x5xf32>
    %129 = arith.truncf %128 : vector<4x5x5xf32> to vector<4x5x5xbf16>
    "tpu.trace_start"() <{level = 10 : i32, message = "gqk,gkd->gqd"}> : () -> ()
    %cst_47 = arith.constant dense<0.000000e+00> : vector<4x5x8xf32>
    %130 = tpu.matmul %129, %117, %cst_47 {dimension_numbers = #tpu.dot_dimension_numbers<[2], [1], [1], [2], [0, 0, 0, 1, 1, 2], [0], [0]>} : vector<4x5x5xbf16>, vector<4x5x8xbf16>, vector<4x5x8xf32> -> vector<4x5x8xf32>
    "tpu.trace_stop"() : () -> ()
    %131 = vector.shape_cast %130 : vector<4x5x8xf32> to vector<20x8xf32>
    %132 = arith.truncf %131 : vector<20x8xf32> to vector<20x8xbf16>
    %133 = vector.extract_strided_slice %40 {offsets = [16, 0], sizes = [8, 32], strides = [1, 1]} : vector<32x32xbf16> to vector<8x32xbf16>
    %cst_48 = arith.constant dense<0.000000e+00> : vector<20x32xf32>
    %134 = tpu.matmul %132, %133, %cst_48 {dimension_numbers = #tpu.dot_dimension_numbers<[1], [0], [0], [1], [0, 0, 1, 1], [], []>} : vector<20x8xbf16>, vector<8x32xbf16>, vector<20x32xf32> -> vector<20x32xf32>
    %135 = arith.addf %108, %134 : vector<20x32xf32>
    %136 = vector.extract_strided_slice %45 {offsets = [0, 24], sizes = [20, 8], strides = [1, 1]} : vector<20x32xf32> to vector<20x8xf32>
    %137 = vector.shape_cast %136 : vector<20x8xf32> to vector<4x5x8xf32>
    %138 = arith.truncf %137 : vector<4x5x8xf32> to vector<4x5x8xbf16>
    %139 = vector.extract_strided_slice %48 {offsets = [0, 24], sizes = [20, 8], strides = [1, 1]} : vector<20x32xf32> to vector<20x8xf32>
    %140 = vector.shape_cast %139 : vector<20x8xf32> to vector<4x5x8xf32>
    %141 = arith.truncf %140 : vector<4x5x8xf32> to vector<4x5x8xbf16>
    %142 = vector.extract_strided_slice %51 {offsets = [0, 24], sizes = [20, 8], strides = [1, 1]} : vector<20x32xf32> to vector<20x8xf32>
    %143 = vector.shape_cast %142 : vector<20x8xf32> to vector<4x5x8xf32>
    %144 = arith.truncf %143 : vector<4x5x8xf32> to vector<4x5x8xbf16>
    "tpu.trace_start"() <{level = 10 : i32, message = "gqd,gkd->gqk"}> : () -> ()
    %cst_49 = arith.constant dense<0.000000e+00> : vector<4x5x5xf32>
    %145 = tpu.matmul %138, %141, %cst_49 {dimension_numbers = #tpu.dot_dimension_numbers<[2], [2], [1], [1], [0, 0, 0, 1, 1, 1], [0], [0]>} : vector<4x5x8xbf16>, vector<4x5x8xbf16>, vector<4x5x5xf32> -> vector<4x5x5xf32>
    "tpu.trace_stop"() : () -> ()
    %cst_50 = arith.constant dense<0xFF800000> : vector<4x5xf32>
    %146 = vector.multi_reduction <maximumf>, %145, %cst_50 [2] : vector<4x5x5xf32> to vector<4x5xf32>
    %147 = vector.shape_cast %146 : vector<4x5xf32> to vector<4x5x1xf32>
    %148 = vector.broadcast %147 : vector<4x5x1xf32> to vector<4x5x5xf32>
    %149 = arith.subf %145, %148 : vector<4x5x5xf32>
    %150 = math.exp %149 : vector<4x5x5xf32>
    %cst_51 = arith.constant dense<0.000000e+00> : vector<4x5xf32>
    %151 = vector.multi_reduction <add>, %150, %cst_51 [2] : vector<4x5x5xf32> to vector<4x5xf32>
    %152 = vector.shape_cast %151 : vector<4x5xf32> to vector<4x5x1xf32>
    %153 = tpu.reciprocal %152 {approx = true} : vector<4x5x1xf32> -> vector<4x5x1xf32>
    %154 = vector.broadcast %153 : vector<4x5x1xf32> to vector<4x5x5xf32>
    %155 = arith.mulf %150, %154 : vector<4x5x5xf32>
    %156 = arith.truncf %155 : vector<4x5x5xf32> to vector<4x5x5xbf16>
    "tpu.trace_start"() <{level = 10 : i32, message = "gqk,gkd->gqd"}> : () -> ()
    %cst_52 = arith.constant dense<0.000000e+00> : vector<4x5x8xf32>
    %157 = tpu.matmul %156, %144, %cst_52 {dimension_numbers = #tpu.dot_dimension_numbers<[2], [1], [1], [2], [0, 0, 0, 1, 1, 2], [0], [0]>} : vector<4x5x5xbf16>, vector<4x5x8xbf16>, vector<4x5x8xf32> -> vector<4x5x8xf32>
    "tpu.trace_stop"() : () -> ()
    %158 = vector.shape_cast %157 : vector<4x5x8xf32> to vector<20x8xf32>
    %159 = arith.truncf %158 : vector<20x8xf32> to vector<20x8xbf16>
    %160 = vector.extract_strided_slice %40 {offsets = [24, 0], sizes = [8, 32], strides = [1, 1]} : vector<32x32xbf16> to vector<8x32xbf16>
    %cst_53 = arith.constant dense<0.000000e+00> : vector<20x32xf32>
    %161 = tpu.matmul %159, %160, %cst_53 {dimension_numbers = #tpu.dot_dimension_numbers<[1], [0], [0], [1], [0, 0, 1, 1], [], []>} : vector<20x8xbf16>, vector<8x32xbf16>, vector<20x32xf32> -> vector<20x32xf32>
    %162 = arith.addf %135, %161 : vector<20x32xf32>
    %163 = vector.shape_cast %162 : vector<20x32xf32> to vector<4x5x32xf32>
    %164 = vector.extract_strided_slice %163 {offsets = [0, 0, 0], sizes = [4, 1, 32], strides = [1, 1, 1]} : vector<4x5x32xf32> to vector<4x1x32xf32>
    %165 = vector.shape_cast %164 : vector<4x1x32xf32> to vector<4x32xf32>
    %c0_54 = arith.constant 0 : index
    %c0_55 = arith.constant 0 : index
    %c0_56 = arith.constant 0 : index
    %166 = vector.load %arg15[%c0_54, %c0_55, %c0_56] : memref<1x4x32xf32, #tpu.memory_space<vmem>>, vector<1x4x32xf32>
    %167 = vector.shape_cast %166 : vector<1x4x32xf32> to vector<4x32xf32>
    %168 = vector.shape_cast %165 : vector<4x32xf32> to vector<1x4x32xf32>
    tpu.vector_store %arg15[%c0_54, %c0_55, %c0_56], %168 {strides = array<i32>} : memref<1x4x32xf32, #tpu.memory_space<vmem>>, vector<1x4x32xf32>,
    %169 = vector.extract_strided_slice %163 {offsets = [0, 1, 0], sizes = [4, 4, 32], strides = [1, 1, 1]} : vector<4x5x32xf32> to vector<4x4x32xf32>
    %170 = arith.addf %2, %169 : vector<4x4x32xf32>
    %c0_57 = arith.constant 0 : index
    %c0_58 = arith.constant 0 : index
    %c0_59 = arith.constant 0 : index
    %c0_60 = arith.constant 0 : index
    %171 = vector.load %arg14[%c0_57, %c0_58, %c0_59, %c0_60] : memref<1x4x4x32xf32, #tpu.memory_space<vmem>>, vector<1x4x4x32xf32>
    %172 = vector.shape_cast %171 : vector<1x4x4x32xf32> to vector<4x4x32xf32>
    %173 = vector.shape_cast %170 : vector<4x4x32xf32> to vector<1x4x4x32xf32>
    tpu.vector_store %arg14[%c0_57, %c0_58, %c0_59, %c0_60], %173 {strides = array<i32>} : memref<1x4x4x32xf32, #tpu.memory_space<vmem>>, vector<1x4x4x32xf32>,
    return
  }
  func.func @transform_0(%arg0: i32, %arg1: i32) -> (i32, i32, i32) {
    %c0_i32 = arith.constant 0 : i32
    %c0_i32_0 = arith.constant 0 : i32
    %c0_i32_1 = arith.constant 0 : i32
    return %arg0, %c0_i32, %c0_i32_0 : i32, i32, i32
  }
  func.func @transform_1(%arg0: i32, %arg1: i32) -> (i32, i32, i32, i32) {
    %c0_i32 = arith.constant 0 : i32
    %c0_i32_0 = arith.constant 0 : i32
    %c0_i32_1 = arith.constant 0 : i32
    return %arg0, %c0_i32, %arg1, %c0_i32_0 : i32, i32, i32, i32
  }
  func.func @transform_2(%arg0: i32, %arg1: i32) -> (i32, i32) {
    %c0_i32 = arith.constant 0 : i32
    %c0_i32_0 = arith.constant 0 : i32
    %c0_i32_1 = arith.constant 0 : i32
    return %c0_i32, %c0_i32_0 : i32, i32
  }
  func.func @transform_3(%arg0: i32, %arg1: i32) -> (i32, i32) {
    %c0_i32 = arith.constant 0 : i32
    %c0_i32_0 = arith.constant 0 : i32
    %c0_i32_1 = arith.constant 0 : i32
    return %c0_i32, %c0_i32_0 : i32, i32
  }
  func.func @transform_4(%arg0: i32, %arg1: i32) -> (i32, i32) {
    %c0_i32 = arith.constant 0 : i32
    %c0_i32_0 = arith.constant 0 : i32
    %c0_i32_1 = arith.constant 0 : i32
    return %c0_i32, %c0_i32_0 : i32, i32
  }
  func.func @transform_5(%arg0: i32, %arg1: i32) -> (i32, i32) {
    %c0_i32 = arith.constant 0 : i32
    %c0_i32_0 = arith.constant 0 : i32
    %c0_i32_1 = arith.constant 0 : i32
    return %c0_i32, %c0_i32_0 : i32, i32
  }
  func.func @transform_6(%arg0: i32, %arg1: i32) -> (i32, i32) {
    %c0_i32 = arith.constant 0 : i32
    %c0_i32_0 = arith.constant 0 : i32
    %c0_i32_1 = arith.constant 0 : i32
    return %c0_i32, %c0_i32_0 : i32, i32
  }
  func.func @transform_7(%arg0: i32, %arg1: i32) -> (i32, i32) {
    %c0_i32 = arith.constant 0 : i32
    %c0_i32_0 = arith.constant 0 : i32
    %c0_i32_1 = arith.constant 0 : i32
    return %c0_i32, %c0_i32_0 : i32, i32
  }
  func.func @transform_8(%arg0: i32, %arg1: i32) -> (i32, i32) {
    %c0_i32 = arith.constant 0 : i32
    %c0_i32_0 = arith.constant 0 : i32
    %c0_i32_1 = arith.constant 0 : i32
    return %c0_i32, %c0_i32_0 : i32, i32
  }
  func.func @transform_9(%arg0: i32, %arg1: i32) -> (i32, i32) {
    %c0_i32 = arith.constant 0 : i32
    %c0_i32_0 = arith.constant 0 : i32
    %c0_i32_1 = arith.constant 0 : i32
    return %c0_i32, %c0_i32_0 : i32, i32
  }
  func.func @transform_10(%arg0: i32, %arg1: i32) -> (i32, i32) {
    %c0_i32 = arith.constant 0 : i32
    %c0_i32_0 = arith.constant 0 : i32
    %c0_i32_1 = arith.constant 0 : i32
    return %c0_i32, %c0_i32_0 : i32, i32
  }
  func.func @transform_11(%arg0: i32, %arg1: i32) -> (i32, i32) {
    %c0_i32 = arith.constant 0 : i32
    %c0_i32_0 = arith.constant 0 : i32
    %c0_i32_1 = arith.constant 0 : i32
    return %c0_i32, %c0_i32_0 : i32, i32
  }
  func.func @transform_12(%arg0: i32, %arg1: i32) -> (i32, i32, i32, i32) {
    %c0_i32 = arith.constant 0 : i32
    %c0_i32_0 = arith.constant 0 : i32
    %c0_i32_1 = arith.constant 0 : i32
    return %arg0, %arg1, %c0_i32, %c0_i32_0 : i32, i32, i32, i32
  }
  func.func @transform_13(%arg0: i32, %arg1: i32) -> (i32, i32, i32) {
    %c0_i32 = arith.constant 0 : i32
    %c0_i32_0 = arith.constant 0 : i32
    return %arg0, %arg1, %c0_i32 : i32, i32, i32
  }
}

module attributes {stable_mosaic.version = 11 : i64} {
  func.func @_temporal_block_kernel(%arg0: i32, %arg1: i32, %arg2: memref<1x4x4x32xf32, #tpu.memory_space<vmem>>, %arg3: memref<4x32xf32, #tpu.memory_space<vmem>>, %arg4: memref<4x32xf32, #tpu.memory_space<vmem>>, %arg5: memref<1x32xf32, #tpu.memory_space<vmem>>, %arg6: memref<1x32xf32, #tpu.memory_space<vmem>>, %arg7: memref<32x32xbf16, #tpu.memory_space<vmem>>, %arg8: memref<1x32xf32, #tpu.memory_space<vmem>>, %arg9: memref<32x32xbf16, #tpu.memory_space<vmem>>, %arg10: memref<1x32xf32, #tpu.memory_space<vmem>>, %arg11: memref<32x32xbf16, #tpu.memory_space<vmem>>, %arg12: memref<1x32xf32, #tpu.memory_space<vmem>>, %arg13: memref<32x32xbf16, #tpu.memory_space<vmem>>, %arg14: memref<1x32xf32, #tpu.memory_space<vmem>>, %arg15: memref<32x32xbf16, #tpu.memory_space<vmem>>, %arg16: memref<1x32xf32, #tpu.memory_space<vmem>>, %arg17: memref<1x4x4x32xf32, #tpu.memory_space<vmem>>) attributes {dimension_semantics = [#tpu.dimension_semantics<parallel>, #tpu.dimension_semantics<parallel>], iteration_bounds = array<i64: 2, 1>, scalar_prefetch = 0 : i64, scratch_operands = 0 : i64, tpu.core_type = #tpu.core_type<tc>, window_params = [{transform_indices = @transform_0, window_bounds = array<i64: 1, 4, 4, 32>}, {transform_indices = @transform_1, window_bounds = array<i64: 4, 32>}, {pipeline_mode = #tpu.pipeline_mode<synchronous>, transform_indices = @transform_2, window_bounds = array<i64: 4, 32>}, {pipeline_mode = #tpu.pipeline_mode<synchronous>, transform_indices = @transform_3, window_bounds = array<i64: 1, 32>}, {pipeline_mode = #tpu.pipeline_mode<synchronous>, transform_indices = @transform_4, window_bounds = array<i64: 1, 32>}, {pipeline_mode = #tpu.pipeline_mode<synchronous>, transform_indices = @transform_5, window_bounds = array<i64: 32, 32>}, {pipeline_mode = #tpu.pipeline_mode<synchronous>, transform_indices = @transform_6, window_bounds = array<i64: 1, 32>}, {pipeline_mode = #tpu.pipeline_mode<synchronous>, transform_indices = @transform_7, window_bounds = array<i64: 32, 32>}, {pipeline_mode = #tpu.pipeline_mode<synchronous>, transform_indices = @transform_8, window_bounds = array<i64: 1, 32>}, {pipeline_mode = #tpu.pipeline_mode<synchronous>, transform_indices = @transform_9, window_bounds = array<i64: 32, 32>}, {pipeline_mode = #tpu.pipeline_mode<synchronous>, transform_indices = @transform_10, window_bounds = array<i64: 1, 32>}, {pipeline_mode = #tpu.pipeline_mode<synchronous>, transform_indices = @transform_11, window_bounds = array<i64: 32, 32>}, {pipeline_mode = #tpu.pipeline_mode<synchronous>, transform_indices = @transform_12, window_bounds = array<i64: 1, 32>}, {pipeline_mode = #tpu.pipeline_mode<synchronous>, transform_indices = @transform_13, window_bounds = array<i64: 32, 32>}, {pipeline_mode = #tpu.pipeline_mode<synchronous>, transform_indices = @transform_14, window_bounds = array<i64: 1, 32>}, {transform_indices = @transform_15, window_bounds = array<i64: 1, 4, 4, 32>}]} {
    %c0 = arith.constant 0 : index
    %c0_0 = arith.constant 0 : index
    %c0_1 = arith.constant 0 : index
    %c0_2 = arith.constant 0 : index
    %0 = vector.load %arg2[%c0, %c0_0, %c0_1, %c0_2] : memref<1x4x4x32xf32, #tpu.memory_space<vmem>>, vector<1x4x4x32xf32>
    %1 = vector.shape_cast %0 : vector<1x4x4x32xf32> to vector<4x4x32xf32>
    %c0_3 = arith.constant 0 : index
    %c0_4 = arith.constant 0 : index
    %2 = vector.load %arg4[%c0_3, %c0_4] : memref<4x32xf32, #tpu.memory_space<vmem>>, vector<4x32xf32>
    %3 = vector.shape_cast %2 : vector<4x32xf32> to vector<4x1x32xf32>
    %4 = vector.broadcast %3 : vector<4x1x32xf32> to vector<4x4x32xf32>
    %5 = arith.addf %1, %4 : vector<4x4x32xf32>
    %c0_5 = arith.constant 0 : index
    %c0_6 = arith.constant 0 : index
    %6 = vector.load %arg3[%c0_5, %c0_6] : memref<4x32xf32, #tpu.memory_space<vmem>>, vector<4x32xf32>
    %7 = vector.shape_cast %6 : vector<4x32xf32> to vector<1x4x32xf32>
    %8 = vector.broadcast %7 : vector<1x4x32xf32> to vector<4x4x32xf32>
    %9 = arith.addf %5, %8 : vector<4x4x32xf32>
    %10 = tpu.transpose %9, [1, 0, 2] : vector<4x4x32xf32> -> vector<4x4x32xf32>
    %11 = vector.shape_cast %10 : vector<4x4x32xf32> to vector<16x32xf32>
    %c0_7 = arith.constant 0 : index
    %c0_8 = arith.constant 0 : index
    %12 = vector.load %arg5[%c0_7, %c0_8] : memref<1x32xf32, #tpu.memory_space<vmem>>, vector<1x32xf32>
    %c0_9 = arith.constant 0 : index
    %c0_10 = arith.constant 0 : index
    %13 = vector.load %arg6[%c0_9, %c0_10] : memref<1x32xf32, #tpu.memory_space<vmem>>, vector<1x32xf32>
    %cst = arith.constant dense<0.000000e+00> : vector<16xf32>
    %14 = vector.multi_reduction <add>, %11, %cst [1] : vector<16x32xf32> to vector<16xf32>
    %15 = vector.shape_cast %14 : vector<16xf32> to vector<16x1xf32>
    %cst_11 = arith.constant 3.200000e+01 : f32
    %16 = vector.broadcast %cst_11 : f32 to vector<16x1xf32>
    %17 = arith.divf %15, %16 : vector<16x1xf32>
    %18 = arith.mulf %11, %11 : vector<16x32xf32>
    %cst_12 = arith.constant dense<0.000000e+00> : vector<16xf32>
    %19 = vector.multi_reduction <add>, %18, %cst_12 [1] : vector<16x32xf32> to vector<16xf32>
    %20 = vector.shape_cast %19 : vector<16xf32> to vector<16x1xf32>
    %cst_13 = arith.constant 3.200000e+01 : f32
    %21 = vector.broadcast %cst_13 : f32 to vector<16x1xf32>
    %22 = arith.divf %20, %21 : vector<16x1xf32>
    %23 = arith.mulf %17, %17 : vector<16x1xf32>
    %24 = arith.subf %22, %23 : vector<16x1xf32>
    %cst_14 = arith.constant 9.99999974E-6 : f32
    %25 = vector.broadcast %cst_14 : f32 to vector<16x1xf32>
    %26 = arith.addf %24, %25 : vector<16x1xf32>
    %27 = math.rsqrt %26 : vector<16x1xf32>
    %28 = vector.broadcast %17 : vector<16x1xf32> to vector<16x32xf32>
    %29 = arith.subf %11, %28 : vector<16x32xf32>
    %30 = vector.broadcast %27 : vector<16x1xf32> to vector<16x32xf32>
    %31 = arith.mulf %29, %30 : vector<16x32xf32>
    %32 = vector.broadcast %12 : vector<1x32xf32> to vector<16x32xf32>
    %33 = arith.mulf %31, %32 : vector<16x32xf32>
    %34 = vector.broadcast %13 : vector<1x32xf32> to vector<16x32xf32>
    %35 = arith.addf %33, %34 : vector<16x32xf32>
    %c0_15 = arith.constant 0 : index
    %c0_16 = arith.constant 0 : index
    %36 = vector.load %arg7[%c0_15, %c0_16] : memref<32x32xbf16, #tpu.memory_space<vmem>>, vector<32x32xbf16>
    %c0_17 = arith.constant 0 : index
    %c0_18 = arith.constant 0 : index
    %37 = vector.load %arg8[%c0_17, %c0_18] : memref<1x32xf32, #tpu.memory_space<vmem>>, vector<1x32xf32>
    %c0_19 = arith.constant 0 : index
    %c0_20 = arith.constant 0 : index
    %38 = vector.load %arg9[%c0_19, %c0_20] : memref<32x32xbf16, #tpu.memory_space<vmem>>, vector<32x32xbf16>
    %c0_21 = arith.constant 0 : index
    %c0_22 = arith.constant 0 : index
    %39 = vector.load %arg10[%c0_21, %c0_22] : memref<1x32xf32, #tpu.memory_space<vmem>>, vector<1x32xf32>
    %c0_23 = arith.constant 0 : index
    %c0_24 = arith.constant 0 : index
    %40 = vector.load %arg11[%c0_23, %c0_24] : memref<32x32xbf16, #tpu.memory_space<vmem>>, vector<32x32xbf16>
    %c0_25 = arith.constant 0 : index
    %c0_26 = arith.constant 0 : index
    %41 = vector.load %arg12[%c0_25, %c0_26] : memref<1x32xf32, #tpu.memory_space<vmem>>, vector<1x32xf32>
    %c0_27 = arith.constant 0 : index
    %c0_28 = arith.constant 0 : index
    %42 = vector.load %arg13[%c0_27, %c0_28] : memref<32x32xbf16, #tpu.memory_space<vmem>>, vector<32x32xbf16>
    %c0_29 = arith.constant 0 : index
    %c0_30 = arith.constant 0 : index
    %43 = vector.load %arg14[%c0_29, %c0_30] : memref<1x32xf32, #tpu.memory_space<vmem>>, vector<1x32xf32>
    %44 = arith.truncf %35 : vector<16x32xf32> to vector<16x32xbf16>
    %cst_31 = arith.constant dense<0.000000e+00> : vector<16x32xf32>
    %45 = tpu.matmul %44, %36, %cst_31 {dimension_numbers = #tpu.dot_dimension_numbers<[1], [0], [0], [1], [0, 0, 1, 1], [], []>} : vector<16x32xbf16>, vector<32x32xbf16>, vector<16x32xf32> -> vector<16x32xf32>
    %46 = vector.broadcast %37 : vector<1x32xf32> to vector<16x32xf32>
    %47 = arith.addf %45, %46 : vector<16x32xf32>
    %cst_32 = arith.constant dense<0.000000e+00> : vector<16x32xf32>
    %48 = tpu.matmul %44, %38, %cst_32 {dimension_numbers = #tpu.dot_dimension_numbers<[1], [0], [0], [1], [0, 0, 1, 1], [], []>} : vector<16x32xbf16>, vector<32x32xbf16>, vector<16x32xf32> -> vector<16x32xf32>
    %49 = vector.broadcast %39 : vector<1x32xf32> to vector<16x32xf32>
    %50 = arith.addf %48, %49 : vector<16x32xf32>
    %cst_33 = arith.constant dense<0.000000e+00> : vector<16x32xf32>
    %51 = tpu.matmul %44, %40, %cst_33 {dimension_numbers = #tpu.dot_dimension_numbers<[1], [0], [0], [1], [0, 0, 1, 1], [], []>} : vector<16x32xbf16>, vector<32x32xbf16>, vector<16x32xf32> -> vector<16x32xf32>
    %52 = vector.broadcast %41 : vector<1x32xf32> to vector<16x32xf32>
    %53 = arith.addf %51, %52 : vector<16x32xf32>
    %cst_34 = arith.constant 0.000000e+00 : f32
    %54 = vector.broadcast %cst_34 : f32 to vector<16x32xf32>
    %55 = vector.broadcast %43 : vector<1x32xf32> to vector<16x32xf32>
    %56 = arith.addf %54, %55 : vector<16x32xf32>
    %57 = vector.extract_strided_slice %47 {offsets = [0, 0], sizes = [16, 8], strides = [1, 1]} : vector<16x32xf32> to vector<16x8xf32>
    %58 = vector.shape_cast %57 : vector<16x8xf32> to vector<4x4x8xf32>
    %59 = arith.truncf %58 : vector<4x4x8xf32> to vector<4x4x8xbf16>
    %60 = vector.extract_strided_slice %50 {offsets = [0, 0], sizes = [16, 8], strides = [1, 1]} : vector<16x32xf32> to vector<16x8xf32>
    %61 = vector.shape_cast %60 : vector<16x8xf32> to vector<4x4x8xf32>
    %62 = arith.truncf %61 : vector<4x4x8xf32> to vector<4x4x8xbf16>
    %63 = vector.extract_strided_slice %53 {offsets = [0, 0], sizes = [16, 8], strides = [1, 1]} : vector<16x32xf32> to vector<16x8xf32>
    %64 = vector.shape_cast %63 : vector<16x8xf32> to vector<4x4x8xf32>
    %65 = arith.truncf %64 : vector<4x4x8xf32> to vector<4x4x8xbf16>
    "tpu.trace_start"() <{level = 10 : i32, message = "gqd,gkd->gqk"}> : () -> ()
    %cst_35 = arith.constant dense<0.000000e+00> : vector<4x4x4xf32>
    %66 = tpu.matmul %59, %62, %cst_35 {dimension_numbers = #tpu.dot_dimension_numbers<[2], [2], [1], [1], [0, 0, 0, 1, 1, 1], [0], [0]>} : vector<4x4x8xbf16>, vector<4x4x8xbf16>, vector<4x4x4xf32> -> vector<4x4x4xf32>
    "tpu.trace_stop"() : () -> ()
    %cst_36 = arith.constant dense<0xFF800000> : vector<4x4xf32>
    %67 = vector.multi_reduction <maximumf>, %66, %cst_36 [2] : vector<4x4x4xf32> to vector<4x4xf32>
    %68 = vector.shape_cast %67 : vector<4x4xf32> to vector<4x4x1xf32>
    %69 = vector.broadcast %68 : vector<4x4x1xf32> to vector<4x4x4xf32>
    %70 = arith.subf %66, %69 : vector<4x4x4xf32>
    %71 = math.exp %70 : vector<4x4x4xf32>
    %cst_37 = arith.constant dense<0.000000e+00> : vector<4x4xf32>
    %72 = vector.multi_reduction <add>, %71, %cst_37 [2] : vector<4x4x4xf32> to vector<4x4xf32>
    %73 = vector.shape_cast %72 : vector<4x4xf32> to vector<4x4x1xf32>
    %74 = tpu.reciprocal %73 {approx = true} : vector<4x4x1xf32> -> vector<4x4x1xf32>
    %75 = vector.broadcast %74 : vector<4x4x1xf32> to vector<4x4x4xf32>
    %76 = arith.mulf %71, %75 : vector<4x4x4xf32>
    %77 = arith.truncf %76 : vector<4x4x4xf32> to vector<4x4x4xbf16>
    "tpu.trace_start"() <{level = 10 : i32, message = "gqk,gkd->gqd"}> : () -> ()
    %cst_38 = arith.constant dense<0.000000e+00> : vector<4x4x8xf32>
    %78 = tpu.matmul %77, %65, %cst_38 {dimension_numbers = #tpu.dot_dimension_numbers<[2], [1], [1], [2], [0, 0, 0, 1, 1, 2], [0], [0]>} : vector<4x4x4xbf16>, vector<4x4x8xbf16>, vector<4x4x8xf32> -> vector<4x4x8xf32>
    "tpu.trace_stop"() : () -> ()
    %79 = vector.shape_cast %78 : vector<4x4x8xf32> to vector<16x8xf32>
    %80 = arith.truncf %79 : vector<16x8xf32> to vector<16x8xbf16>
    %81 = vector.extract_strided_slice %42 {offsets = [0, 0], sizes = [8, 32], strides = [1, 1]} : vector<32x32xbf16> to vector<8x32xbf16>
    %cst_39 = arith.constant dense<0.000000e+00> : vector<16x32xf32>
    %82 = tpu.matmul %80, %81, %cst_39 {dimension_numbers = #tpu.dot_dimension_numbers<[1], [0], [0], [1], [0, 0, 1, 1], [], []>} : vector<16x8xbf16>, vector<8x32xbf16>, vector<16x32xf32> -> vector<16x32xf32>
    %83 = arith.addf %56, %82 : vector<16x32xf32>
    %84 = vector.extract_strided_slice %47 {offsets = [0, 8], sizes = [16, 8], strides = [1, 1]} : vector<16x32xf32> to vector<16x8xf32>
    %85 = vector.shape_cast %84 : vector<16x8xf32> to vector<4x4x8xf32>
    %86 = arith.truncf %85 : vector<4x4x8xf32> to vector<4x4x8xbf16>
    %87 = vector.extract_strided_slice %50 {offsets = [0, 8], sizes = [16, 8], strides = [1, 1]} : vector<16x32xf32> to vector<16x8xf32>
    %88 = vector.shape_cast %87 : vector<16x8xf32> to vector<4x4x8xf32>
    %89 = arith.truncf %88 : vector<4x4x8xf32> to vector<4x4x8xbf16>
    %90 = vector.extract_strided_slice %53 {offsets = [0, 8], sizes = [16, 8], strides = [1, 1]} : vector<16x32xf32> to vector<16x8xf32>
    %91 = vector.shape_cast %90 : vector<16x8xf32> to vector<4x4x8xf32>
    %92 = arith.truncf %91 : vector<4x4x8xf32> to vector<4x4x8xbf16>
    "tpu.trace_start"() <{level = 10 : i32, message = "gqd,gkd->gqk"}> : () -> ()
    %cst_40 = arith.constant dense<0.000000e+00> : vector<4x4x4xf32>
    %93 = tpu.matmul %86, %89, %cst_40 {dimension_numbers = #tpu.dot_dimension_numbers<[2], [2], [1], [1], [0, 0, 0, 1, 1, 1], [0], [0]>} : vector<4x4x8xbf16>, vector<4x4x8xbf16>, vector<4x4x4xf32> -> vector<4x4x4xf32>
    "tpu.trace_stop"() : () -> ()
    %cst_41 = arith.constant dense<0xFF800000> : vector<4x4xf32>
    %94 = vector.multi_reduction <maximumf>, %93, %cst_41 [2] : vector<4x4x4xf32> to vector<4x4xf32>
    %95 = vector.shape_cast %94 : vector<4x4xf32> to vector<4x4x1xf32>
    %96 = vector.broadcast %95 : vector<4x4x1xf32> to vector<4x4x4xf32>
    %97 = arith.subf %93, %96 : vector<4x4x4xf32>
    %98 = math.exp %97 : vector<4x4x4xf32>
    %cst_42 = arith.constant dense<0.000000e+00> : vector<4x4xf32>
    %99 = vector.multi_reduction <add>, %98, %cst_42 [2] : vector<4x4x4xf32> to vector<4x4xf32>
    %100 = vector.shape_cast %99 : vector<4x4xf32> to vector<4x4x1xf32>
    %101 = tpu.reciprocal %100 {approx = true} : vector<4x4x1xf32> -> vector<4x4x1xf32>
    %102 = vector.broadcast %101 : vector<4x4x1xf32> to vector<4x4x4xf32>
    %103 = arith.mulf %98, %102 : vector<4x4x4xf32>
    %104 = arith.truncf %103 : vector<4x4x4xf32> to vector<4x4x4xbf16>
    "tpu.trace_start"() <{level = 10 : i32, message = "gqk,gkd->gqd"}> : () -> ()
    %cst_43 = arith.constant dense<0.000000e+00> : vector<4x4x8xf32>
    %105 = tpu.matmul %104, %92, %cst_43 {dimension_numbers = #tpu.dot_dimension_numbers<[2], [1], [1], [2], [0, 0, 0, 1, 1, 2], [0], [0]>} : vector<4x4x4xbf16>, vector<4x4x8xbf16>, vector<4x4x8xf32> -> vector<4x4x8xf32>
    "tpu.trace_stop"() : () -> ()
    %106 = vector.shape_cast %105 : vector<4x4x8xf32> to vector<16x8xf32>
    %107 = arith.truncf %106 : vector<16x8xf32> to vector<16x8xbf16>
    %108 = vector.extract_strided_slice %42 {offsets = [8, 0], sizes = [8, 32], strides = [1, 1]} : vector<32x32xbf16> to vector<8x32xbf16>
    %cst_44 = arith.constant dense<0.000000e+00> : vector<16x32xf32>
    %109 = tpu.matmul %107, %108, %cst_44 {dimension_numbers = #tpu.dot_dimension_numbers<[1], [0], [0], [1], [0, 0, 1, 1], [], []>} : vector<16x8xbf16>, vector<8x32xbf16>, vector<16x32xf32> -> vector<16x32xf32>
    %110 = arith.addf %83, %109 : vector<16x32xf32>
    %111 = vector.extract_strided_slice %47 {offsets = [0, 16], sizes = [16, 8], strides = [1, 1]} : vector<16x32xf32> to vector<16x8xf32>
    %112 = vector.shape_cast %111 : vector<16x8xf32> to vector<4x4x8xf32>
    %113 = arith.truncf %112 : vector<4x4x8xf32> to vector<4x4x8xbf16>
    %114 = vector.extract_strided_slice %50 {offsets = [0, 16], sizes = [16, 8], strides = [1, 1]} : vector<16x32xf32> to vector<16x8xf32>
    %115 = vector.shape_cast %114 : vector<16x8xf32> to vector<4x4x8xf32>
    %116 = arith.truncf %115 : vector<4x4x8xf32> to vector<4x4x8xbf16>
    %117 = vector.extract_strided_slice %53 {offsets = [0, 16], sizes = [16, 8], strides = [1, 1]} : vector<16x32xf32> to vector<16x8xf32>
    %118 = vector.shape_cast %117 : vector<16x8xf32> to vector<4x4x8xf32>
    %119 = arith.truncf %118 : vector<4x4x8xf32> to vector<4x4x8xbf16>
    "tpu.trace_start"() <{level = 10 : i32, message = "gqd,gkd->gqk"}> : () -> ()
    %cst_45 = arith.constant dense<0.000000e+00> : vector<4x4x4xf32>
    %120 = tpu.matmul %113, %116, %cst_45 {dimension_numbers = #tpu.dot_dimension_numbers<[2], [2], [1], [1], [0, 0, 0, 1, 1, 1], [0], [0]>} : vector<4x4x8xbf16>, vector<4x4x8xbf16>, vector<4x4x4xf32> -> vector<4x4x4xf32>
    "tpu.trace_stop"() : () -> ()
    %cst_46 = arith.constant dense<0xFF800000> : vector<4x4xf32>
    %121 = vector.multi_reduction <maximumf>, %120, %cst_46 [2] : vector<4x4x4xf32> to vector<4x4xf32>
    %122 = vector.shape_cast %121 : vector<4x4xf32> to vector<4x4x1xf32>
    %123 = vector.broadcast %122 : vector<4x4x1xf32> to vector<4x4x4xf32>
    %124 = arith.subf %120, %123 : vector<4x4x4xf32>
    %125 = math.exp %124 : vector<4x4x4xf32>
    %cst_47 = arith.constant dense<0.000000e+00> : vector<4x4xf32>
    %126 = vector.multi_reduction <add>, %125, %cst_47 [2] : vector<4x4x4xf32> to vector<4x4xf32>
    %127 = vector.shape_cast %126 : vector<4x4xf32> to vector<4x4x1xf32>
    %128 = tpu.reciprocal %127 {approx = true} : vector<4x4x1xf32> -> vector<4x4x1xf32>
    %129 = vector.broadcast %128 : vector<4x4x1xf32> to vector<4x4x4xf32>
    %130 = arith.mulf %125, %129 : vector<4x4x4xf32>
    %131 = arith.truncf %130 : vector<4x4x4xf32> to vector<4x4x4xbf16>
    "tpu.trace_start"() <{level = 10 : i32, message = "gqk,gkd->gqd"}> : () -> ()
    %cst_48 = arith.constant dense<0.000000e+00> : vector<4x4x8xf32>
    %132 = tpu.matmul %131, %119, %cst_48 {dimension_numbers = #tpu.dot_dimension_numbers<[2], [1], [1], [2], [0, 0, 0, 1, 1, 2], [0], [0]>} : vector<4x4x4xbf16>, vector<4x4x8xbf16>, vector<4x4x8xf32> -> vector<4x4x8xf32>
    "tpu.trace_stop"() : () -> ()
    %133 = vector.shape_cast %132 : vector<4x4x8xf32> to vector<16x8xf32>
    %134 = arith.truncf %133 : vector<16x8xf32> to vector<16x8xbf16>
    %135 = vector.extract_strided_slice %42 {offsets = [16, 0], sizes = [8, 32], strides = [1, 1]} : vector<32x32xbf16> to vector<8x32xbf16>
    %cst_49 = arith.constant dense<0.000000e+00> : vector<16x32xf32>
    %136 = tpu.matmul %134, %135, %cst_49 {dimension_numbers = #tpu.dot_dimension_numbers<[1], [0], [0], [1], [0, 0, 1, 1], [], []>} : vector<16x8xbf16>, vector<8x32xbf16>, vector<16x32xf32> -> vector<16x32xf32>
    %137 = arith.addf %110, %136 : vector<16x32xf32>
    %138 = vector.extract_strided_slice %47 {offsets = [0, 24], sizes = [16, 8], strides = [1, 1]} : vector<16x32xf32> to vector<16x8xf32>
    %139 = vector.shape_cast %138 : vector<16x8xf32> to vector<4x4x8xf32>
    %140 = arith.truncf %139 : vector<4x4x8xf32> to vector<4x4x8xbf16>
    %141 = vector.extract_strided_slice %50 {offsets = [0, 24], sizes = [16, 8], strides = [1, 1]} : vector<16x32xf32> to vector<16x8xf32>
    %142 = vector.shape_cast %141 : vector<16x8xf32> to vector<4x4x8xf32>
    %143 = arith.truncf %142 : vector<4x4x8xf32> to vector<4x4x8xbf16>
    %144 = vector.extract_strided_slice %53 {offsets = [0, 24], sizes = [16, 8], strides = [1, 1]} : vector<16x32xf32> to vector<16x8xf32>
    %145 = vector.shape_cast %144 : vector<16x8xf32> to vector<4x4x8xf32>
    %146 = arith.truncf %145 : vector<4x4x8xf32> to vector<4x4x8xbf16>
    "tpu.trace_start"() <{level = 10 : i32, message = "gqd,gkd->gqk"}> : () -> ()
    %cst_50 = arith.constant dense<0.000000e+00> : vector<4x4x4xf32>
    %147 = tpu.matmul %140, %143, %cst_50 {dimension_numbers = #tpu.dot_dimension_numbers<[2], [2], [1], [1], [0, 0, 0, 1, 1, 1], [0], [0]>} : vector<4x4x8xbf16>, vector<4x4x8xbf16>, vector<4x4x4xf32> -> vector<4x4x4xf32>
    "tpu.trace_stop"() : () -> ()
    %cst_51 = arith.constant dense<0xFF800000> : vector<4x4xf32>
    %148 = vector.multi_reduction <maximumf>, %147, %cst_51 [2] : vector<4x4x4xf32> to vector<4x4xf32>
    %149 = vector.shape_cast %148 : vector<4x4xf32> to vector<4x4x1xf32>
    %150 = vector.broadcast %149 : vector<4x4x1xf32> to vector<4x4x4xf32>
    %151 = arith.subf %147, %150 : vector<4x4x4xf32>
    %152 = math.exp %151 : vector<4x4x4xf32>
    %cst_52 = arith.constant dense<0.000000e+00> : vector<4x4xf32>
    %153 = vector.multi_reduction <add>, %152, %cst_52 [2] : vector<4x4x4xf32> to vector<4x4xf32>
    %154 = vector.shape_cast %153 : vector<4x4xf32> to vector<4x4x1xf32>
    %155 = tpu.reciprocal %154 {approx = true} : vector<4x4x1xf32> -> vector<4x4x1xf32>
    %156 = vector.broadcast %155 : vector<4x4x1xf32> to vector<4x4x4xf32>
    %157 = arith.mulf %152, %156 : vector<4x4x4xf32>
    %158 = arith.truncf %157 : vector<4x4x4xf32> to vector<4x4x4xbf16>
    "tpu.trace_start"() <{level = 10 : i32, message = "gqk,gkd->gqd"}> : () -> ()
    %cst_53 = arith.constant dense<0.000000e+00> : vector<4x4x8xf32>
    %159 = tpu.matmul %158, %146, %cst_53 {dimension_numbers = #tpu.dot_dimension_numbers<[2], [1], [1], [2], [0, 0, 0, 1, 1, 2], [0], [0]>} : vector<4x4x4xbf16>, vector<4x4x8xbf16>, vector<4x4x8xf32> -> vector<4x4x8xf32>
    "tpu.trace_stop"() : () -> ()
    %160 = vector.shape_cast %159 : vector<4x4x8xf32> to vector<16x8xf32>
    %161 = arith.truncf %160 : vector<16x8xf32> to vector<16x8xbf16>
    %162 = vector.extract_strided_slice %42 {offsets = [24, 0], sizes = [8, 32], strides = [1, 1]} : vector<32x32xbf16> to vector<8x32xbf16>
    %cst_54 = arith.constant dense<0.000000e+00> : vector<16x32xf32>
    %163 = tpu.matmul %161, %162, %cst_54 {dimension_numbers = #tpu.dot_dimension_numbers<[1], [0], [0], [1], [0, 0, 1, 1], [], []>} : vector<16x8xbf16>, vector<8x32xbf16>, vector<16x32xf32> -> vector<16x32xf32>
    %164 = arith.addf %137, %163 : vector<16x32xf32>
    %165 = arith.truncf %164 : vector<16x32xf32> to vector<16x32xbf16>
    %c0_55 = arith.constant 0 : index
    %c0_56 = arith.constant 0 : index
    %166 = vector.load %arg15[%c0_55, %c0_56] : memref<32x32xbf16, #tpu.memory_space<vmem>>, vector<32x32xbf16>
    %cst_57 = arith.constant dense<0.000000e+00> : vector<16x32xf32>
    %167 = tpu.matmul %165, %166, %cst_57 {dimension_numbers = #tpu.dot_dimension_numbers<[1], [0], [0], [1], [0, 0, 1, 1], [], []>} : vector<16x32xbf16>, vector<32x32xbf16>, vector<16x32xf32> -> vector<16x32xf32>
    %c0_58 = arith.constant 0 : index
    %c0_59 = arith.constant 0 : index
    %168 = vector.load %arg16[%c0_58, %c0_59] : memref<1x32xf32, #tpu.memory_space<vmem>>, vector<1x32xf32>
    %169 = vector.broadcast %168 : vector<1x32xf32> to vector<16x32xf32>
    %170 = arith.addf %167, %169 : vector<16x32xf32>
    %171 = arith.addf %11, %170 : vector<16x32xf32>
    %172 = vector.shape_cast %171 : vector<16x32xf32> to vector<4x4x32xf32>
    %c0_60 = arith.constant 0 : index
    %c0_61 = arith.constant 0 : index
    %c0_62 = arith.constant 0 : index
    %c0_63 = arith.constant 0 : index
    %173 = vector.load %arg17[%c0_60, %c0_61, %c0_62, %c0_63] : memref<1x4x4x32xf32, #tpu.memory_space<vmem>>, vector<1x4x4x32xf32>
    %174 = vector.shape_cast %173 : vector<1x4x4x32xf32> to vector<4x4x32xf32>
    %175 = vector.shape_cast %172 : vector<4x4x32xf32> to vector<1x4x4x32xf32>
    tpu.vector_store %arg17[%c0_60, %c0_61, %c0_62, %c0_63], %175 {strides = array<i32>} : memref<1x4x4x32xf32, #tpu.memory_space<vmem>>, vector<1x4x4x32xf32>,
    return
  }
  func.func @transform_0(%arg0: i32, %arg1: i32) -> (i32, i32, i32, i32) {
    %c0_i32 = arith.constant 0 : i32
    %c0_i32_0 = arith.constant 0 : i32
    %c0_i32_1 = arith.constant 0 : i32
    return %arg0, %c0_i32, %arg1, %c0_i32_0 : i32, i32, i32, i32
  }
  func.func @transform_1(%arg0: i32, %arg1: i32) -> (i32, i32) {
    %c0_i32 = arith.constant 0 : i32
    %c0_i32_0 = arith.constant 0 : i32
    return %arg1, %c0_i32 : i32, i32
  }
  func.func @transform_2(%arg0: i32, %arg1: i32) -> (i32, i32) {
    %c0_i32 = arith.constant 0 : i32
    %c0_i32_0 = arith.constant 0 : i32
    %c0_i32_1 = arith.constant 0 : i32
    return %c0_i32, %c0_i32_0 : i32, i32
  }
  func.func @transform_3(%arg0: i32, %arg1: i32) -> (i32, i32) {
    %c0_i32 = arith.constant 0 : i32
    %c0_i32_0 = arith.constant 0 : i32
    %c0_i32_1 = arith.constant 0 : i32
    return %c0_i32, %c0_i32_0 : i32, i32
  }
  func.func @transform_4(%arg0: i32, %arg1: i32) -> (i32, i32) {
    %c0_i32 = arith.constant 0 : i32
    %c0_i32_0 = arith.constant 0 : i32
    %c0_i32_1 = arith.constant 0 : i32
    return %c0_i32, %c0_i32_0 : i32, i32
  }
  func.func @transform_5(%arg0: i32, %arg1: i32) -> (i32, i32) {
    %c0_i32 = arith.constant 0 : i32
    %c0_i32_0 = arith.constant 0 : i32
    %c0_i32_1 = arith.constant 0 : i32
    return %c0_i32, %c0_i32_0 : i32, i32
  }
  func.func @transform_6(%arg0: i32, %arg1: i32) -> (i32, i32) {
    %c0_i32 = arith.constant 0 : i32
    %c0_i32_0 = arith.constant 0 : i32
    %c0_i32_1 = arith.constant 0 : i32
    return %c0_i32, %c0_i32_0 : i32, i32
  }
  func.func @transform_7(%arg0: i32, %arg1: i32) -> (i32, i32) {
    %c0_i32 = arith.constant 0 : i32
    %c0_i32_0 = arith.constant 0 : i32
    %c0_i32_1 = arith.constant 0 : i32
    return %c0_i32, %c0_i32_0 : i32, i32
  }
  func.func @transform_8(%arg0: i32, %arg1: i32) -> (i32, i32) {
    %c0_i32 = arith.constant 0 : i32
    %c0_i32_0 = arith.constant 0 : i32
    %c0_i32_1 = arith.constant 0 : i32
    return %c0_i32, %c0_i32_0 : i32, i32
  }
  func.func @transform_9(%arg0: i32, %arg1: i32) -> (i32, i32) {
    %c0_i32 = arith.constant 0 : i32
    %c0_i32_0 = arith.constant 0 : i32
    %c0_i32_1 = arith.constant 0 : i32
    return %c0_i32, %c0_i32_0 : i32, i32
  }
  func.func @transform_10(%arg0: i32, %arg1: i32) -> (i32, i32) {
    %c0_i32 = arith.constant 0 : i32
    %c0_i32_0 = arith.constant 0 : i32
    %c0_i32_1 = arith.constant 0 : i32
    return %c0_i32, %c0_i32_0 : i32, i32
  }
  func.func @transform_11(%arg0: i32, %arg1: i32) -> (i32, i32) {
    %c0_i32 = arith.constant 0 : i32
    %c0_i32_0 = arith.constant 0 : i32
    %c0_i32_1 = arith.constant 0 : i32
    return %c0_i32, %c0_i32_0 : i32, i32
  }
  func.func @transform_12(%arg0: i32, %arg1: i32) -> (i32, i32) {
    %c0_i32 = arith.constant 0 : i32
    %c0_i32_0 = arith.constant 0 : i32
    %c0_i32_1 = arith.constant 0 : i32
    return %c0_i32, %c0_i32_0 : i32, i32
  }
  func.func @transform_13(%arg0: i32, %arg1: i32) -> (i32, i32) {
    %c0_i32 = arith.constant 0 : i32
    %c0_i32_0 = arith.constant 0 : i32
    %c0_i32_1 = arith.constant 0 : i32
    return %c0_i32, %c0_i32_0 : i32, i32
  }
  func.func @transform_14(%arg0: i32, %arg1: i32) -> (i32, i32) {
    %c0_i32 = arith.constant 0 : i32
    %c0_i32_0 = arith.constant 0 : i32
    %c0_i32_1 = arith.constant 0 : i32
    return %c0_i32, %c0_i32_0 : i32, i32
  }
  func.func @transform_15(%arg0: i32, %arg1: i32) -> (i32, i32, i32, i32) {
    %c0_i32 = arith.constant 0 : i32
    %c0_i32_0 = arith.constant 0 : i32
    %c0_i32_1 = arith.constant 0 : i32
    return %arg0, %arg1, %c0_i32, %c0_i32_0 : i32, i32, i32, i32
  }
}

module attributes {stable_mosaic.version = 11 : i64} {
  func.func @_ln_mlp_kernel(%arg0: i32, %arg1: memref<8x32xf32, #tpu.memory_space<vmem>>, %arg2: memref<1x32xf32, #tpu.memory_space<vmem>>, %arg3: memref<1x32xf32, #tpu.memory_space<vmem>>, %arg4: memref<32x64xbf16, #tpu.memory_space<vmem>>, %arg5: memref<1x64xf32, #tpu.memory_space<vmem>>, %arg6: memref<64x32xbf16, #tpu.memory_space<vmem>>, %arg7: memref<1x32xf32, #tpu.memory_space<vmem>>, %arg8: memref<8x32xf32, #tpu.memory_space<vmem>>) attributes {dimension_semantics = [#tpu.dimension_semantics<parallel>], iteration_bounds = array<i64: 1>, scalar_prefetch = 0 : i64, scratch_operands = 0 : i64, tpu.core_type = #tpu.core_type<tc>, window_params = [{transform_indices = @transform_0, window_bounds = array<i64: 8, 32>}, {pipeline_mode = #tpu.pipeline_mode<synchronous>, transform_indices = @transform_1, window_bounds = array<i64: 1, 32>}, {pipeline_mode = #tpu.pipeline_mode<synchronous>, transform_indices = @transform_2, window_bounds = array<i64: 1, 32>}, {pipeline_mode = #tpu.pipeline_mode<synchronous>, transform_indices = @transform_3, window_bounds = array<i64: 32, 64>}, {pipeline_mode = #tpu.pipeline_mode<synchronous>, transform_indices = @transform_4, window_bounds = array<i64: 1, 64>}, {pipeline_mode = #tpu.pipeline_mode<synchronous>, transform_indices = @transform_5, window_bounds = array<i64: 64, 32>}, {pipeline_mode = #tpu.pipeline_mode<synchronous>, transform_indices = @transform_6, window_bounds = array<i64: 1, 32>}, {transform_indices = @transform_7, window_bounds = array<i64: 8, 32>}]} {
    %c0 = arith.constant 0 : index
    %c0_0 = arith.constant 0 : index
    %0 = vector.load %arg1[%c0, %c0_0] : memref<8x32xf32, #tpu.memory_space<vmem>>, vector<8x32xf32>
    %c0_1 = arith.constant 0 : index
    %c0_2 = arith.constant 0 : index
    %1 = vector.load %arg2[%c0_1, %c0_2] : memref<1x32xf32, #tpu.memory_space<vmem>>, vector<1x32xf32>
    %c0_3 = arith.constant 0 : index
    %c0_4 = arith.constant 0 : index
    %2 = vector.load %arg3[%c0_3, %c0_4] : memref<1x32xf32, #tpu.memory_space<vmem>>, vector<1x32xf32>
    %cst = arith.constant dense<0.000000e+00> : vector<8xf32>
    %3 = vector.multi_reduction <add>, %0, %cst [1] : vector<8x32xf32> to vector<8xf32>
    %4 = vector.shape_cast %3 : vector<8xf32> to vector<8x1xf32>
    %cst_5 = arith.constant 3.200000e+01 : f32
    %5 = vector.broadcast %cst_5 : f32 to vector<8x1xf32>
    %6 = arith.divf %4, %5 : vector<8x1xf32>
    %7 = arith.mulf %0, %0 : vector<8x32xf32>
    %cst_6 = arith.constant dense<0.000000e+00> : vector<8xf32>
    %8 = vector.multi_reduction <add>, %7, %cst_6 [1] : vector<8x32xf32> to vector<8xf32>
    %9 = vector.shape_cast %8 : vector<8xf32> to vector<8x1xf32>
    %cst_7 = arith.constant 3.200000e+01 : f32
    %10 = vector.broadcast %cst_7 : f32 to vector<8x1xf32>
    %11 = arith.divf %9, %10 : vector<8x1xf32>
    %12 = arith.mulf %6, %6 : vector<8x1xf32>
    %13 = arith.subf %11, %12 : vector<8x1xf32>
    %cst_8 = arith.constant 9.99999974E-6 : f32
    %14 = vector.broadcast %cst_8 : f32 to vector<8x1xf32>
    %15 = arith.addf %13, %14 : vector<8x1xf32>
    %16 = math.rsqrt %15 : vector<8x1xf32>
    %17 = vector.broadcast %6 : vector<8x1xf32> to vector<8x32xf32>
    %18 = arith.subf %0, %17 : vector<8x32xf32>
    %19 = vector.broadcast %16 : vector<8x1xf32> to vector<8x32xf32>
    %20 = arith.mulf %18, %19 : vector<8x32xf32>
    %21 = vector.broadcast %1 : vector<1x32xf32> to vector<8x32xf32>
    %22 = arith.mulf %20, %21 : vector<8x32xf32>
    %23 = vector.broadcast %2 : vector<1x32xf32> to vector<8x32xf32>
    %24 = arith.addf %22, %23 : vector<8x32xf32>
    %25 = arith.truncf %24 : vector<8x32xf32> to vector<8x32xbf16>
    %c0_9 = arith.constant 0 : index
    %c0_10 = arith.constant 0 : index
    %26 = vector.load %arg4[%c0_9, %c0_10] : memref<32x64xbf16, #tpu.memory_space<vmem>>, vector<32x64xbf16>
    %cst_11 = arith.constant dense<0.000000e+00> : vector<8x64xf32>
    %27 = tpu.matmul %25, %26, %cst_11 {dimension_numbers = #tpu.dot_dimension_numbers<[1], [0], [0], [1], [0, 0, 1, 1], [], []>} : vector<8x32xbf16>, vector<32x64xbf16>, vector<8x64xf32> -> vector<8x64xf32>
    %c0_12 = arith.constant 0 : index
    %c0_13 = arith.constant 0 : index
    %28 = vector.load %arg5[%c0_12, %c0_13] : memref<1x64xf32, #tpu.memory_space<vmem>>, vector<1x64xf32>
    %29 = vector.broadcast %28 : vector<1x64xf32> to vector<8x64xf32>
    %30 = arith.addf %27, %29 : vector<8x64xf32>
    %cst_14 = arith.constant 1.702000e+00 : f32
    %31 = vector.broadcast %cst_14 : f32 to vector<8x64xf32>
    %32 = arith.mulf %31, %30 : vector<8x64xf32>
    %33 = arith.negf %32 : vector<8x64xf32>
    %34 = math.exp %33 : vector<8x64xf32>
    %cst_15 = arith.constant 1.000000e+00 : f32
    %35 = vector.broadcast %cst_15 : f32 to vector<8x64xf32>
    %36 = arith.addf %35, %34 : vector<8x64xf32>
    %37 = arith.divf %35, %36 : vector<8x64xf32>
    %38 = arith.mulf %30, %37 : vector<8x64xf32>
    %39 = arith.truncf %38 : vector<8x64xf32> to vector<8x64xbf16>
    %c0_16 = arith.constant 0 : index
    %c0_17 = arith.constant 0 : index
    %40 = vector.load %arg6[%c0_16, %c0_17] : memref<64x32xbf16, #tpu.memory_space<vmem>>, vector<64x32xbf16>
    %cst_18 = arith.constant dense<0.000000e+00> : vector<8x32xf32>
    %41 = tpu.matmul %39, %40, %cst_18 {dimension_numbers = #tpu.dot_dimension_numbers<[1], [0], [0], [1], [0, 0, 1, 1], [], []>} : vector<8x64xbf16>, vector<64x32xbf16>, vector<8x32xf32> -> vector<8x32xf32>
    %c0_19 = arith.constant 0 : index
    %c0_20 = arith.constant 0 : index
    %42 = vector.load %arg7[%c0_19, %c0_20] : memref<1x32xf32, #tpu.memory_space<vmem>>, vector<1x32xf32>
    %43 = vector.broadcast %42 : vector<1x32xf32> to vector<8x32xf32>
    %44 = arith.addf %41, %43 : vector<8x32xf32>
    %45 = arith.addf %0, %44 : vector<8x32xf32>
    %c0_21 = arith.constant 0 : index
    %c0_22 = arith.constant 0 : index
    %46 = vector.load %arg8[%c0_21, %c0_22] : memref<8x32xf32, #tpu.memory_space<vmem>>, vector<8x32xf32>
    tpu.vector_store %arg8[%c0_21, %c0_22], %45 {strides = array<i32>} : memref<8x32xf32, #tpu.memory_space<vmem>>, vector<8x32xf32>,
    return
  }
  func.func @transform_0(%arg0: i32) -> (i32, i32) {
    %c0_i32 = arith.constant 0 : i32
    %c0_i32_0 = arith.constant 0 : i32
    return %arg0, %c0_i32 : i32, i32
  }
  func.func @transform_1(%arg0: i32) -> (i32, i32) {
    %c0_i32 = arith.constant 0 : i32
    %c0_i32_0 = arith.constant 0 : i32
    %c0_i32_1 = arith.constant 0 : i32
    return %c0_i32, %c0_i32_0 : i32, i32
  }
  func.func @transform_2(%arg0: i32) -> (i32, i32) {
    %c0_i32 = arith.constant 0 : i32
    %c0_i32_0 = arith.constant 0 : i32
    %c0_i32_1 = arith.constant 0 : i32
    return %c0_i32, %c0_i32_0 : i32, i32
  }
  func.func @transform_3(%arg0: i32) -> (i32, i32) {
    %c0_i32 = arith.constant 0 : i32
    %c0_i32_0 = arith.constant 0 : i32
    %c0_i32_1 = arith.constant 0 : i32
    return %c0_i32, %c0_i32_0 : i32, i32
  }
  func.func @transform_4(%arg0: i32) -> (i32, i32) {
    %c0_i32 = arith.constant 0 : i32
    %c0_i32_0 = arith.constant 0 : i32
    %c0_i32_1 = arith.constant 0 : i32
    return %c0_i32, %c0_i32_0 : i32, i32
  }
  func.func @transform_5(%arg0: i32) -> (i32, i32) {
    %c0_i32 = arith.constant 0 : i32
    %c0_i32_0 = arith.constant 0 : i32
    %c0_i32_1 = arith.constant 0 : i32
    return %c0_i32, %c0_i32_0 : i32, i32
  }
  func.func @transform_6(%arg0: i32) -> (i32, i32) {
    %c0_i32 = arith.constant 0 : i32
    %c0_i32_0 = arith.constant 0 : i32
    %c0_i32_1 = arith.constant 0 : i32
    return %c0_i32, %c0_i32_0 : i32, i32
  }
  func.func @transform_7(%arg0: i32) -> (i32, i32) {
    %c0_i32 = arith.constant 0 : i32
    %c0_i32_0 = arith.constant 0 : i32
    return %arg0, %c0_i32 : i32, i32
  }
}

</mosaic_0001>

<llo_original>
// kernel: vitclip_stan_forward.5
$region0: #{vitclip_stan_forward.5}
  #allocation0 [shape = 'u32[]', space=smem, size = 0x4, offset = 0x4, fixed_abs, tag = 'smem constant byte address 0x4 - core index']
  #allocation1 [shape = 'u32[144,128]{1,0:T(1,128)}', space=vmem, size = 0x12000, scoped, tag = 'internal scratch']
  %s0 = inlined_call_operand.vmem [shape: f32[8,32], index: 0, kind: input, shape index: {}]
  %s1 = inlined_call_operand.vmem [shape: f32[1,32], index: 1, kind: input, shape index: {}]
  %s2 = inlined_call_operand.vmem [shape: f32[1,32], index: 2, kind: input, shape index: {}]
  %s3 = inlined_call_operand.vmem [shape: bf16[32,64], index: 3, kind: input, shape index: {}]
  %s4 = inlined_call_operand.vmem [shape: f32[1,64], index: 4, kind: input, shape index: {}]
  %s5 = inlined_call_operand.vmem [shape: bf16[64,32], index: 5, kind: input, shape index: {}]
  %s6 = inlined_call_operand.vmem [shape: f32[1,32], index: 6, kind: input, shape index: {}]
  %s7 = inlined_call_operand.vmem [shape: f32[8,32], index: 7, kind: output, shape index: {}]
  %s8 = sld [smem:[#allocation0]]
  $region38: #{vitclip_stan_forward.5} parent=0
    _
  %s10 = ssub.s32 1, %s8
  %s11 = scalar_select 0, %s10, %s8
  // Predicated region
  $region2: #{vitclip_stan_forward.5} parent=0 // pred_check
    _
  $region3: #{vitclip_stan_forward.5} parent=0 // pred_check_branch
    %13 = sbr.rel (0) target = $region5
  $region4: #{vitclip_stan_forward.5} parent=0 // pred_region
    _
  $region5: #{vitclip_stan_forward.5} parent=0 // pred_fallthru
    _
  // Predicated region
  $region6: #{vitclip_stan_forward.5} parent=0 // pred_check
    _
  $region7: #{vitclip_stan_forward.5} parent=0 // pred_check_branch
    %15 = sbr.rel (0) target = $region9
  $region8: #{vitclip_stan_forward.5} parent=0 // pred_region
    _
  $region9: #{vitclip_stan_forward.5} parent=0 // pred_fallthru
    _
  // Predicated region
  $region10: #{vitclip_stan_forward.5} parent=0 // pred_check
    _
  $region11: #{vitclip_stan_forward.5} parent=0 // pred_check_branch
    %17 = sbr.rel (0) target = $region13
  $region12: #{vitclip_stan_forward.5} parent=0 // pred_region
    _
  $region13: #{vitclip_stan_forward.5} parent=0 // pred_fallthru
    _
  // Predicated region
  $region14: #{vitclip_stan_forward.5} parent=0 // pred_check
    _
  $region15: #{vitclip_stan_forward.5} parent=0 // pred_check_branch
    %19 = sbr.rel (0) target = $region17
  $region16: #{vitclip_stan_forward.5} parent=0 // pred_region
    _
  $region17: #{vitclip_stan_forward.5} parent=0 // pred_fallthru
    _
  // Predicated region
  $region18: #{vitclip_stan_forward.5} parent=0 // pred_check
    _
  $region19: #{vitclip_stan_forward.5} parent=0 // pred_check_branch
    %21 = sbr.rel (0) target = $region21
  $region20: #{vitclip_stan_forward.5} parent=0 // pred_region
    _
  $region21: #{vitclip_stan_forward.5} parent=0 // pred_fallthru
    _
  // Predicated region
  $region22: #{vitclip_stan_forward.5} parent=0 // pred_check
    _
  $region23: #{vitclip_stan_forward.5} parent=0 // pred_check_branch
    %23 = sbr.rel (0) target = $region25
  $region24: #{vitclip_stan_forward.5} parent=0 // pred_region
    _
  $region25: #{vitclip_stan_forward.5} parent=0 // pred_fallthru
    _
  // Predicated region
  $region26: #{vitclip_stan_forward.5} parent=0 // pred_check
    _
  $region27: #{vitclip_stan_forward.5} parent=0 // pred_check_branch
    %25 = sbr.rel (0) target = $region29
  $region28: #{vitclip_stan_forward.5} parent=0 // pred_region
    _
  $region29: #{vitclip_stan_forward.5} parent=0 // pred_fallthru
    _
  %v27 = vld [vmem:[%s0] sm:$0xff]
  %v28 = vld [vmem:[%s1] sm:$0x1]
  %v29 = vld [vmem:[%s2] sm:$0x1]
  %vm30 = vcmask 261120
  %v31 = vsel %vm30, %v27, 0.0
  %32 = vadd.xlane.f32.xlu0 %v31
  %v33 = vpop.xlane.xlu0 %32
  %v34 = vrcp.pop 32.0
  %v35 = vmul.f32 %v33, %v34
  %v36 = vmul.f32 %v27, %v27
  %v37 = vsel %vm30, %v36, 0.0
  %38 = vadd.xlane.f32.xlu0 %v37
  %v39 = vpop.xlane.xlu0 %38
  %v40 = vmul.f32 %v39, %v34
  %v41 = vmul.f32 %v35, %v35
  %v42 = vsub.f32 %v40, %v41
  %v43 = vadd.f32 %v42, 1e-05
  %v44 = vrsqrt.pop %v43
  %v45 = vsub.f32 %v27, %v35
  %v46 = vmul.f32 %v45, %v44
  %v48 = vlaneseq
  %v49 = vshrl.u32 %v48, 7
  %v50 = vsub.s32 0, %v49
  %v51 = vrot.slane %v28, %v50
  %v53 = vmul.f32 %v46, %v51
  %v55 = vlaneseq
  %v56 = vshrl.u32 %v55, 7
  %v57 = vsub.s32 0, %v56
  %v58 = vrot.slane %v29, %v57
  %v60 = vadd.f32 %v53, %v58
  %v61 = vpack.c.bf16 %v60, %v60
  %v62 = vld [vmem:[%s3] sm:$0xf]
  %v63 = vld [vmem:[%s3 + $0x4] sm:$0xf]
  %v64 = vld [vmem:[%s3 + $0x8] sm:$0xf]
  %v65 = vld [vmem:[%s3 + $0xc] sm:$0xf]
  %v66 = vld [vmem:[%s4] sm:$0x1]
  %v68 = vlaneseq
  %v69 = vshrl.u32 %v68, 7
  %v70 = vsub.s32 0, %v69
  %v71 = vrot.slane %v66, %v70
  %v77 = vunpack.c.l.b16 %v62
  %v78 = vunpack.c.l.b16 %v63
  %v79 = vunpack.c.l.b16 %v64
  %v80 = vunpack.c.l.b16 %v65
  %v81 = vpack.c.b16 %v78, %v77
  %v82 = vpack.c.b16 %v80, %v79
  %v86 = vsel %vm30, %v61, 0
  %88 = vmatprep.subr.bf16.mxu0 0
  %89 = vmatpush1.bf16.msra.mxu0 0
  %90 = vmatprep.subr.bf16.mxu0 0
  %91 = vmatpush1.bf16.msra.mxu0 0
  %92 = vmatprep.subr.bf16.mxu0 0
  %93 = vmatpush1.bf16.msra.mxu0 0
  %94 = vmatprep.subr.bf16.mxu0 0
  %95 = vmatpush1.bf16.msra.mxu0 0
  %96 = vmatprep.subr.bf16.mxu0 0
  %97 = vmatpush1.bf16.msra.mxu0 0
  %98 = vmatprep.subr.bf16.mxu0 0
  %99 = vmatpush1.bf16.msra.mxu0 0
  %100 = vmatprep.subr.bf16.mxu0 0
  %101 = vmatpush1.bf16.msra.mxu0 %v82
  %102 = vmatprep.subr.bf16.mxu0 0
  %103 = vmatpush1.bf16.msra.mxu0 %v81
  %104 = vmatprep.subr.bf16.mxu0 0
  %105 = vmatpush2.bf16.msra.mxu0 0
  %106 = vmatprep.subr.bf16.mxu0 0
  %107 = vmatpush2.bf16.msra.mxu0 0
  %108 = vmatprep.subr.bf16.mxu0 0
  %109 = vmatpush2.bf16.msra.mxu0 0
  %110 = vmatprep.subr.bf16.mxu0 0
  %111 = vmatpush2.bf16.msra.mxu0 0
  %112 = vmatprep.subr.bf16.mxu0 0
  %113 = vmatpush2.bf16.msra.mxu0 0
  %114 = vmatprep.subr.bf16.mxu0 0
  %115 = vmatpush2.bf16.msra.mxu0 0
  %116 = vmatprep.subr.bf16.mxu0 0
  %117 = vmatpush2.bf16.msra.mxu0 0
  %118 = vmatprep.subr.bf16.mxu0 0
  %119 = vmatpush2.bf16.msra.mxu0 0
  %120 = vmatprep.mubr.bf16.mxu0 0
  %121 = vmatmul.mubr.bf16.gmra.mxu0 %v86
  %v122 = vpop.f32.mrf.mxu0
  %v123 = vadd.f32 %v71, %v122
  %v124 = vpop.f32.mrf.mxu0
  %v125 = vpop.f32.mrf.mxu0
  %v126 = vpop.f32.mrf.mxu0
  %127 = vdwg.mxu0
  %v128 = vmul.f32 %v123, 1.702
  %v129 = vxor.u32 %v128, 2147483648
  %v130 = vmul.f32 %v129, 1.442695
  %v131 = vpow.pop %v130
  %v132 = vadd.f32 %v131, 1.0
  %v133 = vrcp.pop %v132
  %v134 = vmul.f32 1.0, %v133
  %v135 = vmul.f32 %v123, %v134
  %v136 = vpack.c.bf16 %v135, %v135
  %v137 = vld [vmem:[%s5] sm:$0xf]
  %v138 = vld [vmem:[%s5 + $0x4] sm:$0xf]
  %v139 = vld [vmem:[%s5 + $0x8] sm:$0xf]
  %v140 = vld [vmem:[%s5 + $0xc] sm:$0xf]
  %v141 = vld [vmem:[%s5 + $0x10] sm:$0xf]
  %v142 = vld [vmem:[%s5 + $0x14] sm:$0xf]
  %v143 = vld [vmem:[%s5 + $0x18] sm:$0xf]
  %v144 = vld [vmem:[%s5 + $0x1c] sm:$0xf]
  %v145 = vld [vmem:[%s6] sm:$0x1]
  %v147 = vlaneseq
  %v148 = vshrl.u32 %v147, 7
  %v149 = vsub.s32 0, %v148
  %v150 = vrot.slane %v145, %v149
  %v160 = vunpack.c.l.b16 %v137
  %v161 = vunpack.c.l.b16 %v138
  %v162 = vunpack.c.l.b16 %v139
  %v163 = vunpack.c.l.b16 %v140
  %v164 = vunpack.c.l.b16 %v141
  %v165 = vunpack.c.l.b16 %v142
  %v166 = vunpack.c.l.b16 %v143
  %v167 = vunpack.c.l.b16 %v144
  %v168 = vpack.c.b16 %v161, %v160
  %v169 = vpack.c.b16 %v163, %v162
  %v170 = vpack.c.b16 %v165, %v164
  %v171 = vpack.c.b16 %v167, %v166
  %vm176 = vcmask 523264
  %v178 = vsel %vm176, %v136, 0
  %180 = vmatprep.subr.bf16.mxu0 0
  %181 = vmatpush1.bf16.msra.mxu0 0
  %182 = vmatprep.subr.bf16.mxu0 0
  %183 = vmatpush1.bf16.msra.mxu0 0
  %184 = vmatprep.subr.bf16.mxu0 0
  %185 = vmatpush1.bf16.msra.mxu0 0
  %186 = vmatprep.subr.bf16.mxu0 0
  %187 = vmatpush1.bf16.msra.mxu0 0
  %188 = vmatprep.subr.bf16.mxu0 0
  %189 = vmatpush1.bf16.msra.mxu0 %v171
  %190 = vmatprep.subr.bf16.mxu0 0
  %191 = vmatpush1.bf16.msra.mxu0 %v170
  %192 = vmatprep.subr.bf16.mxu0 0
  %193 = vmatpush1.bf16.msra.mxu0 %v169
  %194 = vmatprep.subr.bf16.mxu0 0
  %195 = vmatpush1.bf16.msra.mxu0 %v168
  %196 = vmatprep.subr.bf16.mxu0 0
  %197 = vmatpush2.bf16.msra.mxu0 0
  %198 = vmatprep.subr.bf16.mxu0 0
  %199 = vmatpush2.bf16.msra.mxu0 0
  %200 = vmatprep.subr.bf16.mxu0 0
  %201 = vmatpush2.bf16.msra.mxu0 0
  %202 = vmatprep.subr.bf16.mxu0 0
  %203 = vmatpush2.bf16.msra.mxu0 0
  %204 = vmatprep.subr.bf16.mxu0 0
  %205 = vmatpush2.bf16.msra.mxu0 0
  %206 = vmatprep.subr.bf16.mxu0 0
  %207 = vmatpush2.bf16.msra.mxu0 0
  %208 = vmatprep.subr.bf16.mxu0 0
  %209 = vmatpush2.bf16.msra.mxu0 0
  %210 = vmatprep.subr.bf16.mxu0 0
  %211 = vmatpush2.bf16.msra.mxu0 0
  %212 = vmatprep.mubr.bf16.mxu0 0
  %213 = vmatmul.mubr.bf16.gmra.mxu0 %v178
  %v214 = vpop.f32.mrf.mxu0
  %v215 = vadd.f32 %v150, %v214
  %v216 = vpop.f32.mrf.mxu0
  %v217 = vpop.f32.mrf.mxu0
  %v218 = vpop.f32.mrf.mxu0
  %219 = vdwg.mxu0
  %v220 = vadd.f32 %v27, %v215
  %221 = vst.msk [vmem:[%s7] sm:$0xff] %vm30, %v220
  // Predicated region
  $region30: #{vitclip_stan_forward.5} parent=0 // pred_check
    _
  $region31: #{vitclip_stan_forward.5} parent=0 // pred_check_branch
    %223 = sbr.rel (0) target = $region33
  $region32: #{vitclip_stan_forward.5} parent=0 // pred_region
    _
  $region33: #{vitclip_stan_forward.5} parent=0 // pred_fallthru
    _
  // Predicated region
  $region34: #{vitclip_stan_forward.5} parent=0 // pred_check
    _
  $region35: #{vitclip_stan_forward.5} parent=0 // pred_check_branch
    %225 = sbr.rel (0) target = $region37
  $region36: #{vitclip_stan_forward.5} parent=0 // pred_region
    _
  $region37: #{vitclip_stan_forward.5} parent=0 // pred_fallthru
    _

// kernel: vitclip_stan_forward.3
$region0: #{vitclip_stan_forward.3}
  #allocation0 [shape = 'u32[]', space=smem, size = 0x4, offset = 0x4, fixed_abs, tag = 'smem constant byte address 0x4 - core index']
  #allocation1 [shape = 'u32[144,128]{1,0:T(1,128)}', space=vmem, size = 0x12000, scoped, tag = 'internal scratch']
  %s0 = inlined_call_operand.vmem [shape: f32[2,4,4,32], index: 0, kind: input, shape index: {}]
  %s1 = inlined_call_operand.vmem [shape: f32[4,32], index: 1, kind: input, shape index: {}]
  %s2 = inlined_call_operand.vmem [shape: f32[4,32], index: 2, kind: input, shape index: {}]
  %s3 = inlined_call_operand.vmem [shape: f32[1,32], index: 3, kind: input, shape index: {}]
  %s4 = inlined_call_operand.vmem [shape: f32[1,32], index: 4, kind: input, shape index: {}]
  %s5 = inlined_call_operand.vmem [shape: bf16[32,32], index: 5, kind: input, shape index: {}]
  %s6 = inlined_call_operand.vmem [shape: f32[1,32], index: 6, kind: input, shape index: {}]
  %s7 = inlined_call_operand.vmem [shape: bf16[32,32], index: 7, kind: input, shape index: {}]
  %s8 = inlined_call_operand.vmem [shape: f32[1,32], index: 8, kind: input, shape index: {}]
  %s9 = inlined_call_operand.vmem [shape: bf16[32,32], index: 9, kind: input, shape index: {}]
  %s10 = inlined_call_operand.vmem [shape: f32[1,32], index: 10, kind: input, shape index: {}]
  %s11 = inlined_call_operand.vmem [shape: bf16[32,32], index: 11, kind: input, shape index: {}]
  %s12 = inlined_call_operand.vmem [shape: f32[1,32], index: 12, kind: input, shape index: {}]
  %s13 = inlined_call_operand.vmem [shape: bf16[32,32], index: 13, kind: input, shape index: {}]
  %s14 = inlined_call_operand.vmem [shape: f32[1,32], index: 14, kind: input, shape index: {}]
  %s15 = inlined_call_operand.vmem [shape: f32[2,4,4,32], index: 15, kind: output, shape index: {}]
  %s16 = sld [smem:[#allocation0]]
  $region93: #{vitclip_stan_forward.3} parent=0
    _
  %s18 = ssub.s32 1, %s16
  %s19 = scalar_select 0, %s18, %s16
  loop: start=0, step=1, limit=4
  $region2: #{vitclip_stan_forward.3} parent=0 // loop_pre_header
    _
  $region3: #{vitclip_stan_forward.3} parent=0 // loop_header
    %s21 = sphi 0, %s25
    %p22 = scmp.ge.s32.totalorder %s21, 4
    %s28 = sphi 0, %s40
    %s29 = sphi 0, %s36
    %s30 = sphi 0, %s28
    %s31 = sphi 0, %s29
    %s32 = sphi 0, %s30
    %s33 = sphi 0, %s31
    %s45 = sphi 0, %s47
    %s48 = sphi 0, %s45
    %s49 = sphi 0, %s48
    %s65 = sphi 0, %s49
    %s71 = sphi 0, %s73
    %s74 = sphi 0, %s71
    %s75 = sphi 0, %s74
    %s91 = sphi 0, %s75
    %s95 = sphi 0, %s95
    %s97 = sphi 0, %s95
    %s98 = sphi 0, %s97
    %s112 = sphi 0, %s98
    %s116 = sphi 0, %s116
    %s118 = sphi 0, %s116
    %s119 = sphi 0, %s118
    %s133 = sphi 0, %s119
    %s137 = sphi 0, %s137
    %s139 = sphi 0, %s137
    %s140 = sphi 0, %s139
    %s154 = sphi 0, %s140
    %s158 = sphi 0, %s158
    %s160 = sphi 0, %s158
    %s161 = sphi 0, %s160
    %s175 = sphi 0, %s161
    %s179 = sphi 0, %s179
    %s181 = sphi 0, %s179
    %s182 = sphi 0, %s181
    %s196 = sphi 0, %s182
    %s200 = sphi 0, %s200
    %s202 = sphi 0, %s200
    %s203 = sphi 0, %s202
    %s217 = sphi 0, %s203
    %s221 = sphi 0, %s221
    %s223 = sphi 0, %s221
    %s224 = sphi 0, %s223
    %s238 = sphi 0, %s224
    %s242 = sphi 0, %s242
    %s244 = sphi 0, %s242
    %s245 = sphi 0, %s244
    %s259 = sphi 0, %s245
    %s263 = sphi 0, %s263
    %s265 = sphi 0, %s263
    %s266 = sphi 0, %s265
    %s280 = sphi 0, %s266
    %s284 = sphi 0, %s284
    %s286 = sphi 0, %s284
    %s287 = sphi 0, %s286
    %s301 = sphi 0, %s287
    %s305 = sphi 0, %s305
    %s307 = sphi 0, %s305
    %s308 = sphi 0, %s307
    %s322 = sphi 0, %s308
    %s326 = sphi 0, %s326
    %s328 = sphi 0, %s326
    %s329 = sphi 0, %s328
    %s343 = sphi 0, %s329
    %s347 = sphi 0, %s347
    %s349 = sphi 0, %s347
    %s350 = sphi 0, %s349
    %s364 = sphi 0, %s350
    %s372 = sphi 0, %s374
    %s375 = sphi 0, %s372
    %s376 = sphi 0, %s375
    %s392 = sphi 0, %s376
  $region4: #{vitclip_stan_forward.3} parent=0 // loop_header_branch
    %24 = sbr.rel (%p22) target = $region8
  $region5: #{vitclip_stan_forward.3} parent=0 // loop_body
    %s26 = ssub.s32 %s21, 1
    %s27 = ssub.s32 %s21, 2
    %s34 = sadd.s32 1, %s29
    %p35 = scmp.ge.s32.totalorder %s34, 1
    %s36 = scalar_select %p35, 0, %s34
    %s37 = sadd.s32 1, %s28
    %s38 = scalar_select %p35, %s37, %s28
    %p39 = scmp.ge.s32.totalorder %s38, 2
    %s40 = scalar_select %p39, 0, %s38
    %s41 = ssub.s32 %s28, %s40
    %s42 = ssub.s32 %s29, %s36
    %s43 = sor.u32 %s41, %s42
    %p44 = scmp.eq.s32.totalorder %s43, 0
    %s46 = sadd.s32 %s45, 1
    %s47 = scalar_select %p44, %s45, %s46
    %p50 = pneg %p44
    %p51 = scmp.eq.s32.totalorder %s21, 1
    %p52 = por %p50, %p51
    %p53 = scmp.ne.s32.totalorder %s45, %s48
    %p54 = scmp.eq.s32.totalorder %s21, 0
    %p55 = por %p53, %p54
    %p56 = scmp.ne.s32.totalorder %s45, %s48
    %p57 = scmp.eq.s32.totalorder %s26, 1
    %p58 = por %p56, %p57
    %p59 = scmp.ne.s32.totalorder %s48, %s49
    %p60 = scmp.eq.s32.totalorder %s26, 0
    %p61 = por %p59, %p60
    %p62 = scmp.ne.s32.totalorder %s48, %s49
    %p63 = scmp.eq.s32.totalorder %s27, 1
    %p64 = por %p62, %p63
    %p66 = scmp.ne.s32.totalorder %s49, %s65
    %p67 = scmp.eq.s32.totalorder %s27, 0
    %p68 = por %p66, %p67
    %s69 = ssub.s32 %s29, %s36
    %p70 = scmp.eq.s32.totalorder %s69, 0
    %s72 = sadd.s32 %s71, 1
    %s73 = scalar_select %p70, %s71, %s72
    %p76 = pneg %p70
    %p77 = scmp.eq.s32.totalorder %s21, 1
    %p78 = por %p76, %p77
    %p79 = scmp.ne.s32.totalorder %s71, %s74
    %p80 = scmp.eq.s32.totalorder %s21, 0
    %p81 = por %p79, %p80
    %p82 = scmp.ne.s32.totalorder %s71, %s74
    %p83 = scmp.eq.s32.totalorder %s26, 1
    %p84 = por %p82, %p83
    %p85 = scmp.ne.s32.totalorder %s74, %s75
    %p86 = scmp.eq.s32.totalorder %s26, 0
    %p87 = por %p85, %p86
    %p88 = scmp.ne.s32.totalorder %s74, %s75
    %p89 = scmp.eq.s32.totalorder %s27, 1
    %p90 = por %p88, %p89
    %p92 = scmp.ne.s32.totalorder %s75, %s91
    %p93 = scmp.eq.s32.totalorder %s27, 0
    %p94 = por %p92, %p93
    %s96 = sadd.s32 %s95, 1
    %p99 = scmp.eq.s32.totalorder %s21, 1
    %p100 = scmp.ne.s32.totalorder %s95, %s97
    %p101 = scmp.eq.s32.totalorder %s21, 0
    %p102 = por %p100, %p101
    %p103 = scmp.ne.s32.totalorder %s95, %s97
    %p104 = scmp.eq.s32.totalorder %s26, 1
    %p105 = por %p103, %p104
    %p106 = scmp.ne.s32.totalorder %s97, %s98
    %p107 = scmp.eq.s32.totalorder %s26, 0
    %p108 = por %p106, %p107
    %p109 = scmp.ne.s32.totalorder %s97, %s98
    %p110 = scmp.eq.s32.totalorder %s27, 1
    %p111 = por %p109, %p110
    %p113 = scmp.ne.s32.totalorder %s98, %s112
    %p114 = scmp.eq.s32.totalorder %s27, 0
    %p115 = por %p113, %p114
    %s117 = sadd.s32 %s116, 1
    %p120 = scmp.eq.s32.totalorder %s21, 1
    %p121 = scmp.ne.s32.totalorder %s116, %s118
    %p122 = scmp.eq.s32.totalorder %s21, 0
    %p123 = por %p121, %p122
    %p124 = scmp.ne.s32.totalorder %s116, %s118
    %p125 = scmp.eq.s32.totalorder %s26, 1
    %p126 = por %p124, %p125
    %p127 = scmp.ne.s32.totalorder %s118, %s119
    %p128 = scmp.eq.s32.totalorder %s26, 0
    %p129 = por %p127, %p128
    %p130 = scmp.ne.s32.totalorder %s118, %s119
    %p131 = scmp.eq.s32.totalorder %s27, 1
    %p132 = por %p130, %p131
    %p134 = scmp.ne.s32.totalorder %s119, %s133
    %p135 = scmp.eq.s32.totalorder %s27, 0
    %p136 = por %p134, %p135
    %s138 = sadd.s32 %s137, 1
    %p141 = scmp.eq.s32.totalorder %s21, 1
    %p142 = scmp.ne.s32.totalorder %s137, %s139
    %p143 = scmp.eq.s32.totalorder %s21, 0
    %p144 = por %p142, %p143
    %p145 = scmp.ne.s32.totalorder %s137, %s139
    %p146 = scmp.eq.s32.totalorder %s26, 1
    %p147 = por %p145, %p146
    %p148 = scmp.ne.s32.totalorder %s139, %s140
    %p149 = scmp.eq.s32.totalorder %s26, 0
    %p150 = por %p148, %p149
    %p151 = scmp.ne.s32.totalorder %s139, %s140
    %p152 = scmp.eq.s32.totalorder %s27, 1
    %p153 = por %p151, %p152
    %p155 = scmp.ne.s32.totalorder %s140, %s154
    %p156 = scmp.eq.s32.totalorder %s27, 0
    %p157 = por %p155, %p156
    %s159 = sadd.s32 %s158, 1
    %p162 = scmp.eq.s32.totalorder %s21, 1
    %p163 = scmp.ne.s32.totalorder %s158, %s160
    %p164 = scmp.eq.s32.totalorder %s21, 0
    %p165 = por %p163, %p164
    %p166 = scmp.ne.s32.totalorder %s158, %s160
    %p167 = scmp.eq.s32.totalorder %s26, 1
    %p168 = por %p166, %p167
    %p169 = scmp.ne.s32.totalorder %s160, %s161
    %p170 = scmp.eq.s32.totalorder %s26, 0
    %p171 = por %p169, %p170
    %p172 = scmp.ne.s32.totalorder %s160, %s161
    %p173 = scmp.eq.s32.totalorder %s27, 1
    %p174 = por %p172, %p173
    %p176 = scmp.ne.s32.totalorder %s161, %s175
    %p177 = scmp.eq.s32.totalorder %s27, 0
    %p178 = por %p176, %p177
    %s180 = sadd.s32 %s179, 1
    %p183 = scmp.eq.s32.totalorder %s21, 1
    %p184 = scmp.ne.s32.totalorder %s179, %s181
    %p185 = scmp.eq.s32.totalorder %s21, 0
    %p186 = por %p184, %p185
    %p187 = scmp.ne.s32.totalorder %s179, %s181
    %p188 = scmp.eq.s32.totalorder %s26, 1
    %p189 = por %p187, %p188
    %p190 = scmp.ne.s32.totalorder %s181, %s182
    %p191 = scmp.eq.s32.totalorder %s26, 0
    %p192 = por %p190, %p191
    %p193 = scmp.ne.s32.totalorder %s181, %s182
    %p194 = scmp.eq.s32.totalorder %s27, 1
    %p195 = por %p193, %p194
    %p197 = scmp.ne.s32.totalorder %s182, %s196
    %p198 = scmp.eq.s32.totalorder %s27, 0
    %p199 = por %p197, %p198
    %s201 = sadd.s32 %s200, 1
    %p204 = scmp.eq.s32.totalorder %s21, 1
    %p205 = scmp.ne.s32.totalorder %s200, %s202
    %p206 = scmp.eq.s32.totalorder %s21, 0
    %p207 = por %p205, %p206
    %p208 = scmp.ne.s32.totalorder %s200, %s202
    %p209 = scmp.eq.s32.totalorder %s26, 1
    %p210 = por %p208, %p209
    %p211 = scmp.ne.s32.totalorder %s202, %s203
    %p212 = scmp.eq.s32.totalorder %s26, 0
    %p213 = por %p211, %p212
    %p214 = scmp.ne.s32.totalorder %s202, %s203
    %p215 = scmp.eq.s32.totalorder %s27, 1
    %p216 = por %p214, %p215
    %p218 = scmp.ne.s32.totalorder %s203, %s217
    %p219 = scmp.eq.s32.totalorder %s27, 0
    %p220 = por %p218, %p219
    %s222 = sadd.s32 %s221, 1
    %p225 = scmp.eq.s32.totalorder %s21, 1
    %p226 = scmp.ne.s32.totalorder %s221, %s223
    %p227 = scmp.eq.s32.totalorder %s21, 0
    %p228 = por %p226, %p227
    %p229 = scmp.ne.s32.totalorder %s221, %s223
    %p230 = scmp.eq.s32.totalorder %s26, 1
    %p231 = por %p229, %p230
    %p232 = scmp.ne.s32.totalorder %s223, %s224
    %p233 = scmp.eq.s32.totalorder %s26, 0
    %p234 = por %p232, %p233
    %p235 = scmp.ne.s32.totalorder %s223, %s224
    %p236 = scmp.eq.s32.totalorder %s27, 1
    %p237 = por %p235, %p236
    %p239 = scmp.ne.s32.totalorder %s224, %s238
    %p240 = scmp.eq.s32.totalorder %s27, 0
    %p241 = por %p239, %p240
    %s243 = sadd.s32 %s242, 1
    %p246 = scmp.eq.s32.totalorder %s21, 1
    %p247 = scmp.ne.s32.totalorder %s242, %s244
    %p248 = scmp.eq.s32.totalorder %s21, 0
    %p249 = por %p247, %p248
    %p250 = scmp.ne.s32.totalorder %s242, %s244
    %p251 = scmp.eq.s32.totalorder %s26, 1
    %p252 = por %p250, %p251
    %p253 = scmp.ne.s32.totalorder %s244, %s245
    %p254 = scmp.eq.s32.totalorder %s26, 0
    %p255 = por %p253, %p254
    %p256 = scmp.ne.s32.totalorder %s244, %s245
    %p257 = scmp.eq.s32.totalorder %s27, 1
    %p258 = por %p256, %p257
    %p260 = scmp.ne.s32.totalorder %s245, %s259
    %p261 = scmp.eq.s32.totalorder %s27, 0
    %p262 = por %p260, %p261
    %s264 = sadd.s32 %s263, 1
    %p267 = scmp.eq.s32.totalorder %s21, 1
    %p268 = scmp.ne.s32.totalorder %s263, %s265
    %p269 = scmp.eq.s32.totalorder %s21, 0
    %p270 = por %p268, %p269
    %p271 = scmp.ne.s32.totalorder %s263, %s265
    %p272 = scmp.eq.s32.totalorder %s26, 1
    %p273 = por %p271, %p272
    %p274 = scmp.ne.s32.totalorder %s265, %s266
    %p275 = scmp.eq.s32.totalorder %s26, 0
    %p276 = por %p274, %p275
    %p277 = scmp.ne.s32.totalorder %s265, %s266
    %p278 = scmp.eq.s32.totalorder %s27, 1
    %p279 = por %p277, %p278
    %p281 = scmp.ne.s32.totalorder %s266, %s280
    %p282 = scmp.eq.s32.totalorder %s27, 0
    %p283 = por %p281, %p282
    %s285 = sadd.s32 %s284, 1
    %p288 = scmp.eq.s32.totalorder %s21, 1
    %p289 = scmp.ne.s32.totalorder %s284, %s286
    %p290 = scmp.eq.s32.totalorder %s21, 0
    %p291 = por %p289, %p290
    %p292 = scmp.ne.s32.totalorder %s284, %s286
    %p293 = scmp.eq.s32.totalorder %s26, 1
    %p294 = por %p292, %p293
    %p295 = scmp.ne.s32.totalorder %s286, %s287
    %p296 = scmp.eq.s32.totalorder %s26, 0
    %p297 = por %p295, %p296
    %p298 = scmp.ne.s32.totalorder %s286, %s287
    %p299 = scmp.eq.s32.totalorder %s27, 1
    %p300 = por %p298, %p299
    %p302 = scmp.ne.s32.totalorder %s287, %s301
    %p303 = scmp.eq.s32.totalorder %s27, 0
    %p304 = por %p302, %p303
    %s306 = sadd.s32 %s305, 1
    %p309 = scmp.eq.s32.totalorder %s21, 1
    %p310 = scmp.ne.s32.totalorder %s305, %s307
    %p311 = scmp.eq.s32.totalorder %s21, 0
    %p312 = por %p310, %p311
    %p313 = scmp.ne.s32.totalorder %s305, %s307
    %p314 = scmp.eq.s32.totalorder %s26, 1
    %p315 = por %p313, %p314
    %p316 = scmp.ne.s32.totalorder %s307, %s308
    %p317 = scmp.eq.s32.totalorder %s26, 0
    %p318 = por %p316, %p317
    %p319 = scmp.ne.s32.totalorder %s307, %s308
    %p320 = scmp.eq.s32.totalorder %s27, 1
    %p321 = por %p319, %p320
    %p323 = scmp.ne.s32.totalorder %s308, %s322
    %p324 = scmp.eq.s32.totalorder %s27, 0
    %p325 = por %p323, %p324
    %s327 = sadd.s32 %s326, 1
    %p330 = scmp.eq.s32.totalorder %s21, 1
    %p331 = scmp.ne.s32.totalorder %s326, %s328
    %p332 = scmp.eq.s32.totalorder %s21, 0
    %p333 = por %p331, %p332
    %p334 = scmp.ne.s32.totalorder %s326, %s328
    %p335 = scmp.eq.s32.totalorder %s26, 1
    %p336 = por %p334, %p335
    %p337 = scmp.ne.s32.totalorder %s328, %s329
    %p338 = scmp.eq.s32.totalorder %s26, 0
    %p339 = por %p337, %p338
    %p340 = scmp.ne.s32.totalorder %s328, %s329
    %p341 = scmp.eq.s32.totalorder %s27, 1
    %p342 = por %p340, %p341
    %p344 = scmp.ne.s32.totalorder %s329, %s343
    %p345 = scmp.eq.s32.totalorder %s27, 0
    %p346 = por %p344, %p345
    %s348 = sadd.s32 %s347, 1
    %p351 = scmp.eq.s32.totalorder %s21, 1
    %p352 = scmp.ne.s32.totalorder %s347, %s349
    %p353 = scmp.eq.s32.totalorder %s21, 0
    %p354 = por %p352, %p353
    %p355 = scmp.ne.s32.totalorder %s347, %s349
    %p356 = scmp.eq.s32.totalorder %s26, 1
    %p357 = por %p355, %p356
    %p358 = scmp.ne.s32.totalorder %s349, %s350
    %p359 = scmp.eq.s32.totalorder %s26, 0
    %p360 = por %p358, %p359
    %p361 = scmp.ne.s32.totalorder %s349, %s350
    %p362 = scmp.eq.s32.totalorder %s27, 1
    %p363 = por %p361, %p362
    %p365 = scmp.ne.s32.totalorder %s350, %s364
    %p366 = scmp.eq.s32.totalorder %s27, 0
    %p367 = por %p365, %p366
    %s368 = ssub.s32 %s28, %s40
    %s369 = ssub.s32 %s29, %s36
    %s370 = sor.u32 %s368, %s369
    %p371 = scmp.eq.s32.totalorder %s370, 0
    %s373 = sadd.s32 %s372, 1
    %s374 = scalar_select %p371, %s372, %s373
    %p377 = pneg %p371
    %p378 = scmp.eq.s32.totalorder %s21, 1
    %p379 = por %p377, %p378
    %p380 = scmp.ne.s32.totalorder %s372, %s375
    %p381 = scmp.eq.s32.totalorder %s21, 0
    %p382 = por %p380, %p381
    %p383 = scmp.ne.s32.totalorder %s372, %s375
    %p384 = scmp.eq.s32.totalorder %s26, 1
    %p385 = por %p383, %p384
    %p386 = scmp.ne.s32.totalorder %s375, %s376
    %p387 = scmp.eq.s32.totalorder %s26, 0
    %p388 = por %p386, %p387
    %p389 = scmp.ne.s32.totalorder %s375, %s376
    %p390 = scmp.eq.s32.totalorder %s27, 1
    %p391 = por %p389, %p390
    %p393 = scmp.ne.s32.totalorder %s376, %s392
    %p394 = scmp.eq.s32.totalorder %s27, 0
    %p395 = por %p393, %p394
    %p396 = scmp.le.s32.totalorder 1, %s21
    %p397 = scmp.lt.s32.totalorder %s21, 3
    %p398 = pnand %p396, %p397
    %p399 = pneg %p398
    // Predicated region
    $region9: #{vitclip_stan_forward.3} parent=5 // pred_check
      _
    $region10: #{vitclip_stan_forward.3} parent=5 // pred_check_branch
      %401 = sbr.rel (%p398) target = $region12
    $region11: #{vitclip_stan_forward.3} parent=5 // pred_region
      %s402 = ssub.s32 %s21, 1
      // Predicated region
      $region13: #{vitclip_stan_forward.3} parent=11 // pred_check
        %p403 = pneg %p87
      $region14: #{vitclip_stan_forward.3} parent=11 // pred_check_branch
        %405 = sbr.rel (%p403) target = $region16
      $region15: #{vitclip_stan_forward.3} parent=11 // pred_region
        %p406 = scmp.lt.s32.totalorder %s31, 0
        %s407 = scalar_select %p406, %s31, 0
        %s408 = smul.addr %s407, 4
        %s409 = scalar_lea.vmem %s1, %s408
      $region16: #{vitclip_stan_forward.3} parent=11 // pred_fallthru
        _
      // Predicated region
      $region17: #{vitclip_stan_forward.3} parent=11 // pred_check
        %p410 = pneg %p108
      $region18: #{vitclip_stan_forward.3} parent=11 // pred_check_branch
        %412 = sbr.rel (%p410) target = $region20
      $region19: #{vitclip_stan_forward.3} parent=11 // pred_region
        _
      $region20: #{vitclip_stan_forward.3} parent=11 // pred_fallthru
        _
      // Predicated region
      $region21: #{vitclip_stan_forward.3} parent=11 // pred_check
        %p413 = pneg %p129
      $region22: #{vitclip_stan_forward.3} parent=11 // pred_check_branch
        %415 = sbr.rel (%p413) target = $region24
      $region23: #{vitclip_stan_forward.3} parent=11 // pred_region
        _
      $region24: #{vitclip_stan_forward.3} parent=11 // pred_fallthru
        _
      // Predicated region
      $region25: #{vitclip_stan_forward.3} parent=11 // pred_check
        %p416 = pneg %p150
      $region26: #{vitclip_stan_forward.3} parent=11 // pred_check_branch
        %418 = sbr.rel (%p416) target = $region28
      $region27: #{vitclip_stan_forward.3} parent=11 // pred_region
        _
      $region28: #{vitclip_stan_forward.3} parent=11 // pred_fallthru
        _
      // Predicated region
      $region29: #{vitclip_stan_forward.3} parent=11 // pred_check
        %p419 = pneg %p171
      $region30: #{vitclip_stan_forward.3} parent=11 // pred_check_branch
        %421 = sbr.rel (%p419) target = $region32
      $region31: #{vitclip_stan_forward.3} parent=11 // pred_region
        _
      $region32: #{vitclip_stan_forward.3} parent=11 // pred_fallthru
        _
      // Predicated region
      $region33: #{vitclip_stan_forward.3} parent=11 // pred_check
        %p422 = pneg %p192
      $region34: #{vitclip_stan_forward.3} parent=11 // pred_check_branch
        %424 = sbr.rel (%p422) target = $region36
      $region35: #{vitclip_stan_forward.3} parent=11 // pred_region
        _
      $region36: #{vitclip_stan_forward.3} parent=11 // pred_fallthru
        _
      // Predicated region
      $region37: #{vitclip_stan_forward.3} parent=11 // pred_check
        %p425 = pneg %p213
      $region38: #{vitclip_stan_forward.3} parent=11 // pred_check_branch
        %427 = sbr.rel (%p425) target = $region40
      $region39: #{vitclip_stan_forward.3} parent=11 // pred_region
        _
      $region40: #{vitclip_stan_forward.3} parent=11 // pred_fallthru
        _
      // Predicated region
      $region41: #{vitclip_stan_forward.3} parent=11 // pred_check
        %p428 = pneg %p234
      $region42: #{vitclip_stan_forward.3} parent=11 // pred_check_branch
        %430 = sbr.rel (%p428) target = $region44
      $region43: #{vitclip_stan_forward.3} parent=11 // pred_region
        _
      $region44: #{vitclip_stan_forward.3} parent=11 // pred_fallthru
        _
      // Predicated region
      $region45: #{vitclip_stan_forward.3} parent=11 // pred_check
        %p431 = pneg %p255
      $region46: #{vitclip_stan_forward.3} parent=11 // pred_check_branch
        %433 = sbr.rel (%p431) target = $region48
      $region47: #{vitclip_stan_forward.3} parent=11 // pred_region
        _
      $region48: #{vitclip_stan_forward.3} parent=11 // pred_fallthru
        _
      // Predicated region
      $region49: #{vitclip_stan_forward.3} parent=11 // pred_check
        %p434 = pneg %p276
      $region50: #{vitclip_stan_forward.3} parent=11 // pred_check_branch
        %436 = sbr.rel (%p434) target = $region52
      $region51: #{vitclip_stan_forward.3} parent=11 // pred_region
        _
      $region52: #{vitclip_stan_forward.3} parent=11 // pred_fallthru
        _
      // Predicated region
      $region53: #{vitclip_stan_forward.3} parent=11 // pred_check
        %p437 = pneg %p297
      $region54: #{vitclip_stan_forward.3} parent=11 // pred_check_branch
        %439 = sbr.rel (%p437) target = $region56
      $region55: #{vitclip_stan_forward.3} parent=11 // pred_region
        _
      $region56: #{vitclip_stan_forward.3} parent=11 // pred_fallthru
        _
      // Predicated region
      $region57: #{vitclip_stan_forward.3} parent=11 // pred_check
        %p440 = pneg %p318
      $region58: #{vitclip_stan_forward.3} parent=11 // pred_check_branch
        %442 = sbr.rel (%p440) target = $region60
      $region59: #{vitclip_stan_forward.3} parent=11 // pred_region
        _
      $region60: #{vitclip_stan_forward.3} parent=11 // pred_fallthru
        _
      // Predicated region
      $region61: #{vitclip_stan_forward.3} parent=11 // pred_check
        %p443 = pneg %p339
      $region62: #{vitclip_stan_forward.3} parent=11 // pred_check_branch
        %445 = sbr.rel (%p443) target = $region64
      $region63: #{vitclip_stan_forward.3} parent=11 // pred_region
        _
      $region64: #{vitclip_stan_forward.3} parent=11 // pred_fallthru
        _
      // Predicated region
      $region65: #{vitclip_stan_forward.3} parent=11 // pred_check
        %p446 = pneg %p360
      $region66: #{vitclip_stan_forward.3} parent=11 // pred_check_branch
        %448 = sbr.rel (%p446) target = $region68
      $region67: #{vitclip_stan_forward.3} parent=11 // pred_region
        _
      $region68: #{vitclip_stan_forward.3} parent=11 // pred_fallthru
        _
    $region12: #{vitclip_stan_forward.3} parent=5 // pred_fallthru
      _
    %p449 = scmp.lt.s32.totalorder %s21, 2
    // Predicated region
    $region69: #{vitclip_stan_forward.3} parent=5 // pred_check
      %p450 = pneg %p449
    $region70: #{vitclip_stan_forward.3} parent=5 // pred_check_branch
      %452 = sbr.rel (%p450) target = $region72
    $region71: #{vitclip_stan_forward.3} parent=5 // pred_region
      // Predicated region
      $region73: #{vitclip_stan_forward.3} parent=71 // pred_check
        %p453 = pneg %p55
      $region74: #{vitclip_stan_forward.3} parent=71 // pred_check_branch
        %455 = sbr.rel (%p453) target = $region76
      $region75: #{vitclip_stan_forward.3} parent=71 // pred_region
        %p456 = scmp.lt.s32.totalorder %s28, 1
        %s457 = scalar_select %p456, %s28, 1
        %p458 = scmp.lt.s32.totalorder %s29, 0
        %s459 = scalar_select %p458, %s29, 0
        %s460 = smul.addr %s457, 4
        %s461 = sadd.s32 %s459, %s460
        %s462 = smul.addr %s461, 4
        %s463 = scalar_lea.vmem %s0, %s462
      $region76: #{vitclip_stan_forward.3} parent=71 // pred_fallthru
        _
    $region72: #{vitclip_stan_forward.3} parent=5 // pred_fallthru
      _
    %p464 = scmp.le.s32.totalorder 1, %s21
    %p465 = scmp.lt.s32.totalorder %s21, 3
    %p466 = pnand %p464, %p465
    %p467 = pneg %p466
    // Predicated region
    $region77: #{vitclip_stan_forward.3} parent=5 // pred_check
      _
    $region78: #{vitclip_stan_forward.3} parent=5 // pred_check_branch
      %469 = sbr.rel (%p466) target = $region80
    $region79: #{vitclip_stan_forward.3} parent=5 // pred_region
      %s470 = ssub.s32 %s21, 1
      %p471 = scmp.lt.s32.totalorder %s30, 1
      %s472 = scalar_select %p471, %s30, 1
      %p473 = scmp.lt.s32.totalorder %s31, 0
      %s474 = scalar_select %p473, %s31, 0
      %s475 = smul.addr %s472, 4
      %s476 = sadd.s32 %s474, %s475
      %s477 = smul.addr %s476, 4
      %s478 = scalar_lea.vmem %s0, %s477
      %p479 = pneg %p61
      %p480 = pneg %p58
      %p481 = scmp.lt.s32.totalorder %s31, 0
      %s482 = scalar_select %p481, %s31, 0
      %s483 = smul.addr %s482, 4
      %s484 = scalar_lea.vmem %s1, %s483
      %p485 = pneg %p87
      %p486 = pneg %p84
      %p487 = pneg %p108
      %p488 = pneg %p105
      %p489 = pneg %p129
      %p490 = pneg %p126
      %p491 = pneg %p150
      %p492 = pneg %p147
      %p493 = pneg %p171
      %p494 = pneg %p168
      %p495 = pneg %p192
      %p496 = pneg %p189
      %p497 = pneg %p213
      %p498 = pneg %p210
      %p499 = pneg %p234
      %p500 = pneg %p231
      %p501 = pneg %p255
      %p502 = pneg %p252
      %p503 = pneg %p276
      %p504 = pneg %p273
      %p505 = pneg %p297
      %p506 = pneg %p294
      %p507 = pneg %p318
      %p508 = pneg %p315
      %p509 = pneg %p339
      %p510 = pneg %p336
      %p511 = pneg %p360
      %p512 = pneg %p357
      %p513 = pneg %p388
      %p514 = pneg %p385
      %s515 = smul.u32 4, %s31
      %p516 = scmp.lt.s32.totalorder %s30, 1
      %s517 = scalar_select %p516, %s30, 1
      %p518 = scmp.lt.s32.totalorder %s515, 3
      %s519 = scalar_select %p518, %s515, 3
      %s520 = smul.addr %s517, 4
      %s521 = sadd.s32 %s519, %s520
      %s522 = smul.addr %s521, 4
      %s523 = scalar_lea.vmem %s15, %s522
      %p524 = scmp.lt.s32.totalorder %s30, 1
      %s525 = scalar_select %p524, %s30, 1
      %p526 = scmp.lt.s32.totalorder %s31, 0
      %s527 = scalar_select %p526, %s31, 0
      %s528 = smul.addr %s525, 4
      %s529 = sadd.s32 %s527, %s528
      %s530 = smul.addr %s529, 4
      %s531 = scalar_lea.vmem %s0, %s530
      %p532 = scmp.lt.s32.totalorder %s31, 0
      %s533 = scalar_select %p532, %s31, 0
      %s534 = smul.addr %s533, 4
      %s535 = scalar_lea.vmem %s1, %s534
      %s536 = smul.u32 4, %s31
      %p537 = scmp.lt.s32.totalorder %s30, 1
      %s538 = scalar_select %p537, %s30, 1
      %p539 = scmp.lt.s32.totalorder %s536, 3
      %s540 = scalar_select %p539, %s536, 3
      %s541 = smul.addr %s538, 4
      %s542 = sadd.s32 %s540, %s541
      %s543 = smul.addr %s542, 4
      %s544 = scalar_lea.vmem %s15, %s543
      %s545 = smul.u32 4, %s31
      %v547 = vld [vmem:[%s531] sm:$0xf]
      %v548 = vld [vmem:[%s531 + $0x4] sm:$0xf]
      %v549 = vld [vmem:[%s531 + $0x8] sm:$0xf]
      %v550 = vld [vmem:[%s531 + $0xc] sm:$0xf]
      %v551 = vld [vmem:[%s2] sm:$0xf]
      %v554 = vunpack.c.l.s4 1966171168
      %v555 = vunpack.c.0.s8 %v554
      %v556 = vlaneseq
      %v557 = vshrl.u32 %v556, 7
      %v558 = vsub.s32 %v555, %v557
      %v559 = vrot.slane %v551, %v558
      %v560 = vcombine.high %v559, %v559
      %v562 = vunpack.c.l.s4 1966171168
      %v563 = vunpack.c.0.s8 %v562
      %v564 = vlaneseq
      %v565 = vshrl.u32 %v564, 7
      %v566 = vsub.s32 %v563, %v565
      %v567 = vrot.slane %v559, %v566
      %v569 = vunpack.c.l.s4 1966171168
      %v570 = vunpack.c.0.s8 %v569
      %v571 = vlaneseq
      %v572 = vshrl.u32 %v571, 7
      %v573 = vsub.s32 %v570, %v572
      %v574 = vrot.slane %v560, %v573
      %v575 = vcombine.high %v567, %v567
      %v576 = vcombine.high %v574, %v574
      %v577 = vlaneseq
      %v578 = vshrl.u32 %v577, 7
      %v579 = vsub.s32 0, %v578
      %v580 = vrot.slane %v567, %v579
      %v581 = vlaneseq
      %v582 = vshrl.u32 %v581, 7
      %v583 = vsub.s32 0, %v582
      %v584 = vrot.slane %v574, %v583
      %v585 = vlaneseq
      %v586 = vshrl.u32 %v585, 7
      %v587 = vsub.s32 0, %v586
      %v588 = vrot.slane %v575, %v587
      %v589 = vlaneseq
      %v590 = vshrl.u32 %v589, 7
      %v591 = vsub.s32 0, %v590
      %v592 = vrot.slane %v576, %v591
      %v597 = vadd.f32 %v547, %v580
      %v598 = vadd.f32 %v548, %v584
      %v599 = vadd.f32 %v549, %v588
      %v600 = vadd.f32 %v550, %v592
      %v601 = vld [vmem:[%s535] sm:$0xf]
      %v602 = vadd.f32 %v597, %v601
      %v603 = vadd.f32 %v598, %v601
      %v604 = vadd.f32 %v599, %v601
      %v605 = vadd.f32 %v600, %v601
      %v606 = vcombine.low %v602, %v604
      %v608 = vunpack.c.l.s4 1983009808
      %v609 = vunpack.c.0.s8 %v608
      %v610 = vlaneseq
      %v611 = vshrl.u32 %v610, 7
      %v612 = vsub.s32 %v609, %v611
      %v613 = vrot.slane %v606, %v612
      %v614 = vcombine.low %v603, %v605
      %v616 = vunpack.c.l.s4 1983009808
      %v617 = vunpack.c.0.s8 %v616
      %v618 = vlaneseq
      %v619 = vshrl.u32 %v618, 7
      %v620 = vsub.s32 %v617, %v619
      %v621 = vrot.slane %v614, %v620
      %v622 = vcombine.low %v613, %v621
      %v623 = vcombine.high %v613, %v621
      %v625 = vunpack.c.l.s4 1934713408
      %v626 = vunpack.c.0.s8 %v625
      %v627 = vlaneseq
      %v628 = vshrl.u32 %v627, 7
      %v629 = vsub.s32 %v626, %v628
      %v630 = vrot.slane %v622, %v629
      %v632 = vunpack.c.l.s4 1934713408
      %v633 = vunpack.c.0.s8 %v632
      %v634 = vlaneseq
      %v635 = vshrl.u32 %v634, 7
      %v636 = vsub.s32 %v633, %v635
      %v637 = vrot.slane %v623, %v636
      %v638 = vcombine.high %v630, 0.0
      %v639 = vcombine.high %v637, 0.0
      %v640 = vld [vmem:[%s3] sm:$0x1]
      %v641 = vld [vmem:[%s4] sm:$0x1]
      %v646 = vcombine.low %v630, %v638
      %v647 = vcombine.low %v637, %v639
      %vm650 = vcmask 261120
      %v651 = vsel %vm650, %v646, 0.0
      %652 = vadd.xlane.f32.xlu0 %v651
      %v653 = vpop.xlane.xlu0 %652
      %v654 = vsel %vm650, %v647, 0.0
      %655 = vadd.xlane.f32.xlu0 %v654
      %v656 = vpop.xlane.xlu0 %655
      %v657 = vrcp.pop 32.0
      %v658 = vmul.f32 %v653, %v657
      %v659 = vmul.f32 %v656, %v657
      %v660 = vmul.f32 %v630, %v630
      %v661 = vmul.f32 %v638, %v638
      %v662 = vmul.f32 %v637, %v637
      %v663 = vmul.f32 %v639, %v639
      %v668 = vcombine.low %v660, %v661
      %v669 = vcombine.low %v662, %v663
      %v672 = vsel %vm650, %v668, 0.0
      %673 = vadd.xlane.f32.xlu0 %v672
      %v674 = vpop.xlane.xlu0 %673
      %v675 = vsel %vm650, %v669, 0.0
      %676 = vadd.xlane.f32.xlu0 %v675
      %v677 = vpop.xlane.xlu0 %676
      %v678 = vmul.f32 %v674, %v657
      %v679 = vmul.f32 %v677, %v657
      %v680 = vmul.f32 %v658, %v658
      %v681 = vmul.f32 %v659, %v659
      %v682 = vsub.f32 %v678, %v680
      %v683 = vsub.f32 %v679, %v681
      %v684 = vadd.f32 %v682, 1e-05
      %v685 = vadd.f32 %v683, 1e-05
      %v686 = vrsqrt.pop %v684
      %v687 = vrsqrt.pop %v685
      %v691 = vunpack.c.l.s4 839922192
      %v692 = vunpack.c.0.s8 %v691
      %v693 = vlaneseq
      %v694 = vshrl.u32 %v693, 7
      %v695 = vsub.s32 %v692, %v694
      %v696 = vrot.slane %v658, %v695
      %v698 = vunpack.c.l.s4 1985246804
      %v699 = vunpack.c.0.s8 %v698
      %v700 = vlaneseq
      %v701 = vshrl.u32 %v700, 7
      %v702 = vsub.s32 %v699, %v701
      %v703 = vrot.slane %v658, %v702
      %v705 = vunpack.c.l.s4 839922192
      %v706 = vunpack.c.0.s8 %v705
      %v707 = vlaneseq
      %v708 = vshrl.u32 %v707, 7
      %v709 = vsub.s32 %v706, %v708
      %v710 = vrot.slane %v659, %v709
      %v712 = vunpack.c.l.s4 1985246804
      %v713 = vunpack.c.0.s8 %v712
      %v714 = vlaneseq
      %v715 = vshrl.u32 %v714, 7
      %v716 = vsub.s32 %v713, %v715
      %v717 = vrot.slane %v659, %v716
      %v722 = vsub.f32 %v630, %v696
      %v723 = vsub.f32 %v638, %v703
      %v724 = vsub.f32 %v637, %v710
      %v725 = vsub.f32 %v639, %v717
      %v729 = vunpack.c.l.s4 839922192
      %v730 = vunpack.c.0.s8 %v729
      %v731 = vlaneseq
      %v732 = vshrl.u32 %v731, 7
      %v733 = vsub.s32 %v730, %v732
      %v734 = vrot.slane %v686, %v733
      %v736 = vunpack.c.l.s4 1985246804
      %v737 = vunpack.c.0.s8 %v736
      %v738 = vlaneseq
      %v739 = vshrl.u32 %v738, 7
      %v740 = vsub.s32 %v737, %v739
      %v741 = vrot.slane %v686, %v740
      %v743 = vunpack.c.l.s4 839922192
      %v744 = vunpack.c.0.s8 %v743
      %v745 = vlaneseq
      %v746 = vshrl.u32 %v745, 7
      %v747 = vsub.s32 %v744, %v746
      %v748 = vrot.slane %v687, %v747
      %v750 = vunpack.c.l.s4 1985246804
      %v751 = vunpack.c.0.s8 %v750
      %v752 = vlaneseq
      %v753 = vshrl.u32 %v752, 7
      %v754 = vsub.s32 %v751, %v753
      %v755 = vrot.slane %v687, %v754
      %v760 = vmul.f32 %v722, %v734
      %v761 = vmul.f32 %v723, %v741
      %v762 = vmul.f32 %v724, %v748
      %v763 = vmul.f32 %v725, %v755
      %v765 = vlaneseq
      %v766 = vshrl.u32 %v765, 7
      %v767 = vsub.s32 0, %v766
      %v768 = vrot.slane %v640, %v767
      %v770 = vcombine.high %v768, %v768
      %v772 = vmul.f32 %v760, %v768
      %v773 = vmul.f32 %v761, %v770
      %v774 = vmul.f32 %v762, %v768
      %v775 = vmul.f32 %v763, %v770
      %v777 = vlaneseq
      %v778 = vshrl.u32 %v777, 7
      %v779 = vsub.s32 0, %v778
      %v780 = vrot.slane %v641, %v779
      %v782 = vcombine.high %v780, %v780
      %v784 = vadd.f32 %v772, %v780
      %v785 = vadd.f32 %v773, %v782
      %v786 = vadd.f32 %v774, %v780
      %v787 = vadd.f32 %v775, %v782
      %v788 = vld [vmem:[%s5] sm:$0xf]
      %v789 = vld [vmem:[%s5 + $0x4] sm:$0xf]
      %v790 = vld [vmem:[%s5 + $0x8] sm:$0xf]
      %v791 = vld [vmem:[%s5 + $0xc] sm:$0xf]
      %v792 = vld [vmem:[%s6] sm:$0x1]
      %v793 = vld [vmem:[%s7] sm:$0xf]
      %v794 = vld [vmem:[%s7 + $0x4] sm:$0xf]
      %v795 = vld [vmem:[%s7 + $0x8] sm:$0xf]
      %v796 = vld [vmem:[%s7 + $0xc] sm:$0xf]
      %v797 = vld [vmem:[%s8] sm:$0x1]
      %v798 = vld [vmem:[%s9] sm:$0xf]
      %v799 = vld [vmem:[%s9 + $0x4] sm:$0xf]
      %v800 = vld [vmem:[%s9 + $0x8] sm:$0xf]
      %v801 = vld [vmem:[%s9 + $0xc] sm:$0xf]
      %v802 = vld [vmem:[%s10] sm:$0x1]
      %v803 = vld [vmem:[%s11] sm:$0xf]
      %v804 = vld [vmem:[%s11 + $0x4] sm:$0xf]
      %v805 = vld [vmem:[%s11 + $0x8] sm:$0xf]
      %v806 = vld [vmem:[%s11 + $0xc] sm:$0xf]
      %v807 = vld [vmem:[%s12] sm:$0x1]
      %v812 = vcombine.low %v784, %v785
      %v813 = vcombine.low %v786, %v787
      %v816 = vpack.c.bf16 %v813, %v812
      %v818 = vlaneseq
      %v819 = vshrl.u32 %v818, 7
      %v820 = vsub.s32 0, %v819
      %v821 = vrot.slane %v792, %v820
      %v827 = vunpack.c.l.b16 %v788
      %v828 = vunpack.c.l.b16 %v789
      %v829 = vunpack.c.l.b16 %v790
      %v830 = vunpack.c.l.b16 %v791
      %v831 = vpack.c.b16 %v828, %v827
      %v832 = vpack.c.b16 %v830, %v829
      %v836 = vsel %vm650, %v816, 0
      %838 = vmatprep.subr.bf16.mxu0 0
      %839 = vmatpush1.bf16.msra.mxu0 0
      %840 = vmatprep.subr.bf16.mxu0 0
      %841 = vmatpush1.bf16.msra.mxu0 0
      %842 = vmatprep.subr.bf16.mxu0 0
      %843 = vmatpush1.bf16.msra.mxu0 0
      %844 = vmatprep.subr.bf16.mxu0 0
      %845 = vmatpush1.bf16.msra.mxu0 0
      %846 = vmatprep.subr.bf16.mxu0 0
      %847 = vmatpush1.bf16.msra.mxu0 0
      %848 = vmatprep.subr.bf16.mxu0 0
      %849 = vmatpush1.bf16.msra.mxu0 0
      %850 = vmatprep.subr.bf16.mxu0 0
      %851 = vmatpush1.bf16.msra.mxu0 %v832
      %852 = vmatprep.subr.bf16.mxu0 0
      %853 = vmatpush1.bf16.msra.mxu0 %v831
      %854 = vmatprep.subr.bf16.mxu0 0
      %855 = vmatpush2.bf16.msra.mxu0 0
      %856 = vmatprep.subr.bf16.mxu0 0
      %857 = vmatpush2.bf16.msra.mxu0 0
      %858 = vmatprep.subr.bf16.mxu0 0
      %859 = vmatpush2.bf16.msra.mxu0 0
      %860 = vmatprep.subr.bf16.mxu0 0
      %861 = vmatpush2.bf16.msra.mxu0 0
      %862 = vmatprep.subr.bf16.mxu0 0
      %863 = vmatpush2.bf16.msra.mxu0 0
      %864 = vmatprep.subr.bf16.mxu0 0
      %865 = vmatpush2.bf16.msra.mxu0 0
      %866 = vmatprep.subr.bf16.mxu0 0
      %867 = vmatpush2.bf16.msra.mxu0 0
      %868 = vmatprep.subr.bf16.mxu0 0
      %869 = vmatpush2.bf16.msra.mxu0 0
      %870 = vmatprep.mubr.bf16.mxu0 0
      %871 = vmatmul.mubr.bf16.gmra.mxu0 %v836
      %v872 = vpop.f32.mrf.mxu0
      %v873 = vadd.f32 %v821, %v872
      %v874 = vpop.f32.mrf.mxu0
      %v875 = vpop.f32.mrf.mxu0
      %v876 = vadd.f32 %v821, %v875
      %v877 = vpop.f32.mrf.mxu0
      %878 = vdwg.mxu0
      %v880 = vlaneseq
      %v881 = vshrl.u32 %v880, 7
      %v882 = vsub.s32 0, %v881
      %v883 = vrot.slane %v797, %v882
      %v889 = vunpack.c.l.b16 %v793
      %v890 = vunpack.c.l.b16 %v794
      %v891 = vunpack.c.l.b16 %v795
      %v892 = vunpack.c.l.b16 %v796
      %v893 = vpack.c.b16 %v890, %v889
      %v894 = vpack.c.b16 %v892, %v891
      %897 = vmatprep.subr.bf16.mxu0 0
      %898 = vmatpush1.bf16.msra.mxu0 0
      %899 = vmatprep.subr.bf16.mxu0 0
      %900 = vmatpush1.bf16.msra.mxu0 0
      %901 = vmatprep.subr.bf16.mxu0 0
      %902 = vmatpush1.bf16.msra.mxu0 0
      %903 = vmatprep.subr.bf16.mxu0 0
      %904 = vmatpush1.bf16.msra.mxu0 0
      %905 = vmatprep.subr.bf16.mxu0 0
      %906 = vmatpush1.bf16.msra.mxu0 0
      %907 = vmatprep.subr.bf16.mxu0 0
      %908 = vmatpush1.bf16.msra.mxu0 0
      %909 = vmatprep.subr.bf16.mxu0 0
      %910 = vmatpush1.bf16.msra.mxu0 %v894
      %911 = vmatprep.subr.bf16.mxu0 0
      %912 = vmatpush1.bf16.msra.mxu0 %v893
      %913 = vmatprep.subr.bf16.mxu0 0
      %914 = vmatpush2.bf16.msra.mxu0 0
      %915 = vmatprep.subr.bf16.mxu0 0
      %916 = vmatpush2.bf16.msra.mxu0 0
      %917 = vmatprep.subr.bf16.mxu0 0
      %918 = vmatpush2.bf16.msra.mxu0 0
      %919 = vmatprep.subr.bf16.mxu0 0
      %920 = vmatpush2.bf16.msra.mxu0 0
      %921 = vmatprep.subr.bf16.mxu0 0
      %922 = vmatpush2.bf16.msra.mxu0 0
      %923 = vmatprep.subr.bf16.mxu0 0
      %924 = vmatpush2.bf16.msra.mxu0 0
      %925 = vmatprep.subr.bf16.mxu0 0
      %926 = vmatpush2.bf16.msra.mxu0 0
      %927 = vmatprep.subr.bf16.mxu0 0
      %928 = vmatpush2.bf16.msra.mxu0 0
      %929 = vmatprep.mubr.bf16.mxu0 0
      %930 = vmatmul.mubr.bf16.gmra.mxu0 %v836
      %v931 = vpop.f32.mrf.mxu0
      %v932 = vadd.f32 %v883, %v931
      %v933 = vpop.f32.mrf.mxu0
      %v934 = vpop.f32.mrf.mxu0
      %v935 = vadd.f32 %v883, %v934
      %v936 = vpop.f32.mrf.mxu0
      %937 = vdwg.mxu0
      %v939 = vlaneseq
      %v940 = vshrl.u32 %v939, 7
      %v941 = vsub.s32 0, %v940
      %v942 = vrot.slane %v802, %v941
      %v948 = vunpack.c.l.b16 %v798
      %v949 = vunpack.c.l.b16 %v799
      %v950 = vunpack.c.l.b16 %v800
      %v951 = vunpack.c.l.b16 %v801
      %v952 = vpack.c.b16 %v949, %v948
      %v953 = vpack.c.b16 %v951, %v950
      %956 = vmatprep.subr.bf16.mxu0 0
      %957 = vmatpush1.bf16.msra.mxu0 0
      %958 = vmatprep.subr.bf16.mxu0 0
      %959 = vmatpush1.bf16.msra.mxu0 0
      %960 = vmatprep.subr.bf16.mxu0 0
      %961 = vmatpush1.bf16.msra.mxu0 0
      %962 = vmatprep.subr.bf16.mxu0 0
      %963 = vmatpush1.bf16.msra.mxu0 0
      %964 = vmatprep.subr.bf16.mxu0 0
      %965 = vmatpush1.bf16.msra.mxu0 0
      %966 = vmatprep.subr.bf16.mxu0 0
      %967 = vmatpush1.bf16.msra.mxu0 0
      %968 = vmatprep.subr.bf16.mxu0 0
      %969 = vmatpush1.bf16.msra.mxu0 %v953
      %970 = vmatprep.subr.bf16.mxu0 0
      %971 = vmatpush1.bf16.msra.mxu0 %v952
      %972 = vmatprep.subr.bf16.mxu0 0
      %973 = vmatpush2.bf16.msra.mxu0 0
      %974 = vmatprep.subr.bf16.mxu0 0
      %975 = vmatpush2.bf16.msra.mxu0 0
      %976 = vmatprep.subr.bf16.mxu0 0
      %977 = vmatpush2.bf16.msra.mxu0 0
      %978 = vmatprep.subr.bf16.mxu0 0
      %979 = vmatpush2.bf16.msra.mxu0 0
      %980 = vmatprep.subr.bf16.mxu0 0
      %981 = vmatpush2.bf16.msra.mxu0 0
      %982 = vmatprep.subr.bf16.mxu0 0
      %983 = vmatpush2.bf16.msra.mxu0 0
      %984 = vmatprep.subr.bf16.mxu0 0
      %985 = vmatpush2.bf16.msra.mxu0 0
      %986 = vmatprep.subr.bf16.mxu0 0
      %987 = vmatpush2.bf16.msra.mxu0 0
      %988 = vmatprep.mubr.bf16.mxu0 0
      %989 = vmatmul.mubr.bf16.gmra.mxu0 %v836
      %v990 = vpop.f32.mrf.mxu0
      %v991 = vadd.f32 %v942, %v990
      %v992 = vpop.f32.mrf.mxu0
      %v993 = vpop.f32.mrf.mxu0
      %v994 = vadd.f32 %v942, %v993
      %v995 = vpop.f32.mrf.mxu0
      %996 = vdwg.mxu0
      %v998 = vlaneseq
      %v999 = vshrl.u32 %v998, 7
      %v1000 = vsub.s32 0, %v999
      %v1001 = vrot.slane %v807, %v1000
      %v1003 = vadd.f32 %v1001, 0.0
      %v1006 = vcombine.high %v873, %v873
      %v1007 = vcombine.high %v876, %v876
      %v1010 = vpack.c.bf16 %v873, %v873
      %v1011 = vpack.c.bf16 %v1006, %v1006
      %v1012 = vpack.c.bf16 %v876, %v876
      %v1013 = vpack.c.bf16 %v1007, %v1007
      %v1016 = vcombine.high %v932, %v932
      %v1017 = vcombine.high %v935, %v935
      %v1020 = vpack.c.bf16 %v932, %v932
      %v1021 = vpack.c.bf16 %v1016, %v1016
      %v1022 = vpack.c.bf16 %v935, %v935
      %v1023 = vpack.c.bf16 %v1017, %v1017
      %v1026 = vcombine.high %v991, %v991
      %v1027 = vcombine.high %v994, %v994
      %v1030 = vpack.c.bf16 %v991, %v991
      %v1031 = vpack.c.bf16 %v1026, %v1026
      %v1032 = vpack.c.bf16 %v994, %v994
      %v1033 = vpack.c.bf16 %v1027, %v1027
      %vm1034 = vcmask 64512
      %v1036 = vsel %vm1034, %v1010, 0
      %v1039 = vsel %vm1034, %v1020, 0
      %1041 = vmatprep.subr.bf16.mxu0 0
      %1042 = vmatpush1.bf16.xpose.msra.mxu0 0
      %1043 = vmatprep.subr.bf16.mxu0 0
      %1044 = vmatpush1.bf16.xpose.msra.mxu0 0
      %1045 = vmatprep.subr.bf16.mxu0 0
      %1046 = vmatpush1.bf16.xpose.msra.mxu0 0
      %1047 = vmatprep.subr.bf16.mxu0 0
      %1048 = vmatpush1.bf16.xpose.msra.mxu0 0
      %1049 = vmatprep.subr.bf16.mxu0 0
      %1050 = vmatpush1.bf16.xpose.msra.mxu0 0
      %1051 = vmatprep.subr.bf16.mxu0 0
      %1052 = vmatpush1.bf16.xpose.msra.mxu0 0
      %1053 = vmatprep.subr.bf16.mxu0 0
      %1054 = vmatpush1.bf16.xpose.msra.mxu0 0
      %1055 = vmatprep.subr.bf16.mxu0 0
      %1056 = vmatpush1.bf16.xpose.msra.mxu0 %v1039
      %1057 = vmatprep.subr.bf16.mxu0 0
      %1058 = vmatpush2.bf16.xpose.msra.mxu0 0
      %1059 = vmatprep.subr.bf16.mxu0 0
      %1060 = vmatpush2.bf16.xpose.msra.mxu0 0
      %1061 = vmatprep.subr.bf16.mxu0 0
      %1062 = vmatpush2.bf16.xpose.msra.mxu0 0
      %1063 = vmatprep.subr.bf16.mxu0 0
      %1064 = vmatpush2.bf16.xpose.msra.mxu0 0
      %1065 = vmatprep.subr.bf16.mxu0 0
      %1066 = vmatpush2.bf16.xpose.msra.mxu0 0
      %1067 = vmatprep.subr.bf16.mxu0 0
      %1068 = vmatpush2.bf16.xpose.msra.mxu0 0
      %1069 = vmatprep.subr.bf16.mxu0 0
      %1070 = vmatpush2.bf16.xpose.msra.mxu0 0
      %1071 = vmatprep.subr.bf16.mxu0 0
      %1072 = vmatpush2.bf16.xpose.msra.mxu0 0
      %1073 = vmatprep.mubr.bf16.mxu0 0
      %1074 = vmatmul.mubr.bf16.gmra.mxu0 %v1036
      %v1075 = vpop.f32.mrf.mxu0
      %v1076 = vadd.f32 0.0, %v1075
      %v1077 = vpop.f32.mrf.mxu0
      %v1078 = vpop.f32.mrf.mxu0
      %v1079 = vpop.f32.mrf.mxu0
      %1080 = vdwg.mxu0
      %v1082 = vsel %vm1034, %v1011, 0
      %v1085 = vsel %vm1034, %v1021, 0
      %1087 = vmatprep.subr.bf16.mxu0 0
      %1088 = vmatpush1.bf16.xpose.msra.mxu0 0
      %1089 = vmatprep.subr.bf16.mxu0 0
      %1090 = vmatpush1.bf16.xpose.msra.mxu0 0
      %1091 = vmatprep.subr.bf16.mxu0 0
      %1092 = vmatpush1.bf16.xpose.msra.mxu0 0
      %1093 = vmatprep.subr.bf16.mxu0 0
      %1094 = vmatpush1.bf16.xpose.msra.mxu0 0
      %1095 = vmatprep.subr.bf16.mxu0 0
      %1096 = vmatpush1.bf16.xpose.msra.mxu0 0
      %1097 = vmatprep.subr.bf16.mxu0 0
      %1098 = vmatpush1.bf16.xpose.msra.mxu0 0
      %1099 = vmatprep.subr.bf16.mxu0 0
      %1100 = vmatpush1.bf16.xpose.msra.mxu0 0
      %1101 = vmatprep.subr.bf16.mxu0 0
      %1102 = vmatpush1.bf16.xpose.msra.mxu0 %v1085
      %1103 = vmatprep.subr.bf16.mxu0 0
      %1104 = vmatpush2.bf16.xpose.msra.mxu0 0
      %1105 = vmatprep.subr.bf16.mxu0 0
      %1106 = vmatpush2.bf16.xpose.msra.mxu0 0
      %1107 = vmatprep.subr.bf16.mxu0 0
      %1108 = vmatpush2.bf16.xpose.msra.mxu0 0
      %1109 = vmatprep.subr.bf16.mxu0 0
      %1110 = vmatpush2.bf16.xpose.msra.mxu0 0
      %1111 = vmatprep.subr.bf16.mxu0 0
      %1112 = vmatpush2.bf16.xpose.msra.mxu0 0
      %1113 = vmatprep.subr.bf16.mxu0 0
      %1114 = vmatpush2.bf16.xpose.msra.mxu0 0
      %1115 = vmatprep.subr.bf16.mxu0 0
      %1116 = vmatpush2.bf16.xpose.msra.mxu0 0
      %1117 = vmatprep.subr.bf16.mxu0 0
      %1118 = vmatpush2.bf16.xpose.msra.mxu0 0
      %1119 = vmatprep.mubr.bf16.mxu0 0
      %1120 = vmatmul.mubr.bf16.gmra.mxu0 %v1082
      %v1121 = vpop.f32.mrf.mxu0
      %v1122 = vadd.f32 0.0, %v1121
      %v1123 = vpop.f32.mrf.mxu0
      %v1124 = vpop.f32.mrf.mxu0
      %v1125 = vpop.f32.mrf.mxu0
      %1126 = vdwg.mxu0
      %v1128 = vsel %vm1034, %v1012, 0
      %v1131 = vsel %vm1034, %v1022, 0
      %1133 = vmatprep.subr.bf16.mxu0 0
      %1134 = vmatpush1.bf16.xpose.msra.mxu0 0
      %1135 = vmatprep.subr.bf16.mxu0 0
      %1136 = vmatpush1.bf16.xpose.msra.mxu0 0
      %1137 = vmatprep.subr.bf16.mxu0 0
      %1138 = vmatpush1.bf16.xpose.msra.mxu0 0
      %1139 = vmatprep.subr.bf16.mxu0 0
      %1140 = vmatpush1.bf16.xpose.msra.mxu0 0
      %1141 = vmatprep.subr.bf16.mxu0 0
      %1142 = vmatpush1.bf16.xpose.msra.mxu0 0
      %1143 = vmatprep.subr.bf16.mxu0 0
      %1144 = vmatpush1.bf16.xpose.msra.mxu0 0
      %1145 = vmatprep.subr.bf16.mxu0 0
      %1146 = vmatpush1.bf16.xpose.msra.mxu0 0
      %1147 = vmatprep.subr.bf16.mxu0 0
      %1148 = vmatpush1.bf16.xpose.msra.mxu0 %v1131
      %1149 = vmatprep.subr.bf16.mxu0 0
      %1150 = vmatpush2.bf16.xpose.msra.mxu0 0
      %1151 = vmatprep.subr.bf16.mxu0 0
      %1152 = vmatpush2.bf16.xpose.msra.mxu0 0
      %1153 = vmatprep.subr.bf16.mxu0 0
      %1154 = vmatpush2.bf16.xpose.msra.mxu0 0
      %1155 = vmatprep.subr.bf16.mxu0 0
      %1156 = vmatpush2.bf16.xpose.msra.mxu0 0
      %1157 = vmatprep.subr.bf16.mxu0 0
      %1158 = vmatpush2.bf16.xpose.msra.mxu0 0
      %1159 = vmatprep.subr.bf16.mxu0 0
      %1160 = vmatpush2.bf16.xpose.msra.mxu0 0
      %1161 = vmatprep.subr.bf16.mxu0 0
      %1162 = vmatpush2.bf16.xpose.msra.mxu0 0
      %1163 = vmatprep.subr.bf16.mxu0 0
      %1164 = vmatpush2.bf16.xpose.msra.mxu0 0
      %1165 = vmatprep.mubr.bf16.mxu0 0
      %1166 = vmatmul.mubr.bf16.gmra.mxu0 %v1128
      %v1167 = vpop.f32.mrf.mxu0
      %v1168 = vadd.f32 0.0, %v1167
      %v1169 = vpop.f32.mrf.mxu0
      %v1170 = vpop.f32.mrf.mxu0
      %v1171 = vpop.f32.mrf.mxu0
      %1172 = vdwg.mxu0
      %v1174 = vsel %vm1034, %v1013, 0
      %v1177 = vsel %vm1034, %v1023, 0
      %1179 = vmatprep.subr.bf16.mxu0 0
      %1180 = vmatpush1.bf16.xpose.msra.mxu0 0
      %1181 = vmatprep.subr.bf16.mxu0 0
      %1182 = vmatpush1.bf16.xpose.msra.mxu0 0
      %1183 = vmatprep.subr.bf16.mxu0 0
      %1184 = vmatpush1.bf16.xpose.msra.mxu0 0
      %1185 = vmatprep.subr.bf16.mxu0 0
      %1186 = vmatpush1.bf16.xpose.msra.mxu0 0
      %1187 = vmatprep.subr.bf16.mxu0 0
      %1188 = vmatpush1.bf16.xpose.msra.mxu0 0
      %1189 = vmatprep.subr.bf16.mxu0 0
      %1190 = vmatpush1.bf16.xpose.msra.mxu0 0
      %1191 = vmatprep.subr.bf16.mxu0 0
      %1192 = vmatpush1.bf16.xpose.msra.mxu0 0
      %1193 = vmatprep.subr.bf16.mxu0 0
      %1194 = vmatpush1.bf16.xpose.msra.mxu0 %v1177
      %1195 = vmatprep.subr.bf16.mxu0 0
      %1196 = vmatpush2.bf16.xpose.msra.mxu0 0
      %1197 = vmatprep.subr.bf16.mxu0 0
      %1198 = vmatpush2.bf16.xpose.msra.mxu0 0
      %1199 = vmatprep.subr.bf16.mxu0 0
      %1200 = vmatpush2.bf16.xpose.msra.mxu0 0
      %1201 = vmatprep.subr.bf16.mxu0 0
      %1202 = vmatpush2.bf16.xpose.msra.mxu0 0
      %1203 = vmatprep.subr.bf16.mxu0 0
      %1204 = vmatpush2.bf16.xpose.msra.mxu0 0
      %1205 = vmatprep.subr.bf16.mxu0 0
      %1206 = vmatpush2.bf16.xpose.msra.mxu0 0
      %1207 = vmatprep.subr.bf16.mxu0 0
      %1208 = vmatpush2.bf16.xpose.msra.mxu0 0
      %1209 = vmatprep.subr.bf16.mxu0 0
      %1210 = vmatpush2.bf16.xpose.msra.mxu0 0
      %1211 = vmatprep.mubr.bf16.mxu0 0
      %1212 = vmatmul.mubr.bf16.gmra.mxu0 %v1174
      %v1213 = vpop.f32.mrf.mxu0
      %v1214 = vadd.f32 0.0, %v1213
      %v1215 = vpop.f32.mrf.mxu0
      %v1216 = vpop.f32.mrf.mxu0
      %v1217 = vpop.f32.mrf.mxu0
      %1218 = vdwg.mxu0
      %vm1219 = vcmask 27648
      %v1220 = vsel %vm1219, %v1076, -inf
      %1221 = vmax.xlane.f32.xlu0 %v1220
      %v1222 = vpop.xlane.xlu0 %1221
      %v1223 = vsel %vm1219, %v1122, -inf
      %1224 = vmax.xlane.f32.xlu0 %v1223
      %v1225 = vpop.xlane.xlu0 %1224
      %v1226 = vsel %vm1219, %v1168, -inf
      %1227 = vmax.xlane.f32.xlu0 %v1226
      %v1228 = vpop.xlane.xlu0 %1227
      %v1229 = vsel %vm1219, %v1214, -inf
      %1230 = vmax.xlane.f32.xlu0 %v1229
      %v1231 = vpop.xlane.xlu0 %1230
      %v1232 = vsub.f32 %v1076, %v1222
      %v1233 = vsub.f32 %v1122, %v1225
      %v1234 = vsub.f32 %v1168, %v1228
      %v1235 = vsub.f32 %v1214, %v1231
      %v1236 = vmul.f32 %v1232, 1.442695
      %v1237 = vpow.pop %v1236
      %v1238 = vmul.f32 %v1233, 1.442695
      %v1239 = vpow.pop %v1238
      %v1240 = vmul.f32 %v1234, 1.442695
      %v1241 = vpow.pop %v1240
      %v1242 = vmul.f32 %v1235, 1.442695
      %v1243 = vpow.pop %v1242
      %v1244 = vsel %vm1219, %v1237, 0.0
      %1245 = vadd.xlane.f32.xlu0 %v1244
      %v1246 = vpop.xlane.xlu0 %1245
      %v1247 = vsel %vm1219, %v1239, 0.0
      %1248 = vadd.xlane.f32.xlu0 %v1247
      %v1249 = vpop.xlane.xlu0 %1248
      %v1250 = vsel %vm1219, %v1241, 0.0
      %1251 = vadd.xlane.f32.xlu0 %v1250
      %v1252 = vpop.xlane.xlu0 %1251
      %v1253 = vsel %vm1219, %v1243, 0.0
      %1254 = vadd.xlane.f32.xlu0 %v1253
      %v1255 = vpop.xlane.xlu0 %1254
      %v1256 = vrcp.pop %v1246
      %v1257 = vrcp.pop %v1249
      %v1258 = vrcp.pop %v1252
      %v1259 = vrcp.pop %v1255
      %v1260 = vmul.f32 %v1237, %v1256
      %v1261 = vmul.f32 %v1239, %v1257
      %v1262 = vmul.f32 %v1241, %v1258
      %v1263 = vmul.f32 %v1243, %v1259
      %v1264 = vpack.c.bf16 %v1260, %v1260
      %v1265 = vpack.c.bf16 %v1261, %v1261
      %v1266 = vpack.c.bf16 %v1262, %v1262
      %v1267 = vpack.c.bf16 %v1263, %v1263
      %vm1268 = vcmask 31744
      %v1270 = vsel %vm1268, %v1264, 0
      %vm1272 = vcmask 1041408
      %v1274 = vsel %vm1272, %v1030, 0
      %1276 = vmatprep.subr.bf16.mxu0 0
      %1277 = vmatpush1.bf16.msra.mxu0 0
      %1278 = vmatprep.subr.bf16.mxu0 0
      %1279 = vmatpush1.bf16.msra.mxu0 0
      %1280 = vmatprep.subr.bf16.mxu0 0
      %1281 = vmatpush1.bf16.msra.mxu0 0
      %1282 = vmatprep.subr.bf16.mxu0 0
      %1283 = vmatpush1.bf16.msra.mxu0 0
      %1284 = vmatprep.subr.bf16.mxu0 0
      %1285 = vmatpush1.bf16.msra.mxu0 0
      %1286 = vmatprep.subr.bf16.mxu0 0
      %1287 = vmatpush1.bf16.msra.mxu0 0
      %1288 = vmatprep.subr.bf16.mxu0 0
      %1289 = vmatpush1.bf16.msra.mxu0 0
      %1290 = vmatprep.subr.bf16.mxu0 0
      %1291 = vmatpush1.bf16.msra.mxu0 %v1274
      %1292 = vmatprep.subr.bf16.mxu0 0
      %1293 = vmatpush2.bf16.msra.mxu0 0
      %1294 = vmatprep.subr.bf16.mxu0 0
      %1295 = vmatpush2.bf16.msra.mxu0 0
      %1296 = vmatprep.subr.bf16.mxu0 0
      %1297 = vmatpush2.bf16.msra.mxu0 0
      %1298 = vmatprep.subr.bf16.mxu0 0
      %1299 = vmatpush2.bf16.msra.mxu0 0
      %1300 = vmatprep.subr.bf16.mxu0 0
      %1301 = vmatpush2.bf16.msra.mxu0 0
      %1302 = vmatprep.subr.bf16.mxu0 0
      %1303 = vmatpush2.bf16.msra.mxu0 0
      %1304 = vmatprep.subr.bf16.mxu0 0
      %1305 = vmatpush2.bf16.msra.mxu0 0
      %1306 = vmatprep.subr.bf16.mxu0 0
      %1307 = vmatpush2.bf16.msra.mxu0 0
      %1308 = vmatprep.mubr.bf16.mxu0 0
      %1309 = vmatmul.mubr.bf16.gmra.mxu0 %v1270
      %v1310 = vpop.f32.mrf.mxu0
      %v1311 = vadd.f32 0.0, %v1310
      %v1312 = vpop.f32.mrf.mxu0
      %v1313 = vpop.f32.mrf.mxu0
      %v1314 = vpop.f32.mrf.mxu0
      %1315 = vdwg.mxu0
      %v1317 = vsel %vm1268, %v1265, 0
      %v1320 = vsel %vm1272, %v1031, 0
      %1322 = vmatprep.subr.bf16.mxu0 0
      %1323 = vmatpush1.bf16.msra.mxu0 0
      %1324 = vmatprep.subr.bf16.mxu0 0
      %1325 = vmatpush1.bf16.msra.mxu0 0
      %1326 = vmatprep.subr.bf16.mxu0 0
      %1327 = vmatpush1.bf16.msra.mxu0 0
      %1328 = vmatprep.subr.bf16.mxu0 0
      %1329 = vmatpush1.bf16.msra.mxu0 0
      %1330 = vmatprep.subr.bf16.mxu0 0
      %1331 = vmatpush1.bf16.msra.mxu0 0
      %1332 = vmatprep.subr.bf16.mxu0 0
      %1333 = vmatpush1.bf16.msra.mxu0 0
      %1334 = vmatprep.subr.bf16.mxu0 0
      %1335 = vmatpush1.bf16.msra.mxu0 0
      %1336 = vmatprep.subr.bf16.mxu0 0
      %1337 = vmatpush1.bf16.msra.mxu0 %v1320
      %1338 = vmatprep.subr.bf16.mxu0 0
      %1339 = vmatpush2.bf16.msra.mxu0 0
      %1340 = vmatprep.subr.bf16.mxu0 0
      %1341 = vmatpush2.bf16.msra.mxu0 0
      %1342 = vmatprep.subr.bf16.mxu0 0
      %1343 = vmatpush2.bf16.msra.mxu0 0
      %1344 = vmatprep.subr.bf16.mxu0 0
      %1345 = vmatpush2.bf16.msra.mxu0 0
      %1346 = vmatprep.subr.bf16.mxu0 0
      %1347 = vmatpush2.bf16.msra.mxu0 0
      %1348 = vmatprep.subr.bf16.mxu0 0
      %1349 = vmatpush2.bf16.msra.mxu0 0
      %1350 = vmatprep.subr.bf16.mxu0 0
      %1351 = vmatpush2.bf16.msra.mxu0 0
      %1352 = vmatprep.subr.bf16.mxu0 0
      %1353 = vmatpush2.bf16.msra.mxu0 0
      %1354 = vmatprep.mubr.bf16.mxu0 0
      %1355 = vmatmul.mubr.bf16.gmra.mxu0 %v1317
      %v1356 = vpop.f32.mrf.mxu0
      %v1357 = vadd.f32 0.0, %v1356
      %v1358 = vpop.f32.mrf.mxu0
      %v1359 = vpop.f32.mrf.mxu0
      %v1360 = vpop.f32.mrf.mxu0
      %1361 = vdwg.mxu0
      %v1363 = vsel %vm1268, %v1266, 0
      %v1366 = vsel %vm1272, %v1032, 0
      %1368 = vmatprep.subr.bf16.mxu0 0
      %1369 = vmatpush1.bf16.msra.mxu0 0
      %1370 = vmatprep.subr.bf16.mxu0 0
      %1371 = vmatpush1.bf16.msra.mxu0 0
      %1372 = vmatprep.subr.bf16.mxu0 0
      %1373 = vmatpush1.bf16.msra.mxu0 0
      %1374 = vmatprep.subr.bf16.mxu0 0
      %1375 = vmatpush1.bf16.msra.mxu0 0
      %1376 = vmatprep.subr.bf16.mxu0 0
      %1377 = vmatpush1.bf16.msra.mxu0 0
      %1378 = vmatprep.subr.bf16.mxu0 0
      %1379 = vmatpush1.bf16.msra.mxu0 0
      %1380 = vmatprep.subr.bf16.mxu0 0
      %1381 = vmatpush1.bf16.msra.mxu0 0
      %1382 = vmatprep.subr.bf16.mxu0 0
      %1383 = vmatpush1.bf16.msra.mxu0 %v1366
      %1384 = vmatprep.subr.bf16.mxu0 0
      %1385 = vmatpush2.bf16.msra.mxu0 0
      %1386 = vmatprep.subr.bf16.mxu0 0
      %1387 = vmatpush2.bf16.msra.mxu0 0
      %1388 = vmatprep.subr.bf16.mxu0 0
      %1389 = vmatpush2.bf16.msra.mxu0 0
      %1390 = vmatprep.subr.bf16.mxu0 0
      %1391 = vmatpush2.bf16.msra.mxu0 0
      %1392 = vmatprep.subr.bf16.mxu0 0
      %1393 = vmatpush2.bf16.msra.mxu0 0
      %1394 = vmatprep.subr.bf16.mxu0 0
      %1395 = vmatpush2.bf16.msra.mxu0 0
      %1396 = vmatprep.subr.bf16.mxu0 0
      %1397 = vmatpush2.bf16.msra.mxu0 0
      %1398 = vmatprep.subr.bf16.mxu0 0
      %1399 = vmatpush2.bf16.msra.mxu0 0
      %1400 = vmatprep.mubr.bf16.mxu0 0
      %1401 = vmatmul.mubr.bf16.gmra.mxu0 %v1363
      %v1402 = vpop.f32.mrf.mxu0
      %v1403 = vadd.f32 0.0, %v1402
      %v1404 = vpop.f32.mrf.mxu0
      %v1405 = vpop.f32.mrf.mxu0
      %v1406 = vpop.f32.mrf.mxu0
      %1407 = vdwg.mxu0
      %v1409 = vsel %vm1268, %v1267, 0
      %v1412 = vsel %vm1272, %v1033, 0
      %1414 = vmatprep.subr.bf16.mxu0 0
      %1415 = vmatpush1.bf16.msra.mxu0 0
      %1416 = vmatprep.subr.bf16.mxu0 0
      %1417 = vmatpush1.bf16.msra.mxu0 0
      %1418 = vmatprep.subr.bf16.mxu0 0
      %1419 = vmatpush1.bf16.msra.mxu0 0
      %1420 = vmatprep.subr.bf16.mxu0 0
      %1421 = vmatpush1.bf16.msra.mxu0 0
      %1422 = vmatprep.subr.bf16.mxu0 0
      %1423 = vmatpush1.bf16.msra.mxu0 0
      %1424 = vmatprep.subr.bf16.mxu0 0
      %1425 = vmatpush1.bf16.msra.mxu0 0
      %1426 = vmatprep.subr.bf16.mxu0 0
      %1427 = vmatpush1.bf16.msra.mxu0 0
      %1428 = vmatprep.subr.bf16.mxu0 0
      %1429 = vmatpush1.bf16.msra.mxu0 %v1412
      %1430 = vmatprep.subr.bf16.mxu0 0
      %1431 = vmatpush2.bf16.msra.mxu0 0
      %1432 = vmatprep.subr.bf16.mxu0 0
      %1433 = vmatpush2.bf16.msra.mxu0 0
      %1434 = vmatprep.subr.bf16.mxu0 0
      %1435 = vmatpush2.bf16.msra.mxu0 0
      %1436 = vmatprep.subr.bf16.mxu0 0
      %1437 = vmatpush2.bf16.msra.mxu0 0
      %1438 = vmatprep.subr.bf16.mxu0 0
      %1439 = vmatpush2.bf16.msra.mxu0 0
      %1440 = vmatprep.subr.bf16.mxu0 0
      %1441 = vmatpush2.bf16.msra.mxu0 0
      %1442 = vmatprep.subr.bf16.mxu0 0
      %1443 = vmatpush2.bf16.msra.mxu0 0
      %1444 = vmatprep.subr.bf16.mxu0 0
      %1445 = vmatpush2.bf16.msra.mxu0 0
      %1446 = vmatprep.mubr.bf16.mxu0 0
      %1447 = vmatmul.mubr.bf16.gmra.mxu0 %v1409
      %v1448 = vpop.f32.mrf.mxu0
      %v1449 = vadd.f32 0.0, %v1448
      %v1450 = vpop.f32.mrf.mxu0
      %v1451 = vpop.f32.mrf.mxu0
      %v1452 = vpop.f32.mrf.mxu0
      %1453 = vdwg.mxu0
      %v1458 = vcombine.low %v1311, %v1357
      %v1459 = vcombine.low %v1403, %v1449
      %v1462 = vpack.c.bf16 %v1459, %v1458
      %v1464 = vsel %vm1034, %v1462, 0
      %vm1466 = vcmask 1043456
      %v1468 = vsel %vm1466, %v803, 0
      %1470 = vmatprep.subr.bf16.mxu0 0
      %1471 = vmatpush1.bf16.msra.mxu0 0
      %1472 = vmatprep.subr.bf16.mxu0 0
      %1473 = vmatpush1.bf16.msra.mxu0 0
      %1474 = vmatprep.subr.bf16.mxu0 0
      %1475 = vmatpush1.bf16.msra.mxu0 0
      %1476 = vmatprep.subr.bf16.mxu0 0
      %1477 = vmatpush1.bf16.msra.mxu0 0
      %1478 = vmatprep.subr.bf16.mxu0 0
      %1479 = vmatpush1.bf16.msra.mxu0 0
      %1480 = vmatprep.subr.bf16.mxu0 0
      %1481 = vmatpush1.bf16.msra.mxu0 0
      %1482 = vmatprep.subr.bf16.mxu0 0
      %1483 = vmatpush1.bf16.msra.mxu0 0
      %1484 = vmatprep.subr.bf16.mxu0 0
      %1485 = vmatpush1.bf16.msra.mxu0 %v1468
      %1486 = vmatprep.subr.bf16.mxu0 0
      %1487 = vmatpush2.bf16.msra.mxu0 0
      %1488 = vmatprep.subr.bf16.mxu0 0
      %1489 = vmatpush2.bf16.msra.mxu0 0
      %1490 = vmatprep.subr.bf16.mxu0 0
      %1491 = vmatpush2.bf16.msra.mxu0 0
      %1492 = vmatprep.subr.bf16.mxu0 0
      %1493 = vmatpush2.bf16.msra.mxu0 0
      %1494 = vmatprep.subr.bf16.mxu0 0
      %1495 = vmatpush2.bf16.msra.mxu0 0
      %1496 = vmatprep.subr.bf16.mxu0 0
      %1497 = vmatpush2.bf16.msra.mxu0 0
      %1498 = vmatprep.subr.bf16.mxu0 0
      %1499 = vmatpush2.bf16.msra.mxu0 0
      %1500 = vmatprep.subr.bf16.mxu0 0
      %1501 = vmatpush2.bf16.msra.mxu0 0
      %1502 = vmatprep.mubr.bf16.mxu0 0
      %1503 = vmatmul.mubr.bf16.gmra.mxu0 %v1464
      %v1504 = vpop.f32.mrf.mxu0
      %v1505 = vadd.f32 0.0, %v1504
      %v1506 = vpop.f32.mrf.mxu0
      %v1507 = vpop.f32.mrf.mxu0
      %v1508 = vadd.f32 0.0, %v1507
      %v1509 = vpop.f32.mrf.mxu0
      %1510 = vdwg.mxu0
      %v1511 = vadd.f32 %v1003, %v1505
      %v1512 = vadd.f32 %v1003, %v1508
      %1514 = vrot.lane.b32.xlu0 %v1010, 120
      %v1515 = vpop.permute.xlu0 %1514
      %1517 = vrot.lane.b32.xlu0 %v1020, 120
      %v1518 = vpop.permute.xlu0 %1517
      %v1520 = vsel %vm1034, %v1515, 0
      %v1523 = vsel %vm1034, %v1518, 0
      %1525 = vmatprep.subr.bf16.mxu0 0
      %1526 = vmatpush1.bf16.xpose.msra.mxu0 0
      %1527 = vmatprep.subr.bf16.mxu0 0
      %1528 = vmatpush1.bf16.xpose.msra.mxu0 0
      %1529 = vmatprep.subr.bf16.mxu0 0
      %1530 = vmatpush1.bf16.xpose.msra.mxu0 0
      %1531 = vmatprep.subr.bf16.mxu0 0
      %1532 = vmatpush1.bf16.xpose.msra.mxu0 0
      %1533 = vmatprep.subr.bf16.mxu0 0
      %1534 = vmatpush1.bf16.xpose.msra.mxu0 0
      %1535 = vmatprep.subr.bf16.mxu0 0
      %1536 = vmatpush1.bf16.xpose.msra.mxu0 0
      %1537 = vmatprep.subr.bf16.mxu0 0
      %1538 = vmatpush1.bf16.xpose.msra.mxu0 0
      %1539 = vmatprep.subr.bf16.mxu0 0
      %1540 = vmatpush1.bf16.xpose.msra.mxu0 %v1523
      %1541 = vmatprep.subr.bf16.mxu0 0
      %1542 = vmatpush2.bf16.xpose.msra.mxu0 0
      %1543 = vmatprep.subr.bf16.mxu0 0
      %1544 = vmatpush2.bf16.xpose.msra.mxu0 0
      %1545 = vmatprep.subr.bf16.mxu0 0
      %1546 = vmatpush2.bf16.xpose.msra.mxu0 0
      %1547 = vmatprep.subr.bf16.mxu0 0
      %1548 = vmatpush2.bf16.xpose.msra.mxu0 0
      %1549 = vmatprep.subr.bf16.mxu0 0
      %1550 = vmatpush2.bf16.xpose.msra.mxu0 0
      %1551 = vmatprep.subr.bf16.mxu0 0
      %1552 = vmatpush2.bf16.xpose.msra.mxu0 0
      %1553 = vmatprep.subr.bf16.mxu0 0
      %1554 = vmatpush2.bf16.xpose.msra.mxu0 0
      %1555 = vmatprep.subr.bf16.mxu0 0
      %1556 = vmatpush2.bf16.xpose.msra.mxu0 0
      %1557 = vmatprep.mubr.bf16.mxu0 0
      %1558 = vmatmul.mubr.bf16.gmra.mxu0 %v1520
      %v1559 = vpop.f32.mrf.mxu0
      %v1560 = vadd.f32 0.0, %v1559
      %v1561 = vpop.f32.mrf.mxu0
      %v1562 = vpop.f32.mrf.mxu0
      %v1563 = vpop.f32.mrf.mxu0
      %1564 = vdwg.mxu0
      %1566 = vrot.lane.b32.xlu0 %v1011, 120
      %v1567 = vpop.permute.xlu0 %1566
      %1569 = vrot.lane.b32.xlu0 %v1021, 120
      %v1570 = vpop.permute.xlu0 %1569
      %v1572 = vsel %vm1034, %v1567, 0
      %v1575 = vsel %vm1034, %v1570, 0
      %1577 = vmatprep.subr.bf16.mxu0 0
      %1578 = vmatpush1.bf16.xpose.msra.mxu0 0
      %1579 = vmatprep.subr.bf16.mxu0 0
      %1580 = vmatpush1.bf16.xpose.msra.mxu0 0
      %1581 = vmatprep.subr.bf16.mxu0 0
      %1582 = vmatpush1.bf16.xpose.msra.mxu0 0
      %1583 = vmatprep.subr.bf16.mxu0 0
      %1584 = vmatpush1.bf16.xpose.msra.mxu0 0
      %1585 = vmatprep.subr.bf16.mxu0 0
      %1586 = vmatpush1.bf16.xpose.msra.mxu0 0
      %1587 = vmatprep.subr.bf16.mxu0 0
      %1588 = vmatpush1.bf16.xpose.msra.mxu0 0
      %1589 = vmatprep.subr.bf16.mxu0 0
      %1590 = vmatpush1.bf16.xpose.msra.mxu0 0
      %1591 = vmatprep.subr.bf16.mxu0 0
      %1592 = vmatpush1.bf16.xpose.msra.mxu0 %v1575
      %1593 = vmatprep.subr.bf16.mxu0 0
      %1594 = vmatpush2.bf16.xpose.msra.mxu0 0
      %1595 = vmatprep.subr.bf16.mxu0 0
      %1596 = vmatpush2.bf16.xpose.msra.mxu0 0
      %1597 = vmatprep.subr.bf16.mxu0 0
      %1598 = vmatpush2.bf16.xpose.msra.mxu0 0
      %1599 = vmatprep.subr.bf16.mxu0 0
      %1600 = vmatpush2.bf16.xpose.msra.mxu0 0
      %1601 = vmatprep.subr.bf16.mxu0 0
      %1602 = vmatpush2.bf16.xpose.msra.mxu0 0
      %1603 = vmatprep.subr.bf16.mxu0 0
      %1604 = vmatpush2.bf16.xpose.msra.mxu0 0
      %1605 = vmatprep.subr.bf16.mxu0 0
      %1606 = vmatpush2.bf16.xpose.msra.mxu0 0
      %1607 = vmatprep.subr.bf16.mxu0 0
      %1608 = vmatpush2.bf16.xpose.msra.mxu0 0
      %1609 = vmatprep.mubr.bf16.mxu0 0
      %1610 = vmatmul.mubr.bf16.gmra.mxu0 %v1572
      %v1611 = vpop.f32.mrf.mxu0
      %v1612 = vadd.f32 0.0, %v1611
      %v1613 = vpop.f32.mrf.mxu0
      %v1614 = vpop.f32.mrf.mxu0
      %v1615 = vpop.f32.mrf.mxu0
      %1616 = vdwg.mxu0
      %1618 = vrot.lane.b32.xlu0 %v1012, 120
      %v1619 = vpop.permute.xlu0 %1618
      %1621 = vrot.lane.b32.xlu0 %v1022, 120
      %v1622 = vpop.permute.xlu0 %1621
      %v1624 = vsel %vm1034, %v1619, 0
      %v1627 = vsel %vm1034, %v1622, 0
      %1629 = vmatprep.subr.bf16.mxu0 0
      %1630 = vmatpush1.bf16.xpose.msra.mxu0 0
      %1631 = vmatprep.subr.bf16.mxu0 0
      %1632 = vmatpush1.bf16.xpose.msra.mxu0 0
      %1633 = vmatprep.subr.bf16.mxu0 0
      %1634 = vmatpush1.bf16.xpose.msra.mxu0 0
      %1635 = vmatprep.subr.bf16.mxu0 0
      %1636 = vmatpush1.bf16.xpose.msra.mxu0 0
      %1637 = vmatprep.subr.bf16.mxu0 0
      %1638 = vmatpush1.bf16.xpose.msra.mxu0 0
      %1639 = vmatprep.subr.bf16.mxu0 0
      %1640 = vmatpush1.bf16.xpose.msra.mxu0 0
      %1641 = vmatprep.subr.bf16.mxu0 0
      %1642 = vmatpush1.bf16.xpose.msra.mxu0 0
      %1643 = vmatprep.subr.bf16.mxu0 0
      %1644 = vmatpush1.bf16.xpose.msra.mxu0 %v1627
      %1645 = vmatprep.subr.bf16.mxu0 0
      %1646 = vmatpush2.bf16.xpose.msra.mxu0 0
      %1647 = vmatprep.subr.bf16.mxu0 0
      %1648 = vmatpush2.bf16.xpose.msra.mxu0 0
      %1649 = vmatprep.subr.bf16.mxu0 0
      %1650 = vmatpush2.bf16.xpose.msra.mxu0 0
      %1651 = vmatprep.subr.bf16.mxu0 0
      %1652 = vmatpush2.bf16.xpose.msra.mxu0 0
      %1653 = vmatprep.subr.bf16.mxu0 0
      %1654 = vmatpush2.bf16.xpose.msra.mxu0 0
      %1655 = vmatprep.subr.bf16.mxu0 0
      %1656 = vmatpush2.bf16.xpose.msra.mxu0 0
      %1657 = vmatprep.subr.bf16.mxu0 0
      %1658 = vmatpush2.bf16.xpose.msra.mxu0 0
      %1659 = vmatprep.subr.bf16.mxu0 0
      %1660 = vmatpush2.bf16.xpose.msra.mxu0 0
      %1661 = vmatprep.mubr.bf16.mxu0 0
      %1662 = vmatmul.mubr.bf16.gmra.mxu0 %v1624
      %v1663 = vpop.f32.mrf.mxu0
      %v1664 = vadd.f32 0.0, %v1663
      %v1665 = vpop.f32.mrf.mxu0
      %v1666 = vpop.f32.mrf.mxu0
      %v1667 = vpop.f32.mrf.mxu0
      %1668 = vdwg.mxu0
      %1670 = vrot.lane.b32.xlu0 %v1013, 120
      %v1671 = vpop.permute.xlu0 %1670
      %1673 = vrot.lane.b32.xlu0 %v1023, 120
      %v1674 = vpop.permute.xlu0 %1673
      %v1676 = vsel %vm1034, %v1671, 0
      %v1679 = vsel %vm1034, %v1674, 0
      %1681 = vmatprep.subr.bf16.mxu0 0
      %1682 = vmatpush1.bf16.xpose.msra.mxu0 0
      %1683 = vmatprep.subr.bf16.mxu0 0
      %1684 = vmatpush1.bf16.xpose.msra.mxu0 0
      %1685 = vmatprep.subr.bf16.mxu0 0
      %1686 = vmatpush1.bf16.xpose.msra.mxu0 0
      %1687 = vmatprep.subr.bf16.mxu0 0
      %1688 = vmatpush1.bf16.xpose.msra.mxu0 0
      %1689 = vmatprep.subr.bf16.mxu0 0
      %1690 = vmatpush1.bf16.xpose.msra.mxu0 0
      %1691 = vmatprep.subr.bf16.mxu0 0
      %1692 = vmatpush1.bf16.xpose.msra.mxu0 0
      %1693 = vmatprep.subr.bf16.mxu0 0
      %1694 = vmatpush1.bf16.xpose.msra.mxu0 0
      %1695 = vmatprep.subr.bf16.mxu0 0
      %1696 = vmatpush1.bf16.xpose.msra.mxu0 %v1679
      %1697 = vmatprep.subr.bf16.mxu0 0
      %1698 = vmatpush2.bf16.xpose.msra.mxu0 0
      %1699 = vmatprep.subr.bf16.mxu0 0
      %1700 = vmatpush2.bf16.xpose.msra.mxu0 0
      %1701 = vmatprep.subr.bf16.mxu0 0
      %1702 = vmatpush2.bf16.xpose.msra.mxu0 0
      %1703 = vmatprep.subr.bf16.mxu0 0
      %1704 = vmatpush2.bf16.xpose.msra.mxu0 0
      %1705 = vmatprep.subr.bf16.mxu0 0
      %1706 = vmatpush2.bf16.xpose.msra.mxu0 0
      %1707 = vmatprep.subr.bf16.mxu0 0
      %1708 = vmatpush2.bf16.xpose.msra.mxu0 0
      %1709 = vmatprep.subr.bf16.mxu0 0
      %1710 = vmatpush2.bf16.xpose.msra.mxu0 0
      %1711 = vmatprep.subr.bf16.mxu0 0
      %1712 = vmatpush2.bf16.xpose.msra.mxu0 0
      %1713 = vmatprep.mubr.bf16.mxu0 0
      %1714 = vmatmul.mubr.bf16.gmra.mxu0 %v1676
      %v1715 = vpop.f32.mrf.mxu0
      %v1716 = vadd.f32 0.0, %v1715
      %v1717 = vpop.f32.mrf.mxu0
      %v1718 = vpop.f32.mrf.mxu0
      %v1719 = vpop.f32.mrf.mxu0
      %1720 = vdwg.mxu0
      %v1721 = vsel %vm1219, %v1560, -inf
      %1722 = vmax.xlane.f32.xlu0 %v1721
      %v1723 = vpop.xlane.xlu0 %1722
      %v1724 = vsel %vm1219, %v1612, -inf
      %1725 = vmax.xlane.f32.xlu0 %v1724
      %v1726 = vpop.xlane.xlu0 %1725
      %v1727 = vsel %vm1219, %v1664, -inf
      %1728 = vmax.xlane.f32.xlu0 %v1727
      %v1729 = vpop.xlane.xlu0 %1728
      %v1730 = vsel %vm1219, %v1716, -inf
      %1731 = vmax.xlane.f32.xlu0 %v1730
      %v1732 = vpop.xlane.xlu0 %1731
      %v1733 = vsub.f32 %v1560, %v1723
      %v1734 = vsub.f32 %v1612, %v1726
      %v1735 = vsub.f32 %v1664, %v1729
      %v1736 = vsub.f32 %v1716, %v1732
      %v1737 = vmul.f32 %v1733, 1.442695
      %v1738 = vpow.pop %v1737
      %v1739 = vmul.f32 %v1734, 1.442695
      %v1740 = vpow.pop %v1739
      %v1741 = vmul.f32 %v1735, 1.442695
      %v1742 = vpow.pop %v1741
      %v1743 = vmul.f32 %v1736, 1.442695
      %v1744 = vpow.pop %v1743
      %v1745 = vsel %vm1219, %v1738, 0.0
      %1746 = vadd.xlane.f32.xlu0 %v1745
      %v1747 = vpop.xlane.xlu0 %1746
      %v1748 = vsel %vm1219, %v1740, 0.0
      %1749 = vadd.xlane.f32.xlu0 %v1748
      %v1750 = vpop.xlane.xlu0 %1749
      %v1751 = vsel %vm1219, %v1742, 0.0
      %1752 = vadd.xlane.f32.xlu0 %v1751
      %v1753 = vpop.xlane.xlu0 %1752
      %v1754 = vsel %vm1219, %v1744, 0.0
      %1755 = vadd.xlane.f32.xlu0 %v1754
      %v1756 = vpop.xlane.xlu0 %1755
      %v1757 = vrcp.pop %v1747
      %v1758 = vrcp.pop %v1750
      %v1759 = vrcp.pop %v1753
      %v1760 = vrcp.pop %v1756
      %v1761 = vmul.f32 %v1738, %v1757
      %v1762 = vmul.f32 %v1740, %v1758
      %v1763 = vmul.f32 %v1742, %v1759
      %v1764 = vmul.f32 %v1744, %v1760
      %v1765 = vpack.c.bf16 %v1761, %v1761
      %v1766 = vpack.c.bf16 %v1762, %v1762
      %v1767 = vpack.c.bf16 %v1763, %v1763
      %v1768 = vpack.c.bf16 %v1764, %v1764
      %1770 = vrot.lane.b32.xlu0 %v1030, 120
      %v1771 = vpop.permute.xlu0 %1770
      %v1773 = vsel %vm1268, %v1765, 0
      %v1776 = vsel %vm1272, %v1771, 0
      %1778 = vmatprep.subr.bf16.mxu0 0
      %1779 = vmatpush1.bf16.msra.mxu0 0
      %1780 = vmatprep.subr.bf16.mxu0 0
      %1781 = vmatpush1.bf16.msra.mxu0 0
      %1782 = vmatprep.subr.bf16.mxu0 0
      %1783 = vmatpush1.bf16.msra.mxu0 0
      %1784 = vmatprep.subr.bf16.mxu0 0
      %1785 = vmatpush1.bf16.msra.mxu0 0
      %1786 = vmatprep.subr.bf16.mxu0 0
      %1787 = vmatpush1.bf16.msra.mxu0 0
      %1788 = vmatprep.subr.bf16.mxu0 0
      %1789 = vmatpush1.bf16.msra.mxu0 0
      %1790 = vmatprep.subr.bf16.mxu0 0
      %1791 = vmatpush1.bf16.msra.mxu0 0
      %1792 = vmatprep.subr.bf16.mxu0 0
      %1793 = vmatpush1.bf16.msra.mxu0 %v1776
      %1794 = vmatprep.subr.bf16.mxu0 0
      %1795 = vmatpush2.bf16.msra.mxu0 0
      %1796 = vmatprep.subr.bf16.mxu0 0
      %1797 = vmatpush2.bf16.msra.mxu0 0
      %1798 = vmatprep.subr.bf16.mxu0 0
      %1799 = vmatpush2.bf16.msra.mxu0 0
      %1800 = vmatprep.subr.bf16.mxu0 0
      %1801 = vmatpush2.bf16.msra.mxu0 0
      %1802 = vmatprep.subr.bf16.mxu0 0
      %1803 = vmatpush2.bf16.msra.mxu0 0
      %1804 = vmatprep.subr.bf16.mxu0 0
      %1805 = vmatpush2.bf16.msra.mxu0 0
      %1806 = vmatprep.subr.bf16.mxu0 0
      %1807 = vmatpush2.bf16.msra.mxu0 0
      %1808 = vmatprep.subr.bf16.mxu0 0
      %1809 = vmatpush2.bf16.msra.mxu0 0
      %1810 = vmatprep.mubr.bf16.mxu0 0
      %1811 = vmatmul.mubr.bf16.gmra.mxu0 %v1773
      %v1812 = vpop.f32.mrf.mxu0
      %v1813 = vadd.f32 0.0, %v1812
      %v1814 = vpop.f32.mrf.mxu0
      %v1815 = vpop.f32.mrf.mxu0
      %v1816 = vpop.f32.mrf.mxu0
      %1817 = vdwg.mxu0
      %1819 = vrot.lane.b32.xlu0 %v1031, 120
      %v1820 = vpop.permute.xlu0 %1819
      %v1822 = vsel %vm1268, %v1766, 0
      %v1825 = vsel %vm1272, %v1820, 0
      %1827 = vmatprep.subr.bf16.mxu0 0
      %1828 = vmatpush1.bf16.msra.mxu0 0
      %1829 = vmatprep.subr.bf16.mxu0 0
      %1830 = vmatpush1.bf16.msra.mxu0 0
      %1831 = vmatprep.subr.bf16.mxu0 0
      %1832 = vmatpush1.bf16.msra.mxu0 0
      %1833 = vmatprep.subr.bf16.mxu0 0
      %1834 = vmatpush1.bf16.msra.mxu0 0
      %1835 = vmatprep.subr.bf16.mxu0 0
      %1836 = vmatpush1.bf16.msra.mxu0 0
      %1837 = vmatprep.subr.bf16.mxu0 0
      %1838 = vmatpush1.bf16.msra.mxu0 0
      %1839 = vmatprep.subr.bf16.mxu0 0
      %1840 = vmatpush1.bf16.msra.mxu0 0
      %1841 = vmatprep.subr.bf16.mxu0 0
      %1842 = vmatpush1.bf16.msra.mxu0 %v1825
      %1843 = vmatprep.subr.bf16.mxu0 0
      %1844 = vmatpush2.bf16.msra.mxu0 0
      %1845 = vmatprep.subr.bf16.mxu0 0
      %1846 = vmatpush2.bf16.msra.mxu0 0
      %1847 = vmatprep.subr.bf16.mxu0 0
      %1848 = vmatpush2.bf16.msra.mxu0 0
      %1849 = vmatprep.subr.bf16.mxu0 0
      %1850 = vmatpush2.bf16.msra.mxu0 0
      %1851 = vmatprep.subr.bf16.mxu0 0
      %1852 = vmatpush2.bf16.msra.mxu0 0
      %1853 = vmatprep.subr.bf16.mxu0 0
      %1854 = vmatpush2.bf16.msra.mxu0 0
      %1855 = vmatprep.subr.bf16.mxu0 0
      %1856 = vmatpush2.bf16.msra.mxu0 0
      %1857 = vmatprep.subr.bf16.mxu0 0
      %1858 = vmatpush2.bf16.msra.mxu0 0
      %1859 = vmatprep.mubr.bf16.mxu0 0
      %1860 = vmatmul.mubr.bf16.gmra.mxu0 %v1822
      %v1861 = vpop.f32.mrf.mxu0
      %v1862 = vadd.f32 0.0, %v1861
      %v1863 = vpop.f32.mrf.mxu0
      %v1864 = vpop.f32.mrf.mxu0
      %v1865 = vpop.f32.mrf.mxu0
      %1866 = vdwg.mxu0
      %1868 = vrot.lane.b32.xlu0 %v1032, 120
      %v1869 = vpop.permute.xlu0 %1868
      %v1871 = vsel %vm1268, %v1767, 0
      %v1874 = vsel %vm1272, %v1869, 0
      %1876 = vmatprep.subr.bf16.mxu0 0
      %1877 = vmatpush1.bf16.msra.mxu0 0
      %1878 = vmatprep.subr.bf16.mxu0 0
      %1879 = vmatpush1.bf16.msra.mxu0 0
      %1880 = vmatprep.subr.bf16.mxu0 0
      %1881 = vmatpush1.bf16.msra.mxu0 0
      %1882 = vmatprep.subr.bf16.mxu0 0
      %1883 = vmatpush1.bf16.msra.mxu0 0
      %1884 = vmatprep.subr.bf16.mxu0 0
      %1885 = vmatpush1.bf16.msra.mxu0 0
      %1886 = vmatprep.subr.bf16.mxu0 0
      %1887 = vmatpush1.bf16.msra.mxu0 0
      %1888 = vmatprep.subr.bf16.mxu0 0
      %1889 = vmatpush1.bf16.msra.mxu0 0
      %1890 = vmatprep.subr.bf16.mxu0 0
      %1891 = vmatpush1.bf16.msra.mxu0 %v1874
      %1892 = vmatprep.subr.bf16.mxu0 0
      %1893 = vmatpush2.bf16.msra.mxu0 0
      %1894 = vmatprep.subr.bf16.mxu0 0
      %1895 = vmatpush2.bf16.msra.mxu0 0
      %1896 = vmatprep.subr.bf16.mxu0 0
      %1897 = vmatpush2.bf16.msra.mxu0 0
      %1898 = vmatprep.subr.bf16.mxu0 0
      %1899 = vmatpush2.bf16.msra.mxu0 0
      %1900 = vmatprep.subr.bf16.mxu0 0
      %1901 = vmatpush2.bf16.msra.mxu0 0
      %1902 = vmatprep.subr.bf16.mxu0 0
      %1903 = vmatpush2.bf16.msra.mxu0 0
      %1904 = vmatprep.subr.bf16.mxu0 0
      %1905 = vmatpush2.bf16.msra.mxu0 0
      %1906 = vmatprep.subr.bf16.mxu0 0
      %1907 = vmatpush2.bf16.msra.mxu0 0
      %1908 = vmatprep.mubr.bf16.mxu0 0
      %1909 = vmatmul.mubr.bf16.gmra.mxu0 %v1871
      %v1910 = vpop.f32.mrf.mxu0
      %v1911 = vadd.f32 0.0, %v1910
      %v1912 = vpop.f32.mrf.mxu0
      %v1913 = vpop.f32.mrf.mxu0
      %v1914 = vpop.f32.mrf.mxu0
      %1915 = vdwg.mxu0
      %1917 = vrot.lane.b32.xlu0 %v1033, 120
      %v1918 = vpop.permute.xlu0 %1917
      %v1920 = vsel %vm1268, %v1768, 0
      %v1923 = vsel %vm1272, %v1918, 0
      %1925 = vmatprep.subr.bf16.mxu0 0
      %1926 = vmatpush1.bf16.msra.mxu0 0
      %1927 = vmatprep.subr.bf16.mxu0 0
      %1928 = vmatpush1.bf16.msra.mxu0 0
      %1929 = vmatprep.subr.bf16.mxu0 0
      %1930 = vmatpush1.bf16.msra.mxu0 0
      %1931 = vmatprep.subr.bf16.mxu0 0
      %1932 = vmatpush1.bf16.msra.mxu0 0
      %1933 = vmatprep.subr.bf16.mxu0 0
      %1934 = vmatpush1.bf16.msra.mxu0 0
      %1935 = vmatprep.subr.bf16.mxu0 0
      %1936 = vmatpush1.bf16.msra.mxu0 0
      %1937 = vmatprep.subr.bf16.mxu0 0
      %1938 = vmatpush1.bf16.msra.mxu0 0
      %1939 = vmatprep.subr.bf16.mxu0 0
      %1940 = vmatpush1.bf16.msra.mxu0 %v1923
      %1941 = vmatprep.subr.bf16.mxu0 0
      %1942 = vmatpush2.bf16.msra.mxu0 0
      %1943 = vmatprep.subr.bf16.mxu0 0
      %1944 = vmatpush2.bf16.msra.mxu0 0
      %1945 = vmatprep.subr.bf16.mxu0 0
      %1946 = vmatpush2.bf16.msra.mxu0 0
      %1947 = vmatprep.subr.bf16.mxu0 0
      %1948 = vmatpush2.bf16.msra.mxu0 0
      %1949 = vmatprep.subr.bf16.mxu0 0
      %1950 = vmatpush2.bf16.msra.mxu0 0
      %1951 = vmatprep.subr.bf16.mxu0 0
      %1952 = vmatpush2.bf16.msra.mxu0 0
      %1953 = vmatprep.subr.bf16.mxu0 0
      %1954 = vmatpush2.bf16.msra.mxu0 0
      %1955 = vmatprep.subr.bf16.mxu0 0
      %1956 = vmatpush2.bf16.msra.mxu0 0
      %1957 = vmatprep.mubr.bf16.mxu0 0
      %1958 = vmatmul.mubr.bf16.gmra.mxu0 %v1920
      %v1959 = vpop.f32.mrf.mxu0
      %v1960 = vadd.f32 0.0, %v1959
      %v1961 = vpop.f32.mrf.mxu0
      %v1962 = vpop.f32.mrf.mxu0
      %v1963 = vpop.f32.mrf.mxu0
      %1964 = vdwg.mxu0
      %v1969 = vcombine.low %v1813, %v1862
      %v1970 = vcombine.low %v1911, %v1960
      %v1973 = vpack.c.bf16 %v1970, %v1969
      %v1975 = vsel %vm1034, %v1973, 0
      %v1978 = vsel %vm1466, %v804, 0
      %1980 = vmatprep.subr.bf16.mxu0 0
      %1981 = vmatpush1.bf16.msra.mxu0 0
      %1982 = vmatprep.subr.bf16.mxu0 0
      %1983 = vmatpush1.bf16.msra.mxu0 0
      %1984 = vmatprep.subr.bf16.mxu0 0
      %1985 = vmatpush1.bf16.msra.mxu0 0
      %1986 = vmatprep.subr.bf16.mxu0 0
      %1987 = vmatpush1.bf16.msra.mxu0 0
      %1988 = vmatprep.subr.bf16.mxu0 0
      %1989 = vmatpush1.bf16.msra.mxu0 0
      %1990 = vmatprep.subr.bf16.mxu0 0
      %1991 = vmatpush1.bf16.msra.mxu0 0
      %1992 = vmatprep.subr.bf16.mxu0 0
      %1993 = vmatpush1.bf16.msra.mxu0 0
      %1994 = vmatprep.subr.bf16.mxu0 0
      %1995 = vmatpush1.bf16.msra.mxu0 %v1978
      %1996 = vmatprep.subr.bf16.mxu0 0
      %1997 = vmatpush2.bf16.msra.mxu0 0
      %1998 = vmatprep.subr.bf16.mxu0 0
      %1999 = vmatpush2.bf16.msra.mxu0 0
      %2000 = vmatprep.subr.bf16.mxu0 0
      %2001 = vmatpush2.bf16.msra.mxu0 0
      %2002 = vmatprep.subr.bf16.mxu0 0
      %2003 = vmatpush2.bf16.msra.mxu0 0
      %2004 = vmatprep.subr.bf16.mxu0 0
      %2005 = vmatpush2.bf16.msra.mxu0 0
      %2006 = vmatprep.subr.bf16.mxu0 0
      %2007 = vmatpush2.bf16.msra.mxu0 0
      %2008 = vmatprep.subr.bf16.mxu0 0
      %2009 = vmatpush2.bf16.msra.mxu0 0
      %2010 = vmatprep.subr.bf16.mxu0 0
      %2011 = vmatpush2.bf16.msra.mxu0 0
      %2012 = vmatprep.mubr.bf16.mxu0 0
      %2013 = vmatmul.mubr.bf16.gmra.mxu0 %v1975
      %v2014 = vpop.f32.mrf.mxu0
      %v2015 = vadd.f32 0.0, %v2014
      %v2016 = vpop.f32.mrf.mxu0
      %v2017 = vpop.f32.mrf.mxu0
      %v2018 = vadd.f32 0.0, %v2017
      %v2019 = vpop.f32.mrf.mxu0
      %2020 = vdwg.mxu0
      %v2021 = vadd.f32 %v1511, %v2015
      %v2022 = vadd.f32 %v1512, %v2018
      %2023 = vrot.lane.b32.xlu0 %v1010, 112
      %v2024 = vpop.permute.xlu0 %2023
      %2025 = vrot.lane.b32.xlu0 %v1020, 112
      %v2026 = vpop.permute.xlu0 %2025
      %v2028 = vsel %vm1034, %v2024, 0
      %v2031 = vsel %vm1034, %v2026, 0
      %2033 = vmatprep.subr.bf16.mxu0 0
      %2034 = vmatpush1.bf16.xpose.msra.mxu0 0
      %2035 = vmatprep.subr.bf16.mxu0 0
      %2036 = vmatpush1.bf16.xpose.msra.mxu0 0
      %2037 = vmatprep.subr.bf16.mxu0 0
      %2038 = vmatpush1.bf16.xpose.msra.mxu0 0
      %2039 = vmatprep.subr.bf16.mxu0 0
      %2040 = vmatpush1.bf16.xpose.msra.mxu0 0
      %2041 = vmatprep.subr.bf16.mxu0 0
      %2042 = vmatpush1.bf16.xpose.msra.mxu0 0
      %2043 = vmatprep.subr.bf16.mxu0 0
      %2044 = vmatpush1.bf16.xpose.msra.mxu0 0
      %2045 = vmatprep.subr.bf16.mxu0 0
      %2046 = vmatpush1.bf16.xpose.msra.mxu0 0
      %2047 = vmatprep.subr.bf16.mxu0 0
      %2048 = vmatpush1.bf16.xpose.msra.mxu0 %v2031
      %2049 = vmatprep.subr.bf16.mxu0 0
      %2050 = vmatpush2.bf16.xpose.msra.mxu0 0
      %2051 = vmatprep.subr.bf16.mxu0 0
      %2052 = vmatpush2.bf16.xpose.msra.mxu0 0
      %2053 = vmatprep.subr.bf16.mxu0 0
      %2054 = vmatpush2.bf16.xpose.msra.mxu0 0
      %2055 = vmatprep.subr.bf16.mxu0 0
      %2056 = vmatpush2.bf16.xpose.msra.mxu0 0
      %2057 = vmatprep.subr.bf16.mxu0 0
      %2058 = vmatpush2.bf16.xpose.msra.mxu0 0
      %2059 = vmatprep.subr.bf16.mxu0 0
      %2060 = vmatpush2.bf16.xpose.msra.mxu0 0
      %2061 = vmatprep.subr.bf16.mxu0 0
      %2062 = vmatpush2.bf16.xpose.msra.mxu0 0
      %2063 = vmatprep.subr.bf16.mxu0 0
      %2064 = vmatpush2.bf16.xpose.msra.mxu0 0
      %2065 = vmatprep.mubr.bf16.mxu0 0
      %2066 = vmatmul.mubr.bf16.gmra.mxu0 %v2028
      %v2067 = vpop.f32.mrf.mxu0
      %v2068 = vadd.f32 0.0, %v2067
      %v2069 = vpop.f32.mrf.mxu0
      %v2070 = vpop.f32.mrf.mxu0
      %v2071 = vpop.f32.mrf.mxu0
      %2072 = vdwg.mxu0
      %2073 = vrot.lane.b32.xlu0 %v1011, 112
      %v2074 = vpop.permute.xlu0 %2073
      %2075 = vrot.lane.b32.xlu0 %v1021, 112
      %v2076 = vpop.permute.xlu0 %2075
      %v2078 = vsel %vm1034, %v2074, 0
      %v2081 = vsel %vm1034, %v2076, 0
      %2083 = vmatprep.subr.bf16.mxu0 0
      %2084 = vmatpush1.bf16.xpose.msra.mxu0 0
      %2085 = vmatprep.subr.bf16.mxu0 0
      %2086 = vmatpush1.bf16.xpose.msra.mxu0 0
      %2087 = vmatprep.subr.bf16.mxu0 0
      %2088 = vmatpush1.bf16.xpose.msra.mxu0 0
      %2089 = vmatprep.subr.bf16.mxu0 0
      %2090 = vmatpush1.bf16.xpose.msra.mxu0 0
      %2091 = vmatprep.subr.bf16.mxu0 0
      %2092 = vmatpush1.bf16.xpose.msra.mxu0 0
      %2093 = vmatprep.subr.bf16.mxu0 0
      %2094 = vmatpush1.bf16.xpose.msra.mxu0 0
      %2095 = vmatprep.subr.bf16.mxu0 0
      %2096 = vmatpush1.bf16.xpose.msra.mxu0 0
      %2097 = vmatprep.subr.bf16.mxu0 0
      %2098 = vmatpush1.bf16.xpose.msra.mxu0 %v2081
      %2099 = vmatprep.subr.bf16.mxu0 0
      %2100 = vmatpush2.bf16.xpose.msra.mxu0 0
      %2101 = vmatprep.subr.bf16.mxu0 0
      %2102 = vmatpush2.bf16.xpose.msra.mxu0 0
      %2103 = vmatprep.subr.bf16.mxu0 0
      %2104 = vmatpush2.bf16.xpose.msra.mxu0 0
      %2105 = vmatprep.subr.bf16.mxu0 0
      %2106 = vmatpush2.bf16.xpose.msra.mxu0 0
      %2107 = vmatprep.subr.bf16.mxu0 0
      %2108 = vmatpush2.bf16.xpose.msra.mxu0 0
      %2109 = vmatprep.subr.bf16.mxu0 0
      %2110 = vmatpush2.bf16.xpose.msra.mxu0 0
      %2111 = vmatprep.subr.bf16.mxu0 0
      %2112 = vmatpush2.bf16.xpose.msra.mxu0 0
      %2113 = vmatprep.subr.bf16.mxu0 0
      %2114 = vmatpush2.bf16.xpose.msra.mxu0 0
      %2115 = vmatprep.mubr.bf16.mxu0 0
      %2116 = vmatmul.mubr.bf16.gmra.mxu0 %v2078
      %v2117 = vpop.f32.mrf.mxu0
      %v2118 = vadd.f32 0.0, %v2117
      %v2119 = vpop.f32.mrf.mxu0
      %v2120 = vpop.f32.mrf.mxu0
      %v2121 = vpop.f32.mrf.mxu0
      %2122 = vdwg.mxu0
      %2123 = vrot.lane.b32.xlu0 %v1012, 112
      %v2124 = vpop.permute.xlu0 %2123
      %2125 = vrot.lane.b32.xlu0 %v1022, 112
      %v2126 = vpop.permute.xlu0 %2125
      %v2128 = vsel %vm1034, %v2124, 0
      %v2131 = vsel %vm1034, %v2126, 0
      %2133 = vmatprep.subr.bf16.mxu0 0
      %2134 = vmatpush1.bf16.xpose.msra.mxu0 0
      %2135 = vmatprep.subr.bf16.mxu0 0
      %2136 = vmatpush1.bf16.xpose.msra.mxu0 0
      %2137 = vmatprep.subr.bf16.mxu0 0
      %2138 = vmatpush1.bf16.xpose.msra.mxu0 0
      %2139 = vmatprep.subr.bf16.mxu0 0
      %2140 = vmatpush1.bf16.xpose.msra.mxu0 0
      %2141 = vmatprep.subr.bf16.mxu0 0
      %2142 = vmatpush1.bf16.xpose.msra.mxu0 0
      %2143 = vmatprep.subr.bf16.mxu0 0
      %2144 = vmatpush1.bf16.xpose.msra.mxu0 0
      %2145 = vmatprep.subr.bf16.mxu0 0
      %2146 = vmatpush1.bf16.xpose.msra.mxu0 0
      %2147 = vmatprep.subr.bf16.mxu0 0
      %2148 = vmatpush1.bf16.xpose.msra.mxu0 %v2131
      %2149 = vmatprep.subr.bf16.mxu0 0
      %2150 = vmatpush2.bf16.xpose.msra.mxu0 0
      %2151 = vmatprep.subr.bf16.mxu0 0
      %2152 = vmatpush2.bf16.xpose.msra.mxu0 0
      %2153 = vmatprep.subr.bf16.mxu0 0
      %2154 = vmatpush2.bf16.xpose.msra.mxu0 0
      %2155 = vmatprep.subr.bf16.mxu0 0
      %2156 = vmatpush2.bf16.xpose.msra.mxu0 0
      %2157 = vmatprep.subr.bf16.mxu0 0
      %2158 = vmatpush2.bf16.xpose.msra.mxu0 0
      %2159 = vmatprep.subr.bf16.mxu0 0
      %2160 = vmatpush2.bf16.xpose.msra.mxu0 0
      %2161 = vmatprep.subr.bf16.mxu0 0
      %2162 = vmatpush2.bf16.xpose.msra.mxu0 0
      %2163 = vmatprep.subr.bf16.mxu0 0
      %2164 = vmatpush2.bf16.xpose.msra.mxu0 0
      %2165 = vmatprep.mubr.bf16.mxu0 0
      %2166 = vmatmul.mubr.bf16.gmra.mxu0 %v2128
      %v2167 = vpop.f32.mrf.mxu0
      %v2168 = vadd.f32 0.0, %v2167
      %v2169 = vpop.f32.mrf.mxu0
      %v2170 = vpop.f32.mrf.mxu0
      %v2171 = vpop.f32.mrf.mxu0
      %2172 = vdwg.mxu0
      %2173 = vrot.lane.b32.xlu0 %v1013, 112
      %v2174 = vpop.permute.xlu0 %2173
      %2175 = vrot.lane.b32.xlu0 %v1023, 112
      %v2176 = vpop.permute.xlu0 %2175
      %v2178 = vsel %vm1034, %v2174, 0
      %v2181 = vsel %vm1034, %v2176, 0
      %2183 = vmatprep.subr.bf16.mxu0 0
      %2184 = vmatpush1.bf16.xpose.msra.mxu0 0
      %2185 = vmatprep.subr.bf16.mxu0 0
      %2186 = vmatpush1.bf16.xpose.msra.mxu0 0
      %2187 = vmatprep.subr.bf16.mxu0 0
      %2188 = vmatpush1.bf16.xpose.msra.mxu0 0
      %2189 = vmatprep.subr.bf16.mxu0 0
      %2190 = vmatpush1.bf16.xpose.msra.mxu0 0
      %2191 = vmatprep.subr.bf16.mxu0 0
      %2192 = vmatpush1.bf16.xpose.msra.mxu0 0
      %2193 = vmatprep.subr.bf16.mxu0 0
      %2194 = vmatpush1.bf16.xpose.msra.mxu0 0
      %2195 = vmatprep.subr.bf16.mxu0 0
      %2196 = vmatpush1.bf16.xpose.msra.mxu0 0
      %2197 = vmatprep.subr.bf16.mxu0 0
      %2198 = vmatpush1.bf16.xpose.msra.mxu0 %v2181
      %2199 = vmatprep.subr.bf16.mxu0 0
      %2200 = vmatpush2.bf16.xpose.msra.mxu0 0
      %2201 = vmatprep.subr.bf16.mxu0 0
      %2202 = vmatpush2.bf16.xpose.msra.mxu0 0
      %2203 = vmatprep.subr.bf16.mxu0 0
      %2204 = vmatpush2.bf16.xpose.msra.mxu0 0
      %2205 = vmatprep.subr.bf16.mxu0 0
      %2206 = vmatpush2.bf16.xpose.msra.mxu0 0
      %2207 = vmatprep.subr.bf16.mxu0 0
      %2208 = vmatpush2.bf16.xpose.msra.mxu0 0
      %2209 = vmatprep.subr.bf16.mxu0 0
      %2210 = vmatpush2.bf16.xpose.msra.mxu0 0
      %2211 = vmatprep.subr.bf16.mxu0 0
      %2212 = vmatpush2.bf16.xpose.msra.mxu0 0
      %2213 = vmatprep.subr.bf16.mxu0 0
      %2214 = vmatpush2.bf16.xpose.msra.mxu0 0
      %2215 = vmatprep.mubr.bf16.mxu0 0
      %2216 = vmatmul.mubr.bf16.gmra.mxu0 %v2178
      %v2217 = vpop.f32.mrf.mxu0
      %v2218 = vadd.f32 0.0, %v2217
      %v2219 = vpop.f32.mrf.mxu0
      %v2220 = vpop.f32.mrf.mxu0
      %v2221 = vpop.f32.mrf.mxu0
      %2222 = vdwg.mxu0
      %v2223 = vsel %vm1219, %v2068, -inf
      %2224 = vmax.xlane.f32.xlu0 %v2223
      %v2225 = vpop.xlane.xlu0 %2224
      %v2226 = vsel %vm1219, %v2118, -inf
      %2227 = vmax.xlane.f32.xlu0 %v2226
      %v2228 = vpop.xlane.xlu0 %2227
      %v2229 = vsel %vm1219, %v2168, -inf
      %2230 = vmax.xlane.f32.xlu0 %v2229
      %v2231 = vpop.xlane.xlu0 %2230
      %v2232 = vsel %vm1219, %v2218, -inf
      %2233 = vmax.xlane.f32.xlu0 %v2232
      %v2234 = vpop.xlane.xlu0 %2233
      %v2235 = vsub.f32 %v2068, %v2225
      %v2236 = vsub.f32 %v2118, %v2228
      %v2237 = vsub.f32 %v2168, %v2231
      %v2238 = vsub.f32 %v2218, %v2234
      %v2239 = vmul.f32 %v2235, 1.442695
      %v2240 = vpow.pop %v2239
      %v2241 = vmul.f32 %v2236, 1.442695
      %v2242 = vpow.pop %v2241
      %v2243 = vmul.f32 %v2237, 1.442695
      %v2244 = vpow.pop %v2243
      %v2245 = vmul.f32 %v2238, 1.442695
      %v2246 = vpow.pop %v2245
      %v2247 = vsel %vm1219, %v2240, 0.0
      %2248 = vadd.xlane.f32.xlu0 %v2247
      %v2249 = vpop.xlane.xlu0 %2248
      %v2250 = vsel %vm1219, %v2242, 0.0
      %2251 = vadd.xlane.f32.xlu0 %v2250
      %v2252 = vpop.xlane.xlu0 %2251
      %v2253 = vsel %vm1219, %v2244, 0.0
      %2254 = vadd.xlane.f32.xlu0 %v2253
      %v2255 = vpop.xlane.xlu0 %2254
      %v2256 = vsel %vm1219, %v2246, 0.0
      %2257 = vadd.xlane.f32.xlu0 %v2256
      %v2258 = vpop.xlane.xlu0 %2257
      %v2259 = vrcp.pop %v2249
      %v2260 = vrcp.pop %v2252
      %v2261 = vrcp.pop %v2255
      %v2262 = vrcp.pop %v2258
      %v2263 = vmul.f32 %v2240, %v2259
      %v2264 = vmul.f32 %v2242, %v2260
      %v2265 = vmul.f32 %v2244, %v2261
      %v2266 = vmul.f32 %v2246, %v2262
      %v2267 = vpack.c.bf16 %v2263, %v2263
      %v2268 = vpack.c.bf16 %v2264, %v2264
      %v2269 = vpack.c.bf16 %v2265, %v2265
      %v2270 = vpack.c.bf16 %v2266, %v2266
      %2271 = vrot.lane.b32.xlu0 %v1030, 112
      %v2272 = vpop.permute.xlu0 %2271
      %v2274 = vsel %vm1268, %v2267, 0
      %v2277 = vsel %vm1272, %v2272, 0
      %2279 = vmatprep.subr.bf16.mxu0 0
      %2280 = vmatpush1.bf16.msra.mxu0 0
      %2281 = vmatprep.subr.bf16.mxu0 0
      %2282 = vmatpush1.bf16.msra.mxu0 0
      %2283 = vmatprep.subr.bf16.mxu0 0
      %2284 = vmatpush1.bf16.msra.mxu0 0
      %2285 = vmatprep.subr.bf16.mxu0 0
      %2286 = vmatpush1.bf16.msra.mxu0 0
      %2287 = vmatprep.subr.bf16.mxu0 0
      %2288 = vmatpush1.bf16.msra.mxu0 0
      %2289 = vmatprep.subr.bf16.mxu0 0
      %2290 = vmatpush1.bf16.msra.mxu0 0
      %2291 = vmatprep.subr.bf16.mxu0 0
      %2292 = vmatpush1.bf16.msra.mxu0 0
      %2293 = vmatprep.subr.bf16.mxu0 0
      %2294 = vmatpush1.bf16.msra.mxu0 %v2277
      %2295 = vmatprep.subr.bf16.mxu0 0
      %2296 = vmatpush2.bf16.msra.mxu0 0
      %2297 = vmatprep.subr.bf16.mxu0 0
      %2298 = vmatpush2.bf16.msra.mxu0 0
      %2299 = vmatprep.subr.bf16.mxu0 0
      %2300 = vmatpush2.bf16.msra.mxu0 0
      %2301 = vmatprep.subr.bf16.mxu0 0
      %2302 = vmatpush2.bf16.msra.mxu0 0
      %2303 = vmatprep.subr.bf16.mxu0 0
      %2304 = vmatpush2.bf16.msra.mxu0 0
      %2305 = vmatprep.subr.bf16.mxu0 0
      %2306 = vmatpush2.bf16.msra.mxu0 0
      %2307 = vmatprep.subr.bf16.mxu0 0
      %2308 = vmatpush2.bf16.msra.mxu0 0
      %2309 = vmatprep.subr.bf16.mxu0 0
      %2310 = vmatpush2.bf16.msra.mxu0 0
      %2311 = vmatprep.mubr.bf16.mxu0 0
      %2312 = vmatmul.mubr.bf16.gmra.mxu0 %v2274
      %v2313 = vpop.f32.mrf.mxu0
      %v2314 = vadd.f32 0.0, %v2313
      %v2315 = vpop.f32.mrf.mxu0
      %v2316 = vpop.f32.mrf.mxu0
      %v2317 = vpop.f32.mrf.mxu0
      %2318 = vdwg.mxu0
      %2319 = vrot.lane.b32.xlu0 %v1031, 112
      %v2320 = vpop.permute.xlu0 %2319
      %v2322 = vsel %vm1268, %v2268, 0
      %v2325 = vsel %vm1272, %v2320, 0
      %2327 = vmatprep.subr.bf16.mxu0 0
      %2328 = vmatpush1.bf16.msra.mxu0 0
      %2329 = vmatprep.subr.bf16.mxu0 0
      %2330 = vmatpush1.bf16.msra.mxu0 0
      %2331 = vmatprep.subr.bf16.mxu0 0
      %2332 = vmatpush1.bf16.msra.mxu0 0
      %2333 = vmatprep.subr.bf16.mxu0 0
      %2334 = vmatpush1.bf16.msra.mxu0 0
      %2335 = vmatprep.subr.bf16.mxu0 0
      %2336 = vmatpush1.bf16.msra.mxu0 0
      %2337 = vmatprep.subr.bf16.mxu0 0
      %2338 = vmatpush1.bf16.msra.mxu0 0
      %2339 = vmatprep.subr.bf16.mxu0 0
      %2340 = vmatpush1.bf16.msra.mxu0 0
      %2341 = vmatprep.subr.bf16.mxu0 0
      %2342 = vmatpush1.bf16.msra.mxu0 %v2325
      %2343 = vmatprep.subr.bf16.mxu0 0
      %2344 = vmatpush2.bf16.msra.mxu0 0
      %2345 = vmatprep.subr.bf16.mxu0 0
      %2346 = vmatpush2.bf16.msra.mxu0 0
      %2347 = vmatprep.subr.bf16.mxu0 0
      %2348 = vmatpush2.bf16.msra.mxu0 0
      %2349 = vmatprep.subr.bf16.mxu0 0
      %2350 = vmatpush2.bf16.msra.mxu0 0
      %2351 = vmatprep.subr.bf16.mxu0 0
      %2352 = vmatpush2.bf16.msra.mxu0 0
      %2353 = vmatprep.subr.bf16.mxu0 0
      %2354 = vmatpush2.bf16.msra.mxu0 0
      %2355 = vmatprep.subr.bf16.mxu0 0
      %2356 = vmatpush2.bf16.msra.mxu0 0
      %2357 = vmatprep.subr.bf16.mxu0 0
      %2358 = vmatpush2.bf16.msra.mxu0 0
      %2359 = vmatprep.mubr.bf16.mxu0 0
      %2360 = vmatmul.mubr.bf16.gmra.mxu0 %v2322
      %v2361 = vpop.f32.mrf.mxu0
      %v2362 = vadd.f32 0.0, %v2361
      %v2363 = vpop.f32.mrf.mxu0
      %v2364 = vpop.f32.mrf.mxu0
      %v2365 = vpop.f32.mrf.mxu0
      %2366 = vdwg.mxu0
      %2367 = vrot.lane.b32.xlu0 %v1032, 112
      %v2368 = vpop.permute.xlu0 %2367
      %v2370 = vsel %vm1268, %v2269, 0
      %v2373 = vsel %vm1272, %v2368, 0
      %2375 = vmatprep.subr.bf16.mxu0 0
      %2376 = vmatpush1.bf16.msra.mxu0 0
      %2377 = vmatprep.subr.bf16.mxu0 0
      %2378 = vmatpush1.bf16.msra.mxu0 0
      %2379 = vmatprep.subr.bf16.mxu0 0
      %2380 = vmatpush1.bf16.msra.mxu0 0
      %2381 = vmatprep.subr.bf16.mxu0 0
      %2382 = vmatpush1.bf16.msra.mxu0 0
      %2383 = vmatprep.subr.bf16.mxu0 0
      %2384 = vmatpush1.bf16.msra.mxu0 0
      %2385 = vmatprep.subr.bf16.mxu0 0
      %2386 = vmatpush1.bf16.msra.mxu0 0
      %2387 = vmatprep.subr.bf16.mxu0 0
      %2388 = vmatpush1.bf16.msra.mxu0 0
      %2389 = vmatprep.subr.bf16.mxu0 0
      %2390 = vmatpush1.bf16.msra.mxu0 %v2373
      %2391 = vmatprep.subr.bf16.mxu0 0
      %2392 = vmatpush2.bf16.msra.mxu0 0
      %2393 = vmatprep.subr.bf16.mxu0 0
      %2394 = vmatpush2.bf16.msra.mxu0 0
      %2395 = vmatprep.subr.bf16.mxu0 0
      %2396 = vmatpush2.bf16.msra.mxu0 0
      %2397 = vmatprep.subr.bf16.mxu0 0
      %2398 = vmatpush2.bf16.msra.mxu0 0
      %2399 = vmatprep.subr.bf16.mxu0 0
      %2400 = vmatpush2.bf16.msra.mxu0 0
      %2401 = vmatprep.subr.bf16.mxu0 0
      %2402 = vmatpush2.bf16.msra.mxu0 0
      %2403 = vmatprep.subr.bf16.mxu0 0
      %2404 = vmatpush2.bf16.msra.mxu0 0
      %2405 = vmatprep.subr.bf16.mxu0 0
      %2406 = vmatpush2.bf16.msra.mxu0 0
      %2407 = vmatprep.mubr.bf16.mxu0 0
      %2408 = vmatmul.mubr.bf16.gmra.mxu0 %v2370
      %v2409 = vpop.f32.mrf.mxu0
      %v2410 = vadd.f32 0.0, %v2409
      %v2411 = vpop.f32.mrf.mxu0
      %v2412 = vpop.f32.mrf.mxu0
      %v2413 = vpop.f32.mrf.mxu0
      %2414 = vdwg.mxu0
      %2415 = vrot.lane.b32.xlu0 %v1033, 112
      %v2416 = vpop.permute.xlu0 %2415
      %v2418 = vsel %vm1268, %v2270, 0
      %v2421 = vsel %vm1272, %v2416, 0
      %2423 = vmatprep.subr.bf16.mxu0 0
      %2424 = vmatpush1.bf16.msra.mxu0 0
      %2425 = vmatprep.subr.bf16.mxu0 0
      %2426 = vmatpush1.bf16.msra.mxu0 0
      %2427 = vmatprep.subr.bf16.mxu0 0
      %2428 = vmatpush1.bf16.msra.mxu0 0
      %2429 = vmatprep.subr.bf16.mxu0 0
      %2430 = vmatpush1.bf16.msra.mxu0 0
      %2431 = vmatprep.subr.bf16.mxu0 0
      %2432 = vmatpush1.bf16.msra.mxu0 0
      %2433 = vmatprep.subr.bf16.mxu0 0
      %2434 = vmatpush1.bf16.msra.mxu0 0
      %2435 = vmatprep.subr.bf16.mxu0 0
      %2436 = vmatpush1.bf16.msra.mxu0 0
      %2437 = vmatprep.subr.bf16.mxu0 0
      %2438 = vmatpush1.bf16.msra.mxu0 %v2421
      %2439 = vmatprep.subr.bf16.mxu0 0
      %2440 = vmatpush2.bf16.msra.mxu0 0
      %2441 = vmatprep.subr.bf16.mxu0 0
      %2442 = vmatpush2.bf16.msra.mxu0 0
      %2443 = vmatprep.subr.bf16.mxu0 0
      %2444 = vmatpush2.bf16.msra.mxu0 0
      %2445 = vmatprep.subr.bf16.mxu0 0
      %2446 = vmatpush2.bf16.msra.mxu0 0
      %2447 = vmatprep.subr.bf16.mxu0 0
      %2448 = vmatpush2.bf16.msra.mxu0 0
      %2449 = vmatprep.subr.bf16.mxu0 0
      %2450 = vmatpush2.bf16.msra.mxu0 0
      %2451 = vmatprep.subr.bf16.mxu0 0
      %2452 = vmatpush2.bf16.msra.mxu0 0
      %2453 = vmatprep.subr.bf16.mxu0 0
      %2454 = vmatpush2.bf16.msra.mxu0 0
      %2455 = vmatprep.mubr.bf16.mxu0 0
      %2456 = vmatmul.mubr.bf16.gmra.mxu0 %v2418
      %v2457 = vpop.f32.mrf.mxu0
      %v2458 = vadd.f32 0.0, %v2457
      %v2459 = vpop.f32.mrf.mxu0
      %v2460 = vpop.f32.mrf.mxu0
      %v2461 = vpop.f32.mrf.mxu0
      %2462 = vdwg.mxu0
      %v2467 = vcombine.low %v2314, %v2362
      %v2468 = vcombine.low %v2410, %v2458
      %v2471 = vpack.c.bf16 %v2468, %v2467
      %v2473 = vsel %vm1034, %v2471, 0
      %v2476 = vsel %vm1466, %v805, 0
      %2478 = vmatprep.subr.bf16.mxu0 0
      %2479 = vmatpush1.bf16.msra.mxu0 0
      %2480 = vmatprep.subr.bf16.mxu0 0
      %2481 = vmatpush1.bf16.msra.mxu0 0
      %2482 = vmatprep.subr.bf16.mxu0 0
      %2483 = vmatpush1.bf16.msra.mxu0 0
      %2484 = vmatprep.subr.bf16.mxu0 0
      %2485 = vmatpush1.bf16.msra.mxu0 0
      %2486 = vmatprep.subr.bf16.mxu0 0
      %2487 = vmatpush1.bf16.msra.mxu0 0
      %2488 = vmatprep.subr.bf16.mxu0 0
      %2489 = vmatpush1.bf16.msra.mxu0 0
      %2490 = vmatprep.subr.bf16.mxu0 0
      %2491 = vmatpush1.bf16.msra.mxu0 0
      %2492 = vmatprep.subr.bf16.mxu0 0
      %2493 = vmatpush1.bf16.msra.mxu0 %v2476
      %2494 = vmatprep.subr.bf16.mxu0 0
      %2495 = vmatpush2.bf16.msra.mxu0 0
      %2496 = vmatprep.subr.bf16.mxu0 0
      %2497 = vmatpush2.bf16.msra.mxu0 0
      %2498 = vmatprep.subr.bf16.mxu0 0
      %2499 = vmatpush2.bf16.msra.mxu0 0
      %2500 = vmatprep.subr.bf16.mxu0 0
      %2501 = vmatpush2.bf16.msra.mxu0 0
      %2502 = vmatprep.subr.bf16.mxu0 0
      %2503 = vmatpush2.bf16.msra.mxu0 0
      %2504 = vmatprep.subr.bf16.mxu0 0
      %2505 = vmatpush2.bf16.msra.mxu0 0
      %2506 = vmatprep.subr.bf16.mxu0 0
      %2507 = vmatpush2.bf16.msra.mxu0 0
      %2508 = vmatprep.subr.bf16.mxu0 0
      %2509 = vmatpush2.bf16.msra.mxu0 0
      %2510 = vmatprep.mubr.bf16.mxu0 0
      %2511 = vmatmul.mubr.bf16.gmra.mxu0 %v2473
      %v2512 = vpop.f32.mrf.mxu0
      %v2513 = vadd.f32 0.0, %v2512
      %v2514 = vpop.f32.mrf.mxu0
      %v2515 = vpop.f32.mrf.mxu0
      %v2516 = vadd.f32 0.0, %v2515
      %v2517 = vpop.f32.mrf.mxu0
      %2518 = vdwg.mxu0
      %v2519 = vadd.f32 %v2021, %v2513
      %v2520 = vadd.f32 %v2022, %v2516
      %2521 = vrot.lane.b32.xlu0 %v1010, 104
      %v2522 = vpop.permute.xlu0 %2521
      %2523 = vrot.lane.b32.xlu0 %v1020, 104
      %v2524 = vpop.permute.xlu0 %2523
      %v2526 = vsel %vm1034, %v2522, 0
      %v2529 = vsel %vm1034, %v2524, 0
      %2531 = vmatprep.subr.bf16.mxu0 0
      %2532 = vmatpush1.bf16.xpose.msra.mxu0 0
      %2533 = vmatprep.subr.bf16.mxu0 0
      %2534 = vmatpush1.bf16.xpose.msra.mxu0 0
      %2535 = vmatprep.subr.bf16.mxu0 0
      %2536 = vmatpush1.bf16.xpose.msra.mxu0 0
      %2537 = vmatprep.subr.bf16.mxu0 0
      %2538 = vmatpush1.bf16.xpose.msra.mxu0 0
      %2539 = vmatprep.subr.bf16.mxu0 0
      %2540 = vmatpush1.bf16.xpose.msra.mxu0 0
      %2541 = vmatprep.subr.bf16.mxu0 0
      %2542 = vmatpush1.bf16.xpose.msra.mxu0 0
      %2543 = vmatprep.subr.bf16.mxu0 0
      %2544 = vmatpush1.bf16.xpose.msra.mxu0 0
      %2545 = vmatprep.subr.bf16.mxu0 0
      %2546 = vmatpush1.bf16.xpose.msra.mxu0 %v2529
      %2547 = vmatprep.subr.bf16.mxu0 0
      %2548 = vmatpush2.bf16.xpose.msra.mxu0 0
      %2549 = vmatprep.subr.bf16.mxu0 0
      %2550 = vmatpush2.bf16.xpose.msra.mxu0 0
      %2551 = vmatprep.subr.bf16.mxu0 0
      %2552 = vmatpush2.bf16.xpose.msra.mxu0 0
      %2553 = vmatprep.subr.bf16.mxu0 0
      %2554 = vmatpush2.bf16.xpose.msra.mxu0 0
      %2555 = vmatprep.subr.bf16.mxu0 0
      %2556 = vmatpush2.bf16.xpose.msra.mxu0 0
      %2557 = vmatprep.subr.bf16.mxu0 0
      %2558 = vmatpush2.bf16.xpose.msra.mxu0 0
      %2559 = vmatprep.subr.bf16.mxu0 0
      %2560 = vmatpush2.bf16.xpose.msra.mxu0 0
      %2561 = vmatprep.subr.bf16.mxu0 0
      %2562 = vmatpush2.bf16.xpose.msra.mxu0 0
      %2563 = vmatprep.mubr.bf16.mxu0 0
      %2564 = vmatmul.mubr.bf16.gmra.mxu0 %v2526
      %v2565 = vpop.f32.mrf.mxu0
      %v2566 = vadd.f32 0.0, %v2565
      %v2567 = vpop.f32.mrf.mxu0
      %v2568 = vpop.f32.mrf.mxu0
      %v2569 = vpop.f32.mrf.mxu0
      %2570 = vdwg.mxu0
      %2571 = vrot.lane.b32.xlu0 %v1011, 104
      %v2572 = vpop.permute.xlu0 %2571
      %2573 = vrot.lane.b32.xlu0 %v1021, 104
      %v2574 = vpop.permute.xlu0 %2573
      %v2576 = vsel %vm1034, %v2572, 0
      %v2579 = vsel %vm1034, %v2574, 0
      %2581 = vmatprep.subr.bf16.mxu0 0
      %2582 = vmatpush1.bf16.xpose.msra.mxu0 0
      %2583 = vmatprep.subr.bf16.mxu0 0
      %2584 = vmatpush1.bf16.xpose.msra.mxu0 0
      %2585 = vmatprep.subr.bf16.mxu0 0
      %2586 = vmatpush1.bf16.xpose.msra.mxu0 0
      %2587 = vmatprep.subr.bf16.mxu0 0
      %2588 = vmatpush1.bf16.xpose.msra.mxu0 0
      %2589 = vmatprep.subr.bf16.mxu0 0
      %2590 = vmatpush1.bf16.xpose.msra.mxu0 0
      %2591 = vmatprep.subr.bf16.mxu0 0
      %2592 = vmatpush1.bf16.xpose.msra.mxu0 0
      %2593 = vmatprep.subr.bf16.mxu0 0
      %2594 = vmatpush1.bf16.xpose.msra.mxu0 0
      %2595 = vmatprep.subr.bf16.mxu0 0
      %2596 = vmatpush1.bf16.xpose.msra.mxu0 %v2579
      %2597 = vmatprep.subr.bf16.mxu0 0
      %2598 = vmatpush2.bf16.xpose.msra.mxu0 0
      %2599 = vmatprep.subr.bf16.mxu0 0
      %2600 = vmatpush2.bf16.xpose.msra.mxu0 0
      %2601 = vmatprep.subr.bf16.mxu0 0
      %2602 = vmatpush2.bf16.xpose.msra.mxu0 0
      %2603 = vmatprep.subr.bf16.mxu0 0
      %2604 = vmatpush2.bf16.xpose.msra.mxu0 0
      %2605 = vmatprep.subr.bf16.mxu0 0
      %2606 = vmatpush2.bf16.xpose.msra.mxu0 0
      %2607 = vmatprep.subr.bf16.mxu0 0
      %2608 = vmatpush2.bf16.xpose.msra.mxu0 0
      %2609 = vmatprep.subr.bf16.mxu0 0
      %2610 = vmatpush2.bf16.xpose.msra.mxu0 0
      %2611 = vmatprep.subr.bf16.mxu0 0
      %2612 = vmatpush2.bf16.xpose.msra.mxu0 0
      %2613 = vmatprep.mubr.bf16.mxu0 0
      %2614 = vmatmul.mubr.bf16.gmra.mxu0 %v2576
      %v2615 = vpop.f32.mrf.mxu0
      %v2616 = vadd.f32 0.0, %v2615
      %v2617 = vpop.f32.mrf.mxu0
      %v2618 = vpop.f32.mrf.mxu0
      %v2619 = vpop.f32.mrf.mxu0
      %2620 = vdwg.mxu0
      %2621 = vrot.lane.b32.xlu0 %v1012, 104
      %v2622 = vpop.permute.xlu0 %2621
      %2623 = vrot.lane.b32.xlu0 %v1022, 104
      %v2624 = vpop.permute.xlu0 %2623
      %v2626 = vsel %vm1034, %v2622, 0
      %v2629 = vsel %vm1034, %v2624, 0
      %2631 = vmatprep.subr.bf16.mxu0 0
      %2632 = vmatpush1.bf16.xpose.msra.mxu0 0
      %2633 = vmatprep.subr.bf16.mxu0 0
      %2634 = vmatpush1.bf16.xpose.msra.mxu0 0
      %2635 = vmatprep.subr.bf16.mxu0 0
      %2636 = vmatpush1.bf16.xpose.msra.mxu0 0
      %2637 = vmatprep.subr.bf16.mxu0 0
      %2638 = vmatpush1.bf16.xpose.msra.mxu0 0
      %2639 = vmatprep.subr.bf16.mxu0 0
      %2640 = vmatpush1.bf16.xpose.msra.mxu0 0
      %2641 = vmatprep.subr.bf16.mxu0 0
      %2642 = vmatpush1.bf16.xpose.msra.mxu0 0
      %2643 = vmatprep.subr.bf16.mxu0 0
      %2644 = vmatpush1.bf16.xpose.msra.mxu0 0
      %2645 = vmatprep.subr.bf16.mxu0 0
      %2646 = vmatpush1.bf16.xpose.msra.mxu0 %v2629
      %2647 = vmatprep.subr.bf16.mxu0 0
      %2648 = vmatpush2.bf16.xpose.msra.mxu0 0
      %2649 = vmatprep.subr.bf16.mxu0 0
      %2650 = vmatpush2.bf16.xpose.msra.mxu0 0
      %2651 = vmatprep.subr.bf16.mxu0 0
      %2652 = vmatpush2.bf16.xpose.msra.mxu0 0
      %2653 = vmatprep.subr.bf16.mxu0 0
      %2654 = vmatpush2.bf16.xpose.msra.mxu0 0
      %2655 = vmatprep.subr.bf16.mxu0 0
      %2656 = vmatpush2.bf16.xpose.msra.mxu0 0
      %2657 = vmatprep.subr.bf16.mxu0 0
      %2658 = vmatpush2.bf16.xpose.msra.mxu0 0
      %2659 = vmatprep.subr.bf16.mxu0 0
      %2660 = vmatpush2.bf16.xpose.msra.mxu0 0
      %2661 = vmatprep.subr.bf16.mxu0 0
      %2662 = vmatpush2.bf16.xpose.msra.mxu0 0
      %2663 = vmatprep.mubr.bf16.mxu0 0
      %2664 = vmatmul.mubr.bf16.gmra.mxu0 %v2626
      %v2665 = vpop.f32.mrf.mxu0
      %v2666 = vadd.f32 0.0, %v2665
      %v2667 = vpop.f32.mrf.mxu0
      %v2668 = vpop.f32.mrf.mxu0
      %v2669 = vpop.f32.mrf.mxu0
      %2670 = vdwg.mxu0
      %2671 = vrot.lane.b32.xlu0 %v1013, 104
      %v2672 = vpop.permute.xlu0 %2671
      %2673 = vrot.lane.b32.xlu0 %v1023, 104
      %v2674 = vpop.permute.xlu0 %2673
      %v2676 = vsel %vm1034, %v2672, 0
      %v2679 = vsel %vm1034, %v2674, 0
      %2681 = vmatprep.subr.bf16.mxu0 0
      %2682 = vmatpush1.bf16.xpose.msra.mxu0 0
      %2683 = vmatprep.subr.bf16.mxu0 0
      %2684 = vmatpush1.bf16.xpose.msra.mxu0 0
      %2685 = vmatprep.subr.bf16.mxu0 0
      %2686 = vmatpush1.bf16.xpose.msra.mxu0 0
      %2687 = vmatprep.subr.bf16.mxu0 0
      %2688 = vmatpush1.bf16.xpose.msra.mxu0 0
      %2689 = vmatprep.subr.bf16.mxu0 0
      %2690 = vmatpush1.bf16.xpose.msra.mxu0 0
      %2691 = vmatprep.subr.bf16.mxu0 0
      %2692 = vmatpush1.bf16.xpose.msra.mxu0 0
      %2693 = vmatprep.subr.bf16.mxu0 0
      %2694 = vmatpush1.bf16.xpose.msra.mxu0 0
      %2695 = vmatprep.subr.bf16.mxu0 0
      %2696 = vmatpush1.bf16.xpose.msra.mxu0 %v2679
      %2697 = vmatprep.subr.bf16.mxu0 0
      %2698 = vmatpush2.bf16.xpose.msra.mxu0 0
      %2699 = vmatprep.subr.bf16.mxu0 0
      %2700 = vmatpush2.bf16.xpose.msra.mxu0 0
      %2701 = vmatprep.subr.bf16.mxu0 0
      %2702 = vmatpush2.bf16.xpose.msra.mxu0 0
      %2703 = vmatprep.subr.bf16.mxu0 0
      %2704 = vmatpush2.bf16.xpose.msra.mxu0 0
      %2705 = vmatprep.subr.bf16.mxu0 0
      %2706 = vmatpush2.bf16.xpose.msra.mxu0 0
      %2707 = vmatprep.subr.bf16.mxu0 0
      %2708 = vmatpush2.bf16.xpose.msra.mxu0 0
      %2709 = vmatprep.subr.bf16.mxu0 0
      %2710 = vmatpush2.bf16.xpose.msra.mxu0 0
      %2711 = vmatprep.subr.bf16.mxu0 0
      %2712 = vmatpush2.bf16.xpose.msra.mxu0 0
      %2713 = vmatprep.mubr.bf16.mxu0 0
      %2714 = vmatmul.mubr.bf16.gmra.mxu0 %v2676
      %v2715 = vpop.f32.mrf.mxu0
      %v2716 = vadd.f32 0.0, %v2715
      %v2717 = vpop.f32.mrf.mxu0
      %v2718 = vpop.f32.mrf.mxu0
      %v2719 = vpop.f32.mrf.mxu0
      %2720 = vdwg.mxu0
      %v2721 = vsel %vm1219, %v2566, -inf
      %2722 = vmax.xlane.f32.xlu0 %v2721
      %v2723 = vpop.xlane.xlu0 %2722
      %v2724 = vsel %vm1219, %v2616, -inf
      %2725 = vmax.xlane.f32.xlu0 %v2724
      %v2726 = vpop.xlane.xlu0 %2725
      %v2727 = vsel %vm1219, %v2666, -inf
      %2728 = vmax.xlane.f32.xlu0 %v2727
      %v2729 = vpop.xlane.xlu0 %2728
      %v2730 = vsel %vm1219, %v2716, -inf
      %2731 = vmax.xlane.f32.xlu0 %v2730
      %v2732 = vpop.xlane.xlu0 %2731
      %v2733 = vsub.f32 %v2566, %v2723
      %v2734 = vsub.f32 %v2616, %v2726
      %v2735 = vsub.f32 %v2666, %v2729
      %v2736 = vsub.f32 %v2716, %v2732
      %v2737 = vmul.f32 %v2733, 1.442695
      %v2738 = vpow.pop %v2737
      %v2739 = vmul.f32 %v2734, 1.442695
      %v2740 = vpow.pop %v2739
      %v2741 = vmul.f32 %v2735, 1.442695
      %v2742 = vpow.pop %v2741
      %v2743 = vmul.f32 %v2736, 1.442695
      %v2744 = vpow.pop %v2743
      %v2745 = vsel %vm1219, %v2738, 0.0
      %2746 = vadd.xlane.f32.xlu0 %v2745
      %v2747 = vpop.xlane.xlu0 %2746
      %v2748 = vsel %vm1219, %v2740, 0.0
      %2749 = vadd.xlane.f32.xlu0 %v2748
      %v2750 = vpop.xlane.xlu0 %2749
      %v2751 = vsel %vm1219, %v2742, 0.0
      %2752 = vadd.xlane.f32.xlu0 %v2751
      %v2753 = vpop.xlane.xlu0 %2752
      %v2754 = vsel %vm1219, %v2744, 0.0
      %2755 = vadd.xlane.f32.xlu0 %v2754
      %v2756 = vpop.xlane.xlu0 %2755
      %v2757 = vrcp.pop %v2747
      %v2758 = vrcp.pop %v2750
      %v2759 = vrcp.pop %v2753
      %v2760 = vrcp.pop %v2756
      %v2761 = vmul.f32 %v2738, %v2757
      %v2762 = vmul.f32 %v2740, %v2758
      %v2763 = vmul.f32 %v2742, %v2759
      %v2764 = vmul.f32 %v2744, %v2760
      %v2765 = vpack.c.bf16 %v2761, %v2761
      %v2766 = vpack.c.bf16 %v2762, %v2762
      %v2767 = vpack.c.bf16 %v2763, %v2763
      %v2768 = vpack.c.bf16 %v2764, %v2764
      %2769 = vrot.lane.b32.xlu0 %v1030, 104
      %v2770 = vpop.permute.xlu0 %2769
      %v2772 = vsel %vm1268, %v2765, 0
      %v2775 = vsel %vm1272, %v2770, 0
      %2777 = vmatprep.subr.bf16.mxu0 0
      %2778 = vmatpush1.bf16.msra.mxu0 0
      %2779 = vmatprep.subr.bf16.mxu0 0
      %2780 = vmatpush1.bf16.msra.mxu0 0
      %2781 = vmatprep.subr.bf16.mxu0 0
      %2782 = vmatpush1.bf16.msra.mxu0 0
      %2783 = vmatprep.subr.bf16.mxu0 0
      %2784 = vmatpush1.bf16.msra.mxu0 0
      %2785 = vmatprep.subr.bf16.mxu0 0
      %2786 = vmatpush1.bf16.msra.mxu0 0
      %2787 = vmatprep.subr.bf16.mxu0 0
      %2788 = vmatpush1.bf16.msra.mxu0 0
      %2789 = vmatprep.subr.bf16.mxu0 0
      %2790 = vmatpush1.bf16.msra.mxu0 0
      %2791 = vmatprep.subr.bf16.mxu0 0
      %2792 = vmatpush1.bf16.msra.mxu0 %v2775
      %2793 = vmatprep.subr.bf16.mxu0 0
      %2794 = vmatpush2.bf16.msra.mxu0 0
      %2795 = vmatprep.subr.bf16.mxu0 0
      %2796 = vmatpush2.bf16.msra.mxu0 0
      %2797 = vmatprep.subr.bf16.mxu0 0
      %2798 = vmatpush2.bf16.msra.mxu0 0
      %2799 = vmatprep.subr.bf16.mxu0 0
      %2800 = vmatpush2.bf16.msra.mxu0 0
      %2801 = vmatprep.subr.bf16.mxu0 0
      %2802 = vmatpush2.bf16.msra.mxu0 0
      %2803 = vmatprep.subr.bf16.mxu0 0
      %2804 = vmatpush2.bf16.msra.mxu0 0
      %2805 = vmatprep.subr.bf16.mxu0 0
      %2806 = vmatpush2.bf16.msra.mxu0 0
      %2807 = vmatprep.subr.bf16.mxu0 0
      %2808 = vmatpush2.bf16.msra.mxu0 0
      %2809 = vmatprep.mubr.bf16.mxu0 0
      %2810 = vmatmul.mubr.bf16.gmra.mxu0 %v2772
      %v2811 = vpop.f32.mrf.mxu0
      %v2812 = vadd.f32 0.0, %v2811
      %v2813 = vpop.f32.mrf.mxu0
      %v2814 = vpop.f32.mrf.mxu0
      %v2815 = vpop.f32.mrf.mxu0
      %2816 = vdwg.mxu0
      %2817 = vrot.lane.b32.xlu0 %v1031, 104
      %v2818 = vpop.permute.xlu0 %2817
      %v2820 = vsel %vm1268, %v2766, 0
      %v2823 = vsel %vm1272, %v2818, 0
      %2825 = vmatprep.subr.bf16.mxu0 0
      %2826 = vmatpush1.bf16.msra.mxu0 0
      %2827 = vmatprep.subr.bf16.mxu0 0
      %2828 = vmatpush1.bf16.msra.mxu0 0
      %2829 = vmatprep.subr.bf16.mxu0 0
      %2830 = vmatpush1.bf16.msra.mxu0 0
      %2831 = vmatprep.subr.bf16.mxu0 0
      %2832 = vmatpush1.bf16.msra.mxu0 0
      %2833 = vmatprep.subr.bf16.mxu0 0
      %2834 = vmatpush1.bf16.msra.mxu0 0
      %2835 = vmatprep.subr.bf16.mxu0 0
      %2836 = vmatpush1.bf16.msra.mxu0 0
      %2837 = vmatprep.subr.bf16.mxu0 0
      %2838 = vmatpush1.bf16.msra.mxu0 0
      %2839 = vmatprep.subr.bf16.mxu0 0
      %2840 = vmatpush1.bf16.msra.mxu0 %v2823
      %2841 = vmatprep.subr.bf16.mxu0 0
      %2842 = vmatpush2.bf16.msra.mxu0 0
      %2843 = vmatprep.subr.bf16.mxu0 0
      %2844 = vmatpush2.bf16.msra.mxu0 0
      %2845 = vmatprep.subr.bf16.mxu0 0
      %2846 = vmatpush2.bf16.msra.mxu0 0
      %2847 = vmatprep.subr.bf16.mxu0 0
      %2848 = vmatpush2.bf16.msra.mxu0 0
      %2849 = vmatprep.subr.bf16.mxu0 0
      %2850 = vmatpush2.bf16.msra.mxu0 0
      %2851 = vmatprep.subr.bf16.mxu0 0
      %2852 = vmatpush2.bf16.msra.mxu0 0
      %2853 = vmatprep.subr.bf16.mxu0 0
      %2854 = vmatpush2.bf16.msra.mxu0 0
      %2855 = vmatprep.subr.bf16.mxu0 0
      %2856 = vmatpush2.bf16.msra.mxu0 0
      %2857 = vmatprep.mubr.bf16.mxu0 0
      %2858 = vmatmul.mubr.bf16.gmra.mxu0 %v2820
      %v2859 = vpop.f32.mrf.mxu0
      %v2860 = vadd.f32 0.0, %v2859
      %v2861 = vpop.f32.mrf.mxu0
      %v2862 = vpop.f32.mrf.mxu0
      %v2863 = vpop.f32.mrf.mxu0
      %2864 = vdwg.mxu0
      %2865 = vrot.lane.b32.xlu0 %v1032, 104
      %v2866 = vpop.permute.xlu0 %2865
      %v2868 = vsel %vm1268, %v2767, 0
      %v2871 = vsel %vm1272, %v2866, 0
      %2873 = vmatprep.subr.bf16.mxu0 0
      %2874 = vmatpush1.bf16.msra.mxu0 0
      %2875 = vmatprep.subr.bf16.mxu0 0
      %2876 = vmatpush1.bf16.msra.mxu0 0
      %2877 = vmatprep.subr.bf16.mxu0 0
      %2878 = vmatpush1.bf16.msra.mxu0 0
      %2879 = vmatprep.subr.bf16.mxu0 0
      %2880 = vmatpush1.bf16.msra.mxu0 0
      %2881 = vmatprep.subr.bf16.mxu0 0
      %2882 = vmatpush1.bf16.msra.mxu0 0
      %2883 = vmatprep.subr.bf16.mxu0 0
      %2884 = vmatpush1.bf16.msra.mxu0 0
      %2885 = vmatprep.subr.bf16.mxu0 0
      %2886 = vmatpush1.bf16.msra.mxu0 0
      %2887 = vmatprep.subr.bf16.mxu0 0
      %2888 = vmatpush1.bf16.msra.mxu0 %v2871
      %2889 = vmatprep.subr.bf16.mxu0 0
      %2890 = vmatpush2.bf16.msra.mxu0 0
      %2891 = vmatprep.subr.bf16.mxu0 0
      %2892 = vmatpush2.bf16.msra.mxu0 0
      %2893 = vmatprep.subr.bf16.mxu0 0
      %2894 = vmatpush2.bf16.msra.mxu0 0
      %2895 = vmatprep.subr.bf16.mxu0 0
      %2896 = vmatpush2.bf16.msra.mxu0 0
      %2897 = vmatprep.subr.bf16.mxu0 0
      %2898 = vmatpush2.bf16.msra.mxu0 0
      %2899 = vmatprep.subr.bf16.mxu0 0
      %2900 = vmatpush2.bf16.msra.mxu0 0
      %2901 = vmatprep.subr.bf16.mxu0 0
      %2902 = vmatpush2.bf16.msra.mxu0 0
      %2903 = vmatprep.subr.bf16.mxu0 0
      %2904 = vmatpush2.bf16.msra.mxu0 0
      %2905 = vmatprep.mubr.bf16.mxu0 0
      %2906 = vmatmul.mubr.bf16.gmra.mxu0 %v2868
      %v2907 = vpop.f32.mrf.mxu0
      %v2908 = vadd.f32 0.0, %v2907
      %v2909 = vpop.f32.mrf.mxu0
      %v2910 = vpop.f32.mrf.mxu0
      %v2911 = vpop.f32.mrf.mxu0
      %2912 = vdwg.mxu0
      %2913 = vrot.lane.b32.xlu0 %v1033, 104
      %v2914 = vpop.permute.xlu0 %2913
      %v2916 = vsel %vm1268, %v2768, 0
      %v2919 = vsel %vm1272, %v2914, 0
      %2921 = vmatprep.subr.bf16.mxu0 0
      %2922 = vmatpush1.bf16.msra.mxu0 0
      %2923 = vmatprep.subr.bf16.mxu0 0
      %2924 = vmatpush1.bf16.msra.mxu0 0
      %2925 = vmatprep.subr.bf16.mxu0 0
      %2926 = vmatpush1.bf16.msra.mxu0 0
      %2927 = vmatprep.subr.bf16.mxu0 0
      %2928 = vmatpush1.bf16.msra.mxu0 0
      %2929 = vmatprep.subr.bf16.mxu0 0
      %2930 = vmatpush1.bf16.msra.mxu0 0
      %2931 = vmatprep.subr.bf16.mxu0 0
      %2932 = vmatpush1.bf16.msra.mxu0 0
      %2933 = vmatprep.subr.bf16.mxu0 0
      %2934 = vmatpush1.bf16.msra.mxu0 0
      %2935 = vmatprep.subr.bf16.mxu0 0
      %2936 = vmatpush1.bf16.msra.mxu0 %v2919
      %2937 = vmatprep.subr.bf16.mxu0 0
      %2938 = vmatpush2.bf16.msra.mxu0 0
      %2939 = vmatprep.subr.bf16.mxu0 0
      %2940 = vmatpush2.bf16.msra.mxu0 0
      %2941 = vmatprep.subr.bf16.mxu0 0
      %2942 = vmatpush2.bf16.msra.mxu0 0
      %2943 = vmatprep.subr.bf16.mxu0 0
      %2944 = vmatpush2.bf16.msra.mxu0 0
      %2945 = vmatprep.subr.bf16.mxu0 0
      %2946 = vmatpush2.bf16.msra.mxu0 0
      %2947 = vmatprep.subr.bf16.mxu0 0
      %2948 = vmatpush2.bf16.msra.mxu0 0
      %2949 = vmatprep.subr.bf16.mxu0 0
      %2950 = vmatpush2.bf16.msra.mxu0 0
      %2951 = vmatprep.subr.bf16.mxu0 0
      %2952 = vmatpush2.bf16.msra.mxu0 0
      %2953 = vmatprep.mubr.bf16.mxu0 0
      %2954 = vmatmul.mubr.bf16.gmra.mxu0 %v2916
      %v2955 = vpop.f32.mrf.mxu0
      %v2956 = vadd.f32 0.0, %v2955
      %v2957 = vpop.f32.mrf.mxu0
      %v2958 = vpop.f32.mrf.mxu0
      %v2959 = vpop.f32.mrf.mxu0
      %2960 = vdwg.mxu0
      %v2965 = vcombine.low %v2812, %v2860
      %v2966 = vcombine.low %v2908, %v2956
      %v2969 = vpack.c.bf16 %v2966, %v2965
      %v2971 = vsel %vm1034, %v2969, 0
      %v2974 = vsel %vm1466, %v806, 0
      %2976 = vmatprep.subr.bf16.mxu0 0
      %2977 = vmatpush1.bf16.msra.mxu0 0
      %2978 = vmatprep.subr.bf16.mxu0 0
      %2979 = vmatpush1.bf16.msra.mxu0 0
      %2980 = vmatprep.subr.bf16.mxu0 0
      %2981 = vmatpush1.bf16.msra.mxu0 0
      %2982 = vmatprep.subr.bf16.mxu0 0
      %2983 = vmatpush1.bf16.msra.mxu0 0
      %2984 = vmatprep.subr.bf16.mxu0 0
      %2985 = vmatpush1.bf16.msra.mxu0 0
      %2986 = vmatprep.subr.bf16.mxu0 0
      %2987 = vmatpush1.bf16.msra.mxu0 0
      %2988 = vmatprep.subr.bf16.mxu0 0
      %2989 = vmatpush1.bf16.msra.mxu0 0
      %2990 = vmatprep.subr.bf16.mxu0 0
      %2991 = vmatpush1.bf16.msra.mxu0 %v2974
      %2992 = vmatprep.subr.bf16.mxu0 0
      %2993 = vmatpush2.bf16.msra.mxu0 0
      %2994 = vmatprep.subr.bf16.mxu0 0
      %2995 = vmatpush2.bf16.msra.mxu0 0
      %2996 = vmatprep.subr.bf16.mxu0 0
      %2997 = vmatpush2.bf16.msra.mxu0 0
      %2998 = vmatprep.subr.bf16.mxu0 0
      %2999 = vmatpush2.bf16.msra.mxu0 0
      %3000 = vmatprep.subr.bf16.mxu0 0
      %3001 = vmatpush2.bf16.msra.mxu0 0
      %3002 = vmatprep.subr.bf16.mxu0 0
      %3003 = vmatpush2.bf16.msra.mxu0 0
      %3004 = vmatprep.subr.bf16.mxu0 0
      %3005 = vmatpush2.bf16.msra.mxu0 0
      %3006 = vmatprep.subr.bf16.mxu0 0
      %3007 = vmatpush2.bf16.msra.mxu0 0
      %3008 = vmatprep.mubr.bf16.mxu0 0
      %3009 = vmatmul.mubr.bf16.gmra.mxu0 %v2971
      %v3010 = vpop.f32.mrf.mxu0
      %v3011 = vadd.f32 0.0, %v3010
      %v3012 = vpop.f32.mrf.mxu0
      %v3013 = vpop.f32.mrf.mxu0
      %v3014 = vadd.f32 0.0, %v3013
      %v3015 = vpop.f32.mrf.mxu0
      %3016 = vdwg.mxu0
      %v3017 = vadd.f32 %v2519, %v3011
      %v3018 = vadd.f32 %v2520, %v3014
      %v3019 = vpack.c.bf16 %v3018, %v3017
      %v3020 = vld [vmem:[%s13] sm:$0xf]
      %v3021 = vld [vmem:[%s13 + $0x4] sm:$0xf]
      %v3022 = vld [vmem:[%s13 + $0x8] sm:$0xf]
      %v3023 = vld [vmem:[%s13 + $0xc] sm:$0xf]
      %v3024 = vld [vmem:[%s14] sm:$0x1]
      %v3026 = vlaneseq
      %v3027 = vshrl.u32 %v3026, 7
      %v3028 = vsub.s32 0, %v3027
      %v3029 = vrot.slane %v3024, %v3028
      %v3035 = vunpack.c.l.b16 %v3020
      %v3036 = vunpack.c.l.b16 %v3021
      %v3037 = vunpack.c.l.b16 %v3022
      %v3038 = vunpack.c.l.b16 %v3023
      %v3039 = vpack.c.b16 %v3036, %v3035
      %v3040 = vpack.c.b16 %v3038, %v3037
      %v3044 = vsel %vm650, %v3019, 0
      %3046 = vmatprep.subr.bf16.mxu0 0
      %3047 = vmatpush1.bf16.msra.mxu0 0
      %3048 = vmatprep.subr.bf16.mxu0 0
      %3049 = vmatpush1.bf16.msra.mxu0 0
      %3050 = vmatprep.subr.bf16.mxu0 0
      %3051 = vmatpush1.bf16.msra.mxu0 0
      %3052 = vmatprep.subr.bf16.mxu0 0
      %3053 = vmatpush1.bf16.msra.mxu0 0
      %3054 = vmatprep.subr.bf16.mxu0 0
      %3055 = vmatpush1.bf16.msra.mxu0 0
      %3056 = vmatprep.subr.bf16.mxu0 0
      %3057 = vmatpush1.bf16.msra.mxu0 0
      %3058 = vmatprep.subr.bf16.mxu0 0
      %3059 = vmatpush1.bf16.msra.mxu0 %v3040
      %3060 = vmatprep.subr.bf16.mxu0 0
      %3061 = vmatpush1.bf16.msra.mxu0 %v3039
      %3062 = vmatprep.subr.bf16.mxu0 0
      %3063 = vmatpush2.bf16.msra.mxu0 0
      %3064 = vmatprep.subr.bf16.mxu0 0
      %3065 = vmatpush2.bf16.msra.mxu0 0
      %3066 = vmatprep.subr.bf16.mxu0 0
      %3067 = vmatpush2.bf16.msra.mxu0 0
      %3068 = vmatprep.subr.bf16.mxu0 0
      %3069 = vmatpush2.bf16.msra.mxu0 0
      %3070 = vmatprep.subr.bf16.mxu0 0
      %3071 = vmatpush2.bf16.msra.mxu0 0
      %3072 = vmatprep.subr.bf16.mxu0 0
      %3073 = vmatpush2.bf16.msra.mxu0 0
      %3074 = vmatprep.subr.bf16.mxu0 0
      %3075 = vmatpush2.bf16.msra.mxu0 0
      %3076 = vmatprep.subr.bf16.mxu0 0
      %3077 = vmatpush2.bf16.msra.mxu0 0
      %3078 = vmatprep.mubr.bf16.mxu0 0
      %3079 = vmatmul.mubr.bf16.gmra.mxu0 %v3044
      %v3080 = vpop.f32.mrf.mxu0
      %v3081 = vadd.f32 %v3029, %v3080
      %v3082 = vpop.f32.mrf.mxu0
      %v3083 = vpop.f32.mrf.mxu0
      %v3084 = vadd.f32 %v3029, %v3083
      %v3085 = vpop.f32.mrf.mxu0
      %3086 = vdwg.mxu0
      %v3089 = vcombine.high %v3081, %v3081
      %v3090 = vcombine.high %v3084, %v3084
      %v3093 = vadd.f32 %v630, %v3081
      %v3094 = vadd.f32 %v638, %v3089
      %v3095 = vadd.f32 %v637, %v3084
      %v3096 = vadd.f32 %v639, %v3090
      %vm3097 = vcmask 257024
      %3098 = vst.msk [vmem:[%s544] sm:$0xf] %vm3097, %v3093
      %3099 = vst.msk [vmem:[%s544 + $0x4] sm:$0xf] %vm3097, %v3094
      %3100 = vst.msk [vmem:[%s544 + $0x8] sm:$0xf] %vm3097, %v3095
      %3101 = vst.msk [vmem:[%s544 + $0xc] sm:$0xf] %vm3097, %v3096
      %s3102 = smul.u32 4, %s31
      %p3103 = scmp.lt.s32.totalorder %s30, 1
      %s3104 = scalar_select %p3103, %s30, 1
      %p3105 = scmp.lt.s32.totalorder %s3102, 3
      %s3106 = scalar_select %p3105, %s3102, 3
      %s3107 = smul.addr %s3104, 4
      %s3108 = sadd.s32 %s3106, %s3107
      %s3109 = smul.addr %s3108, 4
      %s3110 = scalar_lea.vmem %s15, %s3109
      // Predicated region
      $region81: #{vitclip_stan_forward.3} parent=79 // pred_check
        %p3111 = pneg %p385
      $region82: #{vitclip_stan_forward.3} parent=79 // pred_check_branch
        %3113 = sbr.rel (%p3111) target = $region84
      $region83: #{vitclip_stan_forward.3} parent=79 // pred_region
        %s3114 = smul.u32 4, %s31
      $region84: #{vitclip_stan_forward.3} parent=79 // pred_fallthru
        _
    $region80: #{vitclip_stan_forward.3} parent=5 // pred_fallthru
      _
    %p3115 = scmp.le.s32.totalorder 2, %s21
    // Predicated region
    $region85: #{vitclip_stan_forward.3} parent=5 // pred_check
      %p3116 = pneg %p3115
    $region86: #{vitclip_stan_forward.3} parent=5 // pred_check_branch
      %3118 = sbr.rel (%p3116) target = $region88
    $region87: #{vitclip_stan_forward.3} parent=5 // pred_region
      %s3119 = ssub.s32 %s21, 2
      // Predicated region
      $region89: #{vitclip_stan_forward.3} parent=87 // pred_check
        %p3120 = pneg %p391
      $region90: #{vitclip_stan_forward.3} parent=87 // pred_check_branch
        %3122 = sbr.rel (%p3120) target = $region92
      $region91: #{vitclip_stan_forward.3} parent=87 // pred_region
        %s3123 = smul.u32 4, %s33
        %p3124 = scmp.lt.s32.totalorder %s32, 1
        %s3125 = scalar_select %p3124, %s32, 1
        %p3126 = scmp.lt.s32.totalorder %s3123, 3
        %s3127 = scalar_select %p3126, %s3123, 3
        %s3128 = smul.addr %s3125, 4
        %s3129 = sadd.s32 %s3127, %s3128
        %s3130 = smul.addr %s3129, 4
        %s3131 = scalar_lea.vmem %s15, %s3130
      $region92: #{vitclip_stan_forward.3} parent=87 // pred_fallthru
        _
    $region88: #{vitclip_stan_forward.3} parent=5 // pred_fallthru
      _
  $region6: #{vitclip_stan_forward.3} parent=0 // loop_footer
    %s25 = sadd.s32 1, %s21
  $region7: #{vitclip_stan_forward.3} parent=0 // loop_footer_branch
    %20 = sbr.rel target = $region3
  $region8: #{vitclip_stan_forward.3} parent=0 // loop_exit
    _

// kernel: vitclip_stan_forward.4
$region0: #{vitclip_stan_forward.4}
  #allocation0 [shape = 'u32[]', space=smem, size = 0x4, offset = 0x4, fixed_abs, tag = 'smem constant byte address 0x4 - core index']
  #allocation1 [shape = 'u32[144,128]{1,0:T(1,128)}', space=vmem, size = 0x12000, scoped, tag = 'internal scratch']
  %s0 = inlined_call_operand.vmem [shape: f32[2,1,32], index: 0, kind: input, shape index: {}]
  %s1 = inlined_call_operand.vmem [shape: f32[2,4,4,32], index: 1, kind: input, shape index: {}]
  %s2 = inlined_call_operand.vmem [shape: f32[1,32], index: 2, kind: input, shape index: {}]
  %s3 = inlined_call_operand.vmem [shape: f32[1,32], index: 3, kind: input, shape index: {}]
  %s4 = inlined_call_operand.vmem [shape: bf16[32,32], index: 4, kind: input, shape index: {}]
  %s5 = inlined_call_operand.vmem [shape: f32[1,32], index: 5, kind: input, shape index: {}]
  %s6 = inlined_call_operand.vmem [shape: bf16[32,32], index: 6, kind: input, shape index: {}]
  %s7 = inlined_call_operand.vmem [shape: f32[1,32], index: 7, kind: input, shape index: {}]
  %s8 = inlined_call_operand.vmem [shape: bf16[32,32], index: 8, kind: input, shape index: {}]
  %s9 = inlined_call_operand.vmem [shape: f32[1,32], index: 9, kind: input, shape index: {}]
  %s10 = inlined_call_operand.vmem [shape: bf16[32,32], index: 10, kind: input, shape index: {}]
  %s11 = inlined_call_operand.vmem [shape: f32[1,32], index: 11, kind: input, shape index: {}]
  %s12 = inlined_call_operand.hbm [shape: f32[2,4,4,32], index: 12, kind: output, shape index: {0}]
  %s13 = inlined_call_operand.vmem [shape: f32[2,4,32], index: 13, kind: output, shape index: {1}]
  %14 = xla_tuple %s12, %s13
  %s15 = sld [smem:[#allocation0]]
  $region89: #{vitclip_stan_forward.4} parent=0
    _
  %s17 = ssub.s32 1, %s15
  %s18 = scalar_select 0, %s17, %s15
  $region1: #{vitclip_stan_forward.4} parent=0
    #allocation2 [shape = 'u8[16384]{0}', space=vmem, size = 0x4000, scoped, tag = 'output window, operand 0']
    #allocation3 [shape = 's32[2]{0}', space=sflag, size = 0x8, scoped, tag = 'scoped memory for vitclip_stan_forward.4']
    %19 = vsyncpa [#allocation3], 0
    %s20 = scalar_lea.sflag [#allocation3], 1
    %21 = vsyncpa %s20, 0
    loop: start=0, step=1, limit=4
    $region2: #{vitclip_stan_forward.4} parent=1 // loop_pre_header
      _
    $region3: #{vitclip_stan_forward.4} parent=1 // loop_header
      %s23 = sphi 0, %s27
      %p24 = scmp.ge.s32.totalorder %s23, 4
      %s30 = sphi 0, %s42
      %s31 = sphi 0, %s38
      %s32 = sphi 0, %s30
      %s33 = sphi 0, %s31
      %s34 = sphi 0, %s32
      %s35 = sphi 0, %s33
      %s45 = sphi 0, %s47
      %s48 = sphi 0, %s45
      %s49 = sphi 0, %s48
      %s65 = sphi 0, %s49
      %s73 = sphi 0, %s75
      %s76 = sphi 0, %s73
      %s77 = sphi 0, %s76
      %s93 = sphi 0, %s77
      %s97 = sphi 0, %s97
      %s99 = sphi 0, %s97
      %s100 = sphi 0, %s99
      %s114 = sphi 0, %s100
      %s118 = sphi 0, %s118
      %s120 = sphi 0, %s118
      %s121 = sphi 0, %s120
      %s135 = sphi 0, %s121
      %s139 = sphi 0, %s139
      %s141 = sphi 0, %s139
      %s142 = sphi 0, %s141
      %s156 = sphi 0, %s142
      %s160 = sphi 0, %s160
      %s162 = sphi 0, %s160
      %s163 = sphi 0, %s162
      %s177 = sphi 0, %s163
      %s181 = sphi 0, %s181
      %s183 = sphi 0, %s181
      %s184 = sphi 0, %s183
      %s198 = sphi 0, %s184
      %s202 = sphi 0, %s202
      %s204 = sphi 0, %s202
      %s205 = sphi 0, %s204
      %s219 = sphi 0, %s205
      %s223 = sphi 0, %s223
      %s225 = sphi 0, %s223
      %s226 = sphi 0, %s225
      %s240 = sphi 0, %s226
      %s244 = sphi 0, %s244
      %s246 = sphi 0, %s244
      %s247 = sphi 0, %s246
      %s261 = sphi 0, %s247
      %s265 = sphi 0, %s265
      %s267 = sphi 0, %s265
      %s268 = sphi 0, %s267
      %s282 = sphi 0, %s268
      %s286 = sphi 0, %s286
      %s288 = sphi 0, %s286
      %s289 = sphi 0, %s288
      %s303 = sphi 0, %s289
      %s311 = sphi 0, %s313
      %s314 = sphi 0, %s311
      %s315 = sphi 0, %s314
      %s331 = sphi 0, %s315
      %s339 = sphi 0, %s341
      %s342 = sphi 0, %s339
      %s343 = sphi 0, %s342
      %s359 = sphi 0, %s343
    $region4: #{vitclip_stan_forward.4} parent=1 // loop_header_branch
      %26 = sbr.rel (%p24) target = $region8
    $region5: #{vitclip_stan_forward.4} parent=1 // loop_body
      %s28 = ssub.s32 %s23, 1
      %s29 = ssub.s32 %s23, 2
      %s36 = sadd.s32 1, %s31
      %p37 = scmp.ge.s32.totalorder %s36, 1
      %s38 = scalar_select %p37, 0, %s36
      %s39 = sadd.s32 1, %s30
      %s40 = scalar_select %p37, %s39, %s30
      %p41 = scmp.ge.s32.totalorder %s40, 2
      %s42 = scalar_select %p41, 0, %s40
      %s43 = ssub.s32 %s30, %s42
      %p44 = scmp.eq.s32.totalorder %s43, 0
      %s46 = sadd.s32 %s45, 1
      %s47 = scalar_select %p44, %s45, %s46
      %p50 = pneg %p44
      %p51 = scmp.eq.s32.totalorder %s23, 1
      %p52 = por %p50, %p51
      %p53 = scmp.ne.s32.totalorder %s45, %s48
      %p54 = scmp.eq.s32.totalorder %s23, 0
      %p55 = por %p53, %p54
      %p56 = scmp.ne.s32.totalorder %s45, %s48
      %p57 = scmp.eq.s32.totalorder %s28, 1
      %p58 = por %p56, %p57
      %p59 = scmp.ne.s32.totalorder %s48, %s49
      %p60 = scmp.eq.s32.totalorder %s28, 0
      %p61 = por %p59, %p60
      %p62 = scmp.ne.s32.totalorder %s48, %s49
      %p63 = scmp.eq.s32.totalorder %s29, 1
      %p64 = por %p62, %p63
      %p66 = scmp.ne.s32.totalorder %s49, %s65
      %p67 = scmp.eq.s32.totalorder %s29, 0
      %p68 = por %p66, %p67
      %s69 = ssub.s32 %s30, %s42
      %s70 = ssub.s32 %s31, %s38
      %s71 = sor.u32 %s69, %s70
      %p72 = scmp.eq.s32.totalorder %s71, 0
      %s74 = sadd.s32 %s73, 1
      %s75 = scalar_select %p72, %s73, %s74
      %p78 = pneg %p72
      %p79 = scmp.eq.s32.totalorder %s23, 1
      %p80 = por %p78, %p79
      %p81 = scmp.ne.s32.totalorder %s73, %s76
      %p82 = scmp.eq.s32.totalorder %s23, 0
      %p83 = por %p81, %p82
      %p84 = scmp.ne.s32.totalorder %s73, %s76
      %p85 = scmp.eq.s32.totalorder %s28, 1
      %p86 = por %p84, %p85
      %p87 = scmp.ne.s32.totalorder %s76, %s77
      %p88 = scmp.eq.s32.totalorder %s28, 0
      %p89 = por %p87, %p88
      %p90 = scmp.ne.s32.totalorder %s76, %s77
      %p91 = scmp.eq.s32.totalorder %s29, 1
      %p92 = por %p90, %p91
      %p94 = scmp.ne.s32.totalorder %s77, %s93
      %p95 = scmp.eq.s32.totalorder %s29, 0
      %p96 = por %p94, %p95
      %s98 = sadd.s32 %s97, 1
      %p101 = scmp.eq.s32.totalorder %s23, 1
      %p102 = scmp.ne.s32.totalorder %s97, %s99
      %p103 = scmp.eq.s32.totalorder %s23, 0
      %p104 = por %p102, %p103
      %p105 = scmp.ne.s32.totalorder %s97, %s99
      %p106 = scmp.eq.s32.totalorder %s28, 1
      %p107 = por %p105, %p106
      %p108 = scmp.ne.s32.totalorder %s99, %s100
      %p109 = scmp.eq.s32.totalorder %s28, 0
      %p110 = por %p108, %p109
      %p111 = scmp.ne.s32.totalorder %s99, %s100
      %p112 = scmp.eq.s32.totalorder %s29, 1
      %p113 = por %p111, %p112
      %p115 = scmp.ne.s32.totalorder %s100, %s114
      %p116 = scmp.eq.s32.totalorder %s29, 0
      %p117 = por %p115, %p116
      %s119 = sadd.s32 %s118, 1
      %p122 = scmp.eq.s32.totalorder %s23, 1
      %p123 = scmp.ne.s32.totalorder %s118, %s120
      %p124 = scmp.eq.s32.totalorder %s23, 0
      %p125 = por %p123, %p124
      %p126 = scmp.ne.s32.totalorder %s118, %s120
      %p127 = scmp.eq.s32.totalorder %s28, 1
      %p128 = por %p126, %p127
      %p129 = scmp.ne.s32.totalorder %s120, %s121
      %p130 = scmp.eq.s32.totalorder %s28, 0
      %p131 = por %p129, %p130
      %p132 = scmp.ne.s32.totalorder %s120, %s121
      %p133 = scmp.eq.s32.totalorder %s29, 1
      %p134 = por %p132, %p133
      %p136 = scmp.ne.s32.totalorder %s121, %s135
      %p137 = scmp.eq.s32.totalorder %s29, 0
      %p138 = por %p136, %p137
      %s140 = sadd.s32 %s139, 1
      %p143 = scmp.eq.s32.totalorder %s23, 1
      %p144 = scmp.ne.s32.totalorder %s139, %s141
      %p145 = scmp.eq.s32.totalorder %s23, 0
      %p146 = por %p144, %p145
      %p147 = scmp.ne.s32.totalorder %s139, %s141
      %p148 = scmp.eq.s32.totalorder %s28, 1
      %p149 = por %p147, %p148
      %p150 = scmp.ne.s32.totalorder %s141, %s142
      %p151 = scmp.eq.s32.totalorder %s28, 0
      %p152 = por %p150, %p151
      %p153 = scmp.ne.s32.totalorder %s141, %s142
      %p154 = scmp.eq.s32.totalorder %s29, 1
      %p155 = por %p153, %p154
      %p157 = scmp.ne.s32.totalorder %s142, %s156
      %p158 = scmp.eq.s32.totalorder %s29, 0
      %p159 = por %p157, %p158
      %s161 = sadd.s32 %s160, 1
      %p164 = scmp.eq.s32.totalorder %s23, 1
      %p165 = scmp.ne.s32.totalorder %s160, %s162
      %p166 = scmp.eq.s32.totalorder %s23, 0
      %p167 = por %p165, %p166
      %p168 = scmp.ne.s32.totalorder %s160, %s162
      %p169 = scmp.eq.s32.totalorder %s28, 1
      %p170 = por %p168, %p169
      %p171 = scmp.ne.s32.totalorder %s162, %s163
      %p172 = scmp.eq.s32.totalorder %s28, 0
      %p173 = por %p171, %p172
      %p174 = scmp.ne.s32.totalorder %s162, %s163
      %p175 = scmp.eq.s32.totalorder %s29, 1
      %p176 = por %p174, %p175
      %p178 = scmp.ne.s32.totalorder %s163, %s177
      %p179 = scmp.eq.s32.totalorder %s29, 0
      %p180 = por %p178, %p179
      %s182 = sadd.s32 %s181, 1
      %p185 = scmp.eq.s32.totalorder %s23, 1
      %p186 = scmp.ne.s32.totalorder %s181, %s183
      %p187 = scmp.eq.s32.totalorder %s23, 0
      %p188 = por %p186, %p187
      %p189 = scmp.ne.s32.totalorder %s181, %s183
      %p190 = scmp.eq.s32.totalorder %s28, 1
      %p191 = por %p189, %p190
      %p192 = scmp.ne.s32.totalorder %s183, %s184
      %p193 = scmp.eq.s32.totalorder %s28, 0
      %p194 = por %p192, %p193
      %p195 = scmp.ne.s32.totalorder %s183, %s184
      %p196 = scmp.eq.s32.totalorder %s29, 1
      %p197 = por %p195, %p196
      %p199 = scmp.ne.s32.totalorder %s184, %s198
      %p200 = scmp.eq.s32.totalorder %s29, 0
      %p201 = por %p199, %p200
      %s203 = sadd.s32 %s202, 1
      %p206 = scmp.eq.s32.totalorder %s23, 1
      %p207 = scmp.ne.s32.totalorder %s202, %s204
      %p208 = scmp.eq.s32.totalorder %s23, 0
      %p209 = por %p207, %p208
      %p210 = scmp.ne.s32.totalorder %s202, %s204
      %p211 = scmp.eq.s32.totalorder %s28, 1
      %p212 = por %p210, %p211
      %p213 = scmp.ne.s32.totalorder %s204, %s205
      %p214 = scmp.eq.s32.totalorder %s28, 0
      %p215 = por %p213, %p214
      %p216 = scmp.ne.s32.totalorder %s204, %s205
      %p217 = scmp.eq.s32.totalorder %s29, 1
      %p218 = por %p216, %p217
      %p220 = scmp.ne.s32.totalorder %s205, %s219
      %p221 = scmp.eq.s32.totalorder %s29, 0
      %p222 = por %p220, %p221
      %s224 = sadd.s32 %s223, 1
      %p227 = scmp.eq.s32.totalorder %s23, 1
      %p228 = scmp.ne.s32.totalorder %s223, %s225
      %p229 = scmp.eq.s32.totalorder %s23, 0
      %p230 = por %p228, %p229
      %p231 = scmp.ne.s32.totalorder %s223, %s225
      %p232 = scmp.eq.s32.totalorder %s28, 1
      %p233 = por %p231, %p232
      %p234 = scmp.ne.s32.totalorder %s225, %s226
      %p235 = scmp.eq.s32.totalorder %s28, 0
      %p236 = por %p234, %p235
      %p237 = scmp.ne.s32.totalorder %s225, %s226
      %p238 = scmp.eq.s32.totalorder %s29, 1
      %p239 = por %p237, %p238
      %p241 = scmp.ne.s32.totalorder %s226, %s240
      %p242 = scmp.eq.s32.totalorder %s29, 0
      %p243 = por %p241, %p242
      %s245 = sadd.s32 %s244, 1
      %p248 = scmp.eq.s32.totalorder %s23, 1
      %p249 = scmp.ne.s32.totalorder %s244, %s246
      %p250 = scmp.eq.s32.totalorder %s23, 0
      %p251 = por %p249, %p250
      %p252 = scmp.ne.s32.totalorder %s244, %s246
      %p253 = scmp.eq.s32.totalorder %s28, 1
      %p254 = por %p252, %p253
      %p255 = scmp.ne.s32.totalorder %s246, %s247
      %p256 = scmp.eq.s32.totalorder %s28, 0
      %p257 = por %p255, %p256
      %p258 = scmp.ne.s32.totalorder %s246, %s247
      %p259 = scmp.eq.s32.totalorder %s29, 1
      %p260 = por %p258, %p259
      %p262 = scmp.ne.s32.totalorder %s247, %s261
      %p263 = scmp.eq.s32.totalorder %s29, 0
      %p264 = por %p262, %p263
      %s266 = sadd.s32 %s265, 1
      %p269 = scmp.eq.s32.totalorder %s23, 1
      %p270 = scmp.ne.s32.totalorder %s265, %s267
      %p271 = scmp.eq.s32.totalorder %s23, 0
      %p272 = por %p270, %p271
      %p273 = scmp.ne.s32.totalorder %s265, %s267
      %p274 = scmp.eq.s32.totalorder %s28, 1
      %p275 = por %p273, %p274
      %p276 = scmp.ne.s32.totalorder %s267, %s268
      %p277 = scmp.eq.s32.totalorder %s28, 0
      %p278 = por %p276, %p277
      %p279 = scmp.ne.s32.totalorder %s267, %s268
      %p280 = scmp.eq.s32.totalorder %s29, 1
      %p281 = por %p279, %p280
      %p283 = scmp.ne.s32.totalorder %s268, %s282
      %p284 = scmp.eq.s32.totalorder %s29, 0
      %p285 = por %p283, %p284
      %s287 = sadd.s32 %s286, 1
      %p290 = scmp.eq.s32.totalorder %s23, 1
      %p291 = scmp.ne.s32.totalorder %s286, %s288
      %p292 = scmp.eq.s32.totalorder %s23, 0
      %p293 = por %p291, %p292
      %p294 = scmp.ne.s32.totalorder %s286, %s288
      %p295 = scmp.eq.s32.totalorder %s28, 1
      %p296 = por %p294, %p295
      %p297 = scmp.ne.s32.totalorder %s288, %s289
      %p298 = scmp.eq.s32.totalorder %s28, 0
      %p299 = por %p297, %p298
      %p300 = scmp.ne.s32.totalorder %s288, %s289
      %p301 = scmp.eq.s32.totalorder %s29, 1
      %p302 = por %p300, %p301
      %p304 = scmp.ne.s32.totalorder %s289, %s303
      %p305 = scmp.eq.s32.totalorder %s29, 0
      %p306 = por %p304, %p305
      %s307 = ssub.s32 %s30, %s42
      %s308 = ssub.s32 %s31, %s38
      %s309 = sor.u32 %s307, %s308
      %p310 = scmp.eq.s32.totalorder %s309, 0
      %s312 = sadd.s32 %s311, 1
      %s313 = scalar_select %p310, %s311, %s312
      %p316 = pneg %p310
      %p317 = scmp.eq.s32.totalorder %s23, 1
      %p318 = por %p316, %p317
      %p319 = scmp.ne.s32.totalorder %s311, %s314
      %p320 = scmp.eq.s32.totalorder %s23, 0
      %p321 = por %p319, %p320
      %p322 = scmp.ne.s32.totalorder %s311, %s314
      %p323 = scmp.eq.s32.totalorder %s28, 1
      %p324 = por %p322, %p323
      %p325 = scmp.ne.s32.totalorder %s314, %s315
      %p326 = scmp.eq.s32.totalorder %s28, 0
      %p327 = por %p325, %p326
      %p328 = scmp.ne.s32.totalorder %s314, %s315
      %p329 = scmp.eq.s32.totalorder %s29, 1
      %p330 = por %p328, %p329
      %p332 = scmp.ne.s32.totalorder %s315, %s331
      %p333 = scmp.eq.s32.totalorder %s29, 0
      %p334 = por %p332, %p333
      %s335 = ssub.s32 %s30, %s42
      %s336 = ssub.s32 %s31, %s38
      %s337 = sor.u32 %s335, %s336
      %p338 = scmp.eq.s32.totalorder %s337, 0
      %s340 = sadd.s32 %s339, 1
      %s341 = scalar_select %p338, %s339, %s340
      %p344 = pneg %p338
      %p345 = scmp.eq.s32.totalorder %s23, 1
      %p346 = por %p344, %p345
      %p347 = scmp.ne.s32.totalorder %s339, %s342
      %p348 = scmp.eq.s32.totalorder %s23, 0
      %p349 = por %p347, %p348
      %p350 = scmp.ne.s32.totalorder %s339, %s342
      %p351 = scmp.eq.s32.totalorder %s28, 1
      %p352 = por %p350, %p351
      %p353 = scmp.ne.s32.totalorder %s342, %s343
      %p354 = scmp.eq.s32.totalorder %s28, 0
      %p355 = por %p353, %p354
      %p356 = scmp.ne.s32.totalorder %s342, %s343
      %p357 = scmp.eq.s32.totalorder %s29, 1
      %p358 = por %p356, %p357
      %p360 = scmp.ne.s32.totalorder %s343, %s359
      %p361 = scmp.eq.s32.totalorder %s29, 0
      %p362 = por %p360, %p361
      %p363 = scmp.le.s32.totalorder 1, %s23
      %p364 = scmp.lt.s32.totalorder %s23, 3
      %p365 = pnand %p363, %p364
      %p366 = pneg %p365
      // Predicated region
      $region9: #{vitclip_stan_forward.4} parent=5 // pred_check
        _
      $region10: #{vitclip_stan_forward.4} parent=5 // pred_check_branch
        %368 = sbr.rel (%p365) target = $region12
      $region11: #{vitclip_stan_forward.4} parent=5 // pred_region
        %s369 = ssub.s32 %s23, 1
        // Predicated region
        $region13: #{vitclip_stan_forward.4} parent=11 // pred_check
          %p370 = pneg %p110
        $region14: #{vitclip_stan_forward.4} parent=11 // pred_check_branch
          %372 = sbr.rel (%p370) target = $region16
        $region15: #{vitclip_stan_forward.4} parent=11 // pred_region
          _
        $region16: #{vitclip_stan_forward.4} parent=11 // pred_fallthru
          _
        // Predicated region
        $region17: #{vitclip_stan_forward.4} parent=11 // pred_check
          %p373 = pneg %p131
        $region18: #{vitclip_stan_forward.4} parent=11 // pred_check_branch
          %375 = sbr.rel (%p373) target = $region20
        $region19: #{vitclip_stan_forward.4} parent=11 // pred_region
          _
        $region20: #{vitclip_stan_forward.4} parent=11 // pred_fallthru
          _
        // Predicated region
        $region21: #{vitclip_stan_forward.4} parent=11 // pred_check
          %p376 = pneg %p152
        $region22: #{vitclip_stan_forward.4} parent=11 // pred_check_branch
          %378 = sbr.rel (%p376) target = $region24
        $region23: #{vitclip_stan_forward.4} parent=11 // pred_region
          _
        $region24: #{vitclip_stan_forward.4} parent=11 // pred_fallthru
          _
        // Predicated region
        $region25: #{vitclip_stan_forward.4} parent=11 // pred_check
          %p379 = pneg %p173
        $region26: #{vitclip_stan_forward.4} parent=11 // pred_check_branch
          %381 = sbr.rel (%p379) target = $region28
        $region27: #{vitclip_stan_forward.4} parent=11 // pred_region
          _
        $region28: #{vitclip_stan_forward.4} parent=11 // pred_fallthru
          _
        // Predicated region
        $region29: #{vitclip_stan_forward.4} parent=11 // pred_check
          %p382 = pneg %p194
        $region30: #{vitclip_stan_forward.4} parent=11 // pred_check_branch
          %384 = sbr.rel (%p382) target = $region32
        $region31: #{vitclip_stan_forward.4} parent=11 // pred_region
          _
        $region32: #{vitclip_stan_forward.4} parent=11 // pred_fallthru
          _
        // Predicated region
        $region33: #{vitclip_stan_forward.4} parent=11 // pred_check
          %p385 = pneg %p215
        $region34: #{vitclip_stan_forward.4} parent=11 // pred_check_branch
          %387 = sbr.rel (%p385) target = $region36
        $region35: #{vitclip_stan_forward.4} parent=11 // pred_region
          _
        $region36: #{vitclip_stan_forward.4} parent=11 // pred_fallthru
          _
        // Predicated region
        $region37: #{vitclip_stan_forward.4} parent=11 // pred_check
          %p388 = pneg %p236
        $region38: #{vitclip_stan_forward.4} parent=11 // pred_check_branch
          %390 = sbr.rel (%p388) target = $region40
        $region39: #{vitclip_stan_forward.4} parent=11 // pred_region
          _
        $region40: #{vitclip_stan_forward.4} parent=11 // pred_fallthru
          _
        // Predicated region
        $region41: #{vitclip_stan_forward.4} parent=11 // pred_check
          %p391 = pneg %p257
        $region42: #{vitclip_stan_forward.4} parent=11 // pred_check_branch
          %393 = sbr.rel (%p391) target = $region44
        $region43: #{vitclip_stan_forward.4} parent=11 // pred_region
          _
        $region44: #{vitclip_stan_forward.4} parent=11 // pred_fallthru
          _
        // Predicated region
        $region45: #{vitclip_stan_forward.4} parent=11 // pred_check
          %p394 = pneg %p278
        $region46: #{vitclip_stan_forward.4} parent=11 // pred_check_branch
          %396 = sbr.rel (%p394) target = $region48
        $region47: #{vitclip_stan_forward.4} parent=11 // pred_region
          _
        $region48: #{vitclip_stan_forward.4} parent=11 // pred_fallthru
          _
        // Predicated region
        $region49: #{vitclip_stan_forward.4} parent=11 // pred_check
          %p397 = pneg %p299
        $region50: #{vitclip_stan_forward.4} parent=11 // pred_check_branch
          %399 = sbr.rel (%p397) target = $region52
        $region51: #{vitclip_stan_forward.4} parent=11 // pred_region
          _
        $region52: #{vitclip_stan_forward.4} parent=11 // pred_fallthru
          _
      $region12: #{vitclip_stan_forward.4} parent=5 // pred_fallthru
        _
      %p400 = scmp.lt.s32.totalorder %s23, 2
      // Predicated region
      $region53: #{vitclip_stan_forward.4} parent=5 // pred_check
        %p401 = pneg %p400
      $region54: #{vitclip_stan_forward.4} parent=5 // pred_check_branch
        %403 = sbr.rel (%p401) target = $region56
      $region55: #{vitclip_stan_forward.4} parent=5 // pred_region
        // Predicated region
        $region57: #{vitclip_stan_forward.4} parent=55 // pred_check
          %p404 = pneg %p55
        $region58: #{vitclip_stan_forward.4} parent=55 // pred_check_branch
          %406 = sbr.rel (%p404) target = $region60
        $region59: #{vitclip_stan_forward.4} parent=55 // pred_region
          %p407 = scmp.lt.s32.totalorder %s30, 1
          %s408 = scalar_select %p407, %s30, 1
          %s409 = scalar_lea.vmem %s0, %s408
        $region60: #{vitclip_stan_forward.4} parent=55 // pred_fallthru
          _
        // Predicated region
        $region61: #{vitclip_stan_forward.4} parent=55 // pred_check
          %p410 = pneg %p83
        $region62: #{vitclip_stan_forward.4} parent=55 // pred_check_branch
          %412 = sbr.rel (%p410) target = $region64
        $region63: #{vitclip_stan_forward.4} parent=55 // pred_region
          %p413 = scmp.lt.s32.totalorder %s30, 1
          %s414 = scalar_select %p413, %s30, 1
          %p415 = scmp.lt.s32.totalorder %s31, 0
          %s416 = scalar_select %p415, %s31, 0
          %s417 = smul.addr %s414, 4
          %s418 = sadd.s32 %s416, %s417
          %s419 = smul.addr %s418, 4
          %s420 = scalar_lea.vmem %s1, %s419
        $region64: #{vitclip_stan_forward.4} parent=55 // pred_fallthru
          _
      $region56: #{vitclip_stan_forward.4} parent=5 // pred_fallthru
        _
      %p421 = scmp.le.s32.totalorder 1, %s23
      %p422 = scmp.lt.s32.totalorder %s23, 3
      %p423 = pnand %p421, %p422
      %p424 = pneg %p423
      // Predicated region
      $region65: #{vitclip_stan_forward.4} parent=5 // pred_check
        _
      $region66: #{vitclip_stan_forward.4} parent=5 // pred_check_branch
        %426 = sbr.rel (%p423) target = $region68
      $region67: #{vitclip_stan_forward.4} parent=5 // pred_region
        %s427 = ssub.s32 %s23, 1
        %p428 = scmp.lt.s32.totalorder %s32, 1
        %s429 = scalar_select %p428, %s32, 1
        %s430 = scalar_lea.vmem %s0, %s429
        %p431 = pneg %p61
        %p432 = pneg %p58
        %p433 = scmp.lt.s32.totalorder %s32, 1
        %s434 = scalar_select %p433, %s32, 1
        %p435 = scmp.lt.s32.totalorder %s33, 0
        %s436 = scalar_select %p435, %s33, 0
        %s437 = smul.addr %s434, 4
        %s438 = sadd.s32 %s436, %s437
        %s439 = smul.addr %s438, 4
        %s440 = scalar_lea.vmem %s1, %s439
        %p441 = pneg %p89
        %p442 = pneg %p86
        %p443 = pneg %p110
        %p444 = pneg %p107
        %p445 = pneg %p131
        %p446 = pneg %p128
        %p447 = pneg %p152
        %p448 = pneg %p149
        %p449 = pneg %p173
        %p450 = pneg %p170
        %p451 = pneg %p194
        %p452 = pneg %p191
        %p453 = pneg %p215
        %p454 = pneg %p212
        %p455 = pneg %p236
        %p456 = pneg %p233
        %p457 = pneg %p257
        %p458 = pneg %p254
        %p459 = pneg %p278
        %p460 = pneg %p275
        %p461 = pneg %p299
        %p462 = pneg %p296
        %p463 = pneg %p327
        %p464 = pneg %p324
        %s465 = sand.u32 %s314, 1
        %s466 = scalar_lea.sflag [#allocation3], %s465
        %s467 = sand.u32 %s314, 1
        %s468 = smul.addr %s467, 16
        %s469 = scalar_lea.vmem [#allocation2], %s468
        %p470 = pneg %p355
        %p471 = pneg %p352
        %p472 = scmp.lt.s32.totalorder %s32, 1
        %s473 = scalar_select %p472, %s32, 1
        %p474 = scmp.lt.s32.totalorder %s33, 0
        %s475 = scalar_select %p474, %s33, 0
        %s476 = sadd.s32 %s475, %s473
        %s477 = smul.addr %s476, 4
        %s478 = scalar_lea.vmem %s13, %s477
        %p479 = scmp.lt.s32.totalorder %s32, 1
        %s480 = scalar_select %p479, %s32, 1
        %s481 = scalar_lea.vmem %s0, %s480
        %p482 = scmp.lt.s32.totalorder %s32, 1
        %s483 = scalar_select %p482, %s32, 1
        %p484 = scmp.lt.s32.totalorder %s33, 0
        %s485 = scalar_select %p484, %s33, 0
        %s486 = smul.addr %s483, 4
        %s487 = sadd.s32 %s485, %s486
        %s488 = smul.addr %s487, 4
        %s489 = scalar_lea.vmem %s1, %s488
        %s490 = smul.u32 4, %s33
        %p491 = scmp.lt.s32.totalorder %s32, 1
        %s492 = scalar_select %p491, %s32, 1
        %p493 = scmp.lt.s32.totalorder %s33, 0
        %s494 = scalar_select %p493, %s33, 0
        %s495 = sadd.s32 %s494, %s492
        %s496 = smul.addr %s495, 4
        %s497 = scalar_lea.vmem %s13, %s496
        %v499 = vld [vmem:[%s489] sm:$0xf]
        %v500 = vld [vmem:[%s489 + $0x4] sm:$0xf]
        %v501 = vld [vmem:[%s489 + $0x8] sm:$0xf]
        %v502 = vld [vmem:[%s489 + $0xc] sm:$0xf]
        %v503 = vcombine.low %v499, %v501
        %v505 = vunpack.c.l.s4 1983009808
        %v506 = vunpack.c.0.s8 %v505
        %v507 = vlaneseq
        %v508 = vshrl.u32 %v507, 7
        %v509 = vsub.s32 %v506, %v508
        %v510 = vrot.slane %v503, %v509
        %v511 = vcombine.low %v500, %v502
        %v513 = vunpack.c.l.s4 1983009808
        %v514 = vunpack.c.0.s8 %v513
        %v515 = vlaneseq
        %v516 = vshrl.u32 %v515, 7
        %v517 = vsub.s32 %v514, %v516
        %v518 = vrot.slane %v511, %v517
        %v519 = vcombine.low %v510, %v518
        %v520 = vcombine.high %v510, %v518
        %v522 = vunpack.c.l.s4 1934713408
        %v523 = vunpack.c.0.s8 %v522
        %v524 = vlaneseq
        %v525 = vshrl.u32 %v524, 7
        %v526 = vsub.s32 %v523, %v525
        %v527 = vrot.slane %v519, %v526
        %v529 = vunpack.c.l.s4 1934713408
        %v530 = vunpack.c.0.s8 %v529
        %v531 = vlaneseq
        %v532 = vshrl.u32 %v531, 7
        %v533 = vsub.s32 %v530, %v532
        %v534 = vrot.slane %v520, %v533
        %v535 = vcombine.high %v527, 0.0
        %v536 = vcombine.high %v534, 0.0
        %v537 = vld [vmem:[%s481] sm:$0x1]
        %v542 = vrot.slane %v527, 7
        %v543 = vrot.slane %v535, 7
        %v544 = vrot.slane %v534, 7
        %v545 = vrot.slane %v536, 7
        %vm550 = vcmask 1040384
        %v551 = vsel %vm550, %v537, %v542
        %v552 = vsel %vm550, %v537, %v543
        %v553 = vsel %vm550, %v537, %v544
        %v554 = vsel %vm550, %v537, %v545
        %v559 = vcombine.high %v551, %v551
        %v561 = vunpack.c.l.s4 1966171168
        %v562 = vunpack.c.0.s8 %v561
        %v563 = vlaneseq
        %v564 = vshrl.u32 %v563, 7
        %v565 = vsub.s32 %v562, %v564
        %v566 = vrot.slane %v551, %v565
        %v568 = vunpack.c.l.s4 1966171168
        %v569 = vunpack.c.0.s8 %v568
        %v570 = vlaneseq
        %v571 = vshrl.u32 %v570, 7
        %v572 = vsub.s32 %v569, %v571
        %v573 = vrot.slane %v559, %v572
        %v574 = vcombine.high %v566, %v566
        %v576 = vunpack.c.l.s4 1966171168
        %v577 = vunpack.c.0.s8 %v576
        %v578 = vlaneseq
        %v579 = vshrl.u32 %v578, 7
        %v580 = vsub.s32 %v577, %v579
        %v581 = vrot.slane %v566, %v580
        %v583 = vunpack.c.l.s4 1966171168
        %v584 = vunpack.c.0.s8 %v583
        %v585 = vlaneseq
        %v586 = vshrl.u32 %v585, 7
        %v587 = vsub.s32 %v584, %v586
        %v588 = vrot.slane %v573, %v587
        %v590 = vunpack.c.l.s4 1966171168
        %v591 = vunpack.c.0.s8 %v590
        %v592 = vlaneseq
        %v593 = vshrl.u32 %v592, 7
        %v594 = vsub.s32 %v591, %v593
        %v595 = vrot.slane %v574, %v594
        %v596 = vcombine.high %v581, %v581
        %v597 = vcombine.high %v595, %v595
        %v598 = vcombine.high %v552, %v552
        %v600 = vunpack.c.l.s4 1966171168
        %v601 = vunpack.c.0.s8 %v600
        %v602 = vlaneseq
        %v603 = vshrl.u32 %v602, 7
        %v604 = vsub.s32 %v601, %v603
        %v605 = vrot.slane %v552, %v604
        %v607 = vunpack.c.l.s4 1966171168
        %v608 = vunpack.c.0.s8 %v607
        %v609 = vlaneseq
        %v610 = vshrl.u32 %v609, 7
        %v611 = vsub.s32 %v608, %v610
        %v612 = vrot.slane %v598, %v611
        %v613 = vcombine.high %v605, %v605
        %v615 = vunpack.c.l.s4 1966171168
        %v616 = vunpack.c.0.s8 %v615
        %v617 = vlaneseq
        %v618 = vshrl.u32 %v617, 7
        %v619 = vsub.s32 %v616, %v618
        %v620 = vrot.slane %v605, %v619
        %v622 = vunpack.c.l.s4 1966171168
        %v623 = vunpack.c.0.s8 %v622
        %v624 = vlaneseq
        %v625 = vshrl.u32 %v624, 7
        %v626 = vsub.s32 %v623, %v625
        %v627 = vrot.slane %v612, %v626
        %v629 = vunpack.c.l.s4 1966171168
        %v630 = vunpack.c.0.s8 %v629
        %v631 = vlaneseq
        %v632 = vshrl.u32 %v631, 7
        %v633 = vsub.s32 %v630, %v632
        %v634 = vrot.slane %v613, %v633
        %v635 = vcombine.high %v620, %v620
        %v636 = vcombine.high %v634, %v634
        %v637 = vcombine.high %v553, %v553
        %v639 = vunpack.c.l.s4 1966171168
        %v640 = vunpack.c.0.s8 %v639
        %v641 = vlaneseq
        %v642 = vshrl.u32 %v641, 7
        %v643 = vsub.s32 %v640, %v642
        %v644 = vrot.slane %v553, %v643
        %v646 = vunpack.c.l.s4 1966171168
        %v647 = vunpack.c.0.s8 %v646
        %v648 = vlaneseq
        %v649 = vshrl.u32 %v648, 7
        %v650 = vsub.s32 %v647, %v649
        %v651 = vrot.slane %v637, %v650
        %v652 = vcombine.high %v644, %v644
        %v654 = vunpack.c.l.s4 1966171168
        %v655 = vunpack.c.0.s8 %v654
        %v656 = vlaneseq
        %v657 = vshrl.u32 %v656, 7
        %v658 = vsub.s32 %v655, %v657
        %v659 = vrot.slane %v644, %v658
        %v661 = vunpack.c.l.s4 1966171168
        %v662 = vunpack.c.0.s8 %v661
        %v663 = vlaneseq
        %v664 = vshrl.u32 %v663, 7
        %v665 = vsub.s32 %v662, %v664
        %v666 = vrot.slane %v651, %v665
        %v668 = vunpack.c.l.s4 1966171168
        %v669 = vunpack.c.0.s8 %v668
        %v670 = vlaneseq
        %v671 = vshrl.u32 %v670, 7
        %v672 = vsub.s32 %v669, %v671
        %v673 = vrot.slane %v652, %v672
        %v674 = vcombine.high %v659, %v659
        %v675 = vcombine.high %v673, %v673
        %v676 = vcombine.high %v554, %v554
        %v678 = vunpack.c.l.s4 1966171168
        %v679 = vunpack.c.0.s8 %v678
        %v680 = vlaneseq
        %v681 = vshrl.u32 %v680, 7
        %v682 = vsub.s32 %v679, %v681
        %v683 = vrot.slane %v554, %v682
        %v685 = vunpack.c.l.s4 1966171168
        %v686 = vunpack.c.0.s8 %v685
        %v687 = vlaneseq
        %v688 = vshrl.u32 %v687, 7
        %v689 = vsub.s32 %v686, %v688
        %v690 = vrot.slane %v676, %v689
        %v691 = vcombine.high %v683, %v683
        %v693 = vunpack.c.l.s4 1966171168
        %v694 = vunpack.c.0.s8 %v693
        %v695 = vlaneseq
        %v696 = vshrl.u32 %v695, 7
        %v697 = vsub.s32 %v694, %v696
        %v698 = vrot.slane %v683, %v697
        %v700 = vunpack.c.l.s4 1966171168
        %v701 = vunpack.c.0.s8 %v700
        %v702 = vlaneseq
        %v703 = vshrl.u32 %v702, 7
        %v704 = vsub.s32 %v701, %v703
        %v705 = vrot.slane %v690, %v704
        %v707 = vunpack.c.l.s4 1966171168
        %v708 = vunpack.c.0.s8 %v707
        %v709 = vlaneseq
        %v710 = vshrl.u32 %v709, 7
        %v711 = vsub.s32 %v708, %v710
        %v712 = vrot.slane %v691, %v711
        %v713 = vcombine.high %v698, %v698
        %v714 = vcombine.high %v712, %v712
        %v735 = vld [vmem:[%s2] sm:$0x1]
        %v736 = vld [vmem:[%s3] sm:$0x1]
        %v737 = vcombine.low %v581, %v595
        %v738 = vcombine.low %v596, %v597
        %v739 = vcombine.low %v588, %v620
        %v740 = vcombine.low %v634, %v635
        %v742 = vunpack.c.l.s4 1966171168
        %v743 = vunpack.c.0.s8 %v742
        %v744 = vlaneseq
        %v745 = vshrl.u32 %v744, 7
        %v746 = vsub.s32 %v743, %v745
        %v747 = vrot.slane %v737, %v746
        %v749 = vunpack.c.l.s4 1966171168
        %v750 = vunpack.c.0.s8 %v749
        %v751 = vlaneseq
        %v752 = vshrl.u32 %v751, 7
        %v753 = vsub.s32 %v750, %v752
        %v754 = vrot.slane %v738, %v753
        %v756 = vunpack.c.l.s4 1966171168
        %v757 = vunpack.c.0.s8 %v756
        %v758 = vlaneseq
        %v759 = vshrl.u32 %v758, 7
        %v760 = vsub.s32 %v757, %v759
        %v761 = vrot.slane %v739, %v760
        %v763 = vunpack.c.l.s4 1966171168
        %v764 = vunpack.c.0.s8 %v763
        %v765 = vlaneseq
        %v766 = vshrl.u32 %v765, 7
        %v767 = vsub.s32 %v764, %v766
        %v768 = vrot.slane %v740, %v767
        %v769 = vcombine.low %v747, %v754
        %v770 = vcombine.low %v761, %v768
        %v772 = vunpack.c.l.s4 1966171168
        %v773 = vunpack.c.0.s8 %v772
        %v774 = vlaneseq
        %v775 = vshrl.u32 %v774, 7
        %v776 = vsub.s32 %v773, %v775
        %v777 = vrot.slane %v769, %v776
        %v779 = vunpack.c.l.s4 1966171168
        %v780 = vunpack.c.0.s8 %v779
        %v781 = vlaneseq
        %v782 = vshrl.u32 %v781, 7
        %v783 = vsub.s32 %v780, %v782
        %v784 = vrot.slane %v770, %v783
        %v785 = vcombine.low %v777, %v784
        %v786 = vcombine.low %v636, %v627
        %v787 = vcombine.low %v659, %v673
        %v788 = vcombine.low %v674, %v675
        %v789 = vcombine.low %v666, %v698
        %v791 = vunpack.c.l.s4 1966171168
        %v792 = vunpack.c.0.s8 %v791
        %v793 = vlaneseq
        %v794 = vshrl.u32 %v793, 7
        %v795 = vsub.s32 %v792, %v794
        %v796 = vrot.slane %v786, %v795
        %v798 = vunpack.c.l.s4 1966171168
        %v799 = vunpack.c.0.s8 %v798
        %v800 = vlaneseq
        %v801 = vshrl.u32 %v800, 7
        %v802 = vsub.s32 %v799, %v801
        %v803 = vrot.slane %v787, %v802
        %v805 = vunpack.c.l.s4 1966171168
        %v806 = vunpack.c.0.s8 %v805
        %v807 = vlaneseq
        %v808 = vshrl.u32 %v807, 7
        %v809 = vsub.s32 %v806, %v808
        %v810 = vrot.slane %v788, %v809
        %v812 = vunpack.c.l.s4 1966171168
        %v813 = vunpack.c.0.s8 %v812
        %v814 = vlaneseq
        %v815 = vshrl.u32 %v814, 7
        %v816 = vsub.s32 %v813, %v815
        %v817 = vrot.slane %v789, %v816
        %v818 = vcombine.low %v796, %v803
        %v819 = vcombine.low %v810, %v817
        %v821 = vunpack.c.l.s4 1966171168
        %v822 = vunpack.c.0.s8 %v821
        %v823 = vlaneseq
        %v824 = vshrl.u32 %v823, 7
        %v825 = vsub.s32 %v822, %v824
        %v826 = vrot.slane %v818, %v825
        %v828 = vunpack.c.l.s4 1966171168
        %v829 = vunpack.c.0.s8 %v828
        %v830 = vlaneseq
        %v831 = vshrl.u32 %v830, 7
        %v832 = vsub.s32 %v829, %v831
        %v833 = vrot.slane %v819, %v832
        %v834 = vcombine.low %v826, %v833
        %v835 = vcombine.low %v712, %v713
        %v836 = vcombine.low %v714, %v705
        %v838 = vunpack.c.l.s4 1966171168
        %v839 = vunpack.c.0.s8 %v838
        %v840 = vlaneseq
        %v841 = vshrl.u32 %v840, 7
        %v842 = vsub.s32 %v839, %v841
        %v843 = vrot.slane %v835, %v842
        %v845 = vunpack.c.l.s4 1966171168
        %v846 = vunpack.c.0.s8 %v845
        %v847 = vlaneseq
        %v848 = vshrl.u32 %v847, 7
        %v849 = vsub.s32 %v846, %v848
        %v850 = vrot.slane %v836, %v849
        %v851 = vcombine.low %v843, %v850
        %v853 = vunpack.c.l.s4 1966171168
        %v854 = vunpack.c.0.s8 %v853
        %v855 = vlaneseq
        %v856 = vshrl.u32 %v855, 7
        %v857 = vsub.s32 %v854, %v856
        %v858 = vrot.slane %v851, %v857
        %vm862 = vcmask 261120
        %v863 = vsel %vm862, %v785, 0.0
        %864 = vadd.xlane.f32.xlu0 %v863
        %v865 = vpop.xlane.xlu0 %864
        %v866 = vsel %vm862, %v834, 0.0
        %867 = vadd.xlane.f32.xlu0 %v866
        %v868 = vpop.xlane.xlu0 %867
        %vm869 = vcmask 257024
        %v870 = vsel %vm869, %v858, 0.0
        %871 = vadd.xlane.f32.xlu0 %v870
        %v872 = vpop.xlane.xlu0 %871
        %v873 = vrcp.pop 32.0
        %v874 = vmul.f32 %v865, %v873
        %v875 = vmul.f32 %v868, %v873
        %v876 = vmul.f32 %v872, %v873
        %v877 = vmul.f32 %v581, %v581
        %v878 = vmul.f32 %v595, %v595
        %v879 = vmul.f32 %v596, %v596
        %v880 = vmul.f32 %v597, %v597
        %v881 = vmul.f32 %v588, %v588
        %v882 = vmul.f32 %v620, %v620
        %v883 = vmul.f32 %v634, %v634
        %v884 = vmul.f32 %v635, %v635
        %v885 = vmul.f32 %v636, %v636
        %v886 = vmul.f32 %v627, %v627
        %v887 = vmul.f32 %v659, %v659
        %v888 = vmul.f32 %v673, %v673
        %v889 = vmul.f32 %v674, %v674
        %v890 = vmul.f32 %v675, %v675
        %v891 = vmul.f32 %v666, %v666
        %v892 = vmul.f32 %v698, %v698
        %v893 = vmul.f32 %v712, %v712
        %v894 = vmul.f32 %v713, %v713
        %v895 = vmul.f32 %v714, %v714
        %v896 = vmul.f32 %v705, %v705
        %v917 = vcombine.low %v877, %v878
        %v918 = vcombine.low %v879, %v880
        %v919 = vcombine.low %v881, %v882
        %v920 = vcombine.low %v883, %v884
        %v922 = vunpack.c.l.s4 1966171168
        %v923 = vunpack.c.0.s8 %v922
        %v924 = vlaneseq
        %v925 = vshrl.u32 %v924, 7
        %v926 = vsub.s32 %v923, %v925
        %v927 = vrot.slane %v917, %v926
        %v929 = vunpack.c.l.s4 1966171168
        %v930 = vunpack.c.0.s8 %v929
        %v931 = vlaneseq
        %v932 = vshrl.u32 %v931, 7
        %v933 = vsub.s32 %v930, %v932
        %v934 = vrot.slane %v918, %v933
        %v936 = vunpack.c.l.s4 1966171168
        %v937 = vunpack.c.0.s8 %v936
        %v938 = vlaneseq
        %v939 = vshrl.u32 %v938, 7
        %v940 = vsub.s32 %v937, %v939
        %v941 = vrot.slane %v919, %v940
        %v943 = vunpack.c.l.s4 1966171168
        %v944 = vunpack.c.0.s8 %v943
        %v945 = vlaneseq
        %v946 = vshrl.u32 %v945, 7
        %v947 = vsub.s32 %v944, %v946
        %v948 = vrot.slane %v920, %v947
        %v949 = vcombine.low %v927, %v934
        %v950 = vcombine.low %v941, %v948
        %v952 = vunpack.c.l.s4 1966171168
        %v953 = vunpack.c.0.s8 %v952
        %v954 = vlaneseq
        %v955 = vshrl.u32 %v954, 7
        %v956 = vsub.s32 %v953, %v955
        %v957 = vrot.slane %v949, %v956
        %v959 = vunpack.c.l.s4 1966171168
        %v960 = vunpack.c.0.s8 %v959
        %v961 = vlaneseq
        %v962 = vshrl.u32 %v961, 7
        %v963 = vsub.s32 %v960, %v962
        %v964 = vrot.slane %v950, %v963
        %v965 = vcombine.low %v957, %v964
        %v966 = vcombine.low %v885, %v886
        %v967 = vcombine.low %v887, %v888
        %v968 = vcombine.low %v889, %v890
        %v969 = vcombine.low %v891, %v892
        %v971 = vunpack.c.l.s4 1966171168
        %v972 = vunpack.c.0.s8 %v971
        %v973 = vlaneseq
        %v974 = vshrl.u32 %v973, 7
        %v975 = vsub.s32 %v972, %v974
        %v976 = vrot.slane %v966, %v975
        %v978 = vunpack.c.l.s4 1966171168
        %v979 = vunpack.c.0.s8 %v978
        %v980 = vlaneseq
        %v981 = vshrl.u32 %v980, 7
        %v982 = vsub.s32 %v979, %v981
        %v983 = vrot.slane %v967, %v982
        %v985 = vunpack.c.l.s4 1966171168
        %v986 = vunpack.c.0.s8 %v985
        %v987 = vlaneseq
        %v988 = vshrl.u32 %v987, 7
        %v989 = vsub.s32 %v986, %v988
        %v990 = vrot.slane %v968, %v989
        %v992 = vunpack.c.l.s4 1966171168
        %v993 = vunpack.c.0.s8 %v992
        %v994 = vlaneseq
        %v995 = vshrl.u32 %v994, 7
        %v996 = vsub.s32 %v993, %v995
        %v997 = vrot.slane %v969, %v996
        %v998 = vcombine.low %v976, %v983
        %v999 = vcombine.low %v990, %v997
        %v1001 = vunpack.c.l.s4 1966171168
        %v1002 = vunpack.c.0.s8 %v1001
        %v1003 = vlaneseq
        %v1004 = vshrl.u32 %v1003, 7
        %v1005 = vsub.s32 %v1002, %v1004
        %v1006 = vrot.slane %v998, %v1005
        %v1008 = vunpack.c.l.s4 1966171168
        %v1009 = vunpack.c.0.s8 %v1008
        %v1010 = vlaneseq
        %v1011 = vshrl.u32 %v1010, 7
        %v1012 = vsub.s32 %v1009, %v1011
        %v1013 = vrot.slane %v999, %v1012
        %v1014 = vcombine.low %v1006, %v1013
        %v1015 = vcombine.low %v893, %v894
        %v1016 = vcombine.low %v895, %v896
        %v1018 = vunpack.c.l.s4 1966171168
        %v1019 = vunpack.c.0.s8 %v1018
        %v1020 = vlaneseq
        %v1021 = vshrl.u32 %v1020, 7
        %v1022 = vsub.s32 %v1019, %v1021
        %v1023 = vrot.slane %v1015, %v1022
        %v1025 = vunpack.c.l.s4 1966171168
        %v1026 = vunpack.c.0.s8 %v1025
        %v1027 = vlaneseq
        %v1028 = vshrl.u32 %v1027, 7
        %v1029 = vsub.s32 %v1026, %v1028
        %v1030 = vrot.slane %v1016, %v1029
        %v1031 = vcombine.low %v1023, %v1030
        %v1033 = vunpack.c.l.s4 1966171168
        %v1034 = vunpack.c.0.s8 %v1033
        %v1035 = vlaneseq
        %v1036 = vshrl.u32 %v1035, 7
        %v1037 = vsub.s32 %v1034, %v1036
        %v1038 = vrot.slane %v1031, %v1037
        %v1042 = vsel %vm862, %v965, 0.0
        %1043 = vadd.xlane.f32.xlu0 %v1042
        %v1044 = vpop.xlane.xlu0 %1043
        %v1045 = vsel %vm862, %v1014, 0.0
        %1046 = vadd.xlane.f32.xlu0 %v1045
        %v1047 = vpop.xlane.xlu0 %1046
        %v1048 = vsel %vm869, %v1038, 0.0
        %1049 = vadd.xlane.f32.xlu0 %v1048
        %v1050 = vpop.xlane.xlu0 %1049
        %v1051 = vmul.f32 %v1044, %v873
        %v1052 = vmul.f32 %v1047, %v873
        %v1053 = vmul.f32 %v1050, %v873
        %v1054 = vmul.f32 %v874, %v874
        %v1055 = vmul.f32 %v875, %v875
        %v1056 = vmul.f32 %v876, %v876
        %v1057 = vsub.f32 %v1051, %v1054
        %v1058 = vsub.f32 %v1052, %v1055
        %v1059 = vsub.f32 %v1053, %v1056
        %v1060 = vadd.f32 %v1057, 1e-05
        %v1061 = vadd.f32 %v1058, 1e-05
        %v1062 = vadd.f32 %v1059, 1e-05
        %v1063 = vrsqrt.pop %v1060
        %v1064 = vrsqrt.pop %v1061
        %v1065 = vrsqrt.pop %v1062
        %v1069 = vlaneseq
        %v1070 = vshrl.u32 %v1069, 7
        %v1071 = vsub.s32 0, %v1070
        %v1072 = vrot.slane %v874, %v1071
        %v1073 = vlaneseq
        %v1074 = vshrl.u32 %v1073, 7
        %v1075 = vsub.s32 1, %v1074
        %v1076 = vrot.slane %v874, %v1075
        %v1077 = vlaneseq
        %v1078 = vshrl.u32 %v1077, 7
        %v1079 = vsub.s32 2, %v1078
        %v1080 = vrot.slane %v874, %v1079
        %v1081 = vlaneseq
        %v1082 = vshrl.u32 %v1081, 7
        %v1083 = vsub.s32 3, %v1082
        %v1084 = vrot.slane %v874, %v1083
        %v1085 = vlaneseq
        %v1086 = vshrl.u32 %v1085, 7
        %v1087 = vsub.s32 4, %v1086
        %v1088 = vrot.slane %v874, %v1087
        %v1089 = vlaneseq
        %v1090 = vshrl.u32 %v1089, 7
        %v1091 = vsub.s32 5, %v1090
        %v1092 = vrot.slane %v874, %v1091
        %v1093 = vlaneseq
        %v1094 = vshrl.u32 %v1093, 7
        %v1095 = vsub.s32 6, %v1094
        %v1096 = vrot.slane %v874, %v1095
        %v1097 = vlaneseq
        %v1098 = vshrl.u32 %v1097, 7
        %v1099 = vsub.s32 7, %v1098
        %v1100 = vrot.slane %v874, %v1099
        %v1101 = vlaneseq
        %v1102 = vshrl.u32 %v1101, 7
        %v1103 = vsub.s32 0, %v1102
        %v1104 = vrot.slane %v875, %v1103
        %v1105 = vlaneseq
        %v1106 = vshrl.u32 %v1105, 7
        %v1107 = vsub.s32 1, %v1106
        %v1108 = vrot.slane %v875, %v1107
        %v1109 = vlaneseq
        %v1110 = vshrl.u32 %v1109, 7
        %v1111 = vsub.s32 2, %v1110
        %v1112 = vrot.slane %v875, %v1111
        %v1113 = vlaneseq
        %v1114 = vshrl.u32 %v1113, 7
        %v1115 = vsub.s32 3, %v1114
        %v1116 = vrot.slane %v875, %v1115
        %v1117 = vlaneseq
        %v1118 = vshrl.u32 %v1117, 7
        %v1119 = vsub.s32 4, %v1118
        %v1120 = vrot.slane %v875, %v1119
        %v1121 = vlaneseq
        %v1122 = vshrl.u32 %v1121, 7
        %v1123 = vsub.s32 5, %v1122
        %v1124 = vrot.slane %v875, %v1123
        %v1125 = vlaneseq
        %v1126 = vshrl.u32 %v1125, 7
        %v1127 = vsub.s32 6, %v1126
        %v1128 = vrot.slane %v875, %v1127
        %v1129 = vlaneseq
        %v1130 = vshrl.u32 %v1129, 7
        %v1131 = vsub.s32 7, %v1130
        %v1132 = vrot.slane %v875, %v1131
        %v1133 = vlaneseq
        %v1134 = vshrl.u32 %v1133, 7
        %v1135 = vsub.s32 0, %v1134
        %v1136 = vrot.slane %v876, %v1135
        %v1137 = vlaneseq
        %v1138 = vshrl.u32 %v1137, 7
        %v1139 = vsub.s32 1, %v1138
        %v1140 = vrot.slane %v876, %v1139
        %v1141 = vlaneseq
        %v1142 = vshrl.u32 %v1141, 7
        %v1143 = vsub.s32 2, %v1142
        %v1144 = vrot.slane %v876, %v1143
        %v1145 = vlaneseq
        %v1146 = vshrl.u32 %v1145, 7
        %v1147 = vsub.s32 3, %v1146
        %v1148 = vrot.slane %v876, %v1147
        %v1169 = vsub.f32 %v581, %v1072
        %v1170 = vsub.f32 %v595, %v1076
        %v1171 = vsub.f32 %v596, %v1080
        %v1172 = vsub.f32 %v597, %v1084
        %v1173 = vsub.f32 %v588, %v1088
        %v1174 = vsub.f32 %v620, %v1092
        %v1175 = vsub.f32 %v634, %v1096
        %v1176 = vsub.f32 %v635, %v1100
        %v1177 = vsub.f32 %v636, %v1104
        %v1178 = vsub.f32 %v627, %v1108
        %v1179 = vsub.f32 %v659, %v1112
        %v1180 = vsub.f32 %v673, %v1116
        %v1181 = vsub.f32 %v674, %v1120
        %v1182 = vsub.f32 %v675, %v1124
        %v1183 = vsub.f32 %v666, %v1128
        %v1184 = vsub.f32 %v698, %v1132
        %v1185 = vsub.f32 %v712, %v1136
        %v1186 = vsub.f32 %v713, %v1140
        %v1187 = vsub.f32 %v714, %v1144
        %v1188 = vsub.f32 %v705, %v1148
        %v1192 = vlaneseq
        %v1193 = vshrl.u32 %v1192, 7
        %v1194 = vsub.s32 0, %v1193
        %v1195 = vrot.slane %v1063, %v1194
        %v1196 = vlaneseq
        %v1197 = vshrl.u32 %v1196, 7
        %v1198 = vsub.s32 1, %v1197
        %v1199 = vrot.slane %v1063, %v1198
        %v1200 = vlaneseq
        %v1201 = vshrl.u32 %v1200, 7
        %v1202 = vsub.s32 2, %v1201
        %v1203 = vrot.slane %v1063, %v1202
        %v1204 = vlaneseq
        %v1205 = vshrl.u32 %v1204, 7
        %v1206 = vsub.s32 3, %v1205
        %v1207 = vrot.slane %v1063, %v1206
        %v1208 = vlaneseq
        %v1209 = vshrl.u32 %v1208, 7
        %v1210 = vsub.s32 4, %v1209
        %v1211 = vrot.slane %v1063, %v1210
        %v1212 = vlaneseq
        %v1213 = vshrl.u32 %v1212, 7
        %v1214 = vsub.s32 5, %v1213
        %v1215 = vrot.slane %v1063, %v1214
        %v1216 = vlaneseq
        %v1217 = vshrl.u32 %v1216, 7
        %v1218 = vsub.s32 6, %v1217
        %v1219 = vrot.slane %v1063, %v1218
        %v1220 = vlaneseq
        %v1221 = vshrl.u32 %v1220, 7
        %v1222 = vsub.s32 7, %v1221
        %v1223 = vrot.slane %v1063, %v1222
        %v1224 = vlaneseq
        %v1225 = vshrl.u32 %v1224, 7
        %v1226 = vsub.s32 0, %v1225
        %v1227 = vrot.slane %v1064, %v1226
        %v1228 = vlaneseq
        %v1229 = vshrl.u32 %v1228, 7
        %v1230 = vsub.s32 1, %v1229
        %v1231 = vrot.slane %v1064, %v1230
        %v1232 = vlaneseq
        %v1233 = vshrl.u32 %v1232, 7
        %v1234 = vsub.s32 2, %v1233
        %v1235 = vrot.slane %v1064, %v1234
        %v1236 = vlaneseq
        %v1237 = vshrl.u32 %v1236, 7
        %v1238 = vsub.s32 3, %v1237
        %v1239 = vrot.slane %v1064, %v1238
        %v1240 = vlaneseq
        %v1241 = vshrl.u32 %v1240, 7
        %v1242 = vsub.s32 4, %v1241
        %v1243 = vrot.slane %v1064, %v1242
        %v1244 = vlaneseq
        %v1245 = vshrl.u32 %v1244, 7
        %v1246 = vsub.s32 5, %v1245
        %v1247 = vrot.slane %v1064, %v1246
        %v1248 = vlaneseq
        %v1249 = vshrl.u32 %v1248, 7
        %v1250 = vsub.s32 6, %v1249
        %v1251 = vrot.slane %v1064, %v1250
        %v1252 = vlaneseq
        %v1253 = vshrl.u32 %v1252, 7
        %v1254 = vsub.s32 7, %v1253
        %v1255 = vrot.slane %v1064, %v1254
        %v1256 = vlaneseq
        %v1257 = vshrl.u32 %v1256, 7
        %v1258 = vsub.s32 0, %v1257
        %v1259 = vrot.slane %v1065, %v1258
        %v1260 = vlaneseq
        %v1261 = vshrl.u32 %v1260, 7
        %v1262 = vsub.s32 1, %v1261
        %v1263 = vrot.slane %v1065, %v1262
        %v1264 = vlaneseq
        %v1265 = vshrl.u32 %v1264, 7
        %v1266 = vsub.s32 2, %v1265
        %v1267 = vrot.slane %v1065, %v1266
        %v1268 = vlaneseq
        %v1269 = vshrl.u32 %v1268, 7
        %v1270 = vsub.s32 3, %v1269
        %v1271 = vrot.slane %v1065, %v1270
        %v1292 = vmul.f32 %v1169, %v1195
        %v1293 = vmul.f32 %v1170, %v1199
        %v1294 = vmul.f32 %v1171, %v1203
        %v1295 = vmul.f32 %v1172, %v1207
        %v1296 = vmul.f32 %v1173, %v1211
        %v1297 = vmul.f32 %v1174, %v1215
        %v1298 = vmul.f32 %v1175, %v1219
        %v1299 = vmul.f32 %v1176, %v1223
        %v1300 = vmul.f32 %v1177, %v1227
        %v1301 = vmul.f32 %v1178, %v1231
        %v1302 = vmul.f32 %v1179, %v1235
        %v1303 = vmul.f32 %v1180, %v1239
        %v1304 = vmul.f32 %v1181, %v1243
        %v1305 = vmul.f32 %v1182, %v1247
        %v1306 = vmul.f32 %v1183, %v1251
        %v1307 = vmul.f32 %v1184, %v1255
        %v1308 = vmul.f32 %v1185, %v1259
        %v1309 = vmul.f32 %v1186, %v1263
        %v1310 = vmul.f32 %v1187, %v1267
        %v1311 = vmul.f32 %v1188, %v1271
        %v1313 = vlaneseq
        %v1314 = vshrl.u32 %v1313, 7
        %v1315 = vsub.s32 0, %v1314
        %v1316 = vrot.slane %v735, %v1315
        %v1317 = vcombine.high %v1316, %v1316
        %v1319 = vunpack.c.l.s4 1966171168
        %v1320 = vunpack.c.0.s8 %v1319
        %v1321 = vlaneseq
        %v1322 = vshrl.u32 %v1321, 7
        %v1323 = vsub.s32 %v1320, %v1322
        %v1324 = vrot.slane %v1316, %v1323
        %v1326 = vunpack.c.l.s4 1966171168
        %v1327 = vunpack.c.0.s8 %v1326
        %v1328 = vlaneseq
        %v1329 = vshrl.u32 %v1328, 7
        %v1330 = vsub.s32 %v1327, %v1329
        %v1331 = vrot.slane %v1317, %v1330
        %v1332 = vcombine.high %v1324, %v1324
        %v1333 = vcombine.high %v1331, %v1331
        %v1335 = vunpack.c.l.s4 1966171168
        %v1336 = vunpack.c.0.s8 %v1335
        %v1337 = vlaneseq
        %v1338 = vshrl.u32 %v1337, 7
        %v1339 = vsub.s32 %v1336, %v1338
        %v1340 = vrot.slane %v1324, %v1339
        %v1342 = vunpack.c.l.s4 1966171168
        %v1343 = vunpack.c.0.s8 %v1342
        %v1344 = vlaneseq
        %v1345 = vshrl.u32 %v1344, 7
        %v1346 = vsub.s32 %v1343, %v1345
        %v1347 = vrot.slane %v1331, %v1346
        %v1349 = vunpack.c.l.s4 1966171168
        %v1350 = vunpack.c.0.s8 %v1349
        %v1351 = vlaneseq
        %v1352 = vshrl.u32 %v1351, 7
        %v1353 = vsub.s32 %v1350, %v1352
        %v1354 = vrot.slane %v1332, %v1353
        %v1356 = vunpack.c.l.s4 1966171168
        %v1357 = vunpack.c.0.s8 %v1356
        %v1358 = vlaneseq
        %v1359 = vshrl.u32 %v1358, 7
        %v1360 = vsub.s32 %v1357, %v1359
        %v1361 = vrot.slane %v1333, %v1360
        %v1362 = vcombine.high %v1340, %v1340
        %v1363 = vcombine.high %v1347, %v1347
        %v1364 = vcombine.high %v1354, %v1354
        %v1365 = vcombine.high %v1361, %v1361
        %v1374 = vmul.f32 %v1292, %v1340
        %v1375 = vmul.f32 %v1293, %v1354
        %v1376 = vmul.f32 %v1294, %v1362
        %v1377 = vmul.f32 %v1295, %v1364
        %v1378 = vmul.f32 %v1296, %v1347
        %v1379 = vmul.f32 %v1297, %v1361
        %v1380 = vmul.f32 %v1298, %v1363
        %v1381 = vmul.f32 %v1299, %v1365
        %v1382 = vmul.f32 %v1300, %v1340
        %v1383 = vmul.f32 %v1301, %v1354
        %v1384 = vmul.f32 %v1302, %v1362
        %v1385 = vmul.f32 %v1303, %v1364
        %v1386 = vmul.f32 %v1304, %v1347
        %v1387 = vmul.f32 %v1305, %v1361
        %v1388 = vmul.f32 %v1306, %v1363
        %v1389 = vmul.f32 %v1307, %v1365
        %v1390 = vmul.f32 %v1308, %v1340
        %v1391 = vmul.f32 %v1309, %v1354
        %v1392 = vmul.f32 %v1310, %v1362
        %v1393 = vmul.f32 %v1311, %v1364
        %v1395 = vlaneseq
        %v1396 = vshrl.u32 %v1395, 7
        %v1397 = vsub.s32 0, %v1396
        %v1398 = vrot.slane %v736, %v1397
        %v1399 = vcombine.high %v1398, %v1398
        %v1401 = vunpack.c.l.s4 1966171168
        %v1402 = vunpack.c.0.s8 %v1401
        %v1403 = vlaneseq
        %v1404 = vshrl.u32 %v1403, 7
        %v1405 = vsub.s32 %v1402, %v1404
        %v1406 = vrot.slane %v1398, %v1405
        %v1408 = vunpack.c.l.s4 1966171168
        %v1409 = vunpack.c.0.s8 %v1408
        %v1410 = vlaneseq
        %v1411 = vshrl.u32 %v1410, 7
        %v1412 = vsub.s32 %v1409, %v1411
        %v1413 = vrot.slane %v1399, %v1412
        %v1414 = vcombine.high %v1406, %v1406
        %v1415 = vcombine.high %v1413, %v1413
        %v1417 = vunpack.c.l.s4 1966171168
        %v1418 = vunpack.c.0.s8 %v1417
        %v1419 = vlaneseq
        %v1420 = vshrl.u32 %v1419, 7
        %v1421 = vsub.s32 %v1418, %v1420
        %v1422 = vrot.slane %v1406, %v1421
        %v1424 = vunpack.c.l.s4 1966171168
        %v1425 = vunpack.c.0.s8 %v1424
        %v1426 = vlaneseq
        %v1427 = vshrl.u32 %v1426, 7
        %v1428 = vsub.s32 %v1425, %v1427
        %v1429 = vrot.slane %v1413, %v1428
        %v1431 = vunpack.c.l.s4 1966171168
        %v1432 = vunpack.c.0.s8 %v1431
        %v1433 = vlaneseq
        %v1434 = vshrl.u32 %v1433, 7
        %v1435 = vsub.s32 %v1432, %v1434
        %v1436 = vrot.slane %v1414, %v1435
        %v1438 = vunpack.c.l.s4 1966171168
        %v1439 = vunpack.c.0.s8 %v1438
        %v1440 = vlaneseq
        %v1441 = vshrl.u32 %v1440, 7
        %v1442 = vsub.s32 %v1439, %v1441
        %v1443 = vrot.slane %v1415, %v1442
        %v1444 = vcombine.high %v1422, %v1422
        %v1445 = vcombine.high %v1429, %v1429
        %v1446 = vcombine.high %v1436, %v1436
        %v1447 = vcombine.high %v1443, %v1443
        %v1456 = vadd.f32 %v1374, %v1422
        %v1457 = vadd.f32 %v1375, %v1436
        %v1458 = vadd.f32 %v1376, %v1444
        %v1459 = vadd.f32 %v1377, %v1446
        %v1460 = vadd.f32 %v1378, %v1429
        %v1461 = vadd.f32 %v1379, %v1443
        %v1462 = vadd.f32 %v1380, %v1445
        %v1463 = vadd.f32 %v1381, %v1447
        %v1464 = vadd.f32 %v1382, %v1422
        %v1465 = vadd.f32 %v1383, %v1436
        %v1466 = vadd.f32 %v1384, %v1444
        %v1467 = vadd.f32 %v1385, %v1446
        %v1468 = vadd.f32 %v1386, %v1429
        %v1469 = vadd.f32 %v1387, %v1443
        %v1470 = vadd.f32 %v1388, %v1445
        %v1471 = vadd.f32 %v1389, %v1447
        %v1472 = vadd.f32 %v1390, %v1422
        %v1473 = vadd.f32 %v1391, %v1436
        %v1474 = vadd.f32 %v1392, %v1444
        %v1475 = vadd.f32 %v1393, %v1446
        %v1476 = vld [vmem:[%s4] sm:$0xf]
        %v1477 = vld [vmem:[%s4 + $0x4] sm:$0xf]
        %v1478 = vld [vmem:[%s4 + $0x8] sm:$0xf]
        %v1479 = vld [vmem:[%s4 + $0xc] sm:$0xf]
        %v1480 = vld [vmem:[%s5] sm:$0x1]
        %v1481 = vld [vmem:[%s6] sm:$0xf]
        %v1482 = vld [vmem:[%s6 + $0x4] sm:$0xf]
        %v1483 = vld [vmem:[%s6 + $0x8] sm:$0xf]
        %v1484 = vld [vmem:[%s6 + $0xc] sm:$0xf]
        %v1485 = vld [vmem:[%s7] sm:$0x1]
        %v1486 = vld [vmem:[%s8] sm:$0xf]
        %v1487 = vld [vmem:[%s8 + $0x4] sm:$0xf]
        %v1488 = vld [vmem:[%s8 + $0x8] sm:$0xf]
        %v1489 = vld [vmem:[%s8 + $0xc] sm:$0xf]
        %v1490 = vld [vmem:[%s9] sm:$0x1]
        %v1491 = vld [vmem:[%s10] sm:$0xf]
        %v1492 = vld [vmem:[%s10 + $0x4] sm:$0xf]
        %v1493 = vld [vmem:[%s10 + $0x8] sm:$0xf]
        %v1494 = vld [vmem:[%s10 + $0xc] sm:$0xf]
        %v1495 = vld [vmem:[%s11] sm:$0x1]
        %v1516 = vcombine.low %v1456, %v1457
        %v1517 = vcombine.low %v1458, %v1459
        %v1518 = vcombine.low %v1460, %v1461
        %v1519 = vcombine.low %v1462, %v1463
        %v1521 = vunpack.c.l.s4 1966171168
        %v1522 = vunpack.c.0.s8 %v1521
        %v1523 = vlaneseq
        %v1524 = vshrl.u32 %v1523, 7
        %v1525 = vsub.s32 %v1522, %v1524
        %v1526 = vrot.slane %v1516, %v1525
        %v1528 = vunpack.c.l.s4 1966171168
        %v1529 = vunpack.c.0.s8 %v1528
        %v1530 = vlaneseq
        %v1531 = vshrl.u32 %v1530, 7
        %v1532 = vsub.s32 %v1529, %v1531
        %v1533 = vrot.slane %v1517, %v1532
        %v1535 = vunpack.c.l.s4 1966171168
        %v1536 = vunpack.c.0.s8 %v1535
        %v1537 = vlaneseq
        %v1538 = vshrl.u32 %v1537, 7
        %v1539 = vsub.s32 %v1536, %v1538
        %v1540 = vrot.slane %v1518, %v1539
        %v1542 = vunpack.c.l.s4 1966171168
        %v1543 = vunpack.c.0.s8 %v1542
        %v1544 = vlaneseq
        %v1545 = vshrl.u32 %v1544, 7
        %v1546 = vsub.s32 %v1543, %v1545
        %v1547 = vrot.slane %v1519, %v1546
        %v1548 = vcombine.low %v1526, %v1533
        %v1549 = vcombine.low %v1540, %v1547
        %v1551 = vunpack.c.l.s4 1966171168
        %v1552 = vunpack.c.0.s8 %v1551
        %v1553 = vlaneseq
        %v1554 = vshrl.u32 %v1553, 7
        %v1555 = vsub.s32 %v1552, %v1554
        %v1556 = vrot.slane %v1548, %v1555
        %v1558 = vunpack.c.l.s4 1966171168
        %v1559 = vunpack.c.0.s8 %v1558
        %v1560 = vlaneseq
        %v1561 = vshrl.u32 %v1560, 7
        %v1562 = vsub.s32 %v1559, %v1561
        %v1563 = vrot.slane %v1549, %v1562
        %v1564 = vcombine.low %v1556, %v1563
        %v1565 = vcombine.low %v1464, %v1465
        %v1566 = vcombine.low %v1466, %v1467
        %v1567 = vcombine.low %v1468, %v1469
        %v1568 = vcombine.low %v1470, %v1471
        %v1570 = vunpack.c.l.s4 1966171168
        %v1571 = vunpack.c.0.s8 %v1570
        %v1572 = vlaneseq
        %v1573 = vshrl.u32 %v1572, 7
        %v1574 = vsub.s32 %v1571, %v1573
        %v1575 = vrot.slane %v1565, %v1574
        %v1577 = vunpack.c.l.s4 1966171168
        %v1578 = vunpack.c.0.s8 %v1577
        %v1579 = vlaneseq
        %v1580 = vshrl.u32 %v1579, 7
        %v1581 = vsub.s32 %v1578, %v1580
        %v1582 = vrot.slane %v1566, %v1581
        %v1584 = vunpack.c.l.s4 1966171168
        %v1585 = vunpack.c.0.s8 %v1584
        %v1586 = vlaneseq
        %v1587 = vshrl.u32 %v1586, 7
        %v1588 = vsub.s32 %v1585, %v1587
        %v1589 = vrot.slane %v1567, %v1588
        %v1591 = vunpack.c.l.s4 1966171168
        %v1592 = vunpack.c.0.s8 %v1591
        %v1593 = vlaneseq
        %v1594 = vshrl.u32 %v1593, 7
        %v1595 = vsub.s32 %v1592, %v1594
        %v1596 = vrot.slane %v1568, %v1595
        %v1597 = vcombine.low %v1575, %v1582
        %v1598 = vcombine.low %v1589, %v1596
        %v1600 = vunpack.c.l.s4 1966171168
        %v1601 = vunpack.c.0.s8 %v1600
        %v1602 = vlaneseq
        %v1603 = vshrl.u32 %v1602, 7
        %v1604 = vsub.s32 %v1601, %v1603
        %v1605 = vrot.slane %v1597, %v1604
        %v1607 = vunpack.c.l.s4 1966171168
        %v1608 = vunpack.c.0.s8 %v1607
        %v1609 = vlaneseq
        %v1610 = vshrl.u32 %v1609, 7
        %v1611 = vsub.s32 %v1608, %v1610
        %v1612 = vrot.slane %v1598, %v1611
        %v1613 = vcombine.low %v1605, %v1612
        %v1614 = vcombine.low %v1472, %v1473
        %v1615 = vcombine.low %v1474, %v1475
        %v1617 = vunpack.c.l.s4 1966171168
        %v1618 = vunpack.c.0.s8 %v1617
        %v1619 = vlaneseq
        %v1620 = vshrl.u32 %v1619, 7
        %v1621 = vsub.s32 %v1618, %v1620
        %v1622 = vrot.slane %v1614, %v1621
        %v1624 = vunpack.c.l.s4 1966171168
        %v1625 = vunpack.c.0.s8 %v1624
        %v1626 = vlaneseq
        %v1627 = vshrl.u32 %v1626, 7
        %v1628 = vsub.s32 %v1625, %v1627
        %v1629 = vrot.slane %v1615, %v1628
        %v1630 = vcombine.low %v1622, %v1629
        %v1632 = vunpack.c.l.s4 1966171168
        %v1633 = vunpack.c.0.s8 %v1632
        %v1634 = vlaneseq
        %v1635 = vshrl.u32 %v1634, 7
        %v1636 = vsub.s32 %v1633, %v1635
        %v1637 = vrot.slane %v1630, %v1636
        %v1641 = vpack.c.bf16 %v1613, %v1564
        %v1642 = vpack.c.bf16 %v1637, %v1637
        %v1644 = vlaneseq
        %v1645 = vshrl.u32 %v1644, 7
        %v1646 = vsub.s32 0, %v1645
        %v1647 = vrot.slane %v1480, %v1646
        %v1653 = vunpack.c.l.b16 %v1476
        %v1654 = vunpack.c.l.b16 %v1477
        %v1655 = vunpack.c.l.b16 %v1478
        %v1656 = vunpack.c.l.b16 %v1479
        %v1657 = vpack.c.b16 %v1654, %v1653
        %v1658 = vpack.c.b16 %v1656, %v1655
        %v1662 = vsel %vm862, %v1641, 0
        %v1665 = vsel %vm862, %v1642, 0
        %1667 = vmatprep.subr.bf16.mxu0 0
        %1668 = vmatpush1.bf16.msra.mxu0 0
        %1669 = vmatprep.subr.bf16.mxu0 0
        %1670 = vmatpush1.bf16.msra.mxu0 0
        %1671 = vmatprep.subr.bf16.mxu0 0
        %1672 = vmatpush1.bf16.msra.mxu0 0
        %1673 = vmatprep.subr.bf16.mxu0 0
        %1674 = vmatpush1.bf16.msra.mxu0 0
        %1675 = vmatprep.subr.bf16.mxu0 0
        %1676 = vmatpush1.bf16.msra.mxu0 0
        %1677 = vmatprep.subr.bf16.mxu0 0
        %1678 = vmatpush1.bf16.msra.mxu0 0
        %1679 = vmatprep.subr.bf16.mxu0 0
        %1680 = vmatpush1.bf16.msra.mxu0 %v1658
        %1681 = vmatprep.subr.bf16.mxu0 0
        %1682 = vmatpush1.bf16.msra.mxu0 %v1657
        %1683 = vmatprep.subr.bf16.mxu0 0
        %1684 = vmatpush2.bf16.msra.mxu0 0
        %1685 = vmatprep.subr.bf16.mxu0 0
        %1686 = vmatpush2.bf16.msra.mxu0 0
        %1687 = vmatprep.subr.bf16.mxu0 0
        %1688 = vmatpush2.bf16.msra.mxu0 0
        %1689 = vmatprep.subr.bf16.mxu0 0
        %1690 = vmatpush2.bf16.msra.mxu0 0
        %1691 = vmatprep.subr.bf16.mxu0 0
        %1692 = vmatpush2.bf16.msra.mxu0 0
        %1693 = vmatprep.subr.bf16.mxu0 0
        %1694 = vmatpush2.bf16.msra.mxu0 0
        %1695 = vmatprep.subr.bf16.mxu0 0
        %1696 = vmatpush2.bf16.msra.mxu0 0
        %1697 = vmatprep.subr.bf16.mxu0 0
        %1698 = vmatpush2.bf16.msra.mxu0 0
        %1699 = vmatprep.mubr.bf16.mxu0 0
        %1700 = vmatmul.mubr.bf16.gmra.mxu0 %v1662
        %v1701 = vpop.f32.mrf.mxu0
        %v1702 = vadd.f32 %v1647, %v1701
        %v1703 = vpop.f32.mrf.mxu0
        %v1704 = vpop.f32.mrf.mxu0
        %v1705 = vadd.f32 %v1647, %v1704
        %v1706 = vpop.f32.mrf.mxu0
        %1707 = vmatprep.mubr.bf16.mxu0 0
        %1708 = vmatmul.mubr.bf16.gmra.mxu0 %v1665
        %v1709 = vpop.f32.mrf.mxu0
        %v1710 = vadd.f32 %v1647, %v1709
        %v1711 = vpop.f32.mrf.mxu0
        %v1712 = vpop.f32.mrf.mxu0
        %v1713 = vpop.f32.mrf.mxu0
        %1714 = vdwg.mxu0
        %v1716 = vlaneseq
        %v1717 = vshrl.u32 %v1716, 7
        %v1718 = vsub.s32 0, %v1717
        %v1719 = vrot.slane %v1485, %v1718
        %v1725 = vunpack.c.l.b16 %v1481
        %v1726 = vunpack.c.l.b16 %v1482
        %v1727 = vunpack.c.l.b16 %v1483
        %v1728 = vunpack.c.l.b16 %v1484
        %v1729 = vpack.c.b16 %v1726, %v1725
        %v1730 = vpack.c.b16 %v1728, %v1727
        %1733 = vmatprep.subr.bf16.mxu0 0
        %1734 = vmatpush1.bf16.msra.mxu0 0
        %1735 = vmatprep.subr.bf16.mxu0 0
        %1736 = vmatpush1.bf16.msra.mxu0 0
        %1737 = vmatprep.subr.bf16.mxu0 0
        %1738 = vmatpush1.bf16.msra.mxu0 0
        %1739 = vmatprep.subr.bf16.mxu0 0
        %1740 = vmatpush1.bf16.msra.mxu0 0
        %1741 = vmatprep.subr.bf16.mxu0 0
        %1742 = vmatpush1.bf16.msra.mxu0 0
        %1743 = vmatprep.subr.bf16.mxu0 0
        %1744 = vmatpush1.bf16.msra.mxu0 0
        %1745 = vmatprep.subr.bf16.mxu0 0
        %1746 = vmatpush1.bf16.msra.mxu0 %v1730
        %1747 = vmatprep.subr.bf16.mxu0 0
        %1748 = vmatpush1.bf16.msra.mxu0 %v1729
        %1749 = vmatprep.subr.bf16.mxu0 0
        %1750 = vmatpush2.bf16.msra.mxu0 0
        %1751 = vmatprep.subr.bf16.mxu0 0
        %1752 = vmatpush2.bf16.msra.mxu0 0
        %1753 = vmatprep.subr.bf16.mxu0 0
        %1754 = vmatpush2.bf16.msra.mxu0 0
        %1755 = vmatprep.subr.bf16.mxu0 0
        %1756 = vmatpush2.bf16.msra.mxu0 0
        %1757 = vmatprep.subr.bf16.mxu0 0
        %1758 = vmatpush2.bf16.msra.mxu0 0
        %1759 = vmatprep.subr.bf16.mxu0 0
        %1760 = vmatpush2.bf16.msra.mxu0 0
        %1761 = vmatprep.subr.bf16.mxu0 0
        %1762 = vmatpush2.bf16.msra.mxu0 0
        %1763 = vmatprep.subr.bf16.mxu0 0
        %1764 = vmatpush2.bf16.msra.mxu0 0
        %1765 = vmatprep.mubr.bf16.mxu0 0
        %1766 = vmatmul.mubr.bf16.gmra.mxu0 %v1662
        %v1767 = vpop.f32.mrf.mxu0
        %v1768 = vadd.f32 %v1719, %v1767
        %v1769 = vpop.f32.mrf.mxu0
        %v1770 = vpop.f32.mrf.mxu0
        %v1771 = vadd.f32 %v1719, %v1770
        %v1772 = vpop.f32.mrf.mxu0
        %1773 = vmatprep.mubr.bf16.mxu0 0
        %1774 = vmatmul.mubr.bf16.gmra.mxu0 %v1665
        %v1775 = vpop.f32.mrf.mxu0
        %v1776 = vadd.f32 %v1719, %v1775
        %v1777 = vpop.f32.mrf.mxu0
        %v1778 = vpop.f32.mrf.mxu0
        %v1779 = vpop.f32.mrf.mxu0
        %1780 = vdwg.mxu0
        %v1782 = vlaneseq
        %v1783 = vshrl.u32 %v1782, 7
        %v1784 = vsub.s32 0, %v1783
        %v1785 = vrot.slane %v1490, %v1784
        %v1791 = vunpack.c.l.b16 %v1486
        %v1792 = vunpack.c.l.b16 %v1487
        %v1793 = vunpack.c.l.b16 %v1488
        %v1794 = vunpack.c.l.b16 %v1489
        %v1795 = vpack.c.b16 %v1792, %v1791
        %v1796 = vpack.c.b16 %v1794, %v1793
        %1799 = vmatprep.subr.bf16.mxu0 0
        %1800 = vmatpush1.bf16.msra.mxu0 0
        %1801 = vmatprep.subr.bf16.mxu0 0
        %1802 = vmatpush1.bf16.msra.mxu0 0
        %1803 = vmatprep.subr.bf16.mxu0 0
        %1804 = vmatpush1.bf16.msra.mxu0 0
        %1805 = vmatprep.subr.bf16.mxu0 0
        %1806 = vmatpush1.bf16.msra.mxu0 0
        %1807 = vmatprep.subr.bf16.mxu0 0
        %1808 = vmatpush1.bf16.msra.mxu0 0
        %1809 = vmatprep.subr.bf16.mxu0 0
        %1810 = vmatpush1.bf16.msra.mxu0 0
        %1811 = vmatprep.subr.bf16.mxu0 0
        %1812 = vmatpush1.bf16.msra.mxu0 %v1796
        %1813 = vmatprep.subr.bf16.mxu0 0
        %1814 = vmatpush1.bf16.msra.mxu0 %v1795
        %1815 = vmatprep.subr.bf16.mxu0 0
        %1816 = vmatpush2.bf16.msra.mxu0 0
        %1817 = vmatprep.subr.bf16.mxu0 0
        %1818 = vmatpush2.bf16.msra.mxu0 0
        %1819 = vmatprep.subr.bf16.mxu0 0
        %1820 = vmatpush2.bf16.msra.mxu0 0
        %1821 = vmatprep.subr.bf16.mxu0 0
        %1822 = vmatpush2.bf16.msra.mxu0 0
        %1823 = vmatprep.subr.bf16.mxu0 0
        %1824 = vmatpush2.bf16.msra.mxu0 0
        %1825 = vmatprep.subr.bf16.mxu0 0
        %1826 = vmatpush2.bf16.msra.mxu0 0
        %1827 = vmatprep.subr.bf16.mxu0 0
        %1828 = vmatpush2.bf16.msra.mxu0 0
        %1829 = vmatprep.subr.bf16.mxu0 0
        %1830 = vmatpush2.bf16.msra.mxu0 0
        %1831 = vmatprep.mubr.bf16.mxu0 0
        %1832 = vmatmul.mubr.bf16.gmra.mxu0 %v1662
        %v1833 = vpop.f32.mrf.mxu0
        %v1834 = vadd.f32 %v1785, %v1833
        %v1835 = vpop.f32.mrf.mxu0
        %v1836 = vpop.f32.mrf.mxu0
        %v1837 = vadd.f32 %v1785, %v1836
        %v1838 = vpop.f32.mrf.mxu0
        %1839 = vmatprep.mubr.bf16.mxu0 0
        %1840 = vmatmul.mubr.bf16.gmra.mxu0 %v1665
        %v1841 = vpop.f32.mrf.mxu0
        %v1842 = vadd.f32 %v1785, %v1841
        %v1843 = vpop.f32.mrf.mxu0
        %v1844 = vpop.f32.mrf.mxu0
        %v1845 = vpop.f32.mrf.mxu0
        %1846 = vdwg.mxu0
        %v1848 = vlaneseq
        %v1849 = vshrl.u32 %v1848, 7
        %v1850 = vsub.s32 0, %v1849
        %v1851 = vrot.slane %v1495, %v1850
        %v1853 = vadd.f32 %v1851, 0.0
        %v1857 = vcombine.high %v1702, %v1702
        %v1859 = vunpack.c.l.s4 1966171168
        %v1860 = vunpack.c.0.s8 %v1859
        %v1861 = vlaneseq
        %v1862 = vshrl.u32 %v1861, 7
        %v1863 = vsub.s32 %v1860, %v1862
        %v1864 = vrot.slane %v1702, %v1863
        %v1866 = vunpack.c.l.s4 1966171168
        %v1867 = vunpack.c.0.s8 %v1866
        %v1868 = vlaneseq
        %v1869 = vshrl.u32 %v1868, 7
        %v1870 = vsub.s32 %v1867, %v1869
        %v1871 = vrot.slane %v1857, %v1870
        %v1872 = vcombine.high %v1864, %v1864
        %v1873 = vcombine.high %v1871, %v1871
        %v1875 = vunpack.c.l.s4 1966171168
        %v1876 = vunpack.c.0.s8 %v1875
        %v1877 = vlaneseq
        %v1878 = vshrl.u32 %v1877, 7
        %v1879 = vsub.s32 %v1876, %v1878
        %v1880 = vrot.slane %v1864, %v1879
        %v1882 = vunpack.c.l.s4 1966171168
        %v1883 = vunpack.c.0.s8 %v1882
        %v1884 = vlaneseq
        %v1885 = vshrl.u32 %v1884, 7
        %v1886 = vsub.s32 %v1883, %v1885
        %v1887 = vrot.slane %v1871, %v1886
        %v1889 = vunpack.c.l.s4 1966171168
        %v1890 = vunpack.c.0.s8 %v1889
        %v1891 = vlaneseq
        %v1892 = vshrl.u32 %v1891, 7
        %v1893 = vsub.s32 %v1890, %v1892
        %v1894 = vrot.slane %v1872, %v1893
        %v1896 = vunpack.c.l.s4 1966171168
        %v1897 = vunpack.c.0.s8 %v1896
        %v1898 = vlaneseq
        %v1899 = vshrl.u32 %v1898, 7
        %v1900 = vsub.s32 %v1897, %v1899
        %v1901 = vrot.slane %v1873, %v1900
        %v1902 = vcombine.high %v1880, %v1880
        %v1903 = vcombine.high %v1887, %v1887
        %v1904 = vcombine.high %v1894, %v1894
        %v1905 = vcombine.high %v1901, %v1901
        %v1906 = vcombine.high %v1705, %v1705
        %v1908 = vunpack.c.l.s4 1966171168
        %v1909 = vunpack.c.0.s8 %v1908
        %v1910 = vlaneseq
        %v1911 = vshrl.u32 %v1910, 7
        %v1912 = vsub.s32 %v1909, %v1911
        %v1913 = vrot.slane %v1705, %v1912
        %v1915 = vunpack.c.l.s4 1966171168
        %v1916 = vunpack.c.0.s8 %v1915
        %v1917 = vlaneseq
        %v1918 = vshrl.u32 %v1917, 7
        %v1919 = vsub.s32 %v1916, %v1918
        %v1920 = vrot.slane %v1906, %v1919
        %v1921 = vcombine.high %v1913, %v1913
        %v1922 = vcombine.high %v1920, %v1920
        %v1924 = vunpack.c.l.s4 1966171168
        %v1925 = vunpack.c.0.s8 %v1924
        %v1926 = vlaneseq
        %v1927 = vshrl.u32 %v1926, 7
        %v1928 = vsub.s32 %v1925, %v1927
        %v1929 = vrot.slane %v1913, %v1928
        %v1931 = vunpack.c.l.s4 1966171168
        %v1932 = vunpack.c.0.s8 %v1931
        %v1933 = vlaneseq
        %v1934 = vshrl.u32 %v1933, 7
        %v1935 = vsub.s32 %v1932, %v1934
        %v1936 = vrot.slane %v1920, %v1935
        %v1938 = vunpack.c.l.s4 1966171168
        %v1939 = vunpack.c.0.s8 %v1938
        %v1940 = vlaneseq
        %v1941 = vshrl.u32 %v1940, 7
        %v1942 = vsub.s32 %v1939, %v1941
        %v1943 = vrot.slane %v1921, %v1942
        %v1945 = vunpack.c.l.s4 1966171168
        %v1946 = vunpack.c.0.s8 %v1945
        %v1947 = vlaneseq
        %v1948 = vshrl.u32 %v1947, 7
        %v1949 = vsub.s32 %v1946, %v1948
        %v1950 = vrot.slane %v1922, %v1949
        %v1951 = vcombine.high %v1929, %v1929
        %v1952 = vcombine.high %v1936, %v1936
        %v1953 = vcombine.high %v1943, %v1943
        %v1954 = vcombine.high %v1950, %v1950
        %v1956 = vunpack.c.l.s4 1966171168
        %v1957 = vunpack.c.0.s8 %v1956
        %v1958 = vlaneseq
        %v1959 = vshrl.u32 %v1958, 7
        %v1960 = vsub.s32 %v1957, %v1959
        %v1961 = vrot.slane %v1710, %v1960
        %v1962 = vcombine.high %v1961, %v1961
        %v1964 = vunpack.c.l.s4 1966171168
        %v1965 = vunpack.c.0.s8 %v1964
        %v1966 = vlaneseq
        %v1967 = vshrl.u32 %v1966, 7
        %v1968 = vsub.s32 %v1965, %v1967
        %v1969 = vrot.slane %v1961, %v1968
        %v1971 = vunpack.c.l.s4 1966171168
        %v1972 = vunpack.c.0.s8 %v1971
        %v1973 = vlaneseq
        %v1974 = vshrl.u32 %v1973, 7
        %v1975 = vsub.s32 %v1972, %v1974
        %v1976 = vrot.slane %v1962, %v1975
        %v1977 = vcombine.high %v1969, %v1969
        %v1978 = vcombine.high %v1976, %v1976
        %v1979 = vcombine.low %v1880, %v1894
        %v1980 = vcombine.low %v1902, %v1904
        %v1982 = vunpack.c.l.s4 1966171168
        %v1983 = vunpack.c.0.s8 %v1982
        %v1984 = vlaneseq
        %v1985 = vshrl.u32 %v1984, 7
        %v1986 = vsub.s32 %v1983, %v1985
        %v1987 = vrot.slane %v1979, %v1986
        %v1989 = vunpack.c.l.s4 1966171168
        %v1990 = vunpack.c.0.s8 %v1989
        %v1991 = vlaneseq
        %v1992 = vshrl.u32 %v1991, 7
        %v1993 = vsub.s32 %v1990, %v1992
        %v1994 = vrot.slane %v1980, %v1993
        %v1996 = vunpack.c.l.s4 1966171168
        %v1997 = vunpack.c.0.s8 %v1996
        %v1998 = vlaneseq
        %v1999 = vshrl.u32 %v1998, 7
        %v2000 = vsub.s32 %v1997, %v1999
        %v2001 = vrot.slane %v1887, %v2000
        %v2002 = vcombine.low %v1987, %v1994
        %v2004 = vunpack.c.l.s4 1966171168
        %v2005 = vunpack.c.0.s8 %v2004
        %v2006 = vlaneseq
        %v2007 = vshrl.u32 %v2006, 7
        %v2008 = vsub.s32 %v2005, %v2007
        %v2009 = vrot.slane %v2002, %v2008
        %v2011 = vunpack.c.l.s4 1966171168
        %v2012 = vunpack.c.0.s8 %v2011
        %v2013 = vlaneseq
        %v2014 = vshrl.u32 %v2013, 7
        %v2015 = vsub.s32 %v2012, %v2014
        %v2016 = vrot.slane %v2001, %v2015
        %v2017 = vcombine.low %v2009, %v2016
        %v2018 = vcombine.low %v1901, %v1903
        %v2019 = vcombine.low %v1905, %v1929
        %v2021 = vunpack.c.l.s4 1966171168
        %v2022 = vunpack.c.0.s8 %v2021
        %v2023 = vlaneseq
        %v2024 = vshrl.u32 %v2023, 7
        %v2025 = vsub.s32 %v2022, %v2024
        %v2026 = vrot.slane %v2018, %v2025
        %v2028 = vunpack.c.l.s4 1966171168
        %v2029 = vunpack.c.0.s8 %v2028
        %v2030 = vlaneseq
        %v2031 = vshrl.u32 %v2030, 7
        %v2032 = vsub.s32 %v2029, %v2031
        %v2033 = vrot.slane %v2019, %v2032
        %v2035 = vunpack.c.l.s4 1966171168
        %v2036 = vunpack.c.0.s8 %v2035
        %v2037 = vlaneseq
        %v2038 = vshrl.u32 %v2037, 7
        %v2039 = vsub.s32 %v2036, %v2038
        %v2040 = vrot.slane %v1943, %v2039
        %v2041 = vcombine.low %v2026, %v2033
        %v2043 = vunpack.c.l.s4 1966171168
        %v2044 = vunpack.c.0.s8 %v2043
        %v2045 = vlaneseq
        %v2046 = vshrl.u32 %v2045, 7
        %v2047 = vsub.s32 %v2044, %v2046
        %v2048 = vrot.slane %v2041, %v2047
        %v2050 = vunpack.c.l.s4 1966171168
        %v2051 = vunpack.c.0.s8 %v2050
        %v2052 = vlaneseq
        %v2053 = vshrl.u32 %v2052, 7
        %v2054 = vsub.s32 %v2051, %v2053
        %v2055 = vrot.slane %v2040, %v2054
        %v2056 = vcombine.low %v2048, %v2055
        %v2057 = vcombine.low %v1951, %v1953
        %v2058 = vcombine.low %v1936, %v1950
        %v2060 = vunpack.c.l.s4 1966171168
        %v2061 = vunpack.c.0.s8 %v2060
        %v2062 = vlaneseq
        %v2063 = vshrl.u32 %v2062, 7
        %v2064 = vsub.s32 %v2061, %v2063
        %v2065 = vrot.slane %v2057, %v2064
        %v2067 = vunpack.c.l.s4 1966171168
        %v2068 = vunpack.c.0.s8 %v2067
        %v2069 = vlaneseq
        %v2070 = vshrl.u32 %v2069, 7
        %v2071 = vsub.s32 %v2068, %v2070
        %v2072 = vrot.slane %v2058, %v2071
        %v2074 = vunpack.c.l.s4 1966171168
        %v2075 = vunpack.c.0.s8 %v2074
        %v2076 = vlaneseq
        %v2077 = vshrl.u32 %v2076, 7
        %v2078 = vsub.s32 %v2075, %v2077
        %v2079 = vrot.slane %v1952, %v2078
        %v2080 = vcombine.low %v2065, %v2072
        %v2082 = vunpack.c.l.s4 1966171168
        %v2083 = vunpack.c.0.s8 %v2082
        %v2084 = vlaneseq
        %v2085 = vshrl.u32 %v2084, 7
        %v2086 = vsub.s32 %v2083, %v2085
        %v2087 = vrot.slane %v2080, %v2086
        %v2089 = vunpack.c.l.s4 1966171168
        %v2090 = vunpack.c.0.s8 %v2089
        %v2091 = vlaneseq
        %v2092 = vshrl.u32 %v2091, 7
        %v2093 = vsub.s32 %v2090, %v2092
        %v2094 = vrot.slane %v2079, %v2093
        %v2095 = vcombine.low %v2087, %v2094
        %v2096 = vcombine.low %v1954, %v1969
        %v2097 = vcombine.low %v1976, %v1977
        %v2099 = vunpack.c.l.s4 1966171168
        %v2100 = vunpack.c.0.s8 %v2099
        %v2101 = vlaneseq
        %v2102 = vshrl.u32 %v2101, 7
        %v2103 = vsub.s32 %v2100, %v2102
        %v2104 = vrot.slane %v2096, %v2103
        %v2106 = vunpack.c.l.s4 1966171168
        %v2107 = vunpack.c.0.s8 %v2106
        %v2108 = vlaneseq
        %v2109 = vshrl.u32 %v2108, 7
        %v2110 = vsub.s32 %v2107, %v2109
        %v2111 = vrot.slane %v2097, %v2110
        %v2113 = vunpack.c.l.s4 1966171168
        %v2114 = vunpack.c.0.s8 %v2113
        %v2115 = vlaneseq
        %v2116 = vshrl.u32 %v2115, 7
        %v2117 = vsub.s32 %v2114, %v2116
        %v2118 = vrot.slane %v1978, %v2117
        %v2119 = vcombine.low %v2104, %v2111
        %v2121 = vunpack.c.l.s4 1966171168
        %v2122 = vunpack.c.0.s8 %v2121
        %v2123 = vlaneseq
        %v2124 = vshrl.u32 %v2123, 7
        %v2125 = vsub.s32 %v2122, %v2124
        %v2126 = vrot.slane %v2119, %v2125
        %v2128 = vunpack.c.l.s4 1966171168
        %v2129 = vunpack.c.0.s8 %v2128
        %v2130 = vlaneseq
        %v2131 = vshrl.u32 %v2130, 7
        %v2132 = vsub.s32 %v2129, %v2131
        %v2133 = vrot.slane %v2118, %v2132
        %v2134 = vcombine.low %v2126, %v2133
        %v2139 = vpack.c.bf16 %v2017, %v2017
        %v2140 = vpack.c.bf16 %v2056, %v2056
        %v2141 = vpack.c.bf16 %v2095, %v2095
        %v2142 = vpack.c.bf16 %v2134, %v2134
        %v2146 = vcombine.high %v1768, %v1768
        %v2148 = vunpack.c.l.s4 1966171168
        %v2149 = vunpack.c.0.s8 %v2148
        %v2150 = vlaneseq
        %v2151 = vshrl.u32 %v2150, 7
        %v2152 = vsub.s32 %v2149, %v2151
        %v2153 = vrot.slane %v1768, %v2152
        %v2155 = vunpack.c.l.s4 1966171168
        %v2156 = vunpack.c.0.s8 %v2155
        %v2157 = vlaneseq
        %v2158 = vshrl.u32 %v2157, 7
        %v2159 = vsub.s32 %v2156, %v2158
        %v2160 = vrot.slane %v2146, %v2159
        %v2161 = vcombine.high %v2153, %v2153
        %v2162 = vcombine.high %v2160, %v2160
        %v2164 = vunpack.c.l.s4 1966171168
        %v2165 = vunpack.c.0.s8 %v2164
        %v2166 = vlaneseq
        %v2167 = vshrl.u32 %v2166, 7
        %v2168 = vsub.s32 %v2165, %v2167
        %v2169 = vrot.slane %v2153, %v2168
        %v2171 = vunpack.c.l.s4 1966171168
        %v2172 = vunpack.c.0.s8 %v2171
        %v2173 = vlaneseq
        %v2174 = vshrl.u32 %v2173, 7
        %v2175 = vsub.s32 %v2172, %v2174
        %v2176 = vrot.slane %v2160, %v2175
        %v2178 = vunpack.c.l.s4 1966171168
        %v2179 = vunpack.c.0.s8 %v2178
        %v2180 = vlaneseq
        %v2181 = vshrl.u32 %v2180, 7
        %v2182 = vsub.s32 %v2179, %v2181
        %v2183 = vrot.slane %v2161, %v2182
        %v2185 = vunpack.c.l.s4 1966171168
        %v2186 = vunpack.c.0.s8 %v2185
        %v2187 = vlaneseq
        %v2188 = vshrl.u32 %v2187, 7
        %v2189 = vsub.s32 %v2186, %v2188
        %v2190 = vrot.slane %v2162, %v2189
        %v2191 = vcombine.high %v2169, %v2169
        %v2192 = vcombine.high %v2176, %v2176
        %v2193 = vcombine.high %v2183, %v2183
        %v2194 = vcombine.high %v2190, %v2190
        %v2195 = vcombine.high %v1771, %v1771
        %v2197 = vunpack.c.l.s4 1966171168
        %v2198 = vunpack.c.0.s8 %v2197
        %v2199 = vlaneseq
        %v2200 = vshrl.u32 %v2199, 7
        %v2201 = vsub.s32 %v2198, %v2200
        %v2202 = vrot.slane %v1771, %v2201
        %v2204 = vunpack.c.l.s4 1966171168
        %v2205 = vunpack.c.0.s8 %v2204
        %v2206 = vlaneseq
        %v2207 = vshrl.u32 %v2206, 7
        %v2208 = vsub.s32 %v2205, %v2207
        %v2209 = vrot.slane %v2195, %v2208
        %v2210 = vcombine.high %v2202, %v2202
        %v2211 = vcombine.high %v2209, %v2209
        %v2213 = vunpack.c.l.s4 1966171168
        %v2214 = vunpack.c.0.s8 %v2213
        %v2215 = vlaneseq
        %v2216 = vshrl.u32 %v2215, 7
        %v2217 = vsub.s32 %v2214, %v2216
        %v2218 = vrot.slane %v2202, %v2217
        %v2220 = vunpack.c.l.s4 1966171168
        %v2221 = vunpack.c.0.s8 %v2220
        %v2222 = vlaneseq
        %v2223 = vshrl.u32 %v2222, 7
        %v2224 = vsub.s32 %v2221, %v2223
        %v2225 = vrot.slane %v2209, %v2224
        %v2227 = vunpack.c.l.s4 1966171168
        %v2228 = vunpack.c.0.s8 %v2227
        %v2229 = vlaneseq
        %v2230 = vshrl.u32 %v2229, 7
        %v2231 = vsub.s32 %v2228, %v2230
        %v2232 = vrot.slane %v2210, %v2231
        %v2234 = vunpack.c.l.s4 1966171168
        %v2235 = vunpack.c.0.s8 %v2234
        %v2236 = vlaneseq
        %v2237 = vshrl.u32 %v2236, 7
        %v2238 = vsub.s32 %v2235, %v2237
        %v2239 = vrot.slane %v2211, %v2238
        %v2240 = vcombine.high %v2218, %v2218
        %v2241 = vcombine.high %v2225, %v2225
        %v2242 = vcombine.high %v2232, %v2232
        %v2243 = vcombine.high %v2239, %v2239
        %v2245 = vunpack.c.l.s4 1966171168
        %v2246 = vunpack.c.0.s8 %v2245
        %v2247 = vlaneseq
        %v2248 = vshrl.u32 %v2247, 7
        %v2249 = vsub.s32 %v2246, %v2248
        %v2250 = vrot.slane %v1776, %v2249
        %v2251 = vcombine.high %v2250, %v2250
        %v2253 = vunpack.c.l.s4 1966171168
        %v2254 = vunpack.c.0.s8 %v2253
        %v2255 = vlaneseq
        %v2256 = vshrl.u32 %v2255, 7
        %v2257 = vsub.s32 %v2254, %v2256
        %v2258 = vrot.slane %v2250, %v2257
        %v2260 = vunpack.c.l.s4 1966171168
        %v2261 = vunpack.c.0.s8 %v2260
        %v2262 = vlaneseq
        %v2263 = vshrl.u32 %v2262, 7
        %v2264 = vsub.s32 %v2261, %v2263
        %v2265 = vrot.slane %v2251, %v2264
        %v2266 = vcombine.high %v2258, %v2258
        %v2267 = vcombine.high %v2265, %v2265
        %v2268 = vcombine.low %v2169, %v2183
        %v2269 = vcombine.low %v2191, %v2193
        %v2271 = vunpack.c.l.s4 1966171168
        %v2272 = vunpack.c.0.s8 %v2271
        %v2273 = vlaneseq
        %v2274 = vshrl.u32 %v2273, 7
        %v2275 = vsub.s32 %v2272, %v2274
        %v2276 = vrot.slane %v2268, %v2275
        %v2278 = vunpack.c.l.s4 1966171168
        %v2279 = vunpack.c.0.s8 %v2278
        %v2280 = vlaneseq
        %v2281 = vshrl.u32 %v2280, 7
        %v2282 = vsub.s32 %v2279, %v2281
        %v2283 = vrot.slane %v2269, %v2282
        %v2285 = vunpack.c.l.s4 1966171168
        %v2286 = vunpack.c.0.s8 %v2285
        %v2287 = vlaneseq
        %v2288 = vshrl.u32 %v2287, 7
        %v2289 = vsub.s32 %v2286, %v2288
        %v2290 = vrot.slane %v2176, %v2289
        %v2291 = vcombine.low %v2276, %v2283
        %v2293 = vunpack.c.l.s4 1966171168
        %v2294 = vunpack.c.0.s8 %v2293
        %v2295 = vlaneseq
        %v2296 = vshrl.u32 %v2295, 7
        %v2297 = vsub.s32 %v2294, %v2296
        %v2298 = vrot.slane %v2291, %v2297
        %v2300 = vunpack.c.l.s4 1966171168
        %v2301 = vunpack.c.0.s8 %v2300
        %v2302 = vlaneseq
        %v2303 = vshrl.u32 %v2302, 7
        %v2304 = vsub.s32 %v2301, %v2303
        %v2305 = vrot.slane %v2290, %v2304
        %v2306 = vcombine.low %v2298, %v2305
        %v2307 = vcombine.low %v2190, %v2192
        %v2308 = vcombine.low %v2194, %v2218
        %v2310 = vunpack.c.l.s4 1966171168
        %v2311 = vunpack.c.0.s8 %v2310
        %v2312 = vlaneseq
        %v2313 = vshrl.u32 %v2312, 7
        %v2314 = vsub.s32 %v2311, %v2313
        %v2315 = vrot.slane %v2307, %v2314
        %v2317 = vunpack.c.l.s4 1966171168
        %v2318 = vunpack.c.0.s8 %v2317
        %v2319 = vlaneseq
        %v2320 = vshrl.u32 %v2319, 7
        %v2321 = vsub.s32 %v2318, %v2320
        %v2322 = vrot.slane %v2308, %v2321
        %v2324 = vunpack.c.l.s4 1966171168
        %v2325 = vunpack.c.0.s8 %v2324
        %v2326 = vlaneseq
        %v2327 = vshrl.u32 %v2326, 7
        %v2328 = vsub.s32 %v2325, %v2327
        %v2329 = vrot.slane %v2232, %v2328
        %v2330 = vcombine.low %v2315, %v2322
        %v2332 = vunpack.c.l.s4 1966171168
        %v2333 = vunpack.c.0.s8 %v2332
        %v2334 = vlaneseq
        %v2335 = vshrl.u32 %v2334, 7
        %v2336 = vsub.s32 %v2333, %v2335
        %v2337 = vrot.slane %v2330, %v2336
        %v2339 = vunpack.c.l.s4 1966171168
        %v2340 = vunpack.c.0.s8 %v2339
        %v2341 = vlaneseq
        %v2342 = vshrl.u32 %v2341, 7
        %v2343 = vsub.s32 %v2340, %v2342
        %v2344 = vrot.slane %v2329, %v2343
        %v2345 = vcombine.low %v2337, %v2344
        %v2346 = vcombine.low %v2240, %v2242
        %v2347 = vcombine.low %v2225, %v2239
        %v2349 = vunpack.c.l.s4 1966171168
        %v2350 = vunpack.c.0.s8 %v2349
        %v2351 = vlaneseq
        %v2352 = vshrl.u32 %v2351, 7
        %v2353 = vsub.s32 %v2350, %v2352
        %v2354 = vrot.slane %v2346, %v2353
        %v2356 = vunpack.c.l.s4 1966171168
        %v2357 = vunpack.c.0.s8 %v2356
        %v2358 = vlaneseq
        %v2359 = vshrl.u32 %v2358, 7
        %v2360 = vsub.s32 %v2357, %v2359
        %v2361 = vrot.slane %v2347, %v2360
        %v2363 = vunpack.c.l.s4 1966171168
        %v2364 = vunpack.c.0.s8 %v2363
        %v2365 = vlaneseq
        %v2366 = vshrl.u32 %v2365, 7
        %v2367 = vsub.s32 %v2364, %v2366
        %v2368 = vrot.slane %v2241, %v2367
        %v2369 = vcombine.low %v2354, %v2361
        %v2371 = vunpack.c.l.s4 1966171168
        %v2372 = vunpack.c.0.s8 %v2371
        %v2373 = vlaneseq
        %v2374 = vshrl.u32 %v2373, 7
        %v2375 = vsub.s32 %v2372, %v2374
        %v2376 = vrot.slane %v2369, %v2375
        %v2378 = vunpack.c.l.s4 1966171168
        %v2379 = vunpack.c.0.s8 %v2378
        %v2380 = vlaneseq
        %v2381 = vshrl.u32 %v2380, 7
        %v2382 = vsub.s32 %v2379, %v2381
        %v2383 = vrot.slane %v2368, %v2382
        %v2384 = vcombine.low %v2376, %v2383
        %v2385 = vcombine.low %v2243, %v2258
        %v2386 = vcombine.low %v2265, %v2266
        %v2388 = vunpack.c.l.s4 1966171168
        %v2389 = vunpack.c.0.s8 %v2388
        %v2390 = vlaneseq
        %v2391 = vshrl.u32 %v2390, 7
        %v2392 = vsub.s32 %v2389, %v2391
        %v2393 = vrot.slane %v2385, %v2392
        %v2395 = vunpack.c.l.s4 1966171168
        %v2396 = vunpack.c.0.s8 %v2395
        %v2397 = vlaneseq
        %v2398 = vshrl.u32 %v2397, 7
        %v2399 = vsub.s32 %v2396, %v2398
        %v2400 = vrot.slane %v2386, %v2399
        %v2402 = vunpack.c.l.s4 1966171168
        %v2403 = vunpack.c.0.s8 %v2402
        %v2404 = vlaneseq
        %v2405 = vshrl.u32 %v2404, 7
        %v2406 = vsub.s32 %v2403, %v2405
        %v2407 = vrot.slane %v2267, %v2406
        %v2408 = vcombine.low %v2393, %v2400
        %v2410 = vunpack.c.l.s4 1966171168
        %v2411 = vunpack.c.0.s8 %v2410
        %v2412 = vlaneseq
        %v2413 = vshrl.u32 %v2412, 7
        %v2414 = vsub.s32 %v2411, %v2413
        %v2415 = vrot.slane %v2408, %v2414
        %v2417 = vunpack.c.l.s4 1966171168
        %v2418 = vunpack.c.0.s8 %v2417
        %v2419 = vlaneseq
        %v2420 = vshrl.u32 %v2419, 7
        %v2421 = vsub.s32 %v2418, %v2420
        %v2422 = vrot.slane %v2407, %v2421
        %v2423 = vcombine.low %v2415, %v2422
        %v2428 = vpack.c.bf16 %v2306, %v2306
        %v2429 = vpack.c.bf16 %v2345, %v2345
        %v2430 = vpack.c.bf16 %v2384, %v2384
        %v2431 = vpack.c.bf16 %v2423, %v2423
        %v2435 = vcombine.high %v1834, %v1834
        %v2437 = vunpack.c.l.s4 1966171168
        %v2438 = vunpack.c.0.s8 %v2437
        %v2439 = vlaneseq
        %v2440 = vshrl.u32 %v2439, 7
        %v2441 = vsub.s32 %v2438, %v2440
        %v2442 = vrot.slane %v1834, %v2441
        %v2444 = vunpack.c.l.s4 1966171168
        %v2445 = vunpack.c.0.s8 %v2444
        %v2446 = vlaneseq
        %v2447 = vshrl.u32 %v2446, 7
        %v2448 = vsub.s32 %v2445, %v2447
        %v2449 = vrot.slane %v2435, %v2448
        %v2450 = vcombine.high %v2442, %v2442
        %v2451 = vcombine.high %v2449, %v2449
        %v2453 = vunpack.c.l.s4 1966171168
        %v2454 = vunpack.c.0.s8 %v2453
        %v2455 = vlaneseq
        %v2456 = vshrl.u32 %v2455, 7
        %v2457 = vsub.s32 %v2454, %v2456
        %v2458 = vrot.slane %v2442, %v2457
        %v2460 = vunpack.c.l.s4 1966171168
        %v2461 = vunpack.c.0.s8 %v2460
        %v2462 = vlaneseq
        %v2463 = vshrl.u32 %v2462, 7
        %v2464 = vsub.s32 %v2461, %v2463
        %v2465 = vrot.slane %v2449, %v2464
        %v2467 = vunpack.c.l.s4 1966171168
        %v2468 = vunpack.c.0.s8 %v2467
        %v2469 = vlaneseq
        %v2470 = vshrl.u32 %v2469, 7
        %v2471 = vsub.s32 %v2468, %v2470
        %v2472 = vrot.slane %v2450, %v2471
        %v2474 = vunpack.c.l.s4 1966171168
        %v2475 = vunpack.c.0.s8 %v2474
        %v2476 = vlaneseq
        %v2477 = vshrl.u32 %v2476, 7
        %v2478 = vsub.s32 %v2475, %v2477
        %v2479 = vrot.slane %v2451, %v2478
        %v2480 = vcombine.high %v2458, %v2458
        %v2481 = vcombine.high %v2465, %v2465
        %v2482 = vcombine.high %v2472, %v2472
        %v2483 = vcombine.high %v2479, %v2479
        %v2484 = vcombine.high %v1837, %v1837
        %v2486 = vunpack.c.l.s4 1966171168
        %v2487 = vunpack.c.0.s8 %v2486
        %v2488 = vlaneseq
        %v2489 = vshrl.u32 %v2488, 7
        %v2490 = vsub.s32 %v2487, %v2489
        %v2491 = vrot.slane %v1837, %v2490
        %v2493 = vunpack.c.l.s4 1966171168
        %v2494 = vunpack.c.0.s8 %v2493
        %v2495 = vlaneseq
        %v2496 = vshrl.u32 %v2495, 7
        %v2497 = vsub.s32 %v2494, %v2496
        %v2498 = vrot.slane %v2484, %v2497
        %v2499 = vcombine.high %v2491, %v2491
        %v2500 = vcombine.high %v2498, %v2498
        %v2502 = vunpack.c.l.s4 1966171168
        %v2503 = vunpack.c.0.s8 %v2502
        %v2504 = vlaneseq
        %v2505 = vshrl.u32 %v2504, 7
        %v2506 = vsub.s32 %v2503, %v2505
        %v2507 = vrot.slane %v2491, %v2506
        %v2509 = vunpack.c.l.s4 1966171168
        %v2510 = vunpack.c.0.s8 %v2509
        %v2511 = vlaneseq
        %v2512 = vshrl.u32 %v2511, 7
        %v2513 = vsub.s32 %v2510, %v2512
        %v2514 = vrot.slane %v2498, %v2513
        %v2516 = vunpack.c.l.s4 1966171168
        %v2517 = vunpack.c.0.s8 %v2516
        %v2518 = vlaneseq
        %v2519 = vshrl.u32 %v2518, 7
        %v2520 = vsub.s32 %v2517, %v2519
        %v2521 = vrot.slane %v2499, %v2520
        %v2523 = vunpack.c.l.s4 1966171168
        %v2524 = vunpack.c.0.s8 %v2523
        %v2525 = vlaneseq
        %v2526 = vshrl.u32 %v2525, 7
        %v2527 = vsub.s32 %v2524, %v2526
        %v2528 = vrot.slane %v2500, %v2527
        %v2529 = vcombine.high %v2507, %v2507
        %v2530 = vcombine.high %v2514, %v2514
        %v2531 = vcombine.high %v2521, %v2521
        %v2532 = vcombine.high %v2528, %v2528
        %v2534 = vunpack.c.l.s4 1966171168
        %v2535 = vunpack.c.0.s8 %v2534
        %v2536 = vlaneseq
        %v2537 = vshrl.u32 %v2536, 7
        %v2538 = vsub.s32 %v2535, %v2537
        %v2539 = vrot.slane %v1842, %v2538
        %v2540 = vcombine.high %v2539, %v2539
        %v2542 = vunpack.c.l.s4 1966171168
        %v2543 = vunpack.c.0.s8 %v2542
        %v2544 = vlaneseq
        %v2545 = vshrl.u32 %v2544, 7
        %v2546 = vsub.s32 %v2543, %v2545
        %v2547 = vrot.slane %v2539, %v2546
        %v2549 = vunpack.c.l.s4 1966171168
        %v2550 = vunpack.c.0.s8 %v2549
        %v2551 = vlaneseq
        %v2552 = vshrl.u32 %v2551, 7
        %v2553 = vsub.s32 %v2550, %v2552
        %v2554 = vrot.slane %v2540, %v2553
        %v2555 = vcombine.high %v2547, %v2547
        %v2556 = vcombine.high %v2554, %v2554
        %v2557 = vcombine.low %v2458, %v2472
        %v2558 = vcombine.low %v2480, %v2482
        %v2560 = vunpack.c.l.s4 1966171168
        %v2561 = vunpack.c.0.s8 %v2560
        %v2562 = vlaneseq
        %v2563 = vshrl.u32 %v2562, 7
        %v2564 = vsub.s32 %v2561, %v2563
        %v2565 = vrot.slane %v2557, %v2564
        %v2567 = vunpack.c.l.s4 1966171168
        %v2568 = vunpack.c.0.s8 %v2567
        %v2569 = vlaneseq
        %v2570 = vshrl.u32 %v2569, 7
        %v2571 = vsub.s32 %v2568, %v2570
        %v2572 = vrot.slane %v2558, %v2571
        %v2574 = vunpack.c.l.s4 1966171168
        %v2575 = vunpack.c.0.s8 %v2574
        %v2576 = vlaneseq
        %v2577 = vshrl.u32 %v2576, 7
        %v2578 = vsub.s32 %v2575, %v2577
        %v2579 = vrot.slane %v2465, %v2578
        %v2580 = vcombine.low %v2565, %v2572
        %v2582 = vunpack.c.l.s4 1966171168
        %v2583 = vunpack.c.0.s8 %v2582
        %v2584 = vlaneseq
        %v2585 = vshrl.u32 %v2584, 7
        %v2586 = vsub.s32 %v2583, %v2585
        %v2587 = vrot.slane %v2580, %v2586
        %v2589 = vunpack.c.l.s4 1966171168
        %v2590 = vunpack.c.0.s8 %v2589
        %v2591 = vlaneseq
        %v2592 = vshrl.u32 %v2591, 7
        %v2593 = vsub.s32 %v2590, %v2592
        %v2594 = vrot.slane %v2579, %v2593
        %v2595 = vcombine.low %v2587, %v2594
        %v2596 = vcombine.low %v2479, %v2481
        %v2597 = vcombine.low %v2483, %v2507
        %v2599 = vunpack.c.l.s4 1966171168
        %v2600 = vunpack.c.0.s8 %v2599
        %v2601 = vlaneseq
        %v2602 = vshrl.u32 %v2601, 7
        %v2603 = vsub.s32 %v2600, %v2602
        %v2604 = vrot.slane %v2596, %v2603
        %v2606 = vunpack.c.l.s4 1966171168
        %v2607 = vunpack.c.0.s8 %v2606
        %v2608 = vlaneseq
        %v2609 = vshrl.u32 %v2608, 7
        %v2610 = vsub.s32 %v2607, %v2609
        %v2611 = vrot.slane %v2597, %v2610
        %v2613 = vunpack.c.l.s4 1966171168
        %v2614 = vunpack.c.0.s8 %v2613
        %v2615 = vlaneseq
        %v2616 = vshrl.u32 %v2615, 7
        %v2617 = vsub.s32 %v2614, %v2616
        %v2618 = vrot.slane %v2521, %v2617
        %v2619 = vcombine.low %v2604, %v2611
        %v2621 = vunpack.c.l.s4 1966171168
        %v2622 = vunpack.c.0.s8 %v2621
        %v2623 = vlaneseq
        %v2624 = vshrl.u32 %v2623, 7
        %v2625 = vsub.s32 %v2622, %v2624
        %v2626 = vrot.slane %v2619, %v2625
        %v2628 = vunpack.c.l.s4 1966171168
        %v2629 = vunpack.c.0.s8 %v2628
        %v2630 = vlaneseq
        %v2631 = vshrl.u32 %v2630, 7
        %v2632 = vsub.s32 %v2629, %v2631
        %v2633 = vrot.slane %v2618, %v2632
        %v2634 = vcombine.low %v2626, %v2633
        %v2635 = vcombine.low %v2529, %v2531
        %v2636 = vcombine.low %v2514, %v2528
        %v2638 = vunpack.c.l.s4 1966171168
        %v2639 = vunpack.c.0.s8 %v2638
        %v2640 = vlaneseq
        %v2641 = vshrl.u32 %v2640, 7
        %v2642 = vsub.s32 %v2639, %v2641
        %v2643 = vrot.slane %v2635, %v2642
        %v2645 = vunpack.c.l.s4 1966171168
        %v2646 = vunpack.c.0.s8 %v2645
        %v2647 = vlaneseq
        %v2648 = vshrl.u32 %v2647, 7
        %v2649 = vsub.s32 %v2646, %v2648
        %v2650 = vrot.slane %v2636, %v2649
        %v2652 = vunpack.c.l.s4 1966171168
        %v2653 = vunpack.c.0.s8 %v2652
        %v2654 = vlaneseq
        %v2655 = vshrl.u32 %v2654, 7
        %v2656 = vsub.s32 %v2653, %v2655
        %v2657 = vrot.slane %v2530, %v2656
        %v2658 = vcombine.low %v2643, %v2650
        %v2660 = vunpack.c.l.s4 1966171168
        %v2661 = vunpack.c.0.s8 %v2660
        %v2662 = vlaneseq
        %v2663 = vshrl.u32 %v2662, 7
        %v2664 = vsub.s32 %v2661, %v2663
        %v2665 = vrot.slane %v2658, %v2664
        %v2667 = vunpack.c.l.s4 1966171168
        %v2668 = vunpack.c.0.s8 %v2667
        %v2669 = vlaneseq
        %v2670 = vshrl.u32 %v2669, 7
        %v2671 = vsub.s32 %v2668, %v2670
        %v2672 = vrot.slane %v2657, %v2671
        %v2673 = vcombine.low %v2665, %v2672
        %v2674 = vcombine.low %v2532, %v2547
        %v2675 = vcombine.low %v2554, %v2555
        %v2677 = vunpack.c.l.s4 1966171168
        %v2678 = vunpack.c.0.s8 %v2677
        %v2679 = vlaneseq
        %v2680 = vshrl.u32 %v2679, 7
        %v2681 = vsub.s32 %v2678, %v2680
        %v2682 = vrot.slane %v2674, %v2681
        %v2684 = vunpack.c.l.s4 1966171168
        %v2685 = vunpack.c.0.s8 %v2684
        %v2686 = vlaneseq
        %v2687 = vshrl.u32 %v2686, 7
        %v2688 = vsub.s32 %v2685, %v2687
        %v2689 = vrot.slane %v2675, %v2688
        %v2691 = vunpack.c.l.s4 1966171168
        %v2692 = vunpack.c.0.s8 %v2691
        %v2693 = vlaneseq
        %v2694 = vshrl.u32 %v2693, 7
        %v2695 = vsub.s32 %v2692, %v2694
        %v2696 = vrot.slane %v2556, %v2695
        %v2697 = vcombine.low %v2682, %v2689
        %v2699 = vunpack.c.l.s4 1966171168
        %v2700 = vunpack.c.0.s8 %v2699
        %v2701 = vlaneseq
        %v2702 = vshrl.u32 %v2701, 7
        %v2703 = vsub.s32 %v2700, %v2702
        %v2704 = vrot.slane %v2697, %v2703
        %v2706 = vunpack.c.l.s4 1966171168
        %v2707 = vunpack.c.0.s8 %v2706
        %v2708 = vlaneseq
        %v2709 = vshrl.u32 %v2708, 7
        %v2710 = vsub.s32 %v2707, %v2709
        %v2711 = vrot.slane %v2696, %v2710
        %v2712 = vcombine.low %v2704, %v2711
        %v2717 = vpack.c.bf16 %v2595, %v2595
        %v2718 = vpack.c.bf16 %v2634, %v2634
        %v2719 = vpack.c.bf16 %v2673, %v2673
        %v2720 = vpack.c.bf16 %v2712, %v2712
        %vm2721 = vcmask 64512
        %v2723 = vsel %vm2721, %v2139, 0
        %v2726 = vsel %vm2721, %v2428, 0
        %2728 = vmatprep.subr.bf16.mxu0 0
        %2729 = vmatpush1.bf16.xpose.msra.mxu0 0
        %2730 = vmatprep.subr.bf16.mxu0 0
        %2731 = vmatpush1.bf16.xpose.msra.mxu0 0
        %2732 = vmatprep.subr.bf16.mxu0 0
        %2733 = vmatpush1.bf16.xpose.msra.mxu0 0
        %2734 = vmatprep.subr.bf16.mxu0 0
        %2735 = vmatpush1.bf16.xpose.msra.mxu0 0
        %2736 = vmatprep.subr.bf16.mxu0 0
        %2737 = vmatpush1.bf16.xpose.msra.mxu0 0
        %2738 = vmatprep.subr.bf16.mxu0 0
        %2739 = vmatpush1.bf16.xpose.msra.mxu0 0
        %2740 = vmatprep.subr.bf16.mxu0 0
        %2741 = vmatpush1.bf16.xpose.msra.mxu0 0
        %2742 = vmatprep.subr.bf16.mxu0 0
        %2743 = vmatpush1.bf16.xpose.msra.mxu0 %v2726
        %2744 = vmatprep.subr.bf16.mxu0 0
        %2745 = vmatpush2.bf16.xpose.msra.mxu0 0
        %2746 = vmatprep.subr.bf16.mxu0 0
        %2747 = vmatpush2.bf16.xpose.msra.mxu0 0
        %2748 = vmatprep.subr.bf16.mxu0 0
        %2749 = vmatpush2.bf16.xpose.msra.mxu0 0
        %2750 = vmatprep.subr.bf16.mxu0 0
        %2751 = vmatpush2.bf16.xpose.msra.mxu0 0
        %2752 = vmatprep.subr.bf16.mxu0 0
        %2753 = vmatpush2.bf16.xpose.msra.mxu0 0
        %2754 = vmatprep.subr.bf16.mxu0 0
        %2755 = vmatpush2.bf16.xpose.msra.mxu0 0
        %2756 = vmatprep.subr.bf16.mxu0 0
        %2757 = vmatpush2.bf16.xpose.msra.mxu0 0
        %2758 = vmatprep.subr.bf16.mxu0 0
        %2759 = vmatpush2.bf16.xpose.msra.mxu0 0
        %2760 = vmatprep.mubr.bf16.mxu0 0
        %2761 = vmatmul.mubr.bf16.gmra.mxu0 %v2723
        %v2762 = vpop.f32.mrf.mxu0
        %v2763 = vadd.f32 0.0, %v2762
        %v2764 = vpop.f32.mrf.mxu0
        %v2765 = vpop.f32.mrf.mxu0
        %v2766 = vpop.f32.mrf.mxu0
        %2767 = vdwg.mxu0
        %v2769 = vsel %vm2721, %v2140, 0
        %v2772 = vsel %vm2721, %v2429, 0
        %2774 = vmatprep.subr.bf16.mxu0 0
        %2775 = vmatpush1.bf16.xpose.msra.mxu0 0
        %2776 = vmatprep.subr.bf16.mxu0 0
        %2777 = vmatpush1.bf16.xpose.msra.mxu0 0
        %2778 = vmatprep.subr.bf16.mxu0 0
        %2779 = vmatpush1.bf16.xpose.msra.mxu0 0
        %2780 = vmatprep.subr.bf16.mxu0 0
        %2781 = vmatpush1.bf16.xpose.msra.mxu0 0
        %2782 = vmatprep.subr.bf16.mxu0 0
        %2783 = vmatpush1.bf16.xpose.msra.mxu0 0
        %2784 = vmatprep.subr.bf16.mxu0 0
        %2785 = vmatpush1.bf16.xpose.msra.mxu0 0
        %2786 = vmatprep.subr.bf16.mxu0 0
        %2787 = vmatpush1.bf16.xpose.msra.mxu0 0
        %2788 = vmatprep.subr.bf16.mxu0 0
        %2789 = vmatpush1.bf16.xpose.msra.mxu0 %v2772
        %2790 = vmatprep.subr.bf16.mxu0 0
        %2791 = vmatpush2.bf16.xpose.msra.mxu0 0
        %2792 = vmatprep.subr.bf16.mxu0 0
        %2793 = vmatpush2.bf16.xpose.msra.mxu0 0
        %2794 = vmatprep.subr.bf16.mxu0 0
        %2795 = vmatpush2.bf16.xpose.msra.mxu0 0
        %2796 = vmatprep.subr.bf16.mxu0 0
        %2797 = vmatpush2.bf16.xpose.msra.mxu0 0
        %2798 = vmatprep.subr.bf16.mxu0 0
        %2799 = vmatpush2.bf16.xpose.msra.mxu0 0
        %2800 = vmatprep.subr.bf16.mxu0 0
        %2801 = vmatpush2.bf16.xpose.msra.mxu0 0
        %2802 = vmatprep.subr.bf16.mxu0 0
        %2803 = vmatpush2.bf16.xpose.msra.mxu0 0
        %2804 = vmatprep.subr.bf16.mxu0 0
        %2805 = vmatpush2.bf16.xpose.msra.mxu0 0
        %2806 = vmatprep.mubr.bf16.mxu0 0
        %2807 = vmatmul.mubr.bf16.gmra.mxu0 %v2769
        %v2808 = vpop.f32.mrf.mxu0
        %v2809 = vadd.f32 0.0, %v2808
        %v2810 = vpop.f32.mrf.mxu0
        %v2811 = vpop.f32.mrf.mxu0
        %v2812 = vpop.f32.mrf.mxu0
        %2813 = vdwg.mxu0
        %v2815 = vsel %vm2721, %v2141, 0
        %v2818 = vsel %vm2721, %v2430, 0
        %2820 = vmatprep.subr.bf16.mxu0 0
        %2821 = vmatpush1.bf16.xpose.msra.mxu0 0
        %2822 = vmatprep.subr.bf16.mxu0 0
        %2823 = vmatpush1.bf16.xpose.msra.mxu0 0
        %2824 = vmatprep.subr.bf16.mxu0 0
        %2825 = vmatpush1.bf16.xpose.msra.mxu0 0
        %2826 = vmatprep.subr.bf16.mxu0 0
        %2827 = vmatpush1.bf16.xpose.msra.mxu0 0
        %2828 = vmatprep.subr.bf16.mxu0 0
        %2829 = vmatpush1.bf16.xpose.msra.mxu0 0
        %2830 = vmatprep.subr.bf16.mxu0 0
        %2831 = vmatpush1.bf16.xpose.msra.mxu0 0
        %2832 = vmatprep.subr.bf16.mxu0 0
        %2833 = vmatpush1.bf16.xpose.msra.mxu0 0
        %2834 = vmatprep.subr.bf16.mxu0 0
        %2835 = vmatpush1.bf16.xpose.msra.mxu0 %v2818
        %2836 = vmatprep.subr.bf16.mxu0 0
        %2837 = vmatpush2.bf16.xpose.msra.mxu0 0
        %2838 = vmatprep.subr.bf16.mxu0 0
        %2839 = vmatpush2.bf16.xpose.msra.mxu0 0
        %2840 = vmatprep.subr.bf16.mxu0 0
        %2841 = vmatpush2.bf16.xpose.msra.mxu0 0
        %2842 = vmatprep.subr.bf16.mxu0 0
        %2843 = vmatpush2.bf16.xpose.msra.mxu0 0
        %2844 = vmatprep.subr.bf16.mxu0 0
        %2845 = vmatpush2.bf16.xpose.msra.mxu0 0
        %2846 = vmatprep.subr.bf16.mxu0 0
        %2847 = vmatpush2.bf16.xpose.msra.mxu0 0
        %2848 = vmatprep.subr.bf16.mxu0 0
        %2849 = vmatpush2.bf16.xpose.msra.mxu0 0
        %2850 = vmatprep.subr.bf16.mxu0 0
        %2851 = vmatpush2.bf16.xpose.msra.mxu0 0
        %2852 = vmatprep.mubr.bf16.mxu0 0
        %2853 = vmatmul.mubr.bf16.gmra.mxu0 %v2815
        %v2854 = vpop.f32.mrf.mxu0
        %v2855 = vadd.f32 0.0, %v2854
        %v2856 = vpop.f32.mrf.mxu0
        %v2857 = vpop.f32.mrf.mxu0
        %v2858 = vpop.f32.mrf.mxu0
        %2859 = vdwg.mxu0
        %v2861 = vsel %vm2721, %v2142, 0
        %v2864 = vsel %vm2721, %v2431, 0
        %2866 = vmatprep.subr.bf16.mxu0 0
        %2867 = vmatpush1.bf16.xpose.msra.mxu0 0
        %2868 = vmatprep.subr.bf16.mxu0 0
        %2869 = vmatpush1.bf16.xpose.msra.mxu0 0
        %2870 = vmatprep.subr.bf16.mxu0 0
        %2871 = vmatpush1.bf16.xpose.msra.mxu0 0
        %2872 = vmatprep.subr.bf16.mxu0 0
        %2873 = vmatpush1.bf16.xpose.msra.mxu0 0
        %2874 = vmatprep.subr.bf16.mxu0 0
        %2875 = vmatpush1.bf16.xpose.msra.mxu0 0
        %2876 = vmatprep.subr.bf16.mxu0 0
        %2877 = vmatpush1.bf16.xpose.msra.mxu0 0
        %2878 = vmatprep.subr.bf16.mxu0 0
        %2879 = vmatpush1.bf16.xpose.msra.mxu0 0
        %2880 = vmatprep.subr.bf16.mxu0 0
        %2881 = vmatpush1.bf16.xpose.msra.mxu0 %v2864
        %2882 = vmatprep.subr.bf16.mxu0 0
        %2883 = vmatpush2.bf16.xpose.msra.mxu0 0
        %2884 = vmatprep.subr.bf16.mxu0 0
        %2885 = vmatpush2.bf16.xpose.msra.mxu0 0
        %2886 = vmatprep.subr.bf16.mxu0 0
        %2887 = vmatpush2.bf16.xpose.msra.mxu0 0
        %2888 = vmatprep.subr.bf16.mxu0 0
        %2889 = vmatpush2.bf16.xpose.msra.mxu0 0
        %2890 = vmatprep.subr.bf16.mxu0 0
        %2891 = vmatpush2.bf16.xpose.msra.mxu0 0
        %2892 = vmatprep.subr.bf16.mxu0 0
        %2893 = vmatpush2.bf16.xpose.msra.mxu0 0
        %2894 = vmatprep.subr.bf16.mxu0 0
        %2895 = vmatpush2.bf16.xpose.msra.mxu0 0
        %2896 = vmatprep.subr.bf16.mxu0 0
        %2897 = vmatpush2.bf16.xpose.msra.mxu0 0
        %2898 = vmatprep.mubr.bf16.mxu0 0
        %2899 = vmatmul.mubr.bf16.gmra.mxu0 %v2861
        %v2900 = vpop.f32.mrf.mxu0
        %v2901 = vadd.f32 0.0, %v2900
        %v2902 = vpop.f32.mrf.mxu0
        %v2903 = vpop.f32.mrf.mxu0
        %v2904 = vpop.f32.mrf.mxu0
        %2905 = vdwg.mxu0
        %vm2906 = vcmask 36864
        %v2907 = vsel %vm2906, %v2763, -inf
        %2908 = vmax.xlane.f32.xlu0 %v2907
        %v2909 = vpop.xlane.xlu0 %2908
        %v2910 = vsel %vm2906, %v2809, -inf
        %2911 = vmax.xlane.f32.xlu0 %v2910
        %v2912 = vpop.xlane.xlu0 %2911
        %v2913 = vsel %vm2906, %v2855, -inf
        %2914 = vmax.xlane.f32.xlu0 %v2913
        %v2915 = vpop.xlane.xlu0 %2914
        %v2916 = vsel %vm2906, %v2901, -inf
        %2917 = vmax.xlane.f32.xlu0 %v2916
        %v2918 = vpop.xlane.xlu0 %2917
        %v2919 = vsub.f32 %v2763, %v2909
        %v2920 = vsub.f32 %v2809, %v2912
        %v2921 = vsub.f32 %v2855, %v2915
        %v2922 = vsub.f32 %v2901, %v2918
        %v2923 = vmul.f32 %v2919, 1.442695
        %v2924 = vpow.pop %v2923
        %v2925 = vmul.f32 %v2920, 1.442695
        %v2926 = vpow.pop %v2925
        %v2927 = vmul.f32 %v2921, 1.442695
        %v2928 = vpow.pop %v2927
        %v2929 = vmul.f32 %v2922, 1.442695
        %v2930 = vpow.pop %v2929
        %v2931 = vsel %vm2906, %v2924, 0.0
        %2932 = vadd.xlane.f32.xlu0 %v2931
        %v2933 = vpop.xlane.xlu0 %2932
        %v2934 = vsel %vm2906, %v2926, 0.0
        %2935 = vadd.xlane.f32.xlu0 %v2934
        %v2936 = vpop.xlane.xlu0 %2935
        %v2937 = vsel %vm2906, %v2928, 0.0
        %2938 = vadd.xlane.f32.xlu0 %v2937
        %v2939 = vpop.xlane.xlu0 %2938
        %v2940 = vsel %vm2906, %v2930, 0.0
        %2941 = vadd.xlane.f32.xlu0 %v2940
        %v2942 = vpop.xlane.xlu0 %2941
        %v2943 = vrcp.pop %v2933
        %v2944 = vrcp.pop %v2936
        %v2945 = vrcp.pop %v2939
        %v2946 = vrcp.pop %v2942
        %v2947 = vmul.f32 %v2924, %v2943
        %v2948 = vmul.f32 %v2926, %v2944
        %v2949 = vmul.f32 %v2928, %v2945
        %v2950 = vmul.f32 %v2930, %v2946
        %v2951 = vpack.c.bf16 %v2947, %v2947
        %v2952 = vpack.c.bf16 %v2948, %v2948
        %v2953 = vpack.c.bf16 %v2949, %v2949
        %v2954 = vpack.c.bf16 %v2950, %v2950
        %vm2955 = vcmask 39936
        %v2957 = vsel %vm2955, %v2951, 0
        %vm2959 = vcmask 1041408
        %vm2960 = vcmask 1042432
        %v2961 = vsel %vm2959, 4294967295, 65535
        %v2962 = vsel %vm2960, %v2961, 0
        %v2964 = vand.u32 %v2717, %v2962
        %2966 = vmatprep.subr.bf16.mxu0 0
        %2967 = vmatpush1.bf16.msra.mxu0 0
        %2968 = vmatprep.subr.bf16.mxu0 0
        %2969 = vmatpush1.bf16.msra.mxu0 0
        %2970 = vmatprep.subr.bf16.mxu0 0
        %2971 = vmatpush1.bf16.msra.mxu0 0
        %2972 = vmatprep.subr.bf16.mxu0 0
        %2973 = vmatpush1.bf16.msra.mxu0 0
        %2974 = vmatprep.subr.bf16.mxu0 0
        %2975 = vmatpush1.bf16.msra.mxu0 0
        %2976 = vmatprep.subr.bf16.mxu0 0
        %2977 = vmatpush1.bf16.msra.mxu0 0
        %2978 = vmatprep.subr.bf16.mxu0 0
        %2979 = vmatpush1.bf16.msra.mxu0 0
        %2980 = vmatprep.subr.bf16.mxu0 0
        %2981 = vmatpush1.bf16.msra.mxu0 %v2964
        %2982 = vmatprep.subr.bf16.mxu0 0
        %2983 = vmatpush2.bf16.msra.mxu0 0
        %2984 = vmatprep.subr.bf16.mxu0 0
        %2985 = vmatpush2.bf16.msra.mxu0 0
        %2986 = vmatprep.subr.bf16.mxu0 0
        %2987 = vmatpush2.bf16.msra.mxu0 0
        %2988 = vmatprep.subr.bf16.mxu0 0
        %2989 = vmatpush2.bf16.msra.mxu0 0
        %2990 = vmatprep.subr.bf16.mxu0 0
        %2991 = vmatpush2.bf16.msra.mxu0 0
        %2992 = vmatprep.subr.bf16.mxu0 0
        %2993 = vmatpush2.bf16.msra.mxu0 0
        %2994 = vmatprep.subr.bf16.mxu0 0
        %2995 = vmatpush2.bf16.msra.mxu0 0
        %2996 = vmatprep.subr.bf16.mxu0 0
        %2997 = vmatpush2.bf16.msra.mxu0 0
        %2998 = vmatprep.mubr.bf16.mxu0 0
        %2999 = vmatmul.mubr.bf16.gmra.mxu0 %v2957
        %v3000 = vpop.f32.mrf.mxu0
        %v3001 = vadd.f32 0.0, %v3000
        %v3002 = vpop.f32.mrf.mxu0
        %v3003 = vpop.f32.mrf.mxu0
        %v3004 = vpop.f32.mrf.mxu0
        %3005 = vdwg.mxu0
        %v3007 = vsel %vm2955, %v2952, 0
        %v3010 = vand.u32 %v2718, %v2962
        %3012 = vmatprep.subr.bf16.mxu0 0
        %3013 = vmatpush1.bf16.msra.mxu0 0
        %3014 = vmatprep.subr.bf16.mxu0 0
        %3015 = vmatpush1.bf16.msra.mxu0 0
        %3016 = vmatprep.subr.bf16.mxu0 0
        %3017 = vmatpush1.bf16.msra.mxu0 0
        %3018 = vmatprep.subr.bf16.mxu0 0
        %3019 = vmatpush1.bf16.msra.mxu0 0
        %3020 = vmatprep.subr.bf16.mxu0 0
        %3021 = vmatpush1.bf16.msra.mxu0 0
        %3022 = vmatprep.subr.bf16.mxu0 0
        %3023 = vmatpush1.bf16.msra.mxu0 0
        %3024 = vmatprep.subr.bf16.mxu0 0
        %3025 = vmatpush1.bf16.msra.mxu0 0
        %3026 = vmatprep.subr.bf16.mxu0 0
        %3027 = vmatpush1.bf16.msra.mxu0 %v3010
        %3028 = vmatprep.subr.bf16.mxu0 0
        %3029 = vmatpush2.bf16.msra.mxu0 0
        %3030 = vmatprep.subr.bf16.mxu0 0
        %3031 = vmatpush2.bf16.msra.mxu0 0
        %3032 = vmatprep.subr.bf16.mxu0 0
        %3033 = vmatpush2.bf16.msra.mxu0 0
        %3034 = vmatprep.subr.bf16.mxu0 0
        %3035 = vmatpush2.bf16.msra.mxu0 0
        %3036 = vmatprep.subr.bf16.mxu0 0
        %3037 = vmatpush2.bf16.msra.mxu0 0
        %3038 = vmatprep.subr.bf16.mxu0 0
        %3039 = vmatpush2.bf16.msra.mxu0 0
        %3040 = vmatprep.subr.bf16.mxu0 0
        %3041 = vmatpush2.bf16.msra.mxu0 0
        %3042 = vmatprep.subr.bf16.mxu0 0
        %3043 = vmatpush2.bf16.msra.mxu0 0
        %3044 = vmatprep.mubr.bf16.mxu0 0
        %3045 = vmatmul.mubr.bf16.gmra.mxu0 %v3007
        %v3046 = vpop.f32.mrf.mxu0
        %v3047 = vadd.f32 0.0, %v3046
        %v3048 = vpop.f32.mrf.mxu0
        %v3049 = vpop.f32.mrf.mxu0
        %v3050 = vpop.f32.mrf.mxu0
        %3051 = vdwg.mxu0
        %v3053 = vsel %vm2955, %v2953, 0
        %v3056 = vand.u32 %v2719, %v2962
        %3058 = vmatprep.subr.bf16.mxu0 0
        %3059 = vmatpush1.bf16.msra.mxu0 0
        %3060 = vmatprep.subr.bf16.mxu0 0
        %3061 = vmatpush1.bf16.msra.mxu0 0
        %3062 = vmatprep.subr.bf16.mxu0 0
        %3063 = vmatpush1.bf16.msra.mxu0 0
        %3064 = vmatprep.subr.bf16.mxu0 0
        %3065 = vmatpush1.bf16.msra.mxu0 0
        %3066 = vmatprep.subr.bf16.mxu0 0
        %3067 = vmatpush1.bf16.msra.mxu0 0
        %3068 = vmatprep.subr.bf16.mxu0 0
        %3069 = vmatpush1.bf16.msra.mxu0 0
        %3070 = vmatprep.subr.bf16.mxu0 0
        %3071 = vmatpush1.bf16.msra.mxu0 0
        %3072 = vmatprep.subr.bf16.mxu0 0
        %3073 = vmatpush1.bf16.msra.mxu0 %v3056
        %3074 = vmatprep.subr.bf16.mxu0 0
        %3075 = vmatpush2.bf16.msra.mxu0 0
        %3076 = vmatprep.subr.bf16.mxu0 0
        %3077 = vmatpush2.bf16.msra.mxu0 0
        %3078 = vmatprep.subr.bf16.mxu0 0
        %3079 = vmatpush2.bf16.msra.mxu0 0
        %3080 = vmatprep.subr.bf16.mxu0 0
        %3081 = vmatpush2.bf16.msra.mxu0 0
        %3082 = vmatprep.subr.bf16.mxu0 0
        %3083 = vmatpush2.bf16.msra.mxu0 0
        %3084 = vmatprep.subr.bf16.mxu0 0
        %3085 = vmatpush2.bf16.msra.mxu0 0
        %3086 = vmatprep.subr.bf16.mxu0 0
        %3087 = vmatpush2.bf16.msra.mxu0 0
        %3088 = vmatprep.subr.bf16.mxu0 0
        %3089 = vmatpush2.bf16.msra.mxu0 0
        %3090 = vmatprep.mubr.bf16.mxu0 0
        %3091 = vmatmul.mubr.bf16.gmra.mxu0 %v3053
        %v3092 = vpop.f32.mrf.mxu0
        %v3093 = vadd.f32 0.0, %v3092
        %v3094 = vpop.f32.mrf.mxu0
        %v3095 = vpop.f32.mrf.mxu0
        %v3096 = vpop.f32.mrf.mxu0
        %3097 = vdwg.mxu0
        %v3099 = vsel %vm2955, %v2954, 0
        %v3102 = vand.u32 %v2720, %v2962
        %3104 = vmatprep.subr.bf16.mxu0 0
        %3105 = vmatpush1.bf16.msra.mxu0 0
        %3106 = vmatprep.subr.bf16.mxu0 0
        %3107 = vmatpush1.bf16.msra.mxu0 0
        %3108 = vmatprep.subr.bf16.mxu0 0
        %3109 = vmatpush1.bf16.msra.mxu0 0
        %3110 = vmatprep.subr.bf16.mxu0 0
        %3111 = vmatpush1.bf16.msra.mxu0 0
        %3112 = vmatprep.subr.bf16.mxu0 0
        %3113 = vmatpush1.bf16.msra.mxu0 0
        %3114 = vmatprep.subr.bf16.mxu0 0
        %3115 = vmatpush1.bf16.msra.mxu0 0
        %3116 = vmatprep.subr.bf16.mxu0 0
        %3117 = vmatpush1.bf16.msra.mxu0 0
        %3118 = vmatprep.subr.bf16.mxu0 0
        %3119 = vmatpush1.bf16.msra.mxu0 %v3102
        %3120 = vmatprep.subr.bf16.mxu0 0
        %3121 = vmatpush2.bf16.msra.mxu0 0
        %3122 = vmatprep.subr.bf16.mxu0 0
        %3123 = vmatpush2.bf16.msra.mxu0 0
        %3124 = vmatprep.subr.bf16.mxu0 0
        %3125 = vmatpush2.bf16.msra.mxu0 0
        %3126 = vmatprep.subr.bf16.mxu0 0
        %3127 = vmatpush2.bf16.msra.mxu0 0
        %3128 = vmatprep.subr.bf16.mxu0 0
        %3129 = vmatpush2.bf16.msra.mxu0 0
        %3130 = vmatprep.subr.bf16.mxu0 0
        %3131 = vmatpush2.bf16.msra.mxu0 0
        %3132 = vmatprep.subr.bf16.mxu0 0
        %3133 = vmatpush2.bf16.msra.mxu0 0
        %3134 = vmatprep.subr.bf16.mxu0 0
        %3135 = vmatpush2.bf16.msra.mxu0 0
        %3136 = vmatprep.mubr.bf16.mxu0 0
        %3137 = vmatmul.mubr.bf16.gmra.mxu0 %v3099
        %v3138 = vpop.f32.mrf.mxu0
        %v3139 = vadd.f32 0.0, %v3138
        %v3140 = vpop.f32.mrf.mxu0
        %v3141 = vpop.f32.mrf.mxu0
        %v3142 = vpop.f32.mrf.mxu0
        %3143 = vdwg.mxu0
        %v3148 = vcombine.high %v3001, %v3001
        %v3150 = vunpack.c.l.s4 1966171168
        %v3151 = vunpack.c.0.s8 %v3150
        %v3152 = vlaneseq
        %v3153 = vshrl.u32 %v3152, 7
        %v3154 = vsub.s32 %v3151, %v3153
        %v3155 = vrot.slane %v3001, %v3154
        %v3157 = vunpack.c.l.s4 1966171168
        %v3158 = vunpack.c.0.s8 %v3157
        %v3159 = vlaneseq
        %v3160 = vshrl.u32 %v3159, 7
        %v3161 = vsub.s32 %v3158, %v3160
        %v3162 = vrot.slane %v3148, %v3161
        %v3163 = vcombine.high %v3155, %v3155
        %v3165 = vunpack.c.l.s4 1966171168
        %v3166 = vunpack.c.0.s8 %v3165
        %v3167 = vlaneseq
        %v3168 = vshrl.u32 %v3167, 7
        %v3169 = vsub.s32 %v3166, %v3168
        %v3170 = vrot.slane %v3155, %v3169
        %v3172 = vunpack.c.l.s4 1966171168
        %v3173 = vunpack.c.0.s8 %v3172
        %v3174 = vlaneseq
        %v3175 = vshrl.u32 %v3174, 7
        %v3176 = vsub.s32 %v3173, %v3175
        %v3177 = vrot.slane %v3162, %v3176
        %v3179 = vunpack.c.l.s4 1966171168
        %v3180 = vunpack.c.0.s8 %v3179
        %v3181 = vlaneseq
        %v3182 = vshrl.u32 %v3181, 7
        %v3183 = vsub.s32 %v3180, %v3182
        %v3184 = vrot.slane %v3163, %v3183
        %v3185 = vcombine.high %v3170, %v3170
        %v3186 = vcombine.high %v3184, %v3184
        %v3187 = vcombine.high %v3047, %v3047
        %v3189 = vunpack.c.l.s4 1966171168
        %v3190 = vunpack.c.0.s8 %v3189
        %v3191 = vlaneseq
        %v3192 = vshrl.u32 %v3191, 7
        %v3193 = vsub.s32 %v3190, %v3192
        %v3194 = vrot.slane %v3047, %v3193
        %v3196 = vunpack.c.l.s4 1966171168
        %v3197 = vunpack.c.0.s8 %v3196
        %v3198 = vlaneseq
        %v3199 = vshrl.u32 %v3198, 7
        %v3200 = vsub.s32 %v3197, %v3199
        %v3201 = vrot.slane %v3187, %v3200
        %v3202 = vcombine.high %v3194, %v3194
        %v3204 = vunpack.c.l.s4 1966171168
        %v3205 = vunpack.c.0.s8 %v3204
        %v3206 = vlaneseq
        %v3207 = vshrl.u32 %v3206, 7
        %v3208 = vsub.s32 %v3205, %v3207
        %v3209 = vrot.slane %v3194, %v3208
        %v3211 = vunpack.c.l.s4 1966171168
        %v3212 = vunpack.c.0.s8 %v3211
        %v3213 = vlaneseq
        %v3214 = vshrl.u32 %v3213, 7
        %v3215 = vsub.s32 %v3212, %v3214
        %v3216 = vrot.slane %v3201, %v3215
        %v3218 = vunpack.c.l.s4 1966171168
        %v3219 = vunpack.c.0.s8 %v3218
        %v3220 = vlaneseq
        %v3221 = vshrl.u32 %v3220, 7
        %v3222 = vsub.s32 %v3219, %v3221
        %v3223 = vrot.slane %v3202, %v3222
        %v3224 = vcombine.high %v3209, %v3209
        %v3225 = vcombine.high %v3223, %v3223
        %v3226 = vcombine.high %v3093, %v3093
        %v3228 = vunpack.c.l.s4 1966171168
        %v3229 = vunpack.c.0.s8 %v3228
        %v3230 = vlaneseq
        %v3231 = vshrl.u32 %v3230, 7
        %v3232 = vsub.s32 %v3229, %v3231
        %v3233 = vrot.slane %v3093, %v3232
        %v3235 = vunpack.c.l.s4 1966171168
        %v3236 = vunpack.c.0.s8 %v3235
        %v3237 = vlaneseq
        %v3238 = vshrl.u32 %v3237, 7
        %v3239 = vsub.s32 %v3236, %v3238
        %v3240 = vrot.slane %v3226, %v3239
        %v3241 = vcombine.high %v3233, %v3233
        %v3243 = vunpack.c.l.s4 1966171168
        %v3244 = vunpack.c.0.s8 %v3243
        %v3245 = vlaneseq
        %v3246 = vshrl.u32 %v3245, 7
        %v3247 = vsub.s32 %v3244, %v3246
        %v3248 = vrot.slane %v3233, %v3247
        %v3250 = vunpack.c.l.s4 1966171168
        %v3251 = vunpack.c.0.s8 %v3250
        %v3252 = vlaneseq
        %v3253 = vshrl.u32 %v3252, 7
        %v3254 = vsub.s32 %v3251, %v3253
        %v3255 = vrot.slane %v3240, %v3254
        %v3257 = vunpack.c.l.s4 1966171168
        %v3258 = vunpack.c.0.s8 %v3257
        %v3259 = vlaneseq
        %v3260 = vshrl.u32 %v3259, 7
        %v3261 = vsub.s32 %v3258, %v3260
        %v3262 = vrot.slane %v3241, %v3261
        %v3263 = vcombine.high %v3248, %v3248
        %v3264 = vcombine.high %v3262, %v3262
        %v3265 = vcombine.high %v3139, %v3139
        %v3267 = vunpack.c.l.s4 1966171168
        %v3268 = vunpack.c.0.s8 %v3267
        %v3269 = vlaneseq
        %v3270 = vshrl.u32 %v3269, 7
        %v3271 = vsub.s32 %v3268, %v3270
        %v3272 = vrot.slane %v3139, %v3271
        %v3274 = vunpack.c.l.s4 1966171168
        %v3275 = vunpack.c.0.s8 %v3274
        %v3276 = vlaneseq
        %v3277 = vshrl.u32 %v3276, 7
        %v3278 = vsub.s32 %v3275, %v3277
        %v3279 = vrot.slane %v3265, %v3278
        %v3280 = vcombine.high %v3272, %v3272
        %v3282 = vunpack.c.l.s4 1966171168
        %v3283 = vunpack.c.0.s8 %v3282
        %v3284 = vlaneseq
        %v3285 = vshrl.u32 %v3284, 7
        %v3286 = vsub.s32 %v3283, %v3285
        %v3287 = vrot.slane %v3272, %v3286
        %v3289 = vunpack.c.l.s4 1966171168
        %v3290 = vunpack.c.0.s8 %v3289
        %v3291 = vlaneseq
        %v3292 = vshrl.u32 %v3291, 7
        %v3293 = vsub.s32 %v3290, %v3292
        %v3294 = vrot.slane %v3279, %v3293
        %v3296 = vunpack.c.l.s4 1966171168
        %v3297 = vunpack.c.0.s8 %v3296
        %v3298 = vlaneseq
        %v3299 = vshrl.u32 %v3298, 7
        %v3300 = vsub.s32 %v3297, %v3299
        %v3301 = vrot.slane %v3280, %v3300
        %v3302 = vcombine.high %v3287, %v3287
        %v3303 = vcombine.high %v3301, %v3301
        %v3304 = vcombine.low %v3170, %v3184
        %v3305 = vcombine.low %v3185, %v3186
        %v3306 = vcombine.low %v3177, %v3209
        %v3307 = vcombine.low %v3223, %v3224
        %v3309 = vunpack.c.l.s4 1966171168
        %v3310 = vunpack.c.0.s8 %v3309
        %v3311 = vlaneseq
        %v3312 = vshrl.u32 %v3311, 7
        %v3313 = vsub.s32 %v3310, %v3312
        %v3314 = vrot.slane %v3304, %v3313
        %v3316 = vunpack.c.l.s4 1966171168
        %v3317 = vunpack.c.0.s8 %v3316
        %v3318 = vlaneseq
        %v3319 = vshrl.u32 %v3318, 7
        %v3320 = vsub.s32 %v3317, %v3319
        %v3321 = vrot.slane %v3305, %v3320
        %v3323 = vunpack.c.l.s4 1966171168
        %v3324 = vunpack.c.0.s8 %v3323
        %v3325 = vlaneseq
        %v3326 = vshrl.u32 %v3325, 7
        %v3327 = vsub.s32 %v3324, %v3326
        %v3328 = vrot.slane %v3306, %v3327
        %v3330 = vunpack.c.l.s4 1966171168
        %v3331 = vunpack.c.0.s8 %v3330
        %v3332 = vlaneseq
        %v3333 = vshrl.u32 %v3332, 7
        %v3334 = vsub.s32 %v3331, %v3333
        %v3335 = vrot.slane %v3307, %v3334
        %v3336 = vcombine.low %v3314, %v3321
        %v3337 = vcombine.low %v3328, %v3335
        %v3339 = vunpack.c.l.s4 1966171168
        %v3340 = vunpack.c.0.s8 %v3339
        %v3341 = vlaneseq
        %v3342 = vshrl.u32 %v3341, 7
        %v3343 = vsub.s32 %v3340, %v3342
        %v3344 = vrot.slane %v3336, %v3343
        %v3346 = vunpack.c.l.s4 1966171168
        %v3347 = vunpack.c.0.s8 %v3346
        %v3348 = vlaneseq
        %v3349 = vshrl.u32 %v3348, 7
        %v3350 = vsub.s32 %v3347, %v3349
        %v3351 = vrot.slane %v3337, %v3350
        %v3352 = vcombine.low %v3344, %v3351
        %v3353 = vcombine.low %v3225, %v3216
        %v3354 = vcombine.low %v3248, %v3262
        %v3355 = vcombine.low %v3263, %v3264
        %v3356 = vcombine.low %v3255, %v3287
        %v3358 = vunpack.c.l.s4 1966171168
        %v3359 = vunpack.c.0.s8 %v3358
        %v3360 = vlaneseq
        %v3361 = vshrl.u32 %v3360, 7
        %v3362 = vsub.s32 %v3359, %v3361
        %v3363 = vrot.slane %v3353, %v3362
        %v3365 = vunpack.c.l.s4 1966171168
        %v3366 = vunpack.c.0.s8 %v3365
        %v3367 = vlaneseq
        %v3368 = vshrl.u32 %v3367, 7
        %v3369 = vsub.s32 %v3366, %v3368
        %v3370 = vrot.slane %v3354, %v3369
        %v3372 = vunpack.c.l.s4 1966171168
        %v3373 = vunpack.c.0.s8 %v3372
        %v3374 = vlaneseq
        %v3375 = vshrl.u32 %v3374, 7
        %v3376 = vsub.s32 %v3373, %v3375
        %v3377 = vrot.slane %v3355, %v3376
        %v3379 = vunpack.c.l.s4 1966171168
        %v3380 = vunpack.c.0.s8 %v3379
        %v3381 = vlaneseq
        %v3382 = vshrl.u32 %v3381, 7
        %v3383 = vsub.s32 %v3380, %v3382
        %v3384 = vrot.slane %v3356, %v3383
        %v3385 = vcombine.low %v3363, %v3370
        %v3386 = vcombine.low %v3377, %v3384
        %v3388 = vunpack.c.l.s4 1966171168
        %v3389 = vunpack.c.0.s8 %v3388
        %v3390 = vlaneseq
        %v3391 = vshrl.u32 %v3390, 7
        %v3392 = vsub.s32 %v3389, %v3391
        %v3393 = vrot.slane %v3385, %v3392
        %v3395 = vunpack.c.l.s4 1966171168
        %v3396 = vunpack.c.0.s8 %v3395
        %v3397 = vlaneseq
        %v3398 = vshrl.u32 %v3397, 7
        %v3399 = vsub.s32 %v3396, %v3398
        %v3400 = vrot.slane %v3386, %v3399
        %v3401 = vcombine.low %v3393, %v3400
        %v3402 = vcombine.low %v3301, %v3302
        %v3403 = vcombine.low %v3303, %v3294
        %v3405 = vunpack.c.l.s4 1966171168
        %v3406 = vunpack.c.0.s8 %v3405
        %v3407 = vlaneseq
        %v3408 = vshrl.u32 %v3407, 7
        %v3409 = vsub.s32 %v3406, %v3408
        %v3410 = vrot.slane %v3402, %v3409
        %v3412 = vunpack.c.l.s4 1966171168
        %v3413 = vunpack.c.0.s8 %v3412
        %v3414 = vlaneseq
        %v3415 = vshrl.u32 %v3414, 7
        %v3416 = vsub.s32 %v3413, %v3415
        %v3417 = vrot.slane %v3403, %v3416
        %v3418 = vcombine.low %v3410, %v3417
        %v3420 = vunpack.c.l.s4 1966171168
        %v3421 = vunpack.c.0.s8 %v3420
        %v3422 = vlaneseq
        %v3423 = vshrl.u32 %v3422, 7
        %v3424 = vsub.s32 %v3421, %v3423
        %v3425 = vrot.slane %v3418, %v3424
        %v3429 = vpack.c.bf16 %v3401, %v3352
        %v3430 = vpack.c.bf16 %v3425, %v3425
        %v3432 = vsel %vm2721, %v3429, 0
        %v3435 = vsel %vm2721, %v3430, 0
        %vm3437 = vcmask 1043456
        %v3439 = vsel %vm3437, %v1491, 0
        %3441 = vmatprep.subr.bf16.mxu0 0
        %3442 = vmatpush1.bf16.msra.mxu0 0
        %3443 = vmatprep.subr.bf16.mxu0 0
        %3444 = vmatpush1.bf16.msra.mxu0 0
        %3445 = vmatprep.subr.bf16.mxu0 0
        %3446 = vmatpush1.bf16.msra.mxu0 0
        %3447 = vmatprep.subr.bf16.mxu0 0
        %3448 = vmatpush1.bf16.msra.mxu0 0
        %3449 = vmatprep.subr.bf16.mxu0 0
        %3450 = vmatpush1.bf16.msra.mxu0 0
        %3451 = vmatprep.subr.bf16.mxu0 0
        %3452 = vmatpush1.bf16.msra.mxu0 0
        %3453 = vmatprep.subr.bf16.mxu0 0
        %3454 = vmatpush1.bf16.msra.mxu0 0
        %3455 = vmatprep.subr.bf16.mxu0 0
        %3456 = vmatpush1.bf16.msra.mxu0 %v3439
        %3457 = vmatprep.subr.bf16.mxu0 0
        %3458 = vmatpush2.bf16.msra.mxu0 0
        %3459 = vmatprep.subr.bf16.mxu0 0
        %3460 = vmatpush2.bf16.msra.mxu0 0
        %3461 = vmatprep.subr.bf16.mxu0 0
        %3462 = vmatpush2.bf16.msra.mxu0 0
        %3463 = vmatprep.subr.bf16.mxu0 0
        %3464 = vmatpush2.bf16.msra.mxu0 0
        %3465 = vmatprep.subr.bf16.mxu0 0
        %3466 = vmatpush2.bf16.msra.mxu0 0
        %3467 = vmatprep.subr.bf16.mxu0 0
        %3468 = vmatpush2.bf16.msra.mxu0 0
        %3469 = vmatprep.subr.bf16.mxu0 0
        %3470 = vmatpush2.bf16.msra.mxu0 0
        %3471 = vmatprep.subr.bf16.mxu0 0
        %3472 = vmatpush2.bf16.msra.mxu0 0
        %3473 = vmatprep.mubr.bf16.mxu0 0
        %3474 = vmatmul.mubr.bf16.gmra.mxu0 %v3432
        %v3475 = vpop.f32.mrf.mxu0
        %v3476 = vadd.f32 0.0, %v3475
        %v3477 = vpop.f32.mrf.mxu0
        %v3478 = vpop.f32.mrf.mxu0
        %v3479 = vadd.f32 0.0, %v3478
        %v3480 = vpop.f32.mrf.mxu0
        %3481 = vmatprep.mubr.bf16.mxu0 0
        %3482 = vmatmul.mubr.bf16.gmra.mxu0 %v3435
        %v3483 = vpop.f32.mrf.mxu0
        %v3484 = vadd.f32 0.0, %v3483
        %v3485 = vpop.f32.mrf.mxu0
        %v3486 = vpop.f32.mrf.mxu0
        %v3487 = vpop.f32.mrf.mxu0
        %3488 = vdwg.mxu0
        %v3489 = vadd.f32 %v1853, %v3476
        %v3490 = vadd.f32 %v1853, %v3479
        %v3491 = vadd.f32 %v1853, %v3484
        %3493 = vrot.lane.b32.xlu0 %v2139, 120
        %v3494 = vpop.permute.xlu0 %3493
        %3496 = vrot.lane.b32.xlu0 %v2428, 120
        %v3497 = vpop.permute.xlu0 %3496
        %v3499 = vsel %vm2721, %v3494, 0
        %v3502 = vsel %vm2721, %v3497, 0
        %3504 = vmatprep.subr.bf16.mxu0 0
        %3505 = vmatpush1.bf16.xpose.msra.mxu0 0
        %3506 = vmatprep.subr.bf16.mxu0 0
        %3507 = vmatpush1.bf16.xpose.msra.mxu0 0
        %3508 = vmatprep.subr.bf16.mxu0 0
        %3509 = vmatpush1.bf16.xpose.msra.mxu0 0
        %3510 = vmatprep.subr.bf16.mxu0 0
        %3511 = vmatpush1.bf16.xpose.msra.mxu0 0
        %3512 = vmatprep.subr.bf16.mxu0 0
        %3513 = vmatpush1.bf16.xpose.msra.mxu0 0
        %3514 = vmatprep.subr.bf16.mxu0 0
        %3515 = vmatpush1.bf16.xpose.msra.mxu0 0
        %3516 = vmatprep.subr.bf16.mxu0 0
        %3517 = vmatpush1.bf16.xpose.msra.mxu0 0
        %3518 = vmatprep.subr.bf16.mxu0 0
        %3519 = vmatpush1.bf16.xpose.msra.mxu0 %v3502
        %3520 = vmatprep.subr.bf16.mxu0 0
        %3521 = vmatpush2.bf16.xpose.msra.mxu0 0
        %3522 = vmatprep.subr.bf16.mxu0 0
        %3523 = vmatpush2.bf16.xpose.msra.mxu0 0
        %3524 = vmatprep.subr.bf16.mxu0 0
        %3525 = vmatpush2.bf16.xpose.msra.mxu0 0
        %3526 = vmatprep.subr.bf16.mxu0 0
        %3527 = vmatpush2.bf16.xpose.msra.mxu0 0
        %3528 = vmatprep.subr.bf16.mxu0 0
        %3529 = vmatpush2.bf16.xpose.msra.mxu0 0
        %3530 = vmatprep.subr.bf16.mxu0 0
        %3531 = vmatpush2.bf16.xpose.msra.mxu0 0
        %3532 = vmatprep.subr.bf16.mxu0 0
        %3533 = vmatpush2.bf16.xpose.msra.mxu0 0
        %3534 = vmatprep.subr.bf16.mxu0 0
        %3535 = vmatpush2.bf16.xpose.msra.mxu0 0
        %3536 = vmatprep.mubr.bf16.mxu0 0
        %3537 = vmatmul.mubr.bf16.gmra.mxu0 %v3499
        %v3538 = vpop.f32.mrf.mxu0
        %v3539 = vadd.f32 0.0, %v3538
        %v3540 = vpop.f32.mrf.mxu0
        %v3541 = vpop.f32.mrf.mxu0
        %v3542 = vpop.f32.mrf.mxu0
        %3543 = vdwg.mxu0
        %3545 = vrot.lane.b32.xlu0 %v2140, 120
        %v3546 = vpop.permute.xlu0 %3545
        %3548 = vrot.lane.b32.xlu0 %v2429, 120
        %v3549 = vpop.permute.xlu0 %3548
        %v3551 = vsel %vm2721, %v3546, 0
        %v3554 = vsel %vm2721, %v3549, 0
        %3556 = vmatprep.subr.bf16.mxu0 0
        %3557 = vmatpush1.bf16.xpose.msra.mxu0 0
        %3558 = vmatprep.subr.bf16.mxu0 0
        %3559 = vmatpush1.bf16.xpose.msra.mxu0 0
        %3560 = vmatprep.subr.bf16.mxu0 0
        %3561 = vmatpush1.bf16.xpose.msra.mxu0 0
        %3562 = vmatprep.subr.bf16.mxu0 0
        %3563 = vmatpush1.bf16.xpose.msra.mxu0 0
        %3564 = vmatprep.subr.bf16.mxu0 0
        %3565 = vmatpush1.bf16.xpose.msra.mxu0 0
        %3566 = vmatprep.subr.bf16.mxu0 0
        %3567 = vmatpush1.bf16.xpose.msra.mxu0 0
        %3568 = vmatprep.subr.bf16.mxu0 0
        %3569 = vmatpush1.bf16.xpose.msra.mxu0 0
        %3570 = vmatprep.subr.bf16.mxu0 0
        %3571 = vmatpush1.bf16.xpose.msra.mxu0 %v3554
        %3572 = vmatprep.subr.bf16.mxu0 0
        %3573 = vmatpush2.bf16.xpose.msra.mxu0 0
        %3574 = vmatprep.subr.bf16.mxu0 0
        %3575 = vmatpush2.bf16.xpose.msra.mxu0 0
        %3576 = vmatprep.subr.bf16.mxu0 0
        %3577 = vmatpush2.bf16.xpose.msra.mxu0 0
        %3578 = vmatprep.subr.bf16.mxu0 0
        %3579 = vmatpush2.bf16.xpose.msra.mxu0 0
        %3580 = vmatprep.subr.bf16.mxu0 0
        %3581 = vmatpush2.bf16.xpose.msra.mxu0 0
        %3582 = vmatprep.subr.bf16.mxu0 0
        %3583 = vmatpush2.bf16.xpose.msra.mxu0 0
        %3584 = vmatprep.subr.bf16.mxu0 0
        %3585 = vmatpush2.bf16.xpose.msra.mxu0 0
        %3586 = vmatprep.subr.bf16.mxu0 0
        %3587 = vmatpush2.bf16.xpose.msra.mxu0 0
        %3588 = vmatprep.mubr.bf16.mxu0 0
        %3589 = vmatmul.mubr.bf16.gmra.mxu0 %v3551
        %v3590 = vpop.f32.mrf.mxu0
        %v3591 = vadd.f32 0.0, %v3590
        %v3592 = vpop.f32.mrf.mxu0
        %v3593 = vpop.f32.mrf.mxu0
        %v3594 = vpop.f32.mrf.mxu0
        %3595 = vdwg.mxu0
        %3597 = vrot.lane.b32.xlu0 %v2141, 120
        %v3598 = vpop.permute.xlu0 %3597
        %3600 = vrot.lane.b32.xlu0 %v2430, 120
        %v3601 = vpop.permute.xlu0 %3600
        %v3603 = vsel %vm2721, %v3598, 0
        %v3606 = vsel %vm2721, %v3601, 0
        %3608 = vmatprep.subr.bf16.mxu0 0
        %3609 = vmatpush1.bf16.xpose.msra.mxu0 0
        %3610 = vmatprep.subr.bf16.mxu0 0
        %3611 = vmatpush1.bf16.xpose.msra.mxu0 0
        %3612 = vmatprep.subr.bf16.mxu0 0
        %3613 = vmatpush1.bf16.xpose.msra.mxu0 0
        %3614 = vmatprep.subr.bf16.mxu0 0
        %3615 = vmatpush1.bf16.xpose.msra.mxu0 0
        %3616 = vmatprep.subr.bf16.mxu0 0
        %3617 = vmatpush1.bf16.xpose.msra.mxu0 0
        %3618 = vmatprep.subr.bf16.mxu0 0
        %3619 = vmatpush1.bf16.xpose.msra.mxu0 0
        %3620 = vmatprep.subr.bf16.mxu0 0
        %3621 = vmatpush1.bf16.xpose.msra.mxu0 0
        %3622 = vmatprep.subr.bf16.mxu0 0
        %3623 = vmatpush1.bf16.xpose.msra.mxu0 %v3606
        %3624 = vmatprep.subr.bf16.mxu0 0
        %3625 = vmatpush2.bf16.xpose.msra.mxu0 0
        %3626 = vmatprep.subr.bf16.mxu0 0
        %3627 = vmatpush2.bf16.xpose.msra.mxu0 0
        %3628 = vmatprep.subr.bf16.mxu0 0
        %3629 = vmatpush2.bf16.xpose.msra.mxu0 0
        %3630 = vmatprep.subr.bf16.mxu0 0
        %3631 = vmatpush2.bf16.xpose.msra.mxu0 0
        %3632 = vmatprep.subr.bf16.mxu0 0
        %3633 = vmatpush2.bf16.xpose.msra.mxu0 0
        %3634 = vmatprep.subr.bf16.mxu0 0
        %3635 = vmatpush2.bf16.xpose.msra.mxu0 0
        %3636 = vmatprep.subr.bf16.mxu0 0
        %3637 = vmatpush2.bf16.xpose.msra.mxu0 0
        %3638 = vmatprep.subr.bf16.mxu0 0
        %3639 = vmatpush2.bf16.xpose.msra.mxu0 0
        %3640 = vmatprep.mubr.bf16.mxu0 0
        %3641 = vmatmul.mubr.bf16.gmra.mxu0 %v3603
        %v3642 = vpop.f32.mrf.mxu0
        %v3643 = vadd.f32 0.0, %v3642
        %v3644 = vpop.f32.mrf.mxu0
        %v3645 = vpop.f32.mrf.mxu0
        %v3646 = vpop.f32.mrf.mxu0
        %3647 = vdwg.mxu0
        %3649 = vrot.lane.b32.xlu0 %v2142, 120
        %v3650 = vpop.permute.xlu0 %3649
        %3652 = vrot.lane.b32.xlu0 %v2431, 120
        %v3653 = vpop.permute.xlu0 %3652
        %v3655 = vsel %vm2721, %v3650, 0
        %v3658 = vsel %vm2721, %v3653, 0
        %3660 = vmatprep.subr.bf16.mxu0 0
        %3661 = vmatpush1.bf16.xpose.msra.mxu0 0
        %3662 = vmatprep.subr.bf16.mxu0 0
        %3663 = vmatpush1.bf16.xpose.msra.mxu0 0
        %3664 = vmatprep.subr.bf16.mxu0 0
        %3665 = vmatpush1.bf16.xpose.msra.mxu0 0
        %3666 = vmatprep.subr.bf16.mxu0 0
        %3667 = vmatpush1.bf16.xpose.msra.mxu0 0
        %3668 = vmatprep.subr.bf16.mxu0 0
        %3669 = vmatpush1.bf16.xpose.msra.mxu0 0
        %3670 = vmatprep.subr.bf16.mxu0 0
        %3671 = vmatpush1.bf16.xpose.msra.mxu0 0
        %3672 = vmatprep.subr.bf16.mxu0 0
        %3673 = vmatpush1.bf16.xpose.msra.mxu0 0
        %3674 = vmatprep.subr.bf16.mxu0 0
        %3675 = vmatpush1.bf16.xpose.msra.mxu0 %v3658
        %3676 = vmatprep.subr.bf16.mxu0 0
        %3677 = vmatpush2.bf16.xpose.msra.mxu0 0
        %3678 = vmatprep.subr.bf16.mxu0 0
        %3679 = vmatpush2.bf16.xpose.msra.mxu0 0
        %3680 = vmatprep.subr.bf16.mxu0 0
        %3681 = vmatpush2.bf16.xpose.msra.mxu0 0
        %3682 = vmatprep.subr.bf16.mxu0 0
        %3683 = vmatpush2.bf16.xpose.msra.mxu0 0
        %3684 = vmatprep.subr.bf16.mxu0 0
        %3685 = vmatpush2.bf16.xpose.msra.mxu0 0
        %3686 = vmatprep.subr.bf16.mxu0 0
        %3687 = vmatpush2.bf16.xpose.msra.mxu0 0
        %3688 = vmatprep.subr.bf16.mxu0 0
        %3689 = vmatpush2.bf16.xpose.msra.mxu0 0
        %3690 = vmatprep.subr.bf16.mxu0 0
        %3691 = vmatpush2.bf16.xpose.msra.mxu0 0
        %3692 = vmatprep.mubr.bf16.mxu0 0
        %3693 = vmatmul.mubr.bf16.gmra.mxu0 %v3655
        %v3694 = vpop.f32.mrf.mxu0
        %v3695 = vadd.f32 0.0, %v3694
        %v3696 = vpop.f32.mrf.mxu0
        %v3697 = vpop.f32.mrf.mxu0
        %v3698 = vpop.f32.mrf.mxu0
        %3699 = vdwg.mxu0
        %v3700 = vsel %vm2906, %v3539, -inf
        %3701 = vmax.xlane.f32.xlu0 %v3700
        %v3702 = vpop.xlane.xlu0 %3701
        %v3703 = vsel %vm2906, %v3591, -inf
        %3704 = vmax.xlane.f32.xlu0 %v3703
        %v3705 = vpop.xlane.xlu0 %3704
        %v3706 = vsel %vm2906, %v3643, -inf
        %3707 = vmax.xlane.f32.xlu0 %v3706
        %v3708 = vpop.xlane.xlu0 %3707
        %v3709 = vsel %vm2906, %v3695, -inf
        %3710 = vmax.xlane.f32.xlu0 %v3709
        %v3711 = vpop.xlane.xlu0 %3710
        %v3712 = vsub.f32 %v3539, %v3702
        %v3713 = vsub.f32 %v3591, %v3705
        %v3714 = vsub.f32 %v3643, %v3708
        %v3715 = vsub.f32 %v3695, %v3711
        %v3716 = vmul.f32 %v3712, 1.442695
        %v3717 = vpow.pop %v3716
        %v3718 = vmul.f32 %v3713, 1.442695
        %v3719 = vpow.pop %v3718
        %v3720 = vmul.f32 %v3714, 1.442695
        %v3721 = vpow.pop %v3720
        %v3722 = vmul.f32 %v3715, 1.442695
        %v3723 = vpow.pop %v3722
        %v3724 = vsel %vm2906, %v3717, 0.0
        %3725 = vadd.xlane.f32.xlu0 %v3724
        %v3726 = vpop.xlane.xlu0 %3725
        %v3727 = vsel %vm2906, %v3719, 0.0
        %3728 = vadd.xlane.f32.xlu0 %v3727
        %v3729 = vpop.xlane.xlu0 %3728
        %v3730 = vsel %vm2906, %v3721, 0.0
        %3731 = vadd.xlane.f32.xlu0 %v3730
        %v3732 = vpop.xlane.xlu0 %3731
        %v3733 = vsel %vm2906, %v3723, 0.0
        %3734 = vadd.xlane.f32.xlu0 %v3733
        %v3735 = vpop.xlane.xlu0 %3734
        %v3736 = vrcp.pop %v3726
        %v3737 = vrcp.pop %v3729
        %v3738 = vrcp.pop %v3732
        %v3739 = vrcp.pop %v3735
        %v3740 = vmul.f32 %v3717, %v3736
        %v3741 = vmul.f32 %v3719, %v3737
        %v3742 = vmul.f32 %v3721, %v3738
        %v3743 = vmul.f32 %v3723, %v3739
        %v3744 = vpack.c.bf16 %v3740, %v3740
        %v3745 = vpack.c.bf16 %v3741, %v3741
        %v3746 = vpack.c.bf16 %v3742, %v3742
        %v3747 = vpack.c.bf16 %v3743, %v3743
        %3749 = vrot.lane.b32.xlu0 %v2717, 120
        %v3750 = vpop.permute.xlu0 %3749
        %v3752 = vsel %vm2955, %v3744, 0
        %v3755 = vand.u32 %v3750, %v2962
        %3757 = vmatprep.subr.bf16.mxu0 0
        %3758 = vmatpush1.bf16.msra.mxu0 0
        %3759 = vmatprep.subr.bf16.mxu0 0
        %3760 = vmatpush1.bf16.msra.mxu0 0
        %3761 = vmatprep.subr.bf16.mxu0 0
        %3762 = vmatpush1.bf16.msra.mxu0 0
        %3763 = vmatprep.subr.bf16.mxu0 0
        %3764 = vmatpush1.bf16.msra.mxu0 0
        %3765 = vmatprep.subr.bf16.mxu0 0
        %3766 = vmatpush1.bf16.msra.mxu0 0
        %3767 = vmatprep.subr.bf16.mxu0 0
        %3768 = vmatpush1.bf16.msra.mxu0 0
        %3769 = vmatprep.subr.bf16.mxu0 0
        %3770 = vmatpush1.bf16.msra.mxu0 0
        %3771 = vmatprep.subr.bf16.mxu0 0
        %3772 = vmatpush1.bf16.msra.mxu0 %v3755
        %3773 = vmatprep.subr.bf16.mxu0 0
        %3774 = vmatpush2.bf16.msra.mxu0 0
        %3775 = vmatprep.subr.bf16.mxu0 0
        %3776 = vmatpush2.bf16.msra.mxu0 0
        %3777 = vmatprep.subr.bf16.mxu0 0
        %3778 = vmatpush2.bf16.msra.mxu0 0
        %3779 = vmatprep.subr.bf16.mxu0 0
        %3780 = vmatpush2.bf16.msra.mxu0 0
        %3781 = vmatprep.subr.bf16.mxu0 0
        %3782 = vmatpush2.bf16.msra.mxu0 0
        %3783 = vmatprep.subr.bf16.mxu0 0
        %3784 = vmatpush2.bf16.msra.mxu0 0
        %3785 = vmatprep.subr.bf16.mxu0 0
        %3786 = vmatpush2.bf16.msra.mxu0 0
        %3787 = vmatprep.subr.bf16.mxu0 0
        %3788 = vmatpush2.bf16.msra.mxu0 0
        %3789 = vmatprep.mubr.bf16.mxu0 0
        %3790 = vmatmul.mubr.bf16.gmra.mxu0 %v3752
        %v3791 = vpop.f32.mrf.mxu0
        %v3792 = vadd.f32 0.0, %v3791
        %v3793 = vpop.f32.mrf.mxu0
        %v3794 = vpop.f32.mrf.mxu0
        %v3795 = vpop.f32.mrf.mxu0
        %3796 = vdwg.mxu0
        %3798 = vrot.lane.b32.xlu0 %v2718, 120
        %v3799 = vpop.permute.xlu0 %3798
        %v3801 = vsel %vm2955, %v3745, 0
        %v3804 = vand.u32 %v3799, %v2962
        %3806 = vmatprep.subr.bf16.mxu0 0
        %3807 = vmatpush1.bf16.msra.mxu0 0
        %3808 = vmatprep.subr.bf16.mxu0 0
        %3809 = vmatpush1.bf16.msra.mxu0 0
        %3810 = vmatprep.subr.bf16.mxu0 0
        %3811 = vmatpush1.bf16.msra.mxu0 0
        %3812 = vmatprep.subr.bf16.mxu0 0
        %3813 = vmatpush1.bf16.msra.mxu0 0
        %3814 = vmatprep.subr.bf16.mxu0 0
        %3815 = vmatpush1.bf16.msra.mxu0 0
        %3816 = vmatprep.subr.bf16.mxu0 0
        %3817 = vmatpush1.bf16.msra.mxu0 0
        %3818 = vmatprep.subr.bf16.mxu0 0
        %3819 = vmatpush1.bf16.msra.mxu0 0
        %3820 = vmatprep.subr.bf16.mxu0 0
        %3821 = vmatpush1.bf16.msra.mxu0 %v3804
        %3822 = vmatprep.subr.bf16.mxu0 0
        %3823 = vmatpush2.bf16.msra.mxu0 0
        %3824 = vmatprep.subr.bf16.mxu0 0
        %3825 = vmatpush2.bf16.msra.mxu0 0
        %3826 = vmatprep.subr.bf16.mxu0 0
        %3827 = vmatpush2.bf16.msra.mxu0 0
        %3828 = vmatprep.subr.bf16.mxu0 0
        %3829 = vmatpush2.bf16.msra.mxu0 0
        %3830 = vmatprep.subr.bf16.mxu0 0
        %3831 = vmatpush2.bf16.msra.mxu0 0
        %3832 = vmatprep.subr.bf16.mxu0 0
        %3833 = vmatpush2.bf16.msra.mxu0 0
        %3834 = vmatprep.subr.bf16.mxu0 0
        %3835 = vmatpush2.bf16.msra.mxu0 0
        %3836 = vmatprep.subr.bf16.mxu0 0
        %3837 = vmatpush2.bf16.msra.mxu0 0
        %3838 = vmatprep.mubr.bf16.mxu0 0
        %3839 = vmatmul.mubr.bf16.gmra.mxu0 %v3801
        %v3840 = vpop.f32.mrf.mxu0
        %v3841 = vadd.f32 0.0, %v3840
        %v3842 = vpop.f32.mrf.mxu0
        %v3843 = vpop.f32.mrf.mxu0
        %v3844 = vpop.f32.mrf.mxu0
        %3845 = vdwg.mxu0
        %3847 = vrot.lane.b32.xlu0 %v2719, 120
        %v3848 = vpop.permute.xlu0 %3847
        %v3850 = vsel %vm2955, %v3746, 0
        %v3853 = vand.u32 %v3848, %v2962
        %3855 = vmatprep.subr.bf16.mxu0 0
        %3856 = vmatpush1.bf16.msra.mxu0 0
        %3857 = vmatprep.subr.bf16.mxu0 0
        %3858 = vmatpush1.bf16.msra.mxu0 0
        %3859 = vmatprep.subr.bf16.mxu0 0
        %3860 = vmatpush1.bf16.msra.mxu0 0
        %3861 = vmatprep.subr.bf16.mxu0 0
        %3862 = vmatpush1.bf16.msra.mxu0 0
        %3863 = vmatprep.subr.bf16.mxu0 0
        %3864 = vmatpush1.bf16.msra.mxu0 0
        %3865 = vmatprep.subr.bf16.mxu0 0
        %3866 = vmatpush1.bf16.msra.mxu0 0
        %3867 = vmatprep.subr.bf16.mxu0 0
        %3868 = vmatpush1.bf16.msra.mxu0 0
        %3869 = vmatprep.subr.bf16.mxu0 0
        %3870 = vmatpush1.bf16.msra.mxu0 %v3853
        %3871 = vmatprep.subr.bf16.mxu0 0
        %3872 = vmatpush2.bf16.msra.mxu0 0
        %3873 = vmatprep.subr.bf16.mxu0 0
        %3874 = vmatpush2.bf16.msra.mxu0 0
        %3875 = vmatprep.subr.bf16.mxu0 0
        %3876 = vmatpush2.bf16.msra.mxu0 0
        %3877 = vmatprep.subr.bf16.mxu0 0
        %3878 = vmatpush2.bf16.msra.mxu0 0
        %3879 = vmatprep.subr.bf16.mxu0 0
        %3880 = vmatpush2.bf16.msra.mxu0 0
        %3881 = vmatprep.subr.bf16.mxu0 0
        %3882 = vmatpush2.bf16.msra.mxu0 0
        %3883 = vmatprep.subr.bf16.mxu0 0
        %3884 = vmatpush2.bf16.msra.mxu0 0
        %3885 = vmatprep.subr.bf16.mxu0 0
        %3886 = vmatpush2.bf16.msra.mxu0 0
        %3887 = vmatprep.mubr.bf16.mxu0 0
        %3888 = vmatmul.mubr.bf16.gmra.mxu0 %v3850
        %v3889 = vpop.f32.mrf.mxu0
        %v3890 = vadd.f32 0.0, %v3889
        %v3891 = vpop.f32.mrf.mxu0
        %v3892 = vpop.f32.mrf.mxu0
        %v3893 = vpop.f32.mrf.mxu0
        %3894 = vdwg.mxu0
        %3896 = vrot.lane.b32.xlu0 %v2720, 120
        %v3897 = vpop.permute.xlu0 %3896
        %v3899 = vsel %vm2955, %v3747, 0
        %v3902 = vand.u32 %v3897, %v2962
        %3904 = vmatprep.subr.bf16.mxu0 0
        %3905 = vmatpush1.bf16.msra.mxu0 0
        %3906 = vmatprep.subr.bf16.mxu0 0
        %3907 = vmatpush1.bf16.msra.mxu0 0
        %3908 = vmatprep.subr.bf16.mxu0 0
        %3909 = vmatpush1.bf16.msra.mxu0 0
        %3910 = vmatprep.subr.bf16.mxu0 0
        %3911 = vmatpush1.bf16.msra.mxu0 0
        %3912 = vmatprep.subr.bf16.mxu0 0
        %3913 = vmatpush1.bf16.msra.mxu0 0
        %3914 = vmatprep.subr.bf16.mxu0 0
        %3915 = vmatpush1.bf16.msra.mxu0 0
        %3916 = vmatprep.subr.bf16.mxu0 0
        %3917 = vmatpush1.bf16.msra.mxu0 0
        %3918 = vmatprep.subr.bf16.mxu0 0
        %3919 = vmatpush1.bf16.msra.mxu0 %v3902
        %3920 = vmatprep.subr.bf16.mxu0 0
        %3921 = vmatpush2.bf16.msra.mxu0 0
        %3922 = vmatprep.subr.bf16.mxu0 0
        %3923 = vmatpush2.bf16.msra.mxu0 0
        %3924 = vmatprep.subr.bf16.mxu0 0
        %3925 = vmatpush2.bf16.msra.mxu0 0
        %3926 = vmatprep.subr.bf16.mxu0 0
        %3927 = vmatpush2.bf16.msra.mxu0 0
        %3928 = vmatprep.subr.bf16.mxu0 0
        %3929 = vmatpush2.bf16.msra.mxu0 0
        %3930 = vmatprep.subr.bf16.mxu0 0
        %3931 = vmatpush2.bf16.msra.mxu0 0
        %3932 = vmatprep.subr.bf16.mxu0 0
        %3933 = vmatpush2.bf16.msra.mxu0 0
        %3934 = vmatprep.subr.bf16.mxu0 0
        %3935 = vmatpush2.bf16.msra.mxu0 0
        %3936 = vmatprep.mubr.bf16.mxu0 0
        %3937 = vmatmul.mubr.bf16.gmra.mxu0 %v3899
        %v3938 = vpop.f32.mrf.mxu0
        %v3939 = vadd.f32 0.0, %v3938
        %v3940 = vpop.f32.mrf.mxu0
        %v3941 = vpop.f32.mrf.mxu0
        %v3942 = vpop.f32.mrf.mxu0
        %3943 = vdwg.mxu0
        %v3948 = vcombine.high %v3792, %v3792
        %v3950 = vunpack.c.l.s4 1966171168
        %v3951 = vunpack.c.0.s8 %v3950
        %v3952 = vlaneseq
        %v3953 = vshrl.u32 %v3952, 7
        %v3954 = vsub.s32 %v3951, %v3953
        %v3955 = vrot.slane %v3792, %v3954
        %v3957 = vunpack.c.l.s4 1966171168
        %v3958 = vunpack.c.0.s8 %v3957
        %v3959 = vlaneseq
        %v3960 = vshrl.u32 %v3959, 7
        %v3961 = vsub.s32 %v3958, %v3960
        %v3962 = vrot.slane %v3948, %v3961
        %v3963 = vcombine.high %v3955, %v3955
        %v3965 = vunpack.c.l.s4 1966171168
        %v3966 = vunpack.c.0.s8 %v3965
        %v3967 = vlaneseq
        %v3968 = vshrl.u32 %v3967, 7
        %v3969 = vsub.s32 %v3966, %v3968
        %v3970 = vrot.slane %v3955, %v3969
        %v3972 = vunpack.c.l.s4 1966171168
        %v3973 = vunpack.c.0.s8 %v3972
        %v3974 = vlaneseq
        %v3975 = vshrl.u32 %v3974, 7
        %v3976 = vsub.s32 %v3973, %v3975
        %v3977 = vrot.slane %v3962, %v3976
        %v3979 = vunpack.c.l.s4 1966171168
        %v3980 = vunpack.c.0.s8 %v3979
        %v3981 = vlaneseq
        %v3982 = vshrl.u32 %v3981, 7
        %v3983 = vsub.s32 %v3980, %v3982
        %v3984 = vrot.slane %v3963, %v3983
        %v3985 = vcombine.high %v3970, %v3970
        %v3986 = vcombine.high %v3984, %v3984
        %v3987 = vcombine.high %v3841, %v3841
        %v3989 = vunpack.c.l.s4 1966171168
        %v3990 = vunpack.c.0.s8 %v3989
        %v3991 = vlaneseq
        %v3992 = vshrl.u32 %v3991, 7
        %v3993 = vsub.s32 %v3990, %v3992
        %v3994 = vrot.slane %v3841, %v3993
        %v3996 = vunpack.c.l.s4 1966171168
        %v3997 = vunpack.c.0.s8 %v3996
        %v3998 = vlaneseq
        %v3999 = vshrl.u32 %v3998, 7
        %v4000 = vsub.s32 %v3997, %v3999
        %v4001 = vrot.slane %v3987, %v4000
        %v4002 = vcombine.high %v3994, %v3994
        %v4004 = vunpack.c.l.s4 1966171168
        %v4005 = vunpack.c.0.s8 %v4004
        %v4006 = vlaneseq
        %v4007 = vshrl.u32 %v4006, 7
        %v4008 = vsub.s32 %v4005, %v4007
        %v4009 = vrot.slane %v3994, %v4008
        %v4011 = vunpack.c.l.s4 1966171168
        %v4012 = vunpack.c.0.s8 %v4011
        %v4013 = vlaneseq
        %v4014 = vshrl.u32 %v4013, 7
        %v4015 = vsub.s32 %v4012, %v4014
        %v4016 = vrot.slane %v4001, %v4015
        %v4018 = vunpack.c.l.s4 1966171168
        %v4019 = vunpack.c.0.s8 %v4018
        %v4020 = vlaneseq
        %v4021 = vshrl.u32 %v4020, 7
        %v4022 = vsub.s32 %v4019, %v4021
        %v4023 = vrot.slane %v4002, %v4022
        %v4024 = vcombine.high %v4009, %v4009
        %v4025 = vcombine.high %v4023, %v4023
        %v4026 = vcombine.high %v3890, %v3890
        %v4028 = vunpack.c.l.s4 1966171168
        %v4029 = vunpack.c.0.s8 %v4028
        %v4030 = vlaneseq
        %v4031 = vshrl.u32 %v4030, 7
        %v4032 = vsub.s32 %v4029, %v4031
        %v4033 = vrot.slane %v3890, %v4032
        %v4035 = vunpack.c.l.s4 1966171168
        %v4036 = vunpack.c.0.s8 %v4035
        %v4037 = vlaneseq
        %v4038 = vshrl.u32 %v4037, 7
        %v4039 = vsub.s32 %v4036, %v4038
        %v4040 = vrot.slane %v4026, %v4039
        %v4041 = vcombine.high %v4033, %v4033
        %v4043 = vunpack.c.l.s4 1966171168
        %v4044 = vunpack.c.0.s8 %v4043
        %v4045 = vlaneseq
        %v4046 = vshrl.u32 %v4045, 7
        %v4047 = vsub.s32 %v4044, %v4046
        %v4048 = vrot.slane %v4033, %v4047
        %v4050 = vunpack.c.l.s4 1966171168
        %v4051 = vunpack.c.0.s8 %v4050
        %v4052 = vlaneseq
        %v4053 = vshrl.u32 %v4052, 7
        %v4054 = vsub.s32 %v4051, %v4053
        %v4055 = vrot.slane %v4040, %v4054
        %v4057 = vunpack.c.l.s4 1966171168
        %v4058 = vunpack.c.0.s8 %v4057
        %v4059 = vlaneseq
        %v4060 = vshrl.u32 %v4059, 7
        %v4061 = vsub.s32 %v4058, %v4060
        %v4062 = vrot.slane %v4041, %v4061
        %v4063 = vcombine.high %v4048, %v4048
        %v4064 = vcombine.high %v4062, %v4062
        %v4065 = vcombine.high %v3939, %v3939
        %v4067 = vunpack.c.l.s4 1966171168
        %v4068 = vunpack.c.0.s8 %v4067
        %v4069 = vlaneseq
        %v4070 = vshrl.u32 %v4069, 7
        %v4071 = vsub.s32 %v4068, %v4070
        %v4072 = vrot.slane %v3939, %v4071
        %v4074 = vunpack.c.l.s4 1966171168
        %v4075 = vunpack.c.0.s8 %v4074
        %v4076 = vlaneseq
        %v4077 = vshrl.u32 %v4076, 7
        %v4078 = vsub.s32 %v4075, %v4077
        %v4079 = vrot.slane %v4065, %v4078
        %v4080 = vcombine.high %v4072, %v4072
        %v4082 = vunpack.c.l.s4 1966171168
        %v4083 = vunpack.c.0.s8 %v4082
        %v4084 = vlaneseq
        %v4085 = vshrl.u32 %v4084, 7
        %v4086 = vsub.s32 %v4083, %v4085
        %v4087 = vrot.slane %v4072, %v4086
        %v4089 = vunpack.c.l.s4 1966171168
        %v4090 = vunpack.c.0.s8 %v4089
        %v4091 = vlaneseq
        %v4092 = vshrl.u32 %v4091, 7
        %v4093 = vsub.s32 %v4090, %v4092
        %v4094 = vrot.slane %v4079, %v4093
        %v4096 = vunpack.c.l.s4 1966171168
        %v4097 = vunpack.c.0.s8 %v4096
        %v4098 = vlaneseq
        %v4099 = vshrl.u32 %v4098, 7
        %v4100 = vsub.s32 %v4097, %v4099
        %v4101 = vrot.slane %v4080, %v4100
        %v4102 = vcombine.high %v4087, %v4087
        %v4103 = vcombine.high %v4101, %v4101
        %v4104 = vcombine.low %v3970, %v3984
        %v4105 = vcombine.low %v3985, %v3986
        %v4106 = vcombine.low %v3977, %v4009
        %v4107 = vcombine.low %v4023, %v4024
        %v4109 = vunpack.c.l.s4 1966171168
        %v4110 = vunpack.c.0.s8 %v4109
        %v4111 = vlaneseq
        %v4112 = vshrl.u32 %v4111, 7
        %v4113 = vsub.s32 %v4110, %v4112
        %v4114 = vrot.slane %v4104, %v4113
        %v4116 = vunpack.c.l.s4 1966171168
        %v4117 = vunpack.c.0.s8 %v4116
        %v4118 = vlaneseq
        %v4119 = vshrl.u32 %v4118, 7
        %v4120 = vsub.s32 %v4117, %v4119
        %v4121 = vrot.slane %v4105, %v4120
        %v4123 = vunpack.c.l.s4 1966171168
        %v4124 = vunpack.c.0.s8 %v4123
        %v4125 = vlaneseq
        %v4126 = vshrl.u32 %v4125, 7
        %v4127 = vsub.s32 %v4124, %v4126
        %v4128 = vrot.slane %v4106, %v4127
        %v4130 = vunpack.c.l.s4 1966171168
        %v4131 = vunpack.c.0.s8 %v4130
        %v4132 = vlaneseq
        %v4133 = vshrl.u32 %v4132, 7
        %v4134 = vsub.s32 %v4131, %v4133
        %v4135 = vrot.slane %v4107, %v4134
        %v4136 = vcombine.low %v4114, %v4121
        %v4137 = vcombine.low %v4128, %v4135
        %v4139 = vunpack.c.l.s4 1966171168
        %v4140 = vunpack.c.0.s8 %v4139
        %v4141 = vlaneseq
        %v4142 = vshrl.u32 %v4141, 7
        %v4143 = vsub.s32 %v4140, %v4142
        %v4144 = vrot.slane %v4136, %v4143
        %v4146 = vunpack.c.l.s4 1966171168
        %v4147 = vunpack.c.0.s8 %v4146
        %v4148 = vlaneseq
        %v4149 = vshrl.u32 %v4148, 7
        %v4150 = vsub.s32 %v4147, %v4149
        %v4151 = vrot.slane %v4137, %v4150
        %v4152 = vcombine.low %v4144, %v4151
        %v4153 = vcombine.low %v4025, %v4016
        %v4154 = vcombine.low %v4048, %v4062
        %v4155 = vcombine.low %v4063, %v4064
        %v4156 = vcombine.low %v4055, %v4087
        %v4158 = vunpack.c.l.s4 1966171168
        %v4159 = vunpack.c.0.s8 %v4158
        %v4160 = vlaneseq
        %v4161 = vshrl.u32 %v4160, 7
        %v4162 = vsub.s32 %v4159, %v4161
        %v4163 = vrot.slane %v4153, %v4162
        %v4165 = vunpack.c.l.s4 1966171168
        %v4166 = vunpack.c.0.s8 %v4165
        %v4167 = vlaneseq
        %v4168 = vshrl.u32 %v4167, 7
        %v4169 = vsub.s32 %v4166, %v4168
        %v4170 = vrot.slane %v4154, %v4169
        %v4172 = vunpack.c.l.s4 1966171168
        %v4173 = vunpack.c.0.s8 %v4172
        %v4174 = vlaneseq
        %v4175 = vshrl.u32 %v4174, 7
        %v4176 = vsub.s32 %v4173, %v4175
        %v4177 = vrot.slane %v4155, %v4176
        %v4179 = vunpack.c.l.s4 1966171168
        %v4180 = vunpack.c.0.s8 %v4179
        %v4181 = vlaneseq
        %v4182 = vshrl.u32 %v4181, 7
        %v4183 = vsub.s32 %v4180, %v4182
        %v4184 = vrot.slane %v4156, %v4183
        %v4185 = vcombine.low %v4163, %v4170
        %v4186 = vcombine.low %v4177, %v4184
        %v4188 = vunpack.c.l.s4 1966171168
        %v4189 = vunpack.c.0.s8 %v4188
        %v4190 = vlaneseq
        %v4191 = vshrl.u32 %v4190, 7
        %v4192 = vsub.s32 %v4189, %v4191
        %v4193 = vrot.slane %v4185, %v4192
        %v4195 = vunpack.c.l.s4 1966171168
        %v4196 = vunpack.c.0.s8 %v4195
        %v4197 = vlaneseq
        %v4198 = vshrl.u32 %v4197, 7
        %v4199 = vsub.s32 %v4196, %v4198
        %v4200 = vrot.slane %v4186, %v4199
        %v4201 = vcombine.low %v4193, %v4200
        %v4202 = vcombine.low %v4101, %v4102
        %v4203 = vcombine.low %v4103, %v4094
        %v4205 = vunpack.c.l.s4 1966171168
        %v4206 = vunpack.c.0.s8 %v4205
        %v4207 = vlaneseq
        %v4208 = vshrl.u32 %v4207, 7
        %v4209 = vsub.s32 %v4206, %v4208
        %v4210 = vrot.slane %v4202, %v4209
        %v4212 = vunpack.c.l.s4 1966171168
        %v4213 = vunpack.c.0.s8 %v4212
        %v4214 = vlaneseq
        %v4215 = vshrl.u32 %v4214, 7
        %v4216 = vsub.s32 %v4213, %v4215
        %v4217 = vrot.slane %v4203, %v4216
        %v4218 = vcombine.low %v4210, %v4217
        %v4220 = vunpack.c.l.s4 1966171168
        %v4221 = vunpack.c.0.s8 %v4220
        %v4222 = vlaneseq
        %v4223 = vshrl.u32 %v4222, 7
        %v4224 = vsub.s32 %v4221, %v4223
        %v4225 = vrot.slane %v4218, %v4224
        %v4229 = vpack.c.bf16 %v4201, %v4152
        %v4230 = vpack.c.bf16 %v4225, %v4225
        %v4232 = vsel %vm2721, %v4229, 0
        %v4235 = vsel %vm2721, %v4230, 0
        %v4238 = vsel %vm3437, %v1492, 0
        %4240 = vmatprep.subr.bf16.mxu0 0
        %4241 = vmatpush1.bf16.msra.mxu0 0
        %4242 = vmatprep.subr.bf16.mxu0 0
        %4243 = vmatpush1.bf16.msra.mxu0 0
        %4244 = vmatprep.subr.bf16.mxu0 0
        %4245 = vmatpush1.bf16.msra.mxu0 0
        %4246 = vmatprep.subr.bf16.mxu0 0
        %4247 = vmatpush1.bf16.msra.mxu0 0
        %4248 = vmatprep.subr.bf16.mxu0 0
        %4249 = vmatpush1.bf16.msra.mxu0 0
        %4250 = vmatprep.subr.bf16.mxu0 0
        %4251 = vmatpush1.bf16.msra.mxu0 0
        %4252 = vmatprep.subr.bf16.mxu0 0
        %4253 = vmatpush1.bf16.msra.mxu0 0
        %4254 = vmatprep.subr.bf16.mxu0 0
        %4255 = vmatpush1.bf16.msra.mxu0 %v4238
        %4256 = vmatprep.subr.bf16.mxu0 0
        %4257 = vmatpush2.bf16.msra.mxu0 0
        %4258 = vmatprep.subr.bf16.mxu0 0
        %4259 = vmatpush2.bf16.msra.mxu0 0
        %4260 = vmatprep.subr.bf16.mxu0 0
        %4261 = vmatpush2.bf16.msra.mxu0 0
        %4262 = vmatprep.subr.bf16.mxu0 0
        %4263 = vmatpush2.bf16.msra.mxu0 0
        %4264 = vmatprep.subr.bf16.mxu0 0
        %4265 = vmatpush2.bf16.msra.mxu0 0
        %4266 = vmatprep.subr.bf16.mxu0 0
        %4267 = vmatpush2.bf16.msra.mxu0 0
        %4268 = vmatprep.subr.bf16.mxu0 0
        %4269 = vmatpush2.bf16.msra.mxu0 0
        %4270 = vmatprep.subr.bf16.mxu0 0
        %4271 = vmatpush2.bf16.msra.mxu0 0
        %4272 = vmatprep.mubr.bf16.mxu0 0
        %4273 = vmatmul.mubr.bf16.gmra.mxu0 %v4232
        %v4274 = vpop.f32.mrf.mxu0
        %v4275 = vadd.f32 0.0, %v4274
        %v4276 = vpop.f32.mrf.mxu0
        %v4277 = vpop.f32.mrf.mxu0
        %v4278 = vadd.f32 0.0, %v4277
        %v4279 = vpop.f32.mrf.mxu0
        %4280 = vmatprep.mubr.bf16.mxu0 0
        %4281 = vmatmul.mubr.bf16.gmra.mxu0 %v4235
        %v4282 = vpop.f32.mrf.mxu0
        %v4283 = vadd.f32 0.0, %v4282
        %v4284 = vpop.f32.mrf.mxu0
        %v4285 = vpop.f32.mrf.mxu0
        %v4286 = vpop.f32.mrf.mxu0
        %4287 = vdwg.mxu0
        %v4288 = vadd.f32 %v3489, %v4275
        %v4289 = vadd.f32 %v3490, %v4278
        %v4290 = vadd.f32 %v3491, %v4283
        %4291 = vrot.lane.b32.xlu0 %v2139, 112
        %v4292 = vpop.permute.xlu0 %4291
        %4293 = vrot.lane.b32.xlu0 %v2428, 112
        %v4294 = vpop.permute.xlu0 %4293
        %v4296 = vsel %vm2721, %v4292, 0
        %v4299 = vsel %vm2721, %v4294, 0
        %4301 = vmatprep.subr.bf16.mxu0 0
        %4302 = vmatpush1.bf16.xpose.msra.mxu0 0
        %4303 = vmatprep.subr.bf16.mxu0 0
        %4304 = vmatpush1.bf16.xpose.msra.mxu0 0
        %4305 = vmatprep.subr.bf16.mxu0 0
        %4306 = vmatpush1.bf16.xpose.msra.mxu0 0
        %4307 = vmatprep.subr.bf16.mxu0 0
        %4308 = vmatpush1.bf16.xpose.msra.mxu0 0
        %4309 = vmatprep.subr.bf16.mxu0 0
        %4310 = vmatpush1.bf16.xpose.msra.mxu0 0
        %4311 = vmatprep.subr.bf16.mxu0 0
        %4312 = vmatpush1.bf16.xpose.msra.mxu0 0
        %4313 = vmatprep.subr.bf16.mxu0 0
        %4314 = vmatpush1.bf16.xpose.msra.mxu0 0
        %4315 = vmatprep.subr.bf16.mxu0 0
        %4316 = vmatpush1.bf16.xpose.msra.mxu0 %v4299
        %4317 = vmatprep.subr.bf16.mxu0 0
        %4318 = vmatpush2.bf16.xpose.msra.mxu0 0
        %4319 = vmatprep.subr.bf16.mxu0 0
        %4320 = vmatpush2.bf16.xpose.msra.mxu0 0
        %4321 = vmatprep.subr.bf16.mxu0 0
        %4322 = vmatpush2.bf16.xpose.msra.mxu0 0
        %4323 = vmatprep.subr.bf16.mxu0 0
        %4324 = vmatpush2.bf16.xpose.msra.mxu0 0
        %4325 = vmatprep.subr.bf16.mxu0 0
        %4326 = vmatpush2.bf16.xpose.msra.mxu0 0
        %4327 = vmatprep.subr.bf16.mxu0 0
        %4328 = vmatpush2.bf16.xpose.msra.mxu0 0
        %4329 = vmatprep.subr.bf16.mxu0 0
        %4330 = vmatpush2.bf16.xpose.msra.mxu0 0
        %4331 = vmatprep.subr.bf16.mxu0 0
        %4332 = vmatpush2.bf16.xpose.msra.mxu0 0
        %4333 = vmatprep.mubr.bf16.mxu0 0
        %4334 = vmatmul.mubr.bf16.gmra.mxu0 %v4296
        %v4335 = vpop.f32.mrf.mxu0
        %v4336 = vadd.f32 0.0, %v4335
        %v4337 = vpop.f32.mrf.mxu0
        %v4338 = vpop.f32.mrf.mxu0
        %v4339 = vpop.f32.mrf.mxu0
        %4340 = vdwg.mxu0
        %4341 = vrot.lane.b32.xlu0 %v2140, 112
        %v4342 = vpop.permute.xlu0 %4341
        %4343 = vrot.lane.b32.xlu0 %v2429, 112
        %v4344 = vpop.permute.xlu0 %4343
        %v4346 = vsel %vm2721, %v4342, 0
        %v4349 = vsel %vm2721, %v4344, 0
        %4351 = vmatprep.subr.bf16.mxu0 0
        %4352 = vmatpush1.bf16.xpose.msra.mxu0 0
        %4353 = vmatprep.subr.bf16.mxu0 0
        %4354 = vmatpush1.bf16.xpose.msra.mxu0 0
        %4355 = vmatprep.subr.bf16.mxu0 0
        %4356 = vmatpush1.bf16.xpose.msra.mxu0 0
        %4357 = vmatprep.subr.bf16.mxu0 0
        %4358 = vmatpush1.bf16.xpose.msra.mxu0 0
        %4359 = vmatprep.subr.bf16.mxu0 0
        %4360 = vmatpush1.bf16.xpose.msra.mxu0 0
        %4361 = vmatprep.subr.bf16.mxu0 0
        %4362 = vmatpush1.bf16.xpose.msra.mxu0 0
        %4363 = vmatprep.subr.bf16.mxu0 0
        %4364 = vmatpush1.bf16.xpose.msra.mxu0 0
        %4365 = vmatprep.subr.bf16.mxu0 0
        %4366 = vmatpush1.bf16.xpose.msra.mxu0 %v4349
        %4367 = vmatprep.subr.bf16.mxu0 0
        %4368 = vmatpush2.bf16.xpose.msra.mxu0 0
        %4369 = vmatprep.subr.bf16.mxu0 0
        %4370 = vmatpush2.bf16.xpose.msra.mxu0 0
        %4371 = vmatprep.subr.bf16.mxu0 0
        %4372 = vmatpush2.bf16.xpose.msra.mxu0 0
        %4373 = vmatprep.subr.bf16.mxu0 0
        %4374 = vmatpush2.bf16.xpose.msra.mxu0 0
        %4375 = vmatprep.subr.bf16.mxu0 0
        %4376 = vmatpush2.bf16.xpose.msra.mxu0 0
        %4377 = vmatprep.subr.bf16.mxu0 0
        %4378 = vmatpush2.bf16.xpose.msra.mxu0 0
        %4379 = vmatprep.subr.bf16.mxu0 0
        %4380 = vmatpush2.bf16.xpose.msra.mxu0 0
        %4381 = vmatprep.subr.bf16.mxu0 0
        %4382 = vmatpush2.bf16.xpose.msra.mxu0 0
        %4383 = vmatprep.mubr.bf16.mxu0 0
        %4384 = vmatmul.mubr.bf16.gmra.mxu0 %v4346
        %v4385 = vpop.f32.mrf.mxu0
        %v4386 = vadd.f32 0.0, %v4385
        %v4387 = vpop.f32.mrf.mxu0
        %v4388 = vpop.f32.mrf.mxu0
        %v4389 = vpop.f32.mrf.mxu0
        %4390 = vdwg.mxu0
        %4391 = vrot.lane.b32.xlu0 %v2141, 112
        %v4392 = vpop.permute.xlu0 %4391
        %4393 = vrot.lane.b32.xlu0 %v2430, 112
        %v4394 = vpop.permute.xlu0 %4393
        %v4396 = vsel %vm2721, %v4392, 0
        %v4399 = vsel %vm2721, %v4394, 0
        %4401 = vmatprep.subr.bf16.mxu0 0
        %4402 = vmatpush1.bf16.xpose.msra.mxu0 0
        %4403 = vmatprep.subr.bf16.mxu0 0
        %4404 = vmatpush1.bf16.xpose.msra.mxu0 0
        %4405 = vmatprep.subr.bf16.mxu0 0
        %4406 = vmatpush1.bf16.xpose.msra.mxu0 0
        %4407 = vmatprep.subr.bf16.mxu0 0
        %4408 = vmatpush1.bf16.xpose.msra.mxu0 0
        %4409 = vmatprep.subr.bf16.mxu0 0
        %4410 = vmatpush1.bf16.xpose.msra.mxu0 0
        %4411 = vmatprep.subr.bf16.mxu0 0
        %4412 = vmatpush1.bf16.xpose.msra.mxu0 0
        %4413 = vmatprep.subr.bf16.mxu0 0
        %4414 = vmatpush1.bf16.xpose.msra.mxu0 0
        %4415 = vmatprep.subr.bf16.mxu0 0
        %4416 = vmatpush1.bf16.xpose.msra.mxu0 %v4399
        %4417 = vmatprep.subr.bf16.mxu0 0
        %4418 = vmatpush2.bf16.xpose.msra.mxu0 0
        %4419 = vmatprep.subr.bf16.mxu0 0
        %4420 = vmatpush2.bf16.xpose.msra.mxu0 0
        %4421 = vmatprep.subr.bf16.mxu0 0
        %4422 = vmatpush2.bf16.xpose.msra.mxu0 0
        %4423 = vmatprep.subr.bf16.mxu0 0
        %4424 = vmatpush2.bf16.xpose.msra.mxu0 0
        %4425 = vmatprep.subr.bf16.mxu0 0
        %4426 = vmatpush2.bf16.xpose.msra.mxu0 0
        %4427 = vmatprep.subr.bf16.mxu0 0
        %4428 = vmatpush2.bf16.xpose.msra.mxu0 0
        %4429 = vmatprep.subr.bf16.mxu0 0
        %4430 = vmatpush2.bf16.xpose.msra.mxu0 0
        %4431 = vmatprep.subr.bf16.mxu0 0
        %4432 = vmatpush2.bf16.xpose.msra.mxu0 0
        %4433 = vmatprep.mubr.bf16.mxu0 0
        %4434 = vmatmul.mubr.bf16.gmra.mxu0 %v4396
        %v4435 = vpop.f32.mrf.mxu0
        %v4436 = vadd.f32 0.0, %v4435
        %v4437 = vpop.f32.mrf.mxu0
        %v4438 = vpop.f32.mrf.mxu0
        %v4439 = vpop.f32.mrf.mxu0
        %4440 = vdwg.mxu0
        %4441 = vrot.lane.b32.xlu0 %v2142, 112
        %v4442 = vpop.permute.xlu0 %4441
        %4443 = vrot.lane.b32.xlu0 %v2431, 112
        %v4444 = vpop.permute.xlu0 %4443
        %v4446 = vsel %vm2721, %v4442, 0
        %v4449 = vsel %vm2721, %v4444, 0
        %4451 = vmatprep.subr.bf16.mxu0 0
        %4452 = vmatpush1.bf16.xpose.msra.mxu0 0
        %4453 = vmatprep.subr.bf16.mxu0 0
        %4454 = vmatpush1.bf16.xpose.msra.mxu0 0
        %4455 = vmatprep.subr.bf16.mxu0 0
        %4456 = vmatpush1.bf16.xpose.msra.mxu0 0
        %4457 = vmatprep.subr.bf16.mxu0 0
        %4458 = vmatpush1.bf16.xpose.msra.mxu0 0
        %4459 = vmatprep.subr.bf16.mxu0 0
        %4460 = vmatpush1.bf16.xpose.msra.mxu0 0
        %4461 = vmatprep.subr.bf16.mxu0 0
        %4462 = vmatpush1.bf16.xpose.msra.mxu0 0
        %4463 = vmatprep.subr.bf16.mxu0 0
        %4464 = vmatpush1.bf16.xpose.msra.mxu0 0
        %4465 = vmatprep.subr.bf16.mxu0 0
        %4466 = vmatpush1.bf16.xpose.msra.mxu0 %v4449
        %4467 = vmatprep.subr.bf16.mxu0 0
        %4468 = vmatpush2.bf16.xpose.msra.mxu0 0
        %4469 = vmatprep.subr.bf16.mxu0 0
        %4470 = vmatpush2.bf16.xpose.msra.mxu0 0
        %4471 = vmatprep.subr.bf16.mxu0 0
        %4472 = vmatpush2.bf16.xpose.msra.mxu0 0
        %4473 = vmatprep.subr.bf16.mxu0 0
        %4474 = vmatpush2.bf16.xpose.msra.mxu0 0
        %4475 = vmatprep.subr.bf16.mxu0 0
        %4476 = vmatpush2.bf16.xpose.msra.mxu0 0
        %4477 = vmatprep.subr.bf16.mxu0 0
        %4478 = vmatpush2.bf16.xpose.msra.mxu0 0
        %4479 = vmatprep.subr.bf16.mxu0 0
        %4480 = vmatpush2.bf16.xpose.msra.mxu0 0
        %4481 = vmatprep.subr.bf16.mxu0 0
        %4482 = vmatpush2.bf16.xpose.msra.mxu0 0
        %4483 = vmatprep.mubr.bf16.mxu0 0
        %4484 = vmatmul.mubr.bf16.gmra.mxu0 %v4446
        %v4485 = vpop.f32.mrf.mxu0
        %v4486 = vadd.f32 0.0, %v4485
        %v4487 = vpop.f32.mrf.mxu0
        %v4488 = vpop.f32.mrf.mxu0
        %v4489 = vpop.f32.mrf.mxu0
        %4490 = vdwg.mxu0
        %v4491 = vsel %vm2906, %v4336, -inf
        %4492 = vmax.xlane.f32.xlu0 %v4491
        %v4493 = vpop.xlane.xlu0 %4492
        %v4494 = vsel %vm2906, %v4386, -inf
        %4495 = vmax.xlane.f32.xlu0 %v4494
        %v4496 = vpop.xlane.xlu0 %4495
        %v4497 = vsel %vm2906, %v4436, -inf
        %4498 = vmax.xlane.f32.xlu0 %v4497
        %v4499 = vpop.xlane.xlu0 %4498
        %v4500 = vsel %vm2906, %v4486, -inf
        %4501 = vmax.xlane.f32.xlu0 %v4500
        %v4502 = vpop.xlane.xlu0 %4501
        %v4503 = vsub.f32 %v4336, %v4493
        %v4504 = vsub.f32 %v4386, %v4496
        %v4505 = vsub.f32 %v4436, %v4499
        %v4506 = vsub.f32 %v4486, %v4502
        %v4507 = vmul.f32 %v4503, 1.442695
        %v4508 = vpow.pop %v4507
        %v4509 = vmul.f32 %v4504, 1.442695
        %v4510 = vpow.pop %v4509
        %v4511 = vmul.f32 %v4505, 1.442695
        %v4512 = vpow.pop %v4511
        %v4513 = vmul.f32 %v4506, 1.442695
        %v4514 = vpow.pop %v4513
        %v4515 = vsel %vm2906, %v4508, 0.0
        %4516 = vadd.xlane.f32.xlu0 %v4515
        %v4517 = vpop.xlane.xlu0 %4516
        %v4518 = vsel %vm2906, %v4510, 0.0
        %4519 = vadd.xlane.f32.xlu0 %v4518
        %v4520 = vpop.xlane.xlu0 %4519
        %v4521 = vsel %vm2906, %v4512, 0.0
        %4522 = vadd.xlane.f32.xlu0 %v4521
        %v4523 = vpop.xlane.xlu0 %4522
        %v4524 = vsel %vm2906, %v4514, 0.0
        %4525 = vadd.xlane.f32.xlu0 %v4524
        %v4526 = vpop.xlane.xlu0 %4525
        %v4527 = vrcp.pop %v4517
        %v4528 = vrcp.pop %v4520
        %v4529 = vrcp.pop %v4523
        %v4530 = vrcp.pop %v4526
        %v4531 = vmul.f32 %v4508, %v4527
        %v4532 = vmul.f32 %v4510, %v4528
        %v4533 = vmul.f32 %v4512, %v4529
        %v4534 = vmul.f32 %v4514, %v4530
        %v4535 = vpack.c.bf16 %v4531, %v4531
        %v4536 = vpack.c.bf16 %v4532, %v4532
        %v4537 = vpack.c.bf16 %v4533, %v4533
        %v4538 = vpack.c.bf16 %v4534, %v4534
        %4539 = vrot.lane.b32.xlu0 %v2717, 112
        %v4540 = vpop.permute.xlu0 %4539
        %v4542 = vsel %vm2955, %v4535, 0
        %v4545 = vand.u32 %v4540, %v2962
        %4547 = vmatprep.subr.bf16.mxu0 0
        %4548 = vmatpush1.bf16.msra.mxu0 0
        %4549 = vmatprep.subr.bf16.mxu0 0
        %4550 = vmatpush1.bf16.msra.mxu0 0
        %4551 = vmatprep.subr.bf16.mxu0 0
        %4552 = vmatpush1.bf16.msra.mxu0 0
        %4553 = vmatprep.subr.bf16.mxu0 0
        %4554 = vmatpush1.bf16.msra.mxu0 0
        %4555 = vmatprep.subr.bf16.mxu0 0
        %4556 = vmatpush1.bf16.msra.mxu0 0
        %4557 = vmatprep.subr.bf16.mxu0 0
        %4558 = vmatpush1.bf16.msra.mxu0 0
        %4559 = vmatprep.subr.bf16.mxu0 0
        %4560 = vmatpush1.bf16.msra.mxu0 0
        %4561 = vmatprep.subr.bf16.mxu0 0
        %4562 = vmatpush1.bf16.msra.mxu0 %v4545
        %4563 = vmatprep.subr.bf16.mxu0 0
        %4564 = vmatpush2.bf16.msra.mxu0 0
        %4565 = vmatprep.subr.bf16.mxu0 0
        %4566 = vmatpush2.bf16.msra.mxu0 0
        %4567 = vmatprep.subr.bf16.mxu0 0
        %4568 = vmatpush2.bf16.msra.mxu0 0
        %4569 = vmatprep.subr.bf16.mxu0 0
        %4570 = vmatpush2.bf16.msra.mxu0 0
        %4571 = vmatprep.subr.bf16.mxu0 0
        %4572 = vmatpush2.bf16.msra.mxu0 0
        %4573 = vmatprep.subr.bf16.mxu0 0
        %4574 = vmatpush2.bf16.msra.mxu0 0
        %4575 = vmatprep.subr.bf16.mxu0 0
        %4576 = vmatpush2.bf16.msra.mxu0 0
        %4577 = vmatprep.subr.bf16.mxu0 0
        %4578 = vmatpush2.bf16.msra.mxu0 0
        %4579 = vmatprep.mubr.bf16.mxu0 0
        %4580 = vmatmul.mubr.bf16.gmra.mxu0 %v4542
        %v4581 = vpop.f32.mrf.mxu0
        %v4582 = vadd.f32 0.0, %v4581
        %v4583 = vpop.f32.mrf.mxu0
        %v4584 = vpop.f32.mrf.mxu0
        %v4585 = vpop.f32.mrf.mxu0
        %4586 = vdwg.mxu0
        %4587 = vrot.lane.b32.xlu0 %v2718, 112
        %v4588 = vpop.permute.xlu0 %4587
        %v4590 = vsel %vm2955, %v4536, 0
        %v4593 = vand.u32 %v4588, %v2962
        %4595 = vmatprep.subr.bf16.mxu0 0
        %4596 = vmatpush1.bf16.msra.mxu0 0
        %4597 = vmatprep.subr.bf16.mxu0 0
        %4598 = vmatpush1.bf16.msra.mxu0 0
        %4599 = vmatprep.subr.bf16.mxu0 0
        %4600 = vmatpush1.bf16.msra.mxu0 0
        %4601 = vmatprep.subr.bf16.mxu0 0
        %4602 = vmatpush1.bf16.msra.mxu0 0
        %4603 = vmatprep.subr.bf16.mxu0 0
        %4604 = vmatpush1.bf16.msra.mxu0 0
        %4605 = vmatprep.subr.bf16.mxu0 0
        %4606 = vmatpush1.bf16.msra.mxu0 0
        %4607 = vmatprep.subr.bf16.mxu0 0
        %4608 = vmatpush1.bf16.msra.mxu0 0
        %4609 = vmatprep.subr.bf16.mxu0 0
        %4610 = vmatpush1.bf16.msra.mxu0 %v4593
        %4611 = vmatprep.subr.bf16.mxu0 0
        %4612 = vmatpush2.bf16.msra.mxu0 0
        %4613 = vmatprep.subr.bf16.mxu0 0
        %4614 = vmatpush2.bf16.msra.mxu0 0
        %4615 = vmatprep.subr.bf16.mxu0 0
        %4616 = vmatpush2.bf16.msra.mxu0 0
        %4617 = vmatprep.subr.bf16.mxu0 0
        %4618 = vmatpush2.bf16.msra.mxu0 0
        %4619 = vmatprep.subr.bf16.mxu0 0
        %4620 = vmatpush2.bf16.msra.mxu0 0
        %4621 = vmatprep.subr.bf16.mxu0 0
        %4622 = vmatpush2.bf16.msra.mxu0 0
        %4623 = vmatprep.subr.bf16.mxu0 0
        %4624 = vmatpush2.bf16.msra.mxu0 0
        %4625 = vmatprep.subr.bf16.mxu0 0
        %4626 = vmatpush2.bf16.msra.mxu0 0
        %4627 = vmatprep.mubr.bf16.mxu0 0
        %4628 = vmatmul.mubr.bf16.gmra.mxu0 %v4590
        %v4629 = vpop.f32.mrf.mxu0
        %v4630 = vadd.f32 0.0, %v4629
        %v4631 = vpop.f32.mrf.mxu0
        %v4632 = vpop.f32.mrf.mxu0
        %v4633 = vpop.f32.mrf.mxu0
        %4634 = vdwg.mxu0
        %4635 = vrot.lane.b32.xlu0 %v2719, 112
        %v4636 = vpop.permute.xlu0 %4635
        %v4638 = vsel %vm2955, %v4537, 0
        %v4641 = vand.u32 %v4636, %v2962
        %4643 = vmatprep.subr.bf16.mxu0 0
        %4644 = vmatpush1.bf16.msra.mxu0 0
        %4645 = vmatprep.subr.bf16.mxu0 0
        %4646 = vmatpush1.bf16.msra.mxu0 0
        %4647 = vmatprep.subr.bf16.mxu0 0
        %4648 = vmatpush1.bf16.msra.mxu0 0
        %4649 = vmatprep.subr.bf16.mxu0 0
        %4650 = vmatpush1.bf16.msra.mxu0 0
        %4651 = vmatprep.subr.bf16.mxu0 0
        %4652 = vmatpush1.bf16.msra.mxu0 0
        %4653 = vmatprep.subr.bf16.mxu0 0
        %4654 = vmatpush1.bf16.msra.mxu0 0
        %4655 = vmatprep.subr.bf16.mxu0 0
        %4656 = vmatpush1.bf16.msra.mxu0 0
        %4657 = vmatprep.subr.bf16.mxu0 0
        %4658 = vmatpush1.bf16.msra.mxu0 %v4641
        %4659 = vmatprep.subr.bf16.mxu0 0
        %4660 = vmatpush2.bf16.msra.mxu0 0
        %4661 = vmatprep.subr.bf16.mxu0 0
        %4662 = vmatpush2.bf16.msra.mxu0 0
        %4663 = vmatprep.subr.bf16.mxu0 0
        %4664 = vmatpush2.bf16.msra.mxu0 0
        %4665 = vmatprep.subr.bf16.mxu0 0
        %4666 = vmatpush2.bf16.msra.mxu0 0
        %4667 = vmatprep.subr.bf16.mxu0 0
        %4668 = vmatpush2.bf16.msra.mxu0 0
        %4669 = vmatprep.subr.bf16.mxu0 0
        %4670 = vmatpush2.bf16.msra.mxu0 0
        %4671 = vmatprep.subr.bf16.mxu0 0
        %4672 = vmatpush2.bf16.msra.mxu0 0
        %4673 = vmatprep.subr.bf16.mxu0 0
        %4674 = vmatpush2.bf16.msra.mxu0 0
        %4675 = vmatprep.mubr.bf16.mxu0 0
        %4676 = vmatmul.mubr.bf16.gmra.mxu0 %v4638
        %v4677 = vpop.f32.mrf.mxu0
        %v4678 = vadd.f32 0.0, %v4677
        %v4679 = vpop.f32.mrf.mxu0
        %v4680 = vpop.f32.mrf.mxu0
        %v4681 = vpop.f32.mrf.mxu0
        %4682 = vdwg.mxu0
        %4683 = vrot.lane.b32.xlu0 %v2720, 112
        %v4684 = vpop.permute.xlu0 %4683
        %v4686 = vsel %vm2955, %v4538, 0
        %v4689 = vand.u32 %v4684, %v2962
        %4691 = vmatprep.subr.bf16.mxu0 0
        %4692 = vmatpush1.bf16.msra.mxu0 0
        %4693 = vmatprep.subr.bf16.mxu0 0
        %4694 = vmatpush1.bf16.msra.mxu0 0
        %4695 = vmatprep.subr.bf16.mxu0 0
        %4696 = vmatpush1.bf16.msra.mxu0 0
        %4697 = vmatprep.subr.bf16.mxu0 0
        %4698 = vmatpush1.bf16.msra.mxu0 0
        %4699 = vmatprep.subr.bf16.mxu0 0
        %4700 = vmatpush1.bf16.msra.mxu0 0
        %4701 = vmatprep.subr.bf16.mxu0 0
        %4702 = vmatpush1.bf16.msra.mxu0 0
        %4703 = vmatprep.subr.bf16.mxu0 0
        %4704 = vmatpush1.bf16.msra.mxu0 0
        %4705 = vmatprep.subr.bf16.mxu0 0
        %4706 = vmatpush1.bf16.msra.mxu0 %v4689
        %4707 = vmatprep.subr.bf16.mxu0 0
        %4708 = vmatpush2.bf16.msra.mxu0 0
        %4709 = vmatprep.subr.bf16.mxu0 0
        %4710 = vmatpush2.bf16.msra.mxu0 0
        %4711 = vmatprep.subr.bf16.mxu0 0
        %4712 = vmatpush2.bf16.msra.mxu0 0
        %4713 = vmatprep.subr.bf16.mxu0 0
        %4714 = vmatpush2.bf16.msra.mxu0 0
        %4715 = vmatprep.subr.bf16.mxu0 0
        %4716 = vmatpush2.bf16.msra.mxu0 0
        %4717 = vmatprep.subr.bf16.mxu0 0
        %4718 = vmatpush2.bf16.msra.mxu0 0
        %4719 = vmatprep.subr.bf16.mxu0 0
        %4720 = vmatpush2.bf16.msra.mxu0 0
        %4721 = vmatprep.subr.bf16.mxu0 0
        %4722 = vmatpush2.bf16.msra.mxu0 0
        %4723 = vmatprep.mubr.bf16.mxu0 0
        %4724 = vmatmul.mubr.bf16.gmra.mxu0 %v4686
        %v4725 = vpop.f32.mrf.mxu0
        %v4726 = vadd.f32 0.0, %v4725
        %v4727 = vpop.f32.mrf.mxu0
        %v4728 = vpop.f32.mrf.mxu0
        %v4729 = vpop.f32.mrf.mxu0
        %4730 = vdwg.mxu0
        %v4735 = vcombine.high %v4582, %v4582
        %v4737 = vunpack.c.l.s4 1966171168
        %v4738 = vunpack.c.0.s8 %v4737
        %v4739 = vlaneseq
        %v4740 = vshrl.u32 %v4739, 7
        %v4741 = vsub.s32 %v4738, %v4740
        %v4742 = vrot.slane %v4582, %v4741
        %v4744 = vunpack.c.l.s4 1966171168
        %v4745 = vunpack.c.0.s8 %v4744
        %v4746 = vlaneseq
        %v4747 = vshrl.u32 %v4746, 7
        %v4748 = vsub.s32 %v4745, %v4747
        %v4749 = vrot.slane %v4735, %v4748
        %v4750 = vcombine.high %v4742, %v4742
        %v4752 = vunpack.c.l.s4 1966171168
        %v4753 = vunpack.c.0.s8 %v4752
        %v4754 = vlaneseq
        %v4755 = vshrl.u32 %v4754, 7
        %v4756 = vsub.s32 %v4753, %v4755
        %v4757 = vrot.slane %v4742, %v4756
        %v4759 = vunpack.c.l.s4 1966171168
        %v4760 = vunpack.c.0.s8 %v4759
        %v4761 = vlaneseq
        %v4762 = vshrl.u32 %v4761, 7
        %v4763 = vsub.s32 %v4760, %v4762
        %v4764 = vrot.slane %v4749, %v4763
        %v4766 = vunpack.c.l.s4 1966171168
        %v4767 = vunpack.c.0.s8 %v4766
        %v4768 = vlaneseq
        %v4769 = vshrl.u32 %v4768, 7
        %v4770 = vsub.s32 %v4767, %v4769
        %v4771 = vrot.slane %v4750, %v4770
        %v4772 = vcombine.high %v4757, %v4757
        %v4773 = vcombine.high %v4771, %v4771
        %v4774 = vcombine.high %v4630, %v4630
        %v4776 = vunpack.c.l.s4 1966171168
        %v4777 = vunpack.c.0.s8 %v4776
        %v4778 = vlaneseq
        %v4779 = vshrl.u32 %v4778, 7
        %v4780 = vsub.s32 %v4777, %v4779
        %v4781 = vrot.slane %v4630, %v4780
        %v4783 = vunpack.c.l.s4 1966171168
        %v4784 = vunpack.c.0.s8 %v4783
        %v4785 = vlaneseq
        %v4786 = vshrl.u32 %v4785, 7
        %v4787 = vsub.s32 %v4784, %v4786
        %v4788 = vrot.slane %v4774, %v4787
        %v4789 = vcombine.high %v4781, %v4781
        %v4791 = vunpack.c.l.s4 1966171168
        %v4792 = vunpack.c.0.s8 %v4791
        %v4793 = vlaneseq
        %v4794 = vshrl.u32 %v4793, 7
        %v4795 = vsub.s32 %v4792, %v4794
        %v4796 = vrot.slane %v4781, %v4795
        %v4798 = vunpack.c.l.s4 1966171168
        %v4799 = vunpack.c.0.s8 %v4798
        %v4800 = vlaneseq
        %v4801 = vshrl.u32 %v4800, 7
        %v4802 = vsub.s32 %v4799, %v4801
        %v4803 = vrot.slane %v4788, %v4802
        %v4805 = vunpack.c.l.s4 1966171168
        %v4806 = vunpack.c.0.s8 %v4805
        %v4807 = vlaneseq
        %v4808 = vshrl.u32 %v4807, 7
        %v4809 = vsub.s32 %v4806, %v4808
        %v4810 = vrot.slane %v4789, %v4809
        %v4811 = vcombine.high %v4796, %v4796
        %v4812 = vcombine.high %v4810, %v4810
        %v4813 = vcombine.high %v4678, %v4678
        %v4815 = vunpack.c.l.s4 1966171168
        %v4816 = vunpack.c.0.s8 %v4815
        %v4817 = vlaneseq
        %v4818 = vshrl.u32 %v4817, 7
        %v4819 = vsub.s32 %v4816, %v4818
        %v4820 = vrot.slane %v4678, %v4819
        %v4822 = vunpack.c.l.s4 1966171168
        %v4823 = vunpack.c.0.s8 %v4822
        %v4824 = vlaneseq
        %v4825 = vshrl.u32 %v4824, 7
        %v4826 = vsub.s32 %v4823, %v4825
        %v4827 = vrot.slane %v4813, %v4826
        %v4828 = vcombine.high %v4820, %v4820
        %v4830 = vunpack.c.l.s4 1966171168
        %v4831 = vunpack.c.0.s8 %v4830
        %v4832 = vlaneseq
        %v4833 = vshrl.u32 %v4832, 7
        %v4834 = vsub.s32 %v4831, %v4833
        %v4835 = vrot.slane %v4820, %v4834
        %v4837 = vunpack.c.l.s4 1966171168
        %v4838 = vunpack.c.0.s8 %v4837
        %v4839 = vlaneseq
        %v4840 = vshrl.u32 %v4839, 7
        %v4841 = vsub.s32 %v4838, %v4840
        %v4842 = vrot.slane %v4827, %v4841
        %v4844 = vunpack.c.l.s4 1966171168
        %v4845 = vunpack.c.0.s8 %v4844
        %v4846 = vlaneseq
        %v4847 = vshrl.u32 %v4846, 7
        %v4848 = vsub.s32 %v4845, %v4847
        %v4849 = vrot.slane %v4828, %v4848
        %v4850 = vcombine.high %v4835, %v4835
        %v4851 = vcombine.high %v4849, %v4849
        %v4852 = vcombine.high %v4726, %v4726
        %v4854 = vunpack.c.l.s4 1966171168
        %v4855 = vunpack.c.0.s8 %v4854
        %v4856 = vlaneseq
        %v4857 = vshrl.u32 %v4856, 7
        %v4858 = vsub.s32 %v4855, %v4857
        %v4859 = vrot.slane %v4726, %v4858
        %v4861 = vunpack.c.l.s4 1966171168
        %v4862 = vunpack.c.0.s8 %v4861
        %v4863 = vlaneseq
        %v4864 = vshrl.u32 %v4863, 7
        %v4865 = vsub.s32 %v4862, %v4864
        %v4866 = vrot.slane %v4852, %v4865
        %v4867 = vcombine.high %v4859, %v4859
        %v4869 = vunpack.c.l.s4 1966171168
        %v4870 = vunpack.c.0.s8 %v4869
        %v4871 = vlaneseq
        %v4872 = vshrl.u32 %v4871, 7
        %v4873 = vsub.s32 %v4870, %v4872
        %v4874 = vrot.slane %v4859, %v4873
        %v4876 = vunpack.c.l.s4 1966171168
        %v4877 = vunpack.c.0.s8 %v4876
        %v4878 = vlaneseq
        %v4879 = vshrl.u32 %v4878, 7
        %v4880 = vsub.s32 %v4877, %v4879
        %v4881 = vrot.slane %v4866, %v4880
        %v4883 = vunpack.c.l.s4 1966171168
        %v4884 = vunpack.c.0.s8 %v4883
        %v4885 = vlaneseq
        %v4886 = vshrl.u32 %v4885, 7
        %v4887 = vsub.s32 %v4884, %v4886
        %v4888 = vrot.slane %v4867, %v4887
        %v4889 = vcombine.high %v4874, %v4874
        %v4890 = vcombine.high %v4888, %v4888
        %v4891 = vcombine.low %v4757, %v4771
        %v4892 = vcombine.low %v4772, %v4773
        %v4893 = vcombine.low %v4764, %v4796
        %v4894 = vcombine.low %v4810, %v4811
        %v4896 = vunpack.c.l.s4 1966171168
        %v4897 = vunpack.c.0.s8 %v4896
        %v4898 = vlaneseq
        %v4899 = vshrl.u32 %v4898, 7
        %v4900 = vsub.s32 %v4897, %v4899
        %v4901 = vrot.slane %v4891, %v4900
        %v4903 = vunpack.c.l.s4 1966171168
        %v4904 = vunpack.c.0.s8 %v4903
        %v4905 = vlaneseq
        %v4906 = vshrl.u32 %v4905, 7
        %v4907 = vsub.s32 %v4904, %v4906
        %v4908 = vrot.slane %v4892, %v4907
        %v4910 = vunpack.c.l.s4 1966171168
        %v4911 = vunpack.c.0.s8 %v4910
        %v4912 = vlaneseq
        %v4913 = vshrl.u32 %v4912, 7
        %v4914 = vsub.s32 %v4911, %v4913
        %v4915 = vrot.slane %v4893, %v4914
        %v4917 = vunpack.c.l.s4 1966171168
        %v4918 = vunpack.c.0.s8 %v4917
        %v4919 = vlaneseq
        %v4920 = vshrl.u32 %v4919, 7
        %v4921 = vsub.s32 %v4918, %v4920
        %v4922 = vrot.slane %v4894, %v4921
        %v4923 = vcombine.low %v4901, %v4908
        %v4924 = vcombine.low %v4915, %v4922
        %v4926 = vunpack.c.l.s4 1966171168
        %v4927 = vunpack.c.0.s8 %v4926
        %v4928 = vlaneseq
        %v4929 = vshrl.u32 %v4928, 7
        %v4930 = vsub.s32 %v4927, %v4929
        %v4931 = vrot.slane %v4923, %v4930
        %v4933 = vunpack.c.l.s4 1966171168
        %v4934 = vunpack.c.0.s8 %v4933
        %v4935 = vlaneseq
        %v4936 = vshrl.u32 %v4935, 7
        %v4937 = vsub.s32 %v4934, %v4936
        %v4938 = vrot.slane %v4924, %v4937
        %v4939 = vcombine.low %v4931, %v4938
        %v4940 = vcombine.low %v4812, %v4803
        %v4941 = vcombine.low %v4835, %v4849
        %v4942 = vcombine.low %v4850, %v4851
        %v4943 = vcombine.low %v4842, %v4874
        %v4945 = vunpack.c.l.s4 1966171168
        %v4946 = vunpack.c.0.s8 %v4945
        %v4947 = vlaneseq
        %v4948 = vshrl.u32 %v4947, 7
        %v4949 = vsub.s32 %v4946, %v4948
        %v4950 = vrot.slane %v4940, %v4949
        %v4952 = vunpack.c.l.s4 1966171168
        %v4953 = vunpack.c.0.s8 %v4952
        %v4954 = vlaneseq
        %v4955 = vshrl.u32 %v4954, 7
        %v4956 = vsub.s32 %v4953, %v4955
        %v4957 = vrot.slane %v4941, %v4956
        %v4959 = vunpack.c.l.s4 1966171168
        %v4960 = vunpack.c.0.s8 %v4959
        %v4961 = vlaneseq
        %v4962 = vshrl.u32 %v4961, 7
        %v4963 = vsub.s32 %v4960, %v4962
        %v4964 = vrot.slane %v4942, %v4963
        %v4966 = vunpack.c.l.s4 1966171168
        %v4967 = vunpack.c.0.s8 %v4966
        %v4968 = vlaneseq
        %v4969 = vshrl.u32 %v4968, 7
        %v4970 = vsub.s32 %v4967, %v4969
        %v4971 = vrot.slane %v4943, %v4970
        %v4972 = vcombine.low %v4950, %v4957
        %v4973 = vcombine.low %v4964, %v4971
        %v4975 = vunpack.c.l.s4 1966171168
        %v4976 = vunpack.c.0.s8 %v4975
        %v4977 = vlaneseq
        %v4978 = vshrl.u32 %v4977, 7
        %v4979 = vsub.s32 %v4976, %v4978
        %v4980 = vrot.slane %v4972, %v4979
        %v4982 = vunpack.c.l.s4 1966171168
        %v4983 = vunpack.c.0.s8 %v4982
        %v4984 = vlaneseq
        %v4985 = vshrl.u32 %v4984, 7
        %v4986 = vsub.s32 %v4983, %v4985
        %v4987 = vrot.slane %v4973, %v4986
        %v4988 = vcombine.low %v4980, %v4987
        %v4989 = vcombine.low %v4888, %v4889
        %v4990 = vcombine.low %v4890, %v4881
        %v4992 = vunpack.c.l.s4 1966171168
        %v4993 = vunpack.c.0.s8 %v4992
        %v4994 = vlaneseq
        %v4995 = vshrl.u32 %v4994, 7
        %v4996 = vsub.s32 %v4993, %v4995
        %v4997 = vrot.slane %v4989, %v4996
        %v4999 = vunpack.c.l.s4 1966171168
        %v5000 = vunpack.c.0.s8 %v4999
        %v5001 = vlaneseq
        %v5002 = vshrl.u32 %v5001, 7
        %v5003 = vsub.s32 %v5000, %v5002
        %v5004 = vrot.slane %v4990, %v5003
        %v5005 = vcombine.low %v4997, %v5004
        %v5007 = vunpack.c.l.s4 1966171168
        %v5008 = vunpack.c.0.s8 %v5007
        %v5009 = vlaneseq
        %v5010 = vshrl.u32 %v5009, 7
        %v5011 = vsub.s32 %v5008, %v5010
        %v5012 = vrot.slane %v5005, %v5011
        %v5016 = vpack.c.bf16 %v4988, %v4939
        %v5017 = vpack.c.bf16 %v5012, %v5012
        %v5019 = vsel %vm2721, %v5016, 0
        %v5022 = vsel %vm2721, %v5017, 0
        %v5025 = vsel %vm3437, %v1493, 0
        %5027 = vmatprep.subr.bf16.mxu0 0
        %5028 = vmatpush1.bf16.msra.mxu0 0
        %5029 = vmatprep.subr.bf16.mxu0 0
        %5030 = vmatpush1.bf16.msra.mxu0 0
        %5031 = vmatprep.subr.bf16.mxu0 0
        %5032 = vmatpush1.bf16.msra.mxu0 0
        %5033 = vmatprep.subr.bf16.mxu0 0
        %5034 = vmatpush1.bf16.msra.mxu0 0
        %5035 = vmatprep.subr.bf16.mxu0 0
        %5036 = vmatpush1.bf16.msra.mxu0 0
        %5037 = vmatprep.subr.bf16.mxu0 0
        %5038 = vmatpush1.bf16.msra.mxu0 0
        %5039 = vmatprep.subr.bf16.mxu0 0
        %5040 = vmatpush1.bf16.msra.mxu0 0
        %5041 = vmatprep.subr.bf16.mxu0 0
        %5042 = vmatpush1.bf16.msra.mxu0 %v5025
        %5043 = vmatprep.subr.bf16.mxu0 0
        %5044 = vmatpush2.bf16.msra.mxu0 0
        %5045 = vmatprep.subr.bf16.mxu0 0
        %5046 = vmatpush2.bf16.msra.mxu0 0
        %5047 = vmatprep.subr.bf16.mxu0 0
        %5048 = vmatpush2.bf16.msra.mxu0 0
        %5049 = vmatprep.subr.bf16.mxu0 0
        %5050 = vmatpush2.bf16.msra.mxu0 0
        %5051 = vmatprep.subr.bf16.mxu0 0
        %5052 = vmatpush2.bf16.msra.mxu0 0
        %5053 = vmatprep.subr.bf16.mxu0 0
        %5054 = vmatpush2.bf16.msra.mxu0 0
        %5055 = vmatprep.subr.bf16.mxu0 0
        %5056 = vmatpush2.bf16.msra.mxu0 0
        %5057 = vmatprep.subr.bf16.mxu0 0
        %5058 = vmatpush2.bf16.msra.mxu0 0
        %5059 = vmatprep.mubr.bf16.mxu0 0
        %5060 = vmatmul.mubr.bf16.gmra.mxu0 %v5019
        %v5061 = vpop.f32.mrf.mxu0
        %v5062 = vadd.f32 0.0, %v5061
        %v5063 = vpop.f32.mrf.mxu0
        %v5064 = vpop.f32.mrf.mxu0
        %v5065 = vadd.f32 0.0, %v5064
        %v5066 = vpop.f32.mrf.mxu0
        %5067 = vmatprep.mubr.bf16.mxu0 0
        %5068 = vmatmul.mubr.bf16.gmra.mxu0 %v5022
        %v5069 = vpop.f32.mrf.mxu0
        %v5070 = vadd.f32 0.0, %v5069
        %v5071 = vpop.f32.mrf.mxu0
        %v5072 = vpop.f32.mrf.mxu0
        %v5073 = vpop.f32.mrf.mxu0
        %5074 = vdwg.mxu0
        %v5075 = vadd.f32 %v4288, %v5062
        %v5076 = vadd.f32 %v4289, %v5065
        %v5077 = vadd.f32 %v4290, %v5070
        %5078 = vrot.lane.b32.xlu0 %v2139, 104
        %v5079 = vpop.permute.xlu0 %5078
        %5080 = vrot.lane.b32.xlu0 %v2428, 104
        %v5081 = vpop.permute.xlu0 %5080
        %v5083 = vsel %vm2721, %v5079, 0
        %v5086 = vsel %vm2721, %v5081, 0
        %5088 = vmatprep.subr.bf16.mxu0 0
        %5089 = vmatpush1.bf16.xpose.msra.mxu0 0
        %5090 = vmatprep.subr.bf16.mxu0 0
        %5091 = vmatpush1.bf16.xpose.msra.mxu0 0
        %5092 = vmatprep.subr.bf16.mxu0 0
        %5093 = vmatpush1.bf16.xpose.msra.mxu0 0
        %5094 = vmatprep.subr.bf16.mxu0 0
        %5095 = vmatpush1.bf16.xpose.msra.mxu0 0
        %5096 = vmatprep.subr.bf16.mxu0 0
        %5097 = vmatpush1.bf16.xpose.msra.mxu0 0
        %5098 = vmatprep.subr.bf16.mxu0 0
        %5099 = vmatpush1.bf16.xpose.msra.mxu0 0
        %5100 = vmatprep.subr.bf16.mxu0 0
        %5101 = vmatpush1.bf16.xpose.msra.mxu0 0
        %5102 = vmatprep.subr.bf16.mxu0 0
        %5103 = vmatpush1.bf16.xpose.msra.mxu0 %v5086
        %5104 = vmatprep.subr.bf16.mxu0 0
        %5105 = vmatpush2.bf16.xpose.msra.mxu0 0
        %5106 = vmatprep.subr.bf16.mxu0 0
        %5107 = vmatpush2.bf16.xpose.msra.mxu0 0
        %5108 = vmatprep.subr.bf16.mxu0 0
        %5109 = vmatpush2.bf16.xpose.msra.mxu0 0
        %5110 = vmatprep.subr.bf16.mxu0 0
        %5111 = vmatpush2.bf16.xpose.msra.mxu0 0
        %5112 = vmatprep.subr.bf16.mxu0 0
        %5113 = vmatpush2.bf16.xpose.msra.mxu0 0
        %5114 = vmatprep.subr.bf16.mxu0 0
        %5115 = vmatpush2.bf16.xpose.msra.mxu0 0
        %5116 = vmatprep.subr.bf16.mxu0 0
        %5117 = vmatpush2.bf16.xpose.msra.mxu0 0
        %5118 = vmatprep.subr.bf16.mxu0 0
        %5119 = vmatpush2.bf16.xpose.msra.mxu0 0
        %5120 = vmatprep.mubr.bf16.mxu0 0
        %5121 = vmatmul.mubr.bf16.gmra.mxu0 %v5083
        %v5122 = vpop.f32.mrf.mxu0
        %v5123 = vadd.f32 0.0, %v5122
        %v5124 = vpop.f32.mrf.mxu0
        %v5125 = vpop.f32.mrf.mxu0
        %v5126 = vpop.f32.mrf.mxu0
        %5127 = vdwg.mxu0
        %5128 = vrot.lane.b32.xlu0 %v2140, 104
        %v5129 = vpop.permute.xlu0 %5128
        %5130 = vrot.lane.b32.xlu0 %v2429, 104
        %v5131 = vpop.permute.xlu0 %5130
        %v5133 = vsel %vm2721, %v5129, 0
        %v5136 = vsel %vm2721, %v5131, 0
        %5138 = vmatprep.subr.bf16.mxu0 0
        %5139 = vmatpush1.bf16.xpose.msra.mxu0 0
        %5140 = vmatprep.subr.bf16.mxu0 0
        %5141 = vmatpush1.bf16.xpose.msra.mxu0 0
        %5142 = vmatprep.subr.bf16.mxu0 0
        %5143 = vmatpush1.bf16.xpose.msra.mxu0 0
        %5144 = vmatprep.subr.bf16.mxu0 0
        %5145 = vmatpush1.bf16.xpose.msra.mxu0 0
        %5146 = vmatprep.subr.bf16.mxu0 0
        %5147 = vmatpush1.bf16.xpose.msra.mxu0 0
        %5148 = vmatprep.subr.bf16.mxu0 0
        %5149 = vmatpush1.bf16.xpose.msra.mxu0 0
        %5150 = vmatprep.subr.bf16.mxu0 0
        %5151 = vmatpush1.bf16.xpose.msra.mxu0 0
        %5152 = vmatprep.subr.bf16.mxu0 0
        %5153 = vmatpush1.bf16.xpose.msra.mxu0 %v5136
        %5154 = vmatprep.subr.bf16.mxu0 0
        %5155 = vmatpush2.bf16.xpose.msra.mxu0 0
        %5156 = vmatprep.subr.bf16.mxu0 0
        %5157 = vmatpush2.bf16.xpose.msra.mxu0 0
        %5158 = vmatprep.subr.bf16.mxu0 0
        %5159 = vmatpush2.bf16.xpose.msra.mxu0 0
        %5160 = vmatprep.subr.bf16.mxu0 0
        %5161 = vmatpush2.bf16.xpose.msra.mxu0 0
        %5162 = vmatprep.subr.bf16.mxu0 0
        %5163 = vmatpush2.bf16.xpose.msra.mxu0 0
        %5164 = vmatprep.subr.bf16.mxu0 0
        %5165 = vmatpush2.bf16.xpose.msra.mxu0 0
        %5166 = vmatprep.subr.bf16.mxu0 0
        %5167 = vmatpush2.bf16.xpose.msra.mxu0 0
        %5168 = vmatprep.subr.bf16.mxu0 0
        %5169 = vmatpush2.bf16.xpose.msra.mxu0 0
        %5170 = vmatprep.mubr.bf16.mxu0 0
        %5171 = vmatmul.mubr.bf16.gmra.mxu0 %v5133
        %v5172 = vpop.f32.mrf.mxu0
        %v5173 = vadd.f32 0.0, %v5172
        %v5174 = vpop.f32.mrf.mxu0
        %v5175 = vpop.f32.mrf.mxu0
        %v5176 = vpop.f32.mrf.mxu0
        %5177 = vdwg.mxu0
        %5178 = vrot.lane.b32.xlu0 %v2141, 104
        %v5179 = vpop.permute.xlu0 %5178
        %5180 = vrot.lane.b32.xlu0 %v2430, 104
        %v5181 = vpop.permute.xlu0 %5180
        %v5183 = vsel %vm2721, %v5179, 0
        %v5186 = vsel %vm2721, %v5181, 0
        %5188 = vmatprep.subr.bf16.mxu0 0
        %5189 = vmatpush1.bf16.xpose.msra.mxu0 0
        %5190 = vmatprep.subr.bf16.mxu0 0
        %5191 = vmatpush1.bf16.xpose.msra.mxu0 0
        %5192 = vmatprep.subr.bf16.mxu0 0
        %5193 = vmatpush1.bf16.xpose.msra.mxu0 0
        %5194 = vmatprep.subr.bf16.mxu0 0
        %5195 = vmatpush1.bf16.xpose.msra.mxu0 0
        %5196 = vmatprep.subr.bf16.mxu0 0
        %5197 = vmatpush1.bf16.xpose.msra.mxu0 0
        %5198 = vmatprep.subr.bf16.mxu0 0
        %5199 = vmatpush1.bf16.xpose.msra.mxu0 0
        %5200 = vmatprep.subr.bf16.mxu0 0
        %5201 = vmatpush1.bf16.xpose.msra.mxu0 0
        %5202 = vmatprep.subr.bf16.mxu0 0
        %5203 = vmatpush1.bf16.xpose.msra.mxu0 %v5186
        %5204 = vmatprep.subr.bf16.mxu0 0
        %5205 = vmatpush2.bf16.xpose.msra.mxu0 0
        %5206 = vmatprep.subr.bf16.mxu0 0
        %5207 = vmatpush2.bf16.xpose.msra.mxu0 0
        %5208 = vmatprep.subr.bf16.mxu0 0
        %5209 = vmatpush2.bf16.xpose.msra.mxu0 0
        %5210 = vmatprep.subr.bf16.mxu0 0
        %5211 = vmatpush2.bf16.xpose.msra.mxu0 0
        %5212 = vmatprep.subr.bf16.mxu0 0
        %5213 = vmatpush2.bf16.xpose.msra.mxu0 0
        %5214 = vmatprep.subr.bf16.mxu0 0
        %5215 = vmatpush2.bf16.xpose.msra.mxu0 0
        %5216 = vmatprep.subr.bf16.mxu0 0
        %5217 = vmatpush2.bf16.xpose.msra.mxu0 0
        %5218 = vmatprep.subr.bf16.mxu0 0
        %5219 = vmatpush2.bf16.xpose.msra.mxu0 0
        %5220 = vmatprep.mubr.bf16.mxu0 0
        %5221 = vmatmul.mubr.bf16.gmra.mxu0 %v5183
        %v5222 = vpop.f32.mrf.mxu0
        %v5223 = vadd.f32 0.0, %v5222
        %v5224 = vpop.f32.mrf.mxu0
        %v5225 = vpop.f32.mrf.mxu0
        %v5226 = vpop.f32.mrf.mxu0
        %5227 = vdwg.mxu0
        %5228 = vrot.lane.b32.xlu0 %v2142, 104
        %v5229 = vpop.permute.xlu0 %5228
        %5230 = vrot.lane.b32.xlu0 %v2431, 104
        %v5231 = vpop.permute.xlu0 %5230
        %v5233 = vsel %vm2721, %v5229, 0
        %v5236 = vsel %vm2721, %v5231, 0
        %5238 = vmatprep.subr.bf16.mxu0 0
        %5239 = vmatpush1.bf16.xpose.msra.mxu0 0
        %5240 = vmatprep.subr.bf16.mxu0 0
        %5241 = vmatpush1.bf16.xpose.msra.mxu0 0
        %5242 = vmatprep.subr.bf16.mxu0 0
        %5243 = vmatpush1.bf16.xpose.msra.mxu0 0
        %5244 = vmatprep.subr.bf16.mxu0 0
        %5245 = vmatpush1.bf16.xpose.msra.mxu0 0
        %5246 = vmatprep.subr.bf16.mxu0 0
        %5247 = vmatpush1.bf16.xpose.msra.mxu0 0
        %5248 = vmatprep.subr.bf16.mxu0 0
        %5249 = vmatpush1.bf16.xpose.msra.mxu0 0
        %5250 = vmatprep.subr.bf16.mxu0 0
        %5251 = vmatpush1.bf16.xpose.msra.mxu0 0
        %5252 = vmatprep.subr.bf16.mxu0 0
        %5253 = vmatpush1.bf16.xpose.msra.mxu0 %v5236
        %5254 = vmatprep.subr.bf16.mxu0 0
        %5255 = vmatpush2.bf16.xpose.msra.mxu0 0
        %5256 = vmatprep.subr.bf16.mxu0 0
        %5257 = vmatpush2.bf16.xpose.msra.mxu0 0
        %5258 = vmatprep.subr.bf16.mxu0 0
        %5259 = vmatpush2.bf16.xpose.msra.mxu0 0
        %5260 = vmatprep.subr.bf16.mxu0 0
        %5261 = vmatpush2.bf16.xpose.msra.mxu0 0
        %5262 = vmatprep.subr.bf16.mxu0 0
        %5263 = vmatpush2.bf16.xpose.msra.mxu0 0
        %5264 = vmatprep.subr.bf16.mxu0 0
        %5265 = vmatpush2.bf16.xpose.msra.mxu0 0
        %5266 = vmatprep.subr.bf16.mxu0 0
        %5267 = vmatpush2.bf16.xpose.msra.mxu0 0
        %5268 = vmatprep.subr.bf16.mxu0 0
        %5269 = vmatpush2.bf16.xpose.msra.mxu0 0
        %5270 = vmatprep.mubr.bf16.mxu0 0
        %5271 = vmatmul.mubr.bf16.gmra.mxu0 %v5233
        %v5272 = vpop.f32.mrf.mxu0
        %v5273 = vadd.f32 0.0, %v5272
        %v5274 = vpop.f32.mrf.mxu0
        %v5275 = vpop.f32.mrf.mxu0
        %v5276 = vpop.f32.mrf.mxu0
        %5277 = vdwg.mxu0
        %v5278 = vsel %vm2906, %v5123, -inf
        %5279 = vmax.xlane.f32.xlu0 %v5278
        %v5280 = vpop.xlane.xlu0 %5279
        %v5281 = vsel %vm2906, %v5173, -inf
        %5282 = vmax.xlane.f32.xlu0 %v5281
        %v5283 = vpop.xlane.xlu0 %5282
        %v5284 = vsel %vm2906, %v5223, -inf
        %5285 = vmax.xlane.f32.xlu0 %v5284
        %v5286 = vpop.xlane.xlu0 %5285
        %v5287 = vsel %vm2906, %v5273, -inf
        %5288 = vmax.xlane.f32.xlu0 %v5287
        %v5289 = vpop.xlane.xlu0 %5288
        %v5290 = vsub.f32 %v5123, %v5280
        %v5291 = vsub.f32 %v5173, %v5283
        %v5292 = vsub.f32 %v5223, %v5286
        %v5293 = vsub.f32 %v5273, %v5289
        %v5294 = vmul.f32 %v5290, 1.442695
        %v5295 = vpow.pop %v5294
        %v5296 = vmul.f32 %v5291, 1.442695
        %v5297 = vpow.pop %v5296
        %v5298 = vmul.f32 %v5292, 1.442695
        %v5299 = vpow.pop %v5298
        %v5300 = vmul.f32 %v5293, 1.442695
        %v5301 = vpow.pop %v5300
        %v5302 = vsel %vm2906, %v5295, 0.0
        %5303 = vadd.xlane.f32.xlu0 %v5302
        %v5304 = vpop.xlane.xlu0 %5303
        %v5305 = vsel %vm2906, %v5297, 0.0
        %5306 = vadd.xlane.f32.xlu0 %v5305
        %v5307 = vpop.xlane.xlu0 %5306
        %v5308 = vsel %vm2906, %v5299, 0.0
        %5309 = vadd.xlane.f32.xlu0 %v5308
        %v5310 = vpop.xlane.xlu0 %5309
        %v5311 = vsel %vm2906, %v5301, 0.0
        %5312 = vadd.xlane.f32.xlu0 %v5311
        %v5313 = vpop.xlane.xlu0 %5312
        %v5314 = vrcp.pop %v5304
        %v5315 = vrcp.pop %v5307
        %v5316 = vrcp.pop %v5310
        %v5317 = vrcp.pop %v5313
        %v5318 = vmul.f32 %v5295, %v5314
        %v5319 = vmul.f32 %v5297, %v5315
        %v5320 = vmul.f32 %v5299, %v5316
        %v5321 = vmul.f32 %v5301, %v5317
        %v5322 = vpack.c.bf16 %v5318, %v5318
        %v5323 = vpack.c.bf16 %v5319, %v5319
        %v5324 = vpack.c.bf16 %v5320, %v5320
        %v5325 = vpack.c.bf16 %v5321, %v5321
        %5326 = vrot.lane.b32.xlu0 %v2717, 104
        %v5327 = vpop.permute.xlu0 %5326
        %v5329 = vsel %vm2955, %v5322, 0
        %v5332 = vand.u32 %v5327, %v2962
        %5334 = vmatprep.subr.bf16.mxu0 0
        %5335 = vmatpush1.bf16.msra.mxu0 0
        %5336 = vmatprep.subr.bf16.mxu0 0
        %5337 = vmatpush1.bf16.msra.mxu0 0
        %5338 = vmatprep.subr.bf16.mxu0 0
        %5339 = vmatpush1.bf16.msra.mxu0 0
        %5340 = vmatprep.subr.bf16.mxu0 0
        %5341 = vmatpush1.bf16.msra.mxu0 0
        %5342 = vmatprep.subr.bf16.mxu0 0
        %5343 = vmatpush1.bf16.msra.mxu0 0
        %5344 = vmatprep.subr.bf16.mxu0 0
        %5345 = vmatpush1.bf16.msra.mxu0 0
        %5346 = vmatprep.subr.bf16.mxu0 0
        %5347 = vmatpush1.bf16.msra.mxu0 0
        %5348 = vmatprep.subr.bf16.mxu0 0
        %5349 = vmatpush1.bf16.msra.mxu0 %v5332
        %5350 = vmatprep.subr.bf16.mxu0 0
        %5351 = vmatpush2.bf16.msra.mxu0 0
        %5352 = vmatprep.subr.bf16.mxu0 0
        %5353 = vmatpush2.bf16.msra.mxu0 0
        %5354 = vmatprep.subr.bf16.mxu0 0
        %5355 = vmatpush2.bf16.msra.mxu0 0
        %5356 = vmatprep.subr.bf16.mxu0 0
        %5357 = vmatpush2.bf16.msra.mxu0 0
        %5358 = vmatprep.subr.bf16.mxu0 0
        %5359 = vmatpush2.bf16.msra.mxu0 0
        %5360 = vmatprep.subr.bf16.mxu0 0
        %5361 = vmatpush2.bf16.msra.mxu0 0
        %5362 = vmatprep.subr.bf16.mxu0 0
        %5363 = vmatpush2.bf16.msra.mxu0 0
        %5364 = vmatprep.subr.bf16.mxu0 0
        %5365 = vmatpush2.bf16.msra.mxu0 0
        %5366 = vmatprep.mubr.bf16.mxu0 0
        %5367 = vmatmul.mubr.bf16.gmra.mxu0 %v5329
        %v5368 = vpop.f32.mrf.mxu0
        %v5369 = vadd.f32 0.0, %v5368
        %v5370 = vpop.f32.mrf.mxu0
        %v5371 = vpop.f32.mrf.mxu0
        %v5372 = vpop.f32.mrf.mxu0
        %5373 = vdwg.mxu0
        %5374 = vrot.lane.b32.xlu0 %v2718, 104
        %v5375 = vpop.permute.xlu0 %5374
        %v5377 = vsel %vm2955, %v5323, 0
        %v5380 = vand.u32 %v5375, %v2962
        %5382 = vmatprep.subr.bf16.mxu0 0
        %5383 = vmatpush1.bf16.msra.mxu0 0
        %5384 = vmatprep.subr.bf16.mxu0 0
        %5385 = vmatpush1.bf16.msra.mxu0 0
        %5386 = vmatprep.subr.bf16.mxu0 0
        %5387 = vmatpush1.bf16.msra.mxu0 0
        %5388 = vmatprep.subr.bf16.mxu0 0
        %5389 = vmatpush1.bf16.msra.mxu0 0
        %5390 = vmatprep.subr.bf16.mxu0 0
        %5391 = vmatpush1.bf16.msra.mxu0 0
        %5392 = vmatprep.subr.bf16.mxu0 0
        %5393 = vmatpush1.bf16.msra.mxu0 0
        %5394 = vmatprep.subr.bf16.mxu0 0
        %5395 = vmatpush1.bf16.msra.mxu0 0
        %5396 = vmatprep.subr.bf16.mxu0 0
        %5397 = vmatpush1.bf16.msra.mxu0 %v5380
        %5398 = vmatprep.subr.bf16.mxu0 0
        %5399 = vmatpush2.bf16.msra.mxu0 0
        %5400 = vmatprep.subr.bf16.mxu0 0
        %5401 = vmatpush2.bf16.msra.mxu0 0
        %5402 = vmatprep.subr.bf16.mxu0 0
        %5403 = vmatpush2.bf16.msra.mxu0 0
        %5404 = vmatprep.subr.bf16.mxu0 0
        %5405 = vmatpush2.bf16.msra.mxu0 0
        %5406 = vmatprep.subr.bf16.mxu0 0
        %5407 = vmatpush2.bf16.msra.mxu0 0
        %5408 = vmatprep.subr.bf16.mxu0 0
        %5409 = vmatpush2.bf16.msra.mxu0 0
        %5410 = vmatprep.subr.bf16.mxu0 0
        %5411 = vmatpush2.bf16.msra.mxu0 0
        %5412 = vmatprep.subr.bf16.mxu0 0
        %5413 = vmatpush2.bf16.msra.mxu0 0
        %5414 = vmatprep.mubr.bf16.mxu0 0
        %5415 = vmatmul.mubr.bf16.gmra.mxu0 %v5377
        %v5416 = vpop.f32.mrf.mxu0
        %v5417 = vadd.f32 0.0, %v5416
        %v5418 = vpop.f32.mrf.mxu0
        %v5419 = vpop.f32.mrf.mxu0
        %v5420 = vpop.f32.mrf.mxu0
        %5421 = vdwg.mxu0
        %5422 = vrot.lane.b32.xlu0 %v2719, 104
        %v5423 = vpop.permute.xlu0 %5422
        %v5425 = vsel %vm2955, %v5324, 0
        %v5428 = vand.u32 %v5423, %v2962
        %5430 = vmatprep.subr.bf16.mxu0 0
        %5431 = vmatpush1.bf16.msra.mxu0 0
        %5432 = vmatprep.subr.bf16.mxu0 0
        %5433 = vmatpush1.bf16.msra.mxu0 0
        %5434 = vmatprep.subr.bf16.mxu0 0
        %5435 = vmatpush1.bf16.msra.mxu0 0
        %5436 = vmatprep.subr.bf16.mxu0 0
        %5437 = vmatpush1.bf16.msra.mxu0 0
        %5438 = vmatprep.subr.bf16.mxu0 0
        %5439 = vmatpush1.bf16.msra.mxu0 0
        %5440 = vmatprep.subr.bf16.mxu0 0
        %5441 = vmatpush1.bf16.msra.mxu0 0
        %5442 = vmatprep.subr.bf16.mxu0 0
        %5443 = vmatpush1.bf16.msra.mxu0 0
        %5444 = vmatprep.subr.bf16.mxu0 0
        %5445 = vmatpush1.bf16.msra.mxu0 %v5428
        %5446 = vmatprep.subr.bf16.mxu0 0
        %5447 = vmatpush2.bf16.msra.mxu0 0
        %5448 = vmatprep.subr.bf16.mxu0 0
        %5449 = vmatpush2.bf16.msra.mxu0 0
        %5450 = vmatprep.subr.bf16.mxu0 0
        %5451 = vmatpush2.bf16.msra.mxu0 0
        %5452 = vmatprep.subr.bf16.mxu0 0
        %5453 = vmatpush2.bf16.msra.mxu0 0
        %5454 = vmatprep.subr.bf16.mxu0 0
        %5455 = vmatpush2.bf16.msra.mxu0 0
        %5456 = vmatprep.subr.bf16.mxu0 0
        %5457 = vmatpush2.bf16.msra.mxu0 0
        %5458 = vmatprep.subr.bf16.mxu0 0
        %5459 = vmatpush2.bf16.msra.mxu0 0
        %5460 = vmatprep.subr.bf16.mxu0 0
        %5461 = vmatpush2.bf16.msra.mxu0 0
        %5462 = vmatprep.mubr.bf16.mxu0 0
        %5463 = vmatmul.mubr.bf16.gmra.mxu0 %v5425
        %v5464 = vpop.f32.mrf.mxu0
        %v5465 = vadd.f32 0.0, %v5464
        %v5466 = vpop.f32.mrf.mxu0
        %v5467 = vpop.f32.mrf.mxu0
        %v5468 = vpop.f32.mrf.mxu0
        %5469 = vdwg.mxu0
        %5470 = vrot.lane.b32.xlu0 %v2720, 104
        %v5471 = vpop.permute.xlu0 %5470
        %v5473 = vsel %vm2955, %v5325, 0
        %v5476 = vand.u32 %v5471, %v2962
        %5478 = vmatprep.subr.bf16.mxu0 0
        %5479 = vmatpush1.bf16.msra.mxu0 0
        %5480 = vmatprep.subr.bf16.mxu0 0
        %5481 = vmatpush1.bf16.msra.mxu0 0
        %5482 = vmatprep.subr.bf16.mxu0 0
        %5483 = vmatpush1.bf16.msra.mxu0 0
        %5484 = vmatprep.subr.bf16.mxu0 0
        %5485 = vmatpush1.bf16.msra.mxu0 0
        %5486 = vmatprep.subr.bf16.mxu0 0
        %5487 = vmatpush1.bf16.msra.mxu0 0
        %5488 = vmatprep.subr.bf16.mxu0 0
        %5489 = vmatpush1.bf16.msra.mxu0 0
        %5490 = vmatprep.subr.bf16.mxu0 0
        %5491 = vmatpush1.bf16.msra.mxu0 0
        %5492 = vmatprep.subr.bf16.mxu0 0
        %5493 = vmatpush1.bf16.msra.mxu0 %v5476
        %5494 = vmatprep.subr.bf16.mxu0 0
        %5495 = vmatpush2.bf16.msra.mxu0 0
        %5496 = vmatprep.subr.bf16.mxu0 0
        %5497 = vmatpush2.bf16.msra.mxu0 0
        %5498 = vmatprep.subr.bf16.mxu0 0
        %5499 = vmatpush2.bf16.msra.mxu0 0
        %5500 = vmatprep.subr.bf16.mxu0 0
        %5501 = vmatpush2.bf16.msra.mxu0 0
        %5502 = vmatprep.subr.bf16.mxu0 0
        %5503 = vmatpush2.bf16.msra.mxu0 0
        %5504 = vmatprep.subr.bf16.mxu0 0
        %5505 = vmatpush2.bf16.msra.mxu0 0
        %5506 = vmatprep.subr.bf16.mxu0 0
        %5507 = vmatpush2.bf16.msra.mxu0 0
        %5508 = vmatprep.subr.bf16.mxu0 0
        %5509 = vmatpush2.bf16.msra.mxu0 0
        %5510 = vmatprep.mubr.bf16.mxu0 0
        %5511 = vmatmul.mubr.bf16.gmra.mxu0 %v5473
        %v5512 = vpop.f32.mrf.mxu0
        %v5513 = vadd.f32 0.0, %v5512
        %v5514 = vpop.f32.mrf.mxu0
        %v5515 = vpop.f32.mrf.mxu0
        %v5516 = vpop.f32.mrf.mxu0
        %5517 = vdwg.mxu0
        %v5522 = vcombine.high %v5369, %v5369
        %v5524 = vunpack.c.l.s4 1966171168
        %v5525 = vunpack.c.0.s8 %v5524
        %v5526 = vlaneseq
        %v5527 = vshrl.u32 %v5526, 7
        %v5528 = vsub.s32 %v5525, %v5527
        %v5529 = vrot.slane %v5369, %v5528
        %v5531 = vunpack.c.l.s4 1966171168
        %v5532 = vunpack.c.0.s8 %v5531
        %v5533 = vlaneseq
        %v5534 = vshrl.u32 %v5533, 7
        %v5535 = vsub.s32 %v5532, %v5534
        %v5536 = vrot.slane %v5522, %v5535
        %v5537 = vcombine.high %v5529, %v5529
        %v5539 = vunpack.c.l.s4 1966171168
        %v5540 = vunpack.c.0.s8 %v5539
        %v5541 = vlaneseq
        %v5542 = vshrl.u32 %v5541, 7
        %v5543 = vsub.s32 %v5540, %v5542
        %v5544 = vrot.slane %v5529, %v5543
        %v5546 = vunpack.c.l.s4 1966171168
        %v5547 = vunpack.c.0.s8 %v5546
        %v5548 = vlaneseq
        %v5549 = vshrl.u32 %v5548, 7
        %v5550 = vsub.s32 %v5547, %v5549
        %v5551 = vrot.slane %v5536, %v5550
        %v5553 = vunpack.c.l.s4 1966171168
        %v5554 = vunpack.c.0.s8 %v5553
        %v5555 = vlaneseq
        %v5556 = vshrl.u32 %v5555, 7
        %v5557 = vsub.s32 %v5554, %v5556
        %v5558 = vrot.slane %v5537, %v5557
        %v5559 = vcombine.high %v5544, %v5544
        %v5560 = vcombine.high %v5558, %v5558
        %v5561 = vcombine.high %v5417, %v5417
        %v5563 = vunpack.c.l.s4 1966171168
        %v5564 = vunpack.c.0.s8 %v5563
        %v5565 = vlaneseq
        %v5566 = vshrl.u32 %v5565, 7
        %v5567 = vsub.s32 %v5564, %v5566
        %v5568 = vrot.slane %v5417, %v5567
        %v5570 = vunpack.c.l.s4 1966171168
        %v5571 = vunpack.c.0.s8 %v5570
        %v5572 = vlaneseq
        %v5573 = vshrl.u32 %v5572, 7
        %v5574 = vsub.s32 %v5571, %v5573
        %v5575 = vrot.slane %v5561, %v5574
        %v5576 = vcombine.high %v5568, %v5568
        %v5578 = vunpack.c.l.s4 1966171168
        %v5579 = vunpack.c.0.s8 %v5578
        %v5580 = vlaneseq
        %v5581 = vshrl.u32 %v5580, 7
        %v5582 = vsub.s32 %v5579, %v5581
        %v5583 = vrot.slane %v5568, %v5582
        %v5585 = vunpack.c.l.s4 1966171168
        %v5586 = vunpack.c.0.s8 %v5585
        %v5587 = vlaneseq
        %v5588 = vshrl.u32 %v5587, 7
        %v5589 = vsub.s32 %v5586, %v5588
        %v5590 = vrot.slane %v5575, %v5589
        %v5592 = vunpack.c.l.s4 1966171168
        %v5593 = vunpack.c.0.s8 %v5592
        %v5594 = vlaneseq
        %v5595 = vshrl.u32 %v5594, 7
        %v5596 = vsub.s32 %v5593, %v5595
        %v5597 = vrot.slane %v5576, %v5596
        %v5598 = vcombine.high %v5583, %v5583
        %v5599 = vcombine.high %v5597, %v5597
        %v5600 = vcombine.high %v5465, %v5465
        %v5602 = vunpack.c.l.s4 1966171168
        %v5603 = vunpack.c.0.s8 %v5602
        %v5604 = vlaneseq
        %v5605 = vshrl.u32 %v5604, 7
        %v5606 = vsub.s32 %v5603, %v5605
        %v5607 = vrot.slane %v5465, %v5606
        %v5609 = vunpack.c.l.s4 1966171168
        %v5610 = vunpack.c.0.s8 %v5609
        %v5611 = vlaneseq
        %v5612 = vshrl.u32 %v5611, 7
        %v5613 = vsub.s32 %v5610, %v5612
        %v5614 = vrot.slane %v5600, %v5613
        %v5615 = vcombine.high %v5607, %v5607
        %v5617 = vunpack.c.l.s4 1966171168
        %v5618 = vunpack.c.0.s8 %v5617
        %v5619 = vlaneseq
        %v5620 = vshrl.u32 %v5619, 7
        %v5621 = vsub.s32 %v5618, %v5620
        %v5622 = vrot.slane %v5607, %v5621
        %v5624 = vunpack.c.l.s4 1966171168
        %v5625 = vunpack.c.0.s8 %v5624
        %v5626 = vlaneseq
        %v5627 = vshrl.u32 %v5626, 7
        %v5628 = vsub.s32 %v5625, %v5627
        %v5629 = vrot.slane %v5614, %v5628
        %v5631 = vunpack.c.l.s4 1966171168
        %v5632 = vunpack.c.0.s8 %v5631
        %v5633 = vlaneseq
        %v5634 = vshrl.u32 %v5633, 7
        %v5635 = vsub.s32 %v5632, %v5634
        %v5636 = vrot.slane %v5615, %v5635
        %v5637 = vcombine.high %v5622, %v5622
        %v5638 = vcombine.high %v5636, %v5636
        %v5639 = vcombine.high %v5513, %v5513
        %v5641 = vunpack.c.l.s4 1966171168
        %v5642 = vunpack.c.0.s8 %v5641
        %v5643 = vlaneseq
        %v5644 = vshrl.u32 %v5643, 7
        %v5645 = vsub.s32 %v5642, %v5644
        %v5646 = vrot.slane %v5513, %v5645
        %v5648 = vunpack.c.l.s4 1966171168
        %v5649 = vunpack.c.0.s8 %v5648
        %v5650 = vlaneseq
        %v5651 = vshrl.u32 %v5650, 7
        %v5652 = vsub.s32 %v5649, %v5651
        %v5653 = vrot.slane %v5639, %v5652
        %v5654 = vcombine.high %v5646, %v5646
        %v5656 = vunpack.c.l.s4 1966171168
        %v5657 = vunpack.c.0.s8 %v5656
        %v5658 = vlaneseq
        %v5659 = vshrl.u32 %v5658, 7
        %v5660 = vsub.s32 %v5657, %v5659
        %v5661 = vrot.slane %v5646, %v5660
        %v5663 = vunpack.c.l.s4 1966171168
        %v5664 = vunpack.c.0.s8 %v5663
        %v5665 = vlaneseq
        %v5666 = vshrl.u32 %v5665, 7
        %v5667 = vsub.s32 %v5664, %v5666
        %v5668 = vrot.slane %v5653, %v5667
        %v5670 = vunpack.c.l.s4 1966171168
        %v5671 = vunpack.c.0.s8 %v5670
        %v5672 = vlaneseq
        %v5673 = vshrl.u32 %v5672, 7
        %v5674 = vsub.s32 %v5671, %v5673
        %v5675 = vrot.slane %v5654, %v5674
        %v5676 = vcombine.high %v5661, %v5661
        %v5677 = vcombine.high %v5675, %v5675
        %v5678 = vcombine.low %v5544, %v5558
        %v5679 = vcombine.low %v5559, %v5560
        %v5680 = vcombine.low %v5551, %v5583
        %v5681 = vcombine.low %v5597, %v5598
        %v5683 = vunpack.c.l.s4 1966171168
        %v5684 = vunpack.c.0.s8 %v5683
        %v5685 = vlaneseq
        %v5686 = vshrl.u32 %v5685, 7
        %v5687 = vsub.s32 %v5684, %v5686
        %v5688 = vrot.slane %v5678, %v5687
        %v5690 = vunpack.c.l.s4 1966171168
        %v5691 = vunpack.c.0.s8 %v5690
        %v5692 = vlaneseq
        %v5693 = vshrl.u32 %v5692, 7
        %v5694 = vsub.s32 %v5691, %v5693
        %v5695 = vrot.slane %v5679, %v5694
        %v5697 = vunpack.c.l.s4 1966171168
        %v5698 = vunpack.c.0.s8 %v5697
        %v5699 = vlaneseq
        %v5700 = vshrl.u32 %v5699, 7
        %v5701 = vsub.s32 %v5698, %v5700
        %v5702 = vrot.slane %v5680, %v5701
        %v5704 = vunpack.c.l.s4 1966171168
        %v5705 = vunpack.c.0.s8 %v5704
        %v5706 = vlaneseq
        %v5707 = vshrl.u32 %v5706, 7
        %v5708 = vsub.s32 %v5705, %v5707
        %v5709 = vrot.slane %v5681, %v5708
        %v5710 = vcombine.low %v5688, %v5695
        %v5711 = vcombine.low %v5702, %v5709
        %v5713 = vunpack.c.l.s4 1966171168
        %v5714 = vunpack.c.0.s8 %v5713
        %v5715 = vlaneseq
        %v5716 = vshrl.u32 %v5715, 7
        %v5717 = vsub.s32 %v5714, %v5716
        %v5718 = vrot.slane %v5710, %v5717
        %v5720 = vunpack.c.l.s4 1966171168
        %v5721 = vunpack.c.0.s8 %v5720
        %v5722 = vlaneseq
        %v5723 = vshrl.u32 %v5722, 7
        %v5724 = vsub.s32 %v5721, %v5723
        %v5725 = vrot.slane %v5711, %v5724
        %v5726 = vcombine.low %v5718, %v5725
        %v5727 = vcombine.low %v5599, %v5590
        %v5728 = vcombine.low %v5622, %v5636
        %v5729 = vcombine.low %v5637, %v5638
        %v5730 = vcombine.low %v5629, %v5661
        %v5732 = vunpack.c.l.s4 1966171168
        %v5733 = vunpack.c.0.s8 %v5732
        %v5734 = vlaneseq
        %v5735 = vshrl.u32 %v5734, 7
        %v5736 = vsub.s32 %v5733, %v5735
        %v5737 = vrot.slane %v5727, %v5736
        %v5739 = vunpack.c.l.s4 1966171168
        %v5740 = vunpack.c.0.s8 %v5739
        %v5741 = vlaneseq
        %v5742 = vshrl.u32 %v5741, 7
        %v5743 = vsub.s32 %v5740, %v5742
        %v5744 = vrot.slane %v5728, %v5743
        %v5746 = vunpack.c.l.s4 1966171168
        %v5747 = vunpack.c.0.s8 %v5746
        %v5748 = vlaneseq
        %v5749 = vshrl.u32 %v5748, 7
        %v5750 = vsub.s32 %v5747, %v5749
        %v5751 = vrot.slane %v5729, %v5750
        %v5753 = vunpack.c.l.s4 1966171168
        %v5754 = vunpack.c.0.s8 %v5753
        %v5755 = vlaneseq
        %v5756 = vshrl.u32 %v5755, 7
        %v5757 = vsub.s32 %v5754, %v5756
        %v5758 = vrot.slane %v5730, %v5757
        %v5759 = vcombine.low %v5737, %v5744
        %v5760 = vcombine.low %v5751, %v5758
        %v5762 = vunpack.c.l.s4 1966171168
        %v5763 = vunpack.c.0.s8 %v5762
        %v5764 = vlaneseq
        %v5765 = vshrl.u32 %v5764, 7
        %v5766 = vsub.s32 %v5763, %v5765
        %v5767 = vrot.slane %v5759, %v5766
        %v5769 = vunpack.c.l.s4 1966171168
        %v5770 = vunpack.c.0.s8 %v5769
        %v5771 = vlaneseq
        %v5772 = vshrl.u32 %v5771, 7
        %v5773 = vsub.s32 %v5770, %v5772
        %v5774 = vrot.slane %v5760, %v5773
        %v5775 = vcombine.low %v5767, %v5774
        %v5776 = vcombine.low %v5675, %v5676
        %v5777 = vcombine.low %v5677, %v5668
        %v5779 = vunpack.c.l.s4 1966171168
        %v5780 = vunpack.c.0.s8 %v5779
        %v5781 = vlaneseq
        %v5782 = vshrl.u32 %v5781, 7
        %v5783 = vsub.s32 %v5780, %v5782
        %v5784 = vrot.slane %v5776, %v5783
        %v5786 = vunpack.c.l.s4 1966171168
        %v5787 = vunpack.c.0.s8 %v5786
        %v5788 = vlaneseq
        %v5789 = vshrl.u32 %v5788, 7
        %v5790 = vsub.s32 %v5787, %v5789
        %v5791 = vrot.slane %v5777, %v5790
        %v5792 = vcombine.low %v5784, %v5791
        %v5794 = vunpack.c.l.s4 1966171168
        %v5795 = vunpack.c.0.s8 %v5794
        %v5796 = vlaneseq
        %v5797 = vshrl.u32 %v5796, 7
        %v5798 = vsub.s32 %v5795, %v5797
        %v5799 = vrot.slane %v5792, %v5798
        %v5803 = vpack.c.bf16 %v5775, %v5726
        %v5804 = vpack.c.bf16 %v5799, %v5799
        %v5806 = vsel %vm2721, %v5803, 0
        %v5809 = vsel %vm2721, %v5804, 0
        %v5812 = vsel %vm3437, %v1494, 0
        %5814 = vmatprep.subr.bf16.mxu0 0
        %5815 = vmatpush1.bf16.msra.mxu0 0
        %5816 = vmatprep.subr.bf16.mxu0 0
        %5817 = vmatpush1.bf16.msra.mxu0 0
        %5818 = vmatprep.subr.bf16.mxu0 0
        %5819 = vmatpush1.bf16.msra.mxu0 0
        %5820 = vmatprep.subr.bf16.mxu0 0
        %5821 = vmatpush1.bf16.msra.mxu0 0
        %5822 = vmatprep.subr.bf16.mxu0 0
        %5823 = vmatpush1.bf16.msra.mxu0 0
        %5824 = vmatprep.subr.bf16.mxu0 0
        %5825 = vmatpush1.bf16.msra.mxu0 0
        %5826 = vmatprep.subr.bf16.mxu0 0
        %5827 = vmatpush1.bf16.msra.mxu0 0
        %5828 = vmatprep.subr.bf16.mxu0 0
        %5829 = vmatpush1.bf16.msra.mxu0 %v5812
        %5830 = vmatprep.subr.bf16.mxu0 0
        %5831 = vmatpush2.bf16.msra.mxu0 0
        %5832 = vmatprep.subr.bf16.mxu0 0
        %5833 = vmatpush2.bf16.msra.mxu0 0
        %5834 = vmatprep.subr.bf16.mxu0 0
        %5835 = vmatpush2.bf16.msra.mxu0 0
        %5836 = vmatprep.subr.bf16.mxu0 0
        %5837 = vmatpush2.bf16.msra.mxu0 0
        %5838 = vmatprep.subr.bf16.mxu0 0
        %5839 = vmatpush2.bf16.msra.mxu0 0
        %5840 = vmatprep.subr.bf16.mxu0 0
        %5841 = vmatpush2.bf16.msra.mxu0 0
        %5842 = vmatprep.subr.bf16.mxu0 0
        %5843 = vmatpush2.bf16.msra.mxu0 0
        %5844 = vmatprep.subr.bf16.mxu0 0
        %5845 = vmatpush2.bf16.msra.mxu0 0
        %5846 = vmatprep.mubr.bf16.mxu0 0
        %5847 = vmatmul.mubr.bf16.gmra.mxu0 %v5806
        %v5848 = vpop.f32.mrf.mxu0
        %v5849 = vadd.f32 0.0, %v5848
        %v5850 = vpop.f32.mrf.mxu0
        %v5851 = vpop.f32.mrf.mxu0
        %v5852 = vadd.f32 0.0, %v5851
        %v5853 = vpop.f32.mrf.mxu0
        %5854 = vmatprep.mubr.bf16.mxu0 0
        %5855 = vmatmul.mubr.bf16.gmra.mxu0 %v5809
        %v5856 = vpop.f32.mrf.mxu0
        %v5857 = vadd.f32 0.0, %v5856
        %v5858 = vpop.f32.mrf.mxu0
        %v5859 = vpop.f32.mrf.mxu0
        %v5860 = vpop.f32.mrf.mxu0
        %5861 = vdwg.mxu0
        %v5862 = vadd.f32 %v5075, %v5849
        %v5863 = vadd.f32 %v5076, %v5852
        %v5864 = vadd.f32 %v5077, %v5857
        %v5868 = vcombine.high %v5862, %v5862
        %v5870 = vunpack.c.l.s4 1966171168
        %v5871 = vunpack.c.0.s8 %v5870
        %v5872 = vlaneseq
        %v5873 = vshrl.u32 %v5872, 7
        %v5874 = vsub.s32 %v5871, %v5873
        %v5875 = vrot.slane %v5862, %v5874
        %v5877 = vunpack.c.l.s4 1966171168
        %v5878 = vunpack.c.0.s8 %v5877
        %v5879 = vlaneseq
        %v5880 = vshrl.u32 %v5879, 7
        %v5881 = vsub.s32 %v5878, %v5880
        %v5882 = vrot.slane %v5868, %v5881
        %v5883 = vcombine.high %v5875, %v5875
        %v5884 = vcombine.high %v5882, %v5882
        %v5886 = vunpack.c.l.s4 1966171168
        %v5887 = vunpack.c.0.s8 %v5886
        %v5888 = vlaneseq
        %v5889 = vshrl.u32 %v5888, 7
        %v5890 = vsub.s32 %v5887, %v5889
        %v5891 = vrot.slane %v5875, %v5890
        %v5893 = vunpack.c.l.s4 1966171168
        %v5894 = vunpack.c.0.s8 %v5893
        %v5895 = vlaneseq
        %v5896 = vshrl.u32 %v5895, 7
        %v5897 = vsub.s32 %v5894, %v5896
        %v5898 = vrot.slane %v5882, %v5897
        %v5900 = vunpack.c.l.s4 1966171168
        %v5901 = vunpack.c.0.s8 %v5900
        %v5902 = vlaneseq
        %v5903 = vshrl.u32 %v5902, 7
        %v5904 = vsub.s32 %v5901, %v5903
        %v5905 = vrot.slane %v5883, %v5904
        %v5907 = vunpack.c.l.s4 1966171168
        %v5908 = vunpack.c.0.s8 %v5907
        %v5909 = vlaneseq
        %v5910 = vshrl.u32 %v5909, 7
        %v5911 = vsub.s32 %v5908, %v5910
        %v5912 = vrot.slane %v5884, %v5911
        %v5913 = vcombine.high %v5891, %v5891
        %v5914 = vcombine.high %v5898, %v5898
        %v5915 = vcombine.high %v5905, %v5905
        %v5916 = vcombine.high %v5912, %v5912
        %v5917 = vcombine.high %v5863, %v5863
        %v5919 = vunpack.c.l.s4 1966171168
        %v5920 = vunpack.c.0.s8 %v5919
        %v5921 = vlaneseq
        %v5922 = vshrl.u32 %v5921, 7
        %v5923 = vsub.s32 %v5920, %v5922
        %v5924 = vrot.slane %v5863, %v5923
        %v5926 = vunpack.c.l.s4 1966171168
        %v5927 = vunpack.c.0.s8 %v5926
        %v5928 = vlaneseq
        %v5929 = vshrl.u32 %v5928, 7
        %v5930 = vsub.s32 %v5927, %v5929
        %v5931 = vrot.slane %v5917, %v5930
        %v5932 = vcombine.high %v5924, %v5924
        %v5933 = vcombine.high %v5931, %v5931
        %v5935 = vunpack.c.l.s4 1966171168
        %v5936 = vunpack.c.0.s8 %v5935
        %v5937 = vlaneseq
        %v5938 = vshrl.u32 %v5937, 7
        %v5939 = vsub.s32 %v5936, %v5938
        %v5940 = vrot.slane %v5924, %v5939
        %v5942 = vunpack.c.l.s4 1966171168
        %v5943 = vunpack.c.0.s8 %v5942
        %v5944 = vlaneseq
        %v5945 = vshrl.u32 %v5944, 7
        %v5946 = vsub.s32 %v5943, %v5945
        %v5947 = vrot.slane %v5931, %v5946
        %v5949 = vunpack.c.l.s4 1966171168
        %v5950 = vunpack.c.0.s8 %v5949
        %v5951 = vlaneseq
        %v5952 = vshrl.u32 %v5951, 7
        %v5953 = vsub.s32 %v5950, %v5952
        %v5954 = vrot.slane %v5932, %v5953
        %v5956 = vunpack.c.l.s4 1966171168
        %v5957 = vunpack.c.0.s8 %v5956
        %v5958 = vlaneseq
        %v5959 = vshrl.u32 %v5958, 7
        %v5960 = vsub.s32 %v5957, %v5959
        %v5961 = vrot.slane %v5933, %v5960
        %v5962 = vcombine.high %v5940, %v5940
        %v5963 = vcombine.high %v5947, %v5947
        %v5964 = vcombine.high %v5954, %v5954
        %v5965 = vcombine.high %v5961, %v5961
        %v5967 = vunpack.c.l.s4 1966171168
        %v5968 = vunpack.c.0.s8 %v5967
        %v5969 = vlaneseq
        %v5970 = vshrl.u32 %v5969, 7
        %v5971 = vsub.s32 %v5968, %v5970
        %v5972 = vrot.slane %v5864, %v5971
        %v5973 = vcombine.high %v5972, %v5972
        %v5975 = vunpack.c.l.s4 1966171168
        %v5976 = vunpack.c.0.s8 %v5975
        %v5977 = vlaneseq
        %v5978 = vshrl.u32 %v5977, 7
        %v5979 = vsub.s32 %v5976, %v5978
        %v5980 = vrot.slane %v5972, %v5979
        %v5982 = vunpack.c.l.s4 1966171168
        %v5983 = vunpack.c.0.s8 %v5982
        %v5984 = vlaneseq
        %v5985 = vshrl.u32 %v5984, 7
        %v5986 = vsub.s32 %v5983, %v5985
        %v5987 = vrot.slane %v5973, %v5986
        %v5988 = vcombine.high %v5980, %v5980
        %v5989 = vcombine.high %v5987, %v5987
        %v5990 = vcombine.low %v5891, %v5912
        %v5991 = vcombine.low %v5962, %v5965
        %v5993 = vunpack.c.l.s4 1966171168
        %v5994 = vunpack.c.0.s8 %v5993
        %v5995 = vlaneseq
        %v5996 = vshrl.u32 %v5995, 7
        %v5997 = vsub.s32 %v5994, %v5996
        %v5998 = vrot.slane %v5990, %v5997
        %v6000 = vunpack.c.l.s4 1966171168
        %v6001 = vunpack.c.0.s8 %v6000
        %v6002 = vlaneseq
        %v6003 = vshrl.u32 %v6002, 7
        %v6004 = vsub.s32 %v6001, %v6003
        %v6005 = vrot.slane %v5991, %v6004
        %v6006 = vcombine.low %v5998, %v6005
        %v6008 = vunpack.c.l.s4 1966171168
        %v6009 = vunpack.c.0.s8 %v6008
        %v6010 = vlaneseq
        %v6011 = vshrl.u32 %v6010, 7
        %v6012 = vsub.s32 %v6009, %v6011
        %v6013 = vrot.slane %v6006, %v6012
        %6015 = vst.msk [vmem:[%s497] sm:$0xf] %vm869, %v6013
        %v6016 = vcombine.low %v5905, %v5913
        %v6017 = vcombine.low %v5915, %v5898
        %v6019 = vunpack.c.l.s4 1966171168
        %v6020 = vunpack.c.0.s8 %v6019
        %v6021 = vlaneseq
        %v6022 = vshrl.u32 %v6021, 7
        %v6023 = vsub.s32 %v6020, %v6022
        %v6024 = vrot.slane %v6016, %v6023
        %v6026 = vunpack.c.l.s4 1966171168
        %v6027 = vunpack.c.0.s8 %v6026
        %v6028 = vlaneseq
        %v6029 = vshrl.u32 %v6028, 7
        %v6030 = vsub.s32 %v6027, %v6029
        %v6031 = vrot.slane %v6017, %v6030
        %v6032 = vcombine.low %v6024, %v6031
        %v6034 = vunpack.c.l.s4 1966171168
        %v6035 = vunpack.c.0.s8 %v6034
        %v6036 = vlaneseq
        %v6037 = vshrl.u32 %v6036, 7
        %v6038 = vsub.s32 %v6035, %v6037
        %v6039 = vrot.slane %v6032, %v6038
        %v6040 = vcombine.low %v5914, %v5916
        %v6041 = vcombine.low %v5940, %v5954
        %v6043 = vunpack.c.l.s4 1966171168
        %v6044 = vunpack.c.0.s8 %v6043
        %v6045 = vlaneseq
        %v6046 = vshrl.u32 %v6045, 7
        %v6047 = vsub.s32 %v6044, %v6046
        %v6048 = vrot.slane %v6040, %v6047
        %v6050 = vunpack.c.l.s4 1966171168
        %v6051 = vunpack.c.0.s8 %v6050
        %v6052 = vlaneseq
        %v6053 = vshrl.u32 %v6052, 7
        %v6054 = vsub.s32 %v6051, %v6053
        %v6055 = vrot.slane %v6041, %v6054
        %v6056 = vcombine.low %v6048, %v6055
        %v6058 = vunpack.c.l.s4 1966171168
        %v6059 = vunpack.c.0.s8 %v6058
        %v6060 = vlaneseq
        %v6061 = vshrl.u32 %v6060, 7
        %v6062 = vsub.s32 %v6059, %v6061
        %v6063 = vrot.slane %v6056, %v6062
        %v6064 = vcombine.low %v5964, %v5947
        %v6065 = vcombine.low %v5961, %v5963
        %v6067 = vunpack.c.l.s4 1966171168
        %v6068 = vunpack.c.0.s8 %v6067
        %v6069 = vlaneseq
        %v6070 = vshrl.u32 %v6069, 7
        %v6071 = vsub.s32 %v6068, %v6070
        %v6072 = vrot.slane %v6064, %v6071
        %v6074 = vunpack.c.l.s4 1966171168
        %v6075 = vunpack.c.0.s8 %v6074
        %v6076 = vlaneseq
        %v6077 = vshrl.u32 %v6076, 7
        %v6078 = vsub.s32 %v6075, %v6077
        %v6079 = vrot.slane %v6065, %v6078
        %v6080 = vcombine.low %v6072, %v6079
        %v6082 = vunpack.c.l.s4 1966171168
        %v6083 = vunpack.c.0.s8 %v6082
        %v6084 = vlaneseq
        %v6085 = vshrl.u32 %v6084, 7
        %v6086 = vsub.s32 %v6083, %v6085
        %v6087 = vrot.slane %v6080, %v6086
        %v6088 = vcombine.low %v5980, %v5987
        %v6089 = vcombine.low %v5988, %v5989
        %v6091 = vunpack.c.l.s4 1966171168
        %v6092 = vunpack.c.0.s8 %v6091
        %v6093 = vlaneseq
        %v6094 = vshrl.u32 %v6093, 7
        %v6095 = vsub.s32 %v6092, %v6094
        %v6096 = vrot.slane %v6088, %v6095
        %v6098 = vunpack.c.l.s4 1966171168
        %v6099 = vunpack.c.0.s8 %v6098
        %v6100 = vlaneseq
        %v6101 = vshrl.u32 %v6100, 7
        %v6102 = vsub.s32 %v6099, %v6101
        %v6103 = vrot.slane %v6089, %v6102
        %v6104 = vcombine.low %v6096, %v6103
        %v6106 = vunpack.c.l.s4 1966171168
        %v6107 = vunpack.c.0.s8 %v6106
        %v6108 = vlaneseq
        %v6109 = vshrl.u32 %v6108, 7
        %v6110 = vsub.s32 %v6107, %v6109
        %v6111 = vrot.slane %v6104, %v6110
        %v6116 = vadd.f32 %v527, %v6039
        %v6117 = vadd.f32 %v535, %v6063
        %v6118 = vadd.f32 %v534, %v6087
        %v6119 = vadd.f32 %v536, %v6111
        %6120 = vst.msk [vmem:[%s469] sm:$0xf] %vm869, %v6116
        %6121 = vst.msk [vmem:[%s469 + $0x4] sm:$0xf] %vm869, %v6117
        %6122 = vst.msk [vmem:[%s469 + $0x8] sm:$0xf] %vm869, %v6118
        %6123 = vst.msk [vmem:[%s469 + $0xc] sm:$0xf] %vm869, %v6119
        %s6124 = sand.u32 %s314, 1
        %s6125 = scalar_lea.sflag [#allocation3], %s6124
        %s6126 = sand.u32 %s314, 1
        %s6127 = smul.addr %s6126, 16
        %s6128 = scalar_lea.vmem [#allocation2], %s6127
        %p6129 = scmp.lt.s32.totalorder %s32, 1
        %s6130 = scalar_select %p6129, %s32, 1
        %p6131 = scmp.lt.s32.totalorder %s33, 0
        %s6132 = scalar_select %p6131, %s33, 0
        %s6133 = sadd.s32 %s6132, %s6130
        %s6134 = smul.addr %s6133, 4
        %s6135 = scalar_lea.vmem %s13, %s6134
        // Predicated region
        $region69: #{vitclip_stan_forward.4} parent=67 // pred_check
          %p6136 = pneg %p324
        $region70: #{vitclip_stan_forward.4} parent=67 // pred_check_branch
          %6138 = sbr.rel (%p6136) target = $region72
        $region71: #{vitclip_stan_forward.4} parent=67 // pred_region
          %s6139 = smul.u32 4, %s33
          %s6141 = ssub.s32 256, 256
          %6142 = vsyncadd %s6125, %s6141
          %s6143 = smul.addr %s32, 4
          %s6144 = sadd.s32 %s6139, %s6143
          %s6145 = smul.addr %s6144, 64
          %s6146 = scalar_lea.hbm %s12, %s6145
          %s6147 = sshll.u32 %s6128, 4
          %s6148 = int_to_ptr.vmem [resolvable:$true] %s6147
          %6153 = dma.vmem_to_hbm [thread:$0]  %s6148, 256, %s6146, %s6125, 64, 64, 4
        $region72: #{vitclip_stan_forward.4} parent=67 // pred_fallthru
          _
        // Predicated region
        $region73: #{vitclip_stan_forward.4} parent=67 // pred_check
          %p6154 = pneg %p352
        $region74: #{vitclip_stan_forward.4} parent=67 // pred_check_branch
          %6156 = sbr.rel (%p6154) target = $region76
        $region75: #{vitclip_stan_forward.4} parent=67 // pred_region
          _
        $region76: #{vitclip_stan_forward.4} parent=67 // pred_fallthru
          _
      $region68: #{vitclip_stan_forward.4} parent=5 // pred_fallthru
        _
      %p6157 = scmp.le.s32.totalorder 2, %s23
      // Predicated region
      $region77: #{vitclip_stan_forward.4} parent=5 // pred_check
        %p6158 = pneg %p6157
      $region78: #{vitclip_stan_forward.4} parent=5 // pred_check_branch
        %6160 = sbr.rel (%p6158) target = $region80
      $region79: #{vitclip_stan_forward.4} parent=5 // pred_region
        %s6161 = ssub.s32 %s23, 2
        // Predicated region
        $region81: #{vitclip_stan_forward.4} parent=79 // pred_check
          %p6162 = pneg %p330
        $region82: #{vitclip_stan_forward.4} parent=79 // pred_check_branch
          %6164 = sbr.rel (%p6162) target = $region84
        $region83: #{vitclip_stan_forward.4} parent=79 // pred_region
          %s6165 = sand.u32 %s315, 1
          %s6166 = scalar_lea.sflag [#allocation3], %s6165
          %s6167 = sand.u32 %s315, 1
          %s6168 = smul.addr %s6167, 16
          %s6169 = scalar_lea.vmem [#allocation2], %s6168
          %6170 = dma.done %s6166, 256
        $region84: #{vitclip_stan_forward.4} parent=79 // pred_fallthru
          _
        // Predicated region
        $region85: #{vitclip_stan_forward.4} parent=79 // pred_check
          %p6171 = pneg %p358
        $region86: #{vitclip_stan_forward.4} parent=79 // pred_check_branch
          %6173 = sbr.rel (%p6171) target = $region88
        $region87: #{vitclip_stan_forward.4} parent=79 // pred_region
          %p6174 = scmp.lt.s32.totalorder %s34, 1
          %s6175 = scalar_select %p6174, %s34, 1
          %p6176 = scmp.lt.s32.totalorder %s35, 0
          %s6177 = scalar_select %p6176, %s35, 0
          %s6178 = sadd.s32 %s6177, %s6175
          %s6179 = smul.addr %s6178, 4
          %s6180 = scalar_lea.vmem %s13, %s6179
        $region88: #{vitclip_stan_forward.4} parent=79 // pred_fallthru
          _
      $region80: #{vitclip_stan_forward.4} parent=5 // pred_fallthru
        _
    $region6: #{vitclip_stan_forward.4} parent=1 // loop_footer
      %s27 = sadd.s32 1, %s23
    $region7: #{vitclip_stan_forward.4} parent=1 // loop_footer_branch
      %22 = sbr.rel target = $region3
    $region8: #{vitclip_stan_forward.4} parent=1 // loop_exit
      _
    %6181 = vsyncpa [#allocation3], 1
    %s6182 = scalar_lea.sflag [#allocation3], 1
    %6183 = vsyncpa %s6182, 1

</llo_original>
